<compile_context>
chip_gen: v7x
topology: tpu7x:2x2x1
jax: 0.10.0
libtpu: 0.0.40
codegen_flags: <defaults>
</compile_context>

<pallas_src>
import functools

import jax
import jax.numpy as jnp
import numpy as np
from jax import lax
from jax.experimental import pallas as pl
from jax.experimental.pallas import tpu as pltpu

_VMEM_LIMIT = 32 * 1024 * 1024     # explicit scoped-VMEM limit (safe on v5e/v6e/v7x)
_VMEM_BUDGET = 20 * 1024 * 1024    # target per-grid-step working set


# ----------------------------------------------------------------------------
# Pallas kernels
# ----------------------------------------------------------------------------
def _mm_bias_relu_kernel(x_ref, w_ref, b_ref, o_ref):
    # x_ref: (1, TM, K) bf16, w_ref: (K, Cout) bf16, b_ref: (1, Cout) f32,
    # o_ref: (1, TM, Cout).  Single MXU matmul + fused bias + ReLU (layer 1, K=27).
    acc = jnp.dot(x_ref[0], w_ref[...], preferred_element_type=jnp.float32)
    o_ref[0] = jnp.maximum(acc + b_ref[...], 0.0).astype(o_ref.dtype)


def _conv3x3_kernel(x_ref, w_ref, b_ref, o_ref, *, wp, pool):
    # x_ref: (1, 1, Rin, Cin) bf16 -- flattened reflect-padded rows of one H tile (+halo)
    # w_ref: (9, Cin, Cout) bf16 tap-major weights, b_ref: (1, Cout) f32
    # o_ref: (1, 1, M, Cout) with M = TH * wp (row-major over the padded width wp)
    m = o_ref.shape[2]
    cout = o_ref.shape[3]
    macc = m + (wp + 1 if pool else 0)            # extra rows so pool shifts stay in-bounds

    acc = jnp.zeros((macc, cout), jnp.float32)
    # TODO(synk): sub-tile the row axis here (fori_loop, taps unrolled) if vst-bound.
    for kh in range(3):
        for kw in range(3):
            tap = x_ref[0, 0, pl.ds(kh * wp + kw, macc), :]   # contiguous slice, no im2col
            acc = acc + jnp.dot(tap, w_ref[kh * 3 + kw],
                                preferred_element_type=jnp.float32)
    acc = jnp.maximum(acc + b_ref[...], 0.0)      # fused bias + ReLU (f32)

    if pool:
        # fused 2x2/stride-2 maxpool over flat offsets {0, 1, wp, wp+1}; kept outputs
        # (even h, even w) only ever read valid conv rows -- tail rows are discarded.
        acc = jnp.maximum(jnp.maximum(acc[0:m], acc[1:m + 1]),
                          jnp.maximum(acc[wp:wp + m], acc[wp + 1:wp + 1 + m]))
    o_ref[0, 0] = acc.astype(o_ref.dtype)


# ----------------------------------------------------------------------------
# Static index / tile-size helpers (all shapes are compile-time constants)
# ----------------------------------------------------------------------------
def _reflect(idx, n):
    idx = np.asarray(idx)
    if n == 1:
        return np.zeros_like(idx)
    period = 2 * (n - 1)
    idx = np.mod(idx, period)
    return np.where(idx >= n, period - idx, idx)


def _choose_m_tile(m, cout):
    per_row = 2 * (27 * 2) + 2 * (cout * 2) + cout * 4
    best = None
    for d in range(8, m + 1, 8):
        if m % d == 0 and d * per_row <= _VMEM_BUDGET:
            best = d
    return best if best is not None else m


def _choose_h_tile(hl, wp, cin, cout, pool, out_bytes):
    extra = 4 if pool else 3
    best = None
    for th in range(1, hl + 1):
        if hl % th:
            continue
        if pool and th % 2:
            continue
        m = th * wp
        macc = m + (wp + 1 if pool else 0)
        need = (2 * (th + extra) * wp * cin * 2    # double-buffered bf16 input tile
                + 2 * m * cout * out_bytes         # double-buffered output tile
                + macc * cout * 4                  # f32 accumulator
                + 2 * 9 * cin * cout * 2           # double-buffered bf16 weights
                + (1 << 16))
        if need <= _VMEM_BUDGET:
            best = th
    if best is None:
        best = 2 if pool else 1
    return best


def _tile_gather_indices(hl, wl, sh, sw, ws, th, th_in):
    """Flat indices into the previous layer's stored (Hs*Ws) rows that build
    reflect-padded, halo-overlapped tiles (and apply the previous pool's 2x subsample)."""
    nt = hl // th
    wp = wl + 2
    rows = _reflect(np.arange(nt)[:, None] * th - 1 + np.arange(th_in)[None, :], hl)
    cols = _reflect(np.arange(wp) - 1, wl)
    flat = (rows[:, :, None] * sh) * ws + (cols[None, None, :] * sw)
    return flat.reshape(nt * th_in * wp).astype(np.int32), nt, wp


# ----------------------------------------------------------------------------
# Layer wrappers
# ----------------------------------------------------------------------------
def _layer1_im2col_matmul(x_nhwc, w27, bias):
    """conv1 (folded) + reflectPad + conv2 + relu2 as a single K=27 matmul."""
    n, h, w, _ = x_nhwc.shape
    m = h * w
    xp = jnp.pad(x_nhwc, ((0, 0), (1, 1), (1, 1), (0, 0)), mode="reflect")
    taps = [xp[:, kh:kh + h, kw:kw + w, :] for kh in range(3) for kw in range(3)]
    xim = jnp.concatenate(taps, axis=-1).reshape(n, m, 27).astype(jnp.bfloat16)

    cout = w27.shape[1]
    tm = _choose_m_tile(m, cout)
    b2 = bias.reshape(1, cout).astype(jnp.float32)
    y = pl.pallas_call(
        _mm_bias_relu_kernel,
        out_shape=jax.ShapeDtypeStruct((n, m, cout), jnp.bfloat16),
        grid=(n, m // tm),
        in_specs=[
            pl.BlockSpec((1, tm, 27), lambda i, j: (i, j, 0)),
            pl.BlockSpec((27, cout), lambda i, j: (0, 0)),
            pl.BlockSpec((1, cout), lambda i, j: (0, 0)),
        ],
        out_specs=pl.BlockSpec((1, tm, cout), lambda i, j: (i, j, 0)),
        compiler_params=pltpu.CompilerParams(
            dimension_semantics=("parallel", "parallel"),
            vmem_limit_bytes=_VMEM_LIMIT),
    )(xim, w27, b2)
    # state: (stored array, logical H, logical W, row stride, col stride)
    return y.reshape(n, h, w, cout), h, w, 1, 1


def _conv3x3_layer(state, wm, bias, *, pool, out_dtype):
    """ReflectionPad2d(1) + Conv2d(3x3) + ReLU (+ fused MaxPool2d(2,2)), H-tiled."""
    y, hl, wl, sh, sw = state
    n, hs, ws, cin = y.shape
    cout = wm.shape[2]
    wp = wl + 2
    out_bytes = jnp.dtype(out_dtype).itemsize

    th = _choose_h_tile(hl, wp, cin, cout, pool, out_bytes)
    th_in = th + (4 if pool else 3)               # +halo (+1 or +2 don't-care rows)
    idx, nt, _ = _tile_gather_indices(hl, wl, sh, sw, ws, th, th_in)
    rin = th_in * wp
    m = th * wp

    # One gather pass: reflect pad (H & W) + halo duplication + previous pool subsample.
    xt = jnp.take(y.reshape(n, hs * ws, cin), jnp.asarray(idx), axis=1)
    xt = xt.reshape(n, nt, rin, cin)
    b2 = bias.reshape(1, cout).astype(jnp.float32)

    out = pl.pallas_call(
        functools.partial(_conv3x3_kernel, wp=wp, pool=pool),
        out_shape=jax.ShapeDtypeStruct((n, nt, m, cout), out_dtype),
        grid=(n, nt),
        in_specs=[
            pl.BlockSpec((1, 1, rin, cin), lambda i, j: (i, j, 0, 0)),
            pl.BlockSpec((9, cin, cout), lambda i, j: (0, 0, 0)),
            pl.BlockSpec((1, cout), lambda i, j: (0, 0)),
        ],
        out_specs=pl.BlockSpec((1, 1, m, cout), lambda i, j: (i, j, 0, 0)),
        compiler_params=pltpu.CompilerParams(
            dimension_semantics=("parallel", "parallel"),
            vmem_limit_bytes=_VMEM_LIMIT),
    )(xt, wm, b2)

    ynew = out.reshape(n, hl, wp, cout)           # junk cols >= wl (and pre-subsample pool
    if pool:                                      # rows) are skipped by the next gather
        return ynew, hl // 2, wl // 2, 2, 2
    return ynew, hl, wl, 1, 1


# ----------------------------------------------------------------------------
# Weight packing: fold conv1 into conv2 (im2col-27), tap-major bf16 layouts
# ----------------------------------------------------------------------------
def _tapify(w_oihw):
    """(O, I, 3, 3) OIHW -> (9, I, O), tap index = kh*3 + kw."""
    o, i, kh, kw = w_oihw.shape
    return jnp.transpose(w_oihw, (2, 3, 1, 0)).reshape(kh * kw, i, o)


def _pack_weights(p):
    bf = jnp.bfloat16
    # conv1 is a per-pixel linear map (no activation) -> compose exactly into conv2.
    a = p["w1"][:, :, 0, 0]                       # (out=3, in=3)
    w2m = _tapify(p["w2"])                        # (9, 3, 64)
    w2f = jnp.einsum("ic,tio->tco", a, w2m)       # compose over conv1 output channels
    b2f = p["b2"] + jnp.einsum("i,tio->o", p["b1"], w2m)
    w27 = w2f.reshape(27, 64).astype(bf)          # (tap, cin) rows, cin fastest
    layer1 = (w27, b2f)
    convs = [
        (_tapify(p["w3"]).astype(bf), p["b3"], True, jnp.bfloat16),   # conv3+relu3+maxPool
        (_tapify(p["w4"]).astype(bf), p["b4"], False, jnp.bfloat16),  # conv4+relu4
        (_tapify(p["w5"]).astype(bf), p["b5"], True, jnp.bfloat16),   # conv5+relu5+maxPool2
        (_tapify(p["w6"]).astype(bf), p["b6"], False, jnp.float32),   # conv6+relu6
    ]
    return layer1, convs


def encoder3_forward_pallas(x_nchw, params):
    """Pallas implementation of Encoder3.forward. Input NCHW (PyTorch convention)."""
    n, c, h, w = x_nchw.shape
    assert c == 3 and h % 4 == 0 and w % 4 == 0, "two 2x2 pools require H, W % 4 == 0"
    (w27, b1f), convs = _pack_weights(params)
    x = jnp.transpose(x_nchw, (0, 2, 3, 1))       # NCHW -> NHWC (channels on lanes)
    state = _layer1_im2col_matmul(x, w27, b1f)
    for wm, b, pool, odt in convs:
        state = _conv3x3_layer(state, wm, b, pool=pool, out_dtype=odt)
    y, hl, wl, _, _ = state                       # final stored (N, H/4, W/4+2, 256)
    out = y[:, :, :wl, :]                         # drop junk columns of the last layer
    return jnp.transpose(out, (0, 3, 1, 2))       # back to NCHW


# ----------------------------------------------------------------------------
# Pure-JAX f32 reference (for correctness check)
# ----------------------------------------------------------------------------
def _conv_ref(x_nhwc, w_oihw, bias, relu, pad):
    if pad > 0:
        x_nhwc = jnp.pad(x_nhwc, ((0, 0), (pad, pad), (pad, pad), (0, 0)), mode="reflect")
    y = lax.conv_general_dilated(x_nhwc, w_oihw, (1, 1), "VALID",
                                 dimension_numbers=("NHWC", "OIHW", "NHWC"))
    y = y + bias.reshape(1, 1, 1, -1)
    return jnp.maximum(y, 0.0) if relu else y


def _maxpool_ref(x_nhwc):
    return lax.reduce_window(x_nhwc, -jnp.inf, lax.max,
                             (1, 2, 2, 1), (1, 2, 2, 1), "VALID")


def encoder3_forward_ref(x_nchw, p):
    x = jnp.transpose(x_nchw, (0, 2, 3, 1))
    out = _conv_ref(x, p["w1"], p["b1"], False, 0)
    out = _conv_ref(out, p["w2"], p["b2"], True, 1)
    out = _conv_ref(out, p["w3"], p["b3"], True, 1)
    out = _maxpool_ref(out)
    out = _conv_ref(out, p["w4"], p["b4"], True, 1)
    out = _conv_ref(out, p["w5"], p["b5"], True, 1)
    out = _maxpool_ref(out)
    out = _conv_ref(out, p["w6"], p["b6"], True, 1)
    return jnp.transpose(out, (0, 3, 1, 2))


# ----------------------------------------------------------------------------
# Deterministic parameter init (weights stored in PyTorch OIHW convention)
# ----------------------------------------------------------------------------
def make_params(key):
    conv_defs = [  # (Cout, Cin, K)
        (3, 3, 1),      # conv1
        (64, 3, 3),     # conv2
        (64, 64, 3),    # conv3
        (128, 64, 3),   # conv4
        (128, 128, 3),  # conv5
        (256, 128, 3),  # conv6
    ]
    params = {}
    for i, (cout, cin, k) in enumerate(conv_defs, start=1):
        key, kw, kb = jax.random.split(key, 3)
        scale = 1.0 / np.sqrt(cin * k * k)
        params[f"w{i}"] = jax.random.normal(kw, (cout, cin, k, k), jnp.float32) * scale
        params[f"b{i}"] = jax.random.normal(kb, (cout,), jnp.float32) * 0.01
    return params


if __name__ == "__main__":
    key = jax.random.PRNGKey(0)
    key, kx = jax.random.split(key)

    # small shapes consistent with the module: batch=2, 3 input channels, 16x16 spatial (NCHW)
    x = jax.random.normal(kx, (2, 3, 16, 16), jnp.float32)
    params = make_params(key)

    fwd = jax.jit(encoder3_forward_pallas)
    out = jax.block_until_ready(fwd(x, params))
    ref = jax.block_until_ready(encoder3_forward_ref(x, params))

    assert out.shape == (2, 256, 4, 4), out.shape
    err = jnp.abs(out.astype(jnp.float32) - ref)
    max_err = float(jnp.max(err))
    mean_err = float(jnp.mean(err))
    # bf16 activations/weights with f32 accumulation -> loosened tolerance vs f32 ref
    assert max_err < 0.3 and mean_err < 0.05, (max_err, mean_err)

    print("KERNEL_OK")
</pallas_src>

<mosaic_0001>
module attributes {stable_mosaic.version = 11 : i64} {
  func.func @_mm_bias_relu_kernel(%arg0: i32, %arg1: i32, %arg2: memref<1x256x27xbf16, #tpu.memory_space<vmem>>, %arg3: memref<27x64xbf16, #tpu.memory_space<vmem>>, %arg4: memref<1x64xf32, #tpu.memory_space<vmem>>, %arg5: memref<1x256x64xbf16, #tpu.memory_space<vmem>>) attributes {dimension_semantics = [#tpu.dimension_semantics<parallel>, #tpu.dimension_semantics<parallel>], iteration_bounds = array<i64: 2, 1>, scalar_prefetch = 0 : i64, scratch_operands = 0 : i64, tpu.core_type = #tpu.core_type<tc>, window_params = [{transform_indices = @transform_0, window_bounds = array<i64: 1, 256, 27>}, {pipeline_mode = #tpu.pipeline_mode<synchronous>, transform_indices = @transform_1, window_bounds = array<i64: 27, 64>}, {pipeline_mode = #tpu.pipeline_mode<synchronous>, transform_indices = @transform_2, window_bounds = array<i64: 1, 64>}, {transform_indices = @transform_3, window_bounds = array<i64: 1, 256, 64>}]} {
    %c0 = arith.constant 0 : index
    %c0_0 = arith.constant 0 : index
    %c0_1 = arith.constant 0 : index
    %0 = vector.load %arg2[%c0, %c0_0, %c0_1] : memref<1x256x27xbf16, #tpu.memory_space<vmem>>, vector<1x256x27xbf16>
    %1 = vector.shape_cast %0 : vector<1x256x27xbf16> to vector<256x27xbf16>
    %c0_2 = arith.constant 0 : index
    %c0_3 = arith.constant 0 : index
    %2 = vector.load %arg3[%c0_2, %c0_3] : memref<27x64xbf16, #tpu.memory_space<vmem>>, vector<27x64xbf16>
    %cst = arith.constant dense<0.000000e+00> : vector<256x64xf32>
    %3 = tpu.matmul %1, %2, %cst {dimension_numbers = #tpu.dot_dimension_numbers<[1], [0], [0], [1], [0, 0, 1, 1], [], []>} : vector<256x27xbf16>, vector<27x64xbf16>, vector<256x64xf32> -> vector<256x64xf32>
    %c0_4 = arith.constant 0 : index
    %c0_5 = arith.constant 0 : index
    %4 = vector.load %arg4[%c0_4, %c0_5] : memref<1x64xf32, #tpu.memory_space<vmem>>, vector<1x64xf32>
    %5 = vector.broadcast %4 : vector<1x64xf32> to vector<256x64xf32>
    %6 = arith.addf %3, %5 : vector<256x64xf32>
    %cst_6 = arith.constant 0.000000e+00 : f32
    %7 = vector.broadcast %cst_6 : f32 to vector<256x64xf32>
    %8 = arith.maximumf %6, %7 : vector<256x64xf32>
    %9 = arith.truncf %8 : vector<256x64xf32> to vector<256x64xbf16>
    %c0_7 = arith.constant 0 : index
    %c0_8 = arith.constant 0 : index
    %c0_9 = arith.constant 0 : index
    %10 = vector.load %arg5[%c0_7, %c0_8, %c0_9] : memref<1x256x64xbf16, #tpu.memory_space<vmem>>, vector<1x256x64xbf16>
    %11 = vector.shape_cast %10 : vector<1x256x64xbf16> to vector<256x64xbf16>
    %12 = vector.shape_cast %9 : vector<256x64xbf16> to vector<1x256x64xbf16>
    tpu.vector_store %arg5[%c0_7, %c0_8, %c0_9], %12 {strides = array<i32>} : memref<1x256x64xbf16, #tpu.memory_space<vmem>>, vector<1x256x64xbf16>,
    return
  }
  func.func @transform_0(%arg0: i32, %arg1: i32) -> (i32, i32, i32) {
    %c0_i32 = arith.constant 0 : i32
    %c0_i32_0 = arith.constant 0 : i32
    return %arg0, %arg1, %c0_i32 : i32, i32, i32
  }
  func.func @transform_1(%arg0: i32, %arg1: i32) -> (i32, i32) {
    %c0_i32 = arith.constant 0 : i32
    %c0_i32_0 = arith.constant 0 : i32
    %c0_i32_1 = arith.constant 0 : i32
    return %c0_i32, %c0_i32_0 : i32, i32
  }
  func.func @transform_2(%arg0: i32, %arg1: i32) -> (i32, i32) {
    %c0_i32 = arith.constant 0 : i32
    %c0_i32_0 = arith.constant 0 : i32
    %c0_i32_1 = arith.constant 0 : i32
    return %c0_i32, %c0_i32_0 : i32, i32
  }
  func.func @transform_3(%arg0: i32, %arg1: i32) -> (i32, i32, i32) {
    %c0_i32 = arith.constant 0 : i32
    %c0_i32_0 = arith.constant 0 : i32
    return %arg0, %arg1, %c0_i32 : i32, i32, i32
  }
}

module attributes {stable_mosaic.version = 11 : i64} {
  func.func @_conv3x3_kernel(%arg0: i32, %arg1: i32, %arg2: memref<1x1x360x64xbf16, #tpu.memory_space<vmem>>, %arg3: memref<9x64x64xbf16, #tpu.memory_space<vmem>>, %arg4: memref<1x64xf32, #tpu.memory_space<vmem>>, %arg5: memref<1x1x288x64xbf16, #tpu.memory_space<vmem>>) attributes {dimension_semantics = [#tpu.dimension_semantics<parallel>, #tpu.dimension_semantics<parallel>], iteration_bounds = array<i64: 2, 1>, scalar_prefetch = 0 : i64, scratch_operands = 0 : i64, tpu.core_type = #tpu.core_type<tc>, window_params = [{transform_indices = @transform_0, window_bounds = array<i64: 1, 1, 360, 64>}, {pipeline_mode = #tpu.pipeline_mode<synchronous>, transform_indices = @transform_1, window_bounds = array<i64: 9, 64, 64>}, {pipeline_mode = #tpu.pipeline_mode<synchronous>, transform_indices = @transform_2, window_bounds = array<i64: 1, 64>}, {transform_indices = @transform_3, window_bounds = array<i64: 1, 1, 288, 64>}]} {
    %cst = arith.constant 0.000000e+00 : f32
    %0 = vector.broadcast %cst : f32 to vector<307x64xf32>
    %c0 = arith.constant 0 : index
    %c0_0 = arith.constant 0 : index
    %c0_1 = arith.constant 0 : index
    %c0_2 = arith.constant 0 : index
    %1 = vector.load %arg2[%c0, %c0_0, %c0_1, %c0_2] : memref<1x1x360x64xbf16, #tpu.memory_space<vmem>>, vector<1x1x307x64xbf16>
    %2 = vector.shape_cast %1 : vector<1x1x307x64xbf16> to vector<307x64xbf16>
    %c0_3 = arith.constant 0 : index
    %c0_4 = arith.constant 0 : index
    %c0_5 = arith.constant 0 : index
    %3 = vector.load %arg3[%c0_3, %c0_4, %c0_5] : memref<9x64x64xbf16, #tpu.memory_space<vmem>>, vector<1x64x64xbf16>
    %4 = vector.shape_cast %3 : vector<1x64x64xbf16> to vector<64x64xbf16>
    %cst_6 = arith.constant dense<0.000000e+00> : vector<307x64xf32>
    %5 = tpu.matmul %2, %4, %cst_6 {dimension_numbers = #tpu.dot_dimension_numbers<[1], [0], [0], [1], [0, 0, 1, 1], [], []>} : vector<307x64xbf16>, vector<64x64xbf16>, vector<307x64xf32> -> vector<307x64xf32>
    %6 = arith.addf %0, %5 : vector<307x64xf32>
    %c0_7 = arith.constant 0 : index
    %c0_8 = arith.constant 0 : index
    %c1 = arith.constant 1 : index
    %c0_9 = arith.constant 0 : index
    %7 = vector.load %arg2[%c0_7, %c0_8, %c1, %c0_9] : memref<1x1x360x64xbf16, #tpu.memory_space<vmem>>, vector<1x1x307x64xbf16>
    %8 = vector.shape_cast %7 : vector<1x1x307x64xbf16> to vector<307x64xbf16>
    %c1_10 = arith.constant 1 : index
    %c0_11 = arith.constant 0 : index
    %c0_12 = arith.constant 0 : index
    %9 = vector.load %arg3[%c1_10, %c0_11, %c0_12] : memref<9x64x64xbf16, #tpu.memory_space<vmem>>, vector<1x64x64xbf16>
    %10 = vector.shape_cast %9 : vector<1x64x64xbf16> to vector<64x64xbf16>
    %cst_13 = arith.constant dense<0.000000e+00> : vector<307x64xf32>
    %11 = tpu.matmul %8, %10, %cst_13 {dimension_numbers = #tpu.dot_dimension_numbers<[1], [0], [0], [1], [0, 0, 1, 1], [], []>} : vector<307x64xbf16>, vector<64x64xbf16>, vector<307x64xf32> -> vector<307x64xf32>
    %12 = arith.addf %6, %11 : vector<307x64xf32>
    %c0_14 = arith.constant 0 : index
    %c0_15 = arith.constant 0 : index
    %c2 = arith.constant 2 : index
    %c0_16 = arith.constant 0 : index
    %13 = vector.load %arg2[%c0_14, %c0_15, %c2, %c0_16] : memref<1x1x360x64xbf16, #tpu.memory_space<vmem>>, vector<1x1x307x64xbf16>
    %14 = vector.shape_cast %13 : vector<1x1x307x64xbf16> to vector<307x64xbf16>
    %c2_17 = arith.constant 2 : index
    %c0_18 = arith.constant 0 : index
    %c0_19 = arith.constant 0 : index
    %15 = vector.load %arg3[%c2_17, %c0_18, %c0_19] : memref<9x64x64xbf16, #tpu.memory_space<vmem>>, vector<1x64x64xbf16>
    %16 = vector.shape_cast %15 : vector<1x64x64xbf16> to vector<64x64xbf16>
    %cst_20 = arith.constant dense<0.000000e+00> : vector<307x64xf32>
    %17 = tpu.matmul %14, %16, %cst_20 {dimension_numbers = #tpu.dot_dimension_numbers<[1], [0], [0], [1], [0, 0, 1, 1], [], []>} : vector<307x64xbf16>, vector<64x64xbf16>, vector<307x64xf32> -> vector<307x64xf32>
    %18 = arith.addf %12, %17 : vector<307x64xf32>
    %c0_21 = arith.constant 0 : index
    %c0_22 = arith.constant 0 : index
    %c18 = arith.constant 18 : index
    %c0_23 = arith.constant 0 : index
    %19 = vector.load %arg2[%c0_21, %c0_22, %c18, %c0_23] : memref<1x1x360x64xbf16, #tpu.memory_space<vmem>>, vector<1x1x307x64xbf16>
    %20 = vector.shape_cast %19 : vector<1x1x307x64xbf16> to vector<307x64xbf16>
    %c3 = arith.constant 3 : index
    %c0_24 = arith.constant 0 : index
    %c0_25 = arith.constant 0 : index
    %21 = vector.load %arg3[%c3, %c0_24, %c0_25] : memref<9x64x64xbf16, #tpu.memory_space<vmem>>, vector<1x64x64xbf16>
    %22 = vector.shape_cast %21 : vector<1x64x64xbf16> to vector<64x64xbf16>
    %cst_26 = arith.constant dense<0.000000e+00> : vector<307x64xf32>
    %23 = tpu.matmul %20, %22, %cst_26 {dimension_numbers = #tpu.dot_dimension_numbers<[1], [0], [0], [1], [0, 0, 1, 1], [], []>} : vector<307x64xbf16>, vector<64x64xbf16>, vector<307x64xf32> -> vector<307x64xf32>
    %24 = arith.addf %18, %23 : vector<307x64xf32>
    %c0_27 = arith.constant 0 : index
    %c0_28 = arith.constant 0 : index
    %c19 = arith.constant 19 : index
    %c0_29 = arith.constant 0 : index
    %25 = vector.load %arg2[%c0_27, %c0_28, %c19, %c0_29] : memref<1x1x360x64xbf16, #tpu.memory_space<vmem>>, vector<1x1x307x64xbf16>
    %26 = vector.shape_cast %25 : vector<1x1x307x64xbf16> to vector<307x64xbf16>
    %c4 = arith.constant 4 : index
    %c0_30 = arith.constant 0 : index
    %c0_31 = arith.constant 0 : index
    %27 = vector.load %arg3[%c4, %c0_30, %c0_31] : memref<9x64x64xbf16, #tpu.memory_space<vmem>>, vector<1x64x64xbf16>
    %28 = vector.shape_cast %27 : vector<1x64x64xbf16> to vector<64x64xbf16>
    %cst_32 = arith.constant dense<0.000000e+00> : vector<307x64xf32>
    %29 = tpu.matmul %26, %28, %cst_32 {dimension_numbers = #tpu.dot_dimension_numbers<[1], [0], [0], [1], [0, 0, 1, 1], [], []>} : vector<307x64xbf16>, vector<64x64xbf16>, vector<307x64xf32> -> vector<307x64xf32>
    %30 = arith.addf %24, %29 : vector<307x64xf32>
    %c0_33 = arith.constant 0 : index
    %c0_34 = arith.constant 0 : index
    %c20 = arith.constant 20 : index
    %c0_35 = arith.constant 0 : index
    %31 = vector.load %arg2[%c0_33, %c0_34, %c20, %c0_35] : memref<1x1x360x64xbf16, #tpu.memory_space<vmem>>, vector<1x1x307x64xbf16>
    %32 = vector.shape_cast %31 : vector<1x1x307x64xbf16> to vector<307x64xbf16>
    %c5 = arith.constant 5 : index
    %c0_36 = arith.constant 0 : index
    %c0_37 = arith.constant 0 : index
    %33 = vector.load %arg3[%c5, %c0_36, %c0_37] : memref<9x64x64xbf16, #tpu.memory_space<vmem>>, vector<1x64x64xbf16>
    %34 = vector.shape_cast %33 : vector<1x64x64xbf16> to vector<64x64xbf16>
    %cst_38 = arith.constant dense<0.000000e+00> : vector<307x64xf32>
    %35 = tpu.matmul %32, %34, %cst_38 {dimension_numbers = #tpu.dot_dimension_numbers<[1], [0], [0], [1], [0, 0, 1, 1], [], []>} : vector<307x64xbf16>, vector<64x64xbf16>, vector<307x64xf32> -> vector<307x64xf32>
    %36 = arith.addf %30, %35 : vector<307x64xf32>
    %c0_39 = arith.constant 0 : index
    %c0_40 = arith.constant 0 : index
    %c36 = arith.constant 36 : index
    %c0_41 = arith.constant 0 : index
    %37 = vector.load %arg2[%c0_39, %c0_40, %c36, %c0_41] : memref<1x1x360x64xbf16, #tpu.memory_space<vmem>>, vector<1x1x307x64xbf16>
    %38 = vector.shape_cast %37 : vector<1x1x307x64xbf16> to vector<307x64xbf16>
    %c6 = arith.constant 6 : index
    %c0_42 = arith.constant 0 : index
    %c0_43 = arith.constant 0 : index
    %39 = vector.load %arg3[%c6, %c0_42, %c0_43] : memref<9x64x64xbf16, #tpu.memory_space<vmem>>, vector<1x64x64xbf16>
    %40 = vector.shape_cast %39 : vector<1x64x64xbf16> to vector<64x64xbf16>
    %cst_44 = arith.constant dense<0.000000e+00> : vector<307x64xf32>
    %41 = tpu.matmul %38, %40, %cst_44 {dimension_numbers = #tpu.dot_dimension_numbers<[1], [0], [0], [1], [0, 0, 1, 1], [], []>} : vector<307x64xbf16>, vector<64x64xbf16>, vector<307x64xf32> -> vector<307x64xf32>
    %42 = arith.addf %36, %41 : vector<307x64xf32>
    %c0_45 = arith.constant 0 : index
    %c0_46 = arith.constant 0 : index
    %c37 = arith.constant 37 : index
    %c0_47 = arith.constant 0 : index
    %43 = vector.load %arg2[%c0_45, %c0_46, %c37, %c0_47] : memref<1x1x360x64xbf16, #tpu.memory_space<vmem>>, vector<1x1x307x64xbf16>
    %44 = vector.shape_cast %43 : vector<1x1x307x64xbf16> to vector<307x64xbf16>
    %c7 = arith.constant 7 : index
    %c0_48 = arith.constant 0 : index
    %c0_49 = arith.constant 0 : index
    %45 = vector.load %arg3[%c7, %c0_48, %c0_49] : memref<9x64x64xbf16, #tpu.memory_space<vmem>>, vector<1x64x64xbf16>
    %46 = vector.shape_cast %45 : vector<1x64x64xbf16> to vector<64x64xbf16>
    %cst_50 = arith.constant dense<0.000000e+00> : vector<307x64xf32>
    %47 = tpu.matmul %44, %46, %cst_50 {dimension_numbers = #tpu.dot_dimension_numbers<[1], [0], [0], [1], [0, 0, 1, 1], [], []>} : vector<307x64xbf16>, vector<64x64xbf16>, vector<307x64xf32> -> vector<307x64xf32>
    %48 = arith.addf %42, %47 : vector<307x64xf32>
    %c0_51 = arith.constant 0 : index
    %c0_52 = arith.constant 0 : index
    %c38 = arith.constant 38 : index
    %c0_53 = arith.constant 0 : index
    %49 = vector.load %arg2[%c0_51, %c0_52, %c38, %c0_53] : memref<1x1x360x64xbf16, #tpu.memory_space<vmem>>, vector<1x1x307x64xbf16>
    %50 = vector.shape_cast %49 : vector<1x1x307x64xbf16> to vector<307x64xbf16>
    %c8 = arith.constant 8 : index
    %c0_54 = arith.constant 0 : index
    %c0_55 = arith.constant 0 : index
    %51 = vector.load %arg3[%c8, %c0_54, %c0_55] : memref<9x64x64xbf16, #tpu.memory_space<vmem>>, vector<1x64x64xbf16>
    %52 = vector.shape_cast %51 : vector<1x64x64xbf16> to vector<64x64xbf16>
    %cst_56 = arith.constant dense<0.000000e+00> : vector<307x64xf32>
    %53 = tpu.matmul %50, %52, %cst_56 {dimension_numbers = #tpu.dot_dimension_numbers<[1], [0], [0], [1], [0, 0, 1, 1], [], []>} : vector<307x64xbf16>, vector<64x64xbf16>, vector<307x64xf32> -> vector<307x64xf32>
    %54 = arith.addf %48, %53 : vector<307x64xf32>
    %c0_57 = arith.constant 0 : index
    %c0_58 = arith.constant 0 : index
    %55 = vector.load %arg4[%c0_57, %c0_58] : memref<1x64xf32, #tpu.memory_space<vmem>>, vector<1x64xf32>
    %56 = vector.broadcast %55 : vector<1x64xf32> to vector<307x64xf32>
    %57 = arith.addf %54, %56 : vector<307x64xf32>
    %cst_59 = arith.constant 0.000000e+00 : f32
    %58 = vector.broadcast %cst_59 : f32 to vector<307x64xf32>
    %59 = arith.maximumf %57, %58 : vector<307x64xf32>
    %60 = vector.extract_strided_slice %59 {offsets = [0, 0], sizes = [288, 64], strides = [1, 1]} : vector<307x64xf32> to vector<288x64xf32>
    %61 = vector.extract_strided_slice %59 {offsets = [1, 0], sizes = [288, 64], strides = [1, 1]} : vector<307x64xf32> to vector<288x64xf32>
    %62 = arith.maximumf %60, %61 : vector<288x64xf32>
    %63 = vector.extract_strided_slice %59 {offsets = [18, 0], sizes = [288, 64], strides = [1, 1]} : vector<307x64xf32> to vector<288x64xf32>
    %64 = vector.extract_strided_slice %59 {offsets = [19, 0], sizes = [288, 64], strides = [1, 1]} : vector<307x64xf32> to vector<288x64xf32>
    %65 = arith.maximumf %63, %64 : vector<288x64xf32>
    %66 = arith.maximumf %62, %65 : vector<288x64xf32>
    %67 = arith.truncf %66 : vector<288x64xf32> to vector<288x64xbf16>
    %c0_60 = arith.constant 0 : index
    %c0_61 = arith.constant 0 : index
    %c0_62 = arith.constant 0 : index
    %c0_63 = arith.constant 0 : index
    %68 = vector.load %arg5[%c0_60, %c0_61, %c0_62, %c0_63] : memref<1x1x288x64xbf16, #tpu.memory_space<vmem>>, vector<1x1x288x64xbf16>
    %69 = vector.shape_cast %68 : vector<1x1x288x64xbf16> to vector<288x64xbf16>
    %70 = vector.shape_cast %67 : vector<288x64xbf16> to vector<1x1x288x64xbf16>
    tpu.vector_store %arg5[%c0_60, %c0_61, %c0_62, %c0_63], %70 {strides = array<i32>} : memref<1x1x288x64xbf16, #tpu.memory_space<vmem>>, vector<1x1x288x64xbf16>,
    return
  }
  func.func @transform_0(%arg0: i32, %arg1: i32) -> (i32, i32, i32, i32) {
    %c0_i32 = arith.constant 0 : i32
    %c0_i32_0 = arith.constant 0 : i32
    %c0_i32_1 = arith.constant 0 : i32
    return %arg0, %arg1, %c0_i32, %c0_i32_0 : i32, i32, i32, i32
  }
  func.func @transform_1(%arg0: i32, %arg1: i32) -> (i32, i32, i32) {
    %c0_i32 = arith.constant 0 : i32
    %c0_i32_0 = arith.constant 0 : i32
    %c0_i32_1 = arith.constant 0 : i32
    %c0_i32_2 = arith.constant 0 : i32
    return %c0_i32, %c0_i32_0, %c0_i32_1 : i32, i32, i32
  }
  func.func @transform_2(%arg0: i32, %arg1: i32) -> (i32, i32) {
    %c0_i32 = arith.constant 0 : i32
    %c0_i32_0 = arith.constant 0 : i32
    %c0_i32_1 = arith.constant 0 : i32
    return %c0_i32, %c0_i32_0 : i32, i32
  }
  func.func @transform_3(%arg0: i32, %arg1: i32) -> (i32, i32, i32, i32) {
    %c0_i32 = arith.constant 0 : i32
    %c0_i32_0 = arith.constant 0 : i32
    %c0_i32_1 = arith.constant 0 : i32
    return %arg0, %arg1, %c0_i32, %c0_i32_0 : i32, i32, i32, i32
  }
}

module attributes {stable_mosaic.version = 11 : i64} {
  func.func @_conv3x3_kernel(%arg0: i32, %arg1: i32, %arg2: memref<1x1x110x64xbf16, #tpu.memory_space<vmem>>, %arg3: memref<9x64x128xbf16, #tpu.memory_space<vmem>>, %arg4: memref<1x128xf32, #tpu.memory_space<vmem>>, %arg5: memref<1x1x80x128xbf16, #tpu.memory_space<vmem>>) attributes {dimension_semantics = [#tpu.dimension_semantics<parallel>, #tpu.dimension_semantics<parallel>], iteration_bounds = array<i64: 2, 1>, scalar_prefetch = 0 : i64, scratch_operands = 0 : i64, tpu.core_type = #tpu.core_type<tc>, window_params = [{transform_indices = @transform_0, window_bounds = array<i64: 1, 1, 110, 64>}, {pipeline_mode = #tpu.pipeline_mode<synchronous>, transform_indices = @transform_1, window_bounds = array<i64: 9, 64, 128>}, {pipeline_mode = #tpu.pipeline_mode<synchronous>, transform_indices = @transform_2, window_bounds = array<i64: 1, 128>}, {transform_indices = @transform_3, window_bounds = array<i64: 1, 1, 80, 128>}]} {
    %cst = arith.constant 0.000000e+00 : f32
    %0 = vector.broadcast %cst : f32 to vector<80x128xf32>
    %c0 = arith.constant 0 : index
    %c0_0 = arith.constant 0 : index
    %c0_1 = arith.constant 0 : index
    %c0_2 = arith.constant 0 : index
    %1 = vector.load %arg2[%c0, %c0_0, %c0_1, %c0_2] : memref<1x1x110x64xbf16, #tpu.memory_space<vmem>>, vector<1x1x80x64xbf16>
    %2 = vector.shape_cast %1 : vector<1x1x80x64xbf16> to vector<80x64xbf16>
    %c0_3 = arith.constant 0 : index
    %c0_4 = arith.constant 0 : index
    %c0_5 = arith.constant 0 : index
    %3 = vector.load %arg3[%c0_3, %c0_4, %c0_5] : memref<9x64x128xbf16, #tpu.memory_space<vmem>>, vector<1x64x128xbf16>
    %4 = vector.shape_cast %3 : vector<1x64x128xbf16> to vector<64x128xbf16>
    %cst_6 = arith.constant dense<0.000000e+00> : vector<80x128xf32>
    %5 = tpu.matmul %2, %4, %cst_6 {dimension_numbers = #tpu.dot_dimension_numbers<[1], [0], [0], [1], [0, 0, 1, 1], [], []>} : vector<80x64xbf16>, vector<64x128xbf16>, vector<80x128xf32> -> vector<80x128xf32>
    %6 = arith.addf %0, %5 : vector<80x128xf32>
    %c0_7 = arith.constant 0 : index
    %c0_8 = arith.constant 0 : index
    %c1 = arith.constant 1 : index
    %c0_9 = arith.constant 0 : index
    %7 = vector.load %arg2[%c0_7, %c0_8, %c1, %c0_9] : memref<1x1x110x64xbf16, #tpu.memory_space<vmem>>, vector<1x1x80x64xbf16>
    %8 = vector.shape_cast %7 : vector<1x1x80x64xbf16> to vector<80x64xbf16>
    %c1_10 = arith.constant 1 : index
    %c0_11 = arith.constant 0 : index
    %c0_12 = arith.constant 0 : index
    %9 = vector.load %arg3[%c1_10, %c0_11, %c0_12] : memref<9x64x128xbf16, #tpu.memory_space<vmem>>, vector<1x64x128xbf16>
    %10 = vector.shape_cast %9 : vector<1x64x128xbf16> to vector<64x128xbf16>
    %cst_13 = arith.constant dense<0.000000e+00> : vector<80x128xf32>
    %11 = tpu.matmul %8, %10, %cst_13 {dimension_numbers = #tpu.dot_dimension_numbers<[1], [0], [0], [1], [0, 0, 1, 1], [], []>} : vector<80x64xbf16>, vector<64x128xbf16>, vector<80x128xf32> -> vector<80x128xf32>
    %12 = arith.addf %6, %11 : vector<80x128xf32>
    %c0_14 = arith.constant 0 : index
    %c0_15 = arith.constant 0 : index
    %c2 = arith.constant 2 : index
    %c0_16 = arith.constant 0 : index
    %13 = vector.load %arg2[%c0_14, %c0_15, %c2, %c0_16] : memref<1x1x110x64xbf16, #tpu.memory_space<vmem>>, vector<1x1x80x64xbf16>
    %14 = vector.shape_cast %13 : vector<1x1x80x64xbf16> to vector<80x64xbf16>
    %c2_17 = arith.constant 2 : index
    %c0_18 = arith.constant 0 : index
    %c0_19 = arith.constant 0 : index
    %15 = vector.load %arg3[%c2_17, %c0_18, %c0_19] : memref<9x64x128xbf16, #tpu.memory_space<vmem>>, vector<1x64x128xbf16>
    %16 = vector.shape_cast %15 : vector<1x64x128xbf16> to vector<64x128xbf16>
    %cst_20 = arith.constant dense<0.000000e+00> : vector<80x128xf32>
    %17 = tpu.matmul %14, %16, %cst_20 {dimension_numbers = #tpu.dot_dimension_numbers<[1], [0], [0], [1], [0, 0, 1, 1], [], []>} : vector<80x64xbf16>, vector<64x128xbf16>, vector<80x128xf32> -> vector<80x128xf32>
    %18 = arith.addf %12, %17 : vector<80x128xf32>
    %c0_21 = arith.constant 0 : index
    %c0_22 = arith.constant 0 : index
    %c10 = arith.constant 10 : index
    %c0_23 = arith.constant 0 : index
    %19 = vector.load %arg2[%c0_21, %c0_22, %c10, %c0_23] : memref<1x1x110x64xbf16, #tpu.memory_space<vmem>>, vector<1x1x80x64xbf16>
    %20 = vector.shape_cast %19 : vector<1x1x80x64xbf16> to vector<80x64xbf16>
    %c3 = arith.constant 3 : index
    %c0_24 = arith.constant 0 : index
    %c0_25 = arith.constant 0 : index
    %21 = vector.load %arg3[%c3, %c0_24, %c0_25] : memref<9x64x128xbf16, #tpu.memory_space<vmem>>, vector<1x64x128xbf16>
    %22 = vector.shape_cast %21 : vector<1x64x128xbf16> to vector<64x128xbf16>
    %cst_26 = arith.constant dense<0.000000e+00> : vector<80x128xf32>
    %23 = tpu.matmul %20, %22, %cst_26 {dimension_numbers = #tpu.dot_dimension_numbers<[1], [0], [0], [1], [0, 0, 1, 1], [], []>} : vector<80x64xbf16>, vector<64x128xbf16>, vector<80x128xf32> -> vector<80x128xf32>
    %24 = arith.addf %18, %23 : vector<80x128xf32>
    %c0_27 = arith.constant 0 : index
    %c0_28 = arith.constant 0 : index
    %c11 = arith.constant 11 : index
    %c0_29 = arith.constant 0 : index
    %25 = vector.load %arg2[%c0_27, %c0_28, %c11, %c0_29] : memref<1x1x110x64xbf16, #tpu.memory_space<vmem>>, vector<1x1x80x64xbf16>
    %26 = vector.shape_cast %25 : vector<1x1x80x64xbf16> to vector<80x64xbf16>
    %c4 = arith.constant 4 : index
    %c0_30 = arith.constant 0 : index
    %c0_31 = arith.constant 0 : index
    %27 = vector.load %arg3[%c4, %c0_30, %c0_31] : memref<9x64x128xbf16, #tpu.memory_space<vmem>>, vector<1x64x128xbf16>
    %28 = vector.shape_cast %27 : vector<1x64x128xbf16> to vector<64x128xbf16>
    %cst_32 = arith.constant dense<0.000000e+00> : vector<80x128xf32>
    %29 = tpu.matmul %26, %28, %cst_32 {dimension_numbers = #tpu.dot_dimension_numbers<[1], [0], [0], [1], [0, 0, 1, 1], [], []>} : vector<80x64xbf16>, vector<64x128xbf16>, vector<80x128xf32> -> vector<80x128xf32>
    %30 = arith.addf %24, %29 : vector<80x128xf32>
    %c0_33 = arith.constant 0 : index
    %c0_34 = arith.constant 0 : index
    %c12 = arith.constant 12 : index
    %c0_35 = arith.constant 0 : index
    %31 = vector.load %arg2[%c0_33, %c0_34, %c12, %c0_35] : memref<1x1x110x64xbf16, #tpu.memory_space<vmem>>, vector<1x1x80x64xbf16>
    %32 = vector.shape_cast %31 : vector<1x1x80x64xbf16> to vector<80x64xbf16>
    %c5 = arith.constant 5 : index
    %c0_36 = arith.constant 0 : index
    %c0_37 = arith.constant 0 : index
    %33 = vector.load %arg3[%c5, %c0_36, %c0_37] : memref<9x64x128xbf16, #tpu.memory_space<vmem>>, vector<1x64x128xbf16>
    %34 = vector.shape_cast %33 : vector<1x64x128xbf16> to vector<64x128xbf16>
    %cst_38 = arith.constant dense<0.000000e+00> : vector<80x128xf32>
    %35 = tpu.matmul %32, %34, %cst_38 {dimension_numbers = #tpu.dot_dimension_numbers<[1], [0], [0], [1], [0, 0, 1, 1], [], []>} : vector<80x64xbf16>, vector<64x128xbf16>, vector<80x128xf32> -> vector<80x128xf32>
    %36 = arith.addf %30, %35 : vector<80x128xf32>
    %c0_39 = arith.constant 0 : index
    %c0_40 = arith.constant 0 : index
    %c20 = arith.constant 20 : index
    %c0_41 = arith.constant 0 : index
    %37 = vector.load %arg2[%c0_39, %c0_40, %c20, %c0_41] : memref<1x1x110x64xbf16, #tpu.memory_space<vmem>>, vector<1x1x80x64xbf16>
    %38 = vector.shape_cast %37 : vector<1x1x80x64xbf16> to vector<80x64xbf16>
    %c6 = arith.constant 6 : index
    %c0_42 = arith.constant 0 : index
    %c0_43 = arith.constant 0 : index
    %39 = vector.load %arg3[%c6, %c0_42, %c0_43] : memref<9x64x128xbf16, #tpu.memory_space<vmem>>, vector<1x64x128xbf16>
    %40 = vector.shape_cast %39 : vector<1x64x128xbf16> to vector<64x128xbf16>
    %cst_44 = arith.constant dense<0.000000e+00> : vector<80x128xf32>
    %41 = tpu.matmul %38, %40, %cst_44 {dimension_numbers = #tpu.dot_dimension_numbers<[1], [0], [0], [1], [0, 0, 1, 1], [], []>} : vector<80x64xbf16>, vector<64x128xbf16>, vector<80x128xf32> -> vector<80x128xf32>
    %42 = arith.addf %36, %41 : vector<80x128xf32>
    %c0_45 = arith.constant 0 : index
    %c0_46 = arith.constant 0 : index
    %c21 = arith.constant 21 : index
    %c0_47 = arith.constant 0 : index
    %43 = vector.load %arg2[%c0_45, %c0_46, %c21, %c0_47] : memref<1x1x110x64xbf16, #tpu.memory_space<vmem>>, vector<1x1x80x64xbf16>
    %44 = vector.shape_cast %43 : vector<1x1x80x64xbf16> to vector<80x64xbf16>
    %c7 = arith.constant 7 : index
    %c0_48 = arith.constant 0 : index
    %c0_49 = arith.constant 0 : index
    %45 = vector.load %arg3[%c7, %c0_48, %c0_49] : memref<9x64x128xbf16, #tpu.memory_space<vmem>>, vector<1x64x128xbf16>
    %46 = vector.shape_cast %45 : vector<1x64x128xbf16> to vector<64x128xbf16>
    %cst_50 = arith.constant dense<0.000000e+00> : vector<80x128xf32>
    %47 = tpu.matmul %44, %46, %cst_50 {dimension_numbers = #tpu.dot_dimension_numbers<[1], [0], [0], [1], [0, 0, 1, 1], [], []>} : vector<80x64xbf16>, vector<64x128xbf16>, vector<80x128xf32> -> vector<80x128xf32>
    %48 = arith.addf %42, %47 : vector<80x128xf32>
    %c0_51 = arith.constant 0 : index
    %c0_52 = arith.constant 0 : index
    %c22 = arith.constant 22 : index
    %c0_53 = arith.constant 0 : index
    %49 = vector.load %arg2[%c0_51, %c0_52, %c22, %c0_53] : memref<1x1x110x64xbf16, #tpu.memory_space<vmem>>, vector<1x1x80x64xbf16>
    %50 = vector.shape_cast %49 : vector<1x1x80x64xbf16> to vector<80x64xbf16>
    %c8 = arith.constant 8 : index
    %c0_54 = arith.constant 0 : index
    %c0_55 = arith.constant 0 : index
    %51 = vector.load %arg3[%c8, %c0_54, %c0_55] : memref<9x64x128xbf16, #tpu.memory_space<vmem>>, vector<1x64x128xbf16>
    %52 = vector.shape_cast %51 : vector<1x64x128xbf16> to vector<64x128xbf16>
    %cst_56 = arith.constant dense<0.000000e+00> : vector<80x128xf32>
    %53 = tpu.matmul %50, %52, %cst_56 {dimension_numbers = #tpu.dot_dimension_numbers<[1], [0], [0], [1], [0, 0, 1, 1], [], []>} : vector<80x64xbf16>, vector<64x128xbf16>, vector<80x128xf32> -> vector<80x128xf32>
    %54 = arith.addf %48, %53 : vector<80x128xf32>
    %c0_57 = arith.constant 0 : index
    %c0_58 = arith.constant 0 : index
    %55 = vector.load %arg4[%c0_57, %c0_58] : memref<1x128xf32, #tpu.memory_space<vmem>>, vector<1x128xf32>
    %56 = vector.broadcast %55 : vector<1x128xf32> to vector<80x128xf32>
    %57 = arith.addf %54, %56 : vector<80x128xf32>
    %cst_59 = arith.constant 0.000000e+00 : f32
    %58 = vector.broadcast %cst_59 : f32 to vector<80x128xf32>
    %59 = arith.maximumf %57, %58 : vector<80x128xf32>
    %60 = arith.truncf %59 : vector<80x128xf32> to vector<80x128xbf16>
    %c0_60 = arith.constant 0 : index
    %c0_61 = arith.constant 0 : index
    %c0_62 = arith.constant 0 : index
    %c0_63 = arith.constant 0 : index
    %61 = vector.load %arg5[%c0_60, %c0_61, %c0_62, %c0_63] : memref<1x1x80x128xbf16, #tpu.memory_space<vmem>>, vector<1x1x80x128xbf16>
    %62 = vector.shape_cast %61 : vector<1x1x80x128xbf16> to vector<80x128xbf16>
    %63 = vector.shape_cast %60 : vector<80x128xbf16> to vector<1x1x80x128xbf16>
    tpu.vector_store %arg5[%c0_60, %c0_61, %c0_62, %c0_63], %63 {strides = array<i32>} : memref<1x1x80x128xbf16, #tpu.memory_space<vmem>>, vector<1x1x80x128xbf16>,
    return
  }
  func.func @transform_0(%arg0: i32, %arg1: i32) -> (i32, i32, i32, i32) {
    %c0_i32 = arith.constant 0 : i32
    %c0_i32_0 = arith.constant 0 : i32
    %c0_i32_1 = arith.constant 0 : i32
    return %arg0, %arg1, %c0_i32, %c0_i32_0 : i32, i32, i32, i32
  }
  func.func @transform_1(%arg0: i32, %arg1: i32) -> (i32, i32, i32) {
    %c0_i32 = arith.constant 0 : i32
    %c0_i32_0 = arith.constant 0 : i32
    %c0_i32_1 = arith.constant 0 : i32
    %c0_i32_2 = arith.constant 0 : i32
    return %c0_i32, %c0_i32_0, %c0_i32_1 : i32, i32, i32
  }
  func.func @transform_2(%arg0: i32, %arg1: i32) -> (i32, i32) {
    %c0_i32 = arith.constant 0 : i32
    %c0_i32_0 = arith.constant 0 : i32
    %c0_i32_1 = arith.constant 0 : i32
    return %c0_i32, %c0_i32_0 : i32, i32
  }
  func.func @transform_3(%arg0: i32, %arg1: i32) -> (i32, i32, i32, i32) {
    %c0_i32 = arith.constant 0 : i32
    %c0_i32_0 = arith.constant 0 : i32
    %c0_i32_1 = arith.constant 0 : i32
    return %arg0, %arg1, %c0_i32, %c0_i32_0 : i32, i32, i32, i32
  }
}

module attributes {stable_mosaic.version = 11 : i64} {
  func.func @_conv3x3_kernel(%arg0: i32, %arg1: i32, %arg2: memref<1x1x120x128xbf16, #tpu.memory_space<vmem>>, %arg3: memref<9x128x128xbf16, #tpu.memory_space<vmem>>, %arg4: memref<1x128xf32, #tpu.memory_space<vmem>>, %arg5: memref<1x1x80x128xbf16, #tpu.memory_space<vmem>>) attributes {dimension_semantics = [#tpu.dimension_semantics<parallel>, #tpu.dimension_semantics<parallel>], iteration_bounds = array<i64: 2, 1>, scalar_prefetch = 0 : i64, scratch_operands = 0 : i64, tpu.core_type = #tpu.core_type<tc>, window_params = [{transform_indices = @transform_0, window_bounds = array<i64: 1, 1, 120, 128>}, {pipeline_mode = #tpu.pipeline_mode<synchronous>, transform_indices = @transform_1, window_bounds = array<i64: 9, 128, 128>}, {pipeline_mode = #tpu.pipeline_mode<synchronous>, transform_indices = @transform_2, window_bounds = array<i64: 1, 128>}, {transform_indices = @transform_3, window_bounds = array<i64: 1, 1, 80, 128>}]} {
    %cst = arith.constant 0.000000e+00 : f32
    %0 = vector.broadcast %cst : f32 to vector<91x128xf32>
    %c0 = arith.constant 0 : index
    %c0_0 = arith.constant 0 : index
    %c0_1 = arith.constant 0 : index
    %c0_2 = arith.constant 0 : index
    %1 = vector.load %arg2[%c0, %c0_0, %c0_1, %c0_2] : memref<1x1x120x128xbf16, #tpu.memory_space<vmem>>, vector<1x1x91x128xbf16>
    %2 = vector.shape_cast %1 : vector<1x1x91x128xbf16> to vector<91x128xbf16>
    %c0_3 = arith.constant 0 : index
    %c0_4 = arith.constant 0 : index
    %c0_5 = arith.constant 0 : index
    %3 = vector.load %arg3[%c0_3, %c0_4, %c0_5] : memref<9x128x128xbf16, #tpu.memory_space<vmem>>, vector<1x128x128xbf16>
    %4 = vector.shape_cast %3 : vector<1x128x128xbf16> to vector<128x128xbf16>
    %cst_6 = arith.constant dense<0.000000e+00> : vector<91x128xf32>
    %5 = tpu.matmul %2, %4, %cst_6 {dimension_numbers = #tpu.dot_dimension_numbers<[1], [0], [0], [1], [0, 0, 1, 1], [], []>} : vector<91x128xbf16>, vector<128x128xbf16>, vector<91x128xf32> -> vector<91x128xf32>
    %6 = arith.addf %0, %5 : vector<91x128xf32>
    %c0_7 = arith.constant 0 : index
    %c0_8 = arith.constant 0 : index
    %c1 = arith.constant 1 : index
    %c0_9 = arith.constant 0 : index
    %7 = vector.load %arg2[%c0_7, %c0_8, %c1, %c0_9] : memref<1x1x120x128xbf16, #tpu.memory_space<vmem>>, vector<1x1x91x128xbf16>
    %8 = vector.shape_cast %7 : vector<1x1x91x128xbf16> to vector<91x128xbf16>
    %c1_10 = arith.constant 1 : index
    %c0_11 = arith.constant 0 : index
    %c0_12 = arith.constant 0 : index
    %9 = vector.load %arg3[%c1_10, %c0_11, %c0_12] : memref<9x128x128xbf16, #tpu.memory_space<vmem>>, vector<1x128x128xbf16>
    %10 = vector.shape_cast %9 : vector<1x128x128xbf16> to vector<128x128xbf16>
    %cst_13 = arith.constant dense<0.000000e+00> : vector<91x128xf32>
    %11 = tpu.matmul %8, %10, %cst_13 {dimension_numbers = #tpu.dot_dimension_numbers<[1], [0], [0], [1], [0, 0, 1, 1], [], []>} : vector<91x128xbf16>, vector<128x128xbf16>, vector<91x128xf32> -> vector<91x128xf32>
    %12 = arith.addf %6, %11 : vector<91x128xf32>
    %c0_14 = arith.constant 0 : index
    %c0_15 = arith.constant 0 : index
    %c2 = arith.constant 2 : index
    %c0_16 = arith.constant 0 : index
    %13 = vector.load %arg2[%c0_14, %c0_15, %c2, %c0_16] : memref<1x1x120x128xbf16, #tpu.memory_space<vmem>>, vector<1x1x91x128xbf16>
    %14 = vector.shape_cast %13 : vector<1x1x91x128xbf16> to vector<91x128xbf16>
    %c2_17 = arith.constant 2 : index
    %c0_18 = arith.constant 0 : index
    %c0_19 = arith.constant 0 : index
    %15 = vector.load %arg3[%c2_17, %c0_18, %c0_19] : memref<9x128x128xbf16, #tpu.memory_space<vmem>>, vector<1x128x128xbf16>
    %16 = vector.shape_cast %15 : vector<1x128x128xbf16> to vector<128x128xbf16>
    %cst_20 = arith.constant dense<0.000000e+00> : vector<91x128xf32>
    %17 = tpu.matmul %14, %16, %cst_20 {dimension_numbers = #tpu.dot_dimension_numbers<[1], [0], [0], [1], [0, 0, 1, 1], [], []>} : vector<91x128xbf16>, vector<128x128xbf16>, vector<91x128xf32> -> vector<91x128xf32>
    %18 = arith.addf %12, %17 : vector<91x128xf32>
    %c0_21 = arith.constant 0 : index
    %c0_22 = arith.constant 0 : index
    %c10 = arith.constant 10 : index
    %c0_23 = arith.constant 0 : index
    %19 = vector.load %arg2[%c0_21, %c0_22, %c10, %c0_23] : memref<1x1x120x128xbf16, #tpu.memory_space<vmem>>, vector<1x1x91x128xbf16>
    %20 = vector.shape_cast %19 : vector<1x1x91x128xbf16> to vector<91x128xbf16>
    %c3 = arith.constant 3 : index
    %c0_24 = arith.constant 0 : index
    %c0_25 = arith.constant 0 : index
    %21 = vector.load %arg3[%c3, %c0_24, %c0_25] : memref<9x128x128xbf16, #tpu.memory_space<vmem>>, vector<1x128x128xbf16>
    %22 = vector.shape_cast %21 : vector<1x128x128xbf16> to vector<128x128xbf16>
    %cst_26 = arith.constant dense<0.000000e+00> : vector<91x128xf32>
    %23 = tpu.matmul %20, %22, %cst_26 {dimension_numbers = #tpu.dot_dimension_numbers<[1], [0], [0], [1], [0, 0, 1, 1], [], []>} : vector<91x128xbf16>, vector<128x128xbf16>, vector<91x128xf32> -> vector<91x128xf32>
    %24 = arith.addf %18, %23 : vector<91x128xf32>
    %c0_27 = arith.constant 0 : index
    %c0_28 = arith.constant 0 : index
    %c11 = arith.constant 11 : index
    %c0_29 = arith.constant 0 : index
    %25 = vector.load %arg2[%c0_27, %c0_28, %c11, %c0_29] : memref<1x1x120x128xbf16, #tpu.memory_space<vmem>>, vector<1x1x91x128xbf16>
    %26 = vector.shape_cast %25 : vector<1x1x91x128xbf16> to vector<91x128xbf16>
    %c4 = arith.constant 4 : index
    %c0_30 = arith.constant 0 : index
    %c0_31 = arith.constant 0 : index
    %27 = vector.load %arg3[%c4, %c0_30, %c0_31] : memref<9x128x128xbf16, #tpu.memory_space<vmem>>, vector<1x128x128xbf16>
    %28 = vector.shape_cast %27 : vector<1x128x128xbf16> to vector<128x128xbf16>
    %cst_32 = arith.constant dense<0.000000e+00> : vector<91x128xf32>
    %29 = tpu.matmul %26, %28, %cst_32 {dimension_numbers = #tpu.dot_dimension_numbers<[1], [0], [0], [1], [0, 0, 1, 1], [], []>} : vector<91x128xbf16>, vector<128x128xbf16>, vector<91x128xf32> -> vector<91x128xf32>
    %30 = arith.addf %24, %29 : vector<91x128xf32>
    %c0_33 = arith.constant 0 : index
    %c0_34 = arith.constant 0 : index
    %c12 = arith.constant 12 : index
    %c0_35 = arith.constant 0 : index
    %31 = vector.load %arg2[%c0_33, %c0_34, %c12, %c0_35] : memref<1x1x120x128xbf16, #tpu.memory_space<vmem>>, vector<1x1x91x128xbf16>
    %32 = vector.shape_cast %31 : vector<1x1x91x128xbf16> to vector<91x128xbf16>
    %c5 = arith.constant 5 : index
    %c0_36 = arith.constant 0 : index
    %c0_37 = arith.constant 0 : index
    %33 = vector.load %arg3[%c5, %c0_36, %c0_37] : memref<9x128x128xbf16, #tpu.memory_space<vmem>>, vector<1x128x128xbf16>
    %34 = vector.shape_cast %33 : vector<1x128x128xbf16> to vector<128x128xbf16>
    %cst_38 = arith.constant dense<0.000000e+00> : vector<91x128xf32>
    %35 = tpu.matmul %32, %34, %cst_38 {dimension_numbers = #tpu.dot_dimension_numbers<[1], [0], [0], [1], [0, 0, 1, 1], [], []>} : vector<91x128xbf16>, vector<128x128xbf16>, vector<91x128xf32> -> vector<91x128xf32>
    %36 = arith.addf %30, %35 : vector<91x128xf32>
    %c0_39 = arith.constant 0 : index
    %c0_40 = arith.constant 0 : index
    %c20 = arith.constant 20 : index
    %c0_41 = arith.constant 0 : index
    %37 = vector.load %arg2[%c0_39, %c0_40, %c20, %c0_41] : memref<1x1x120x128xbf16, #tpu.memory_space<vmem>>, vector<1x1x91x128xbf16>
    %38 = vector.shape_cast %37 : vector<1x1x91x128xbf16> to vector<91x128xbf16>
    %c6 = arith.constant 6 : index
    %c0_42 = arith.constant 0 : index
    %c0_43 = arith.constant 0 : index
    %39 = vector.load %arg3[%c6, %c0_42, %c0_43] : memref<9x128x128xbf16, #tpu.memory_space<vmem>>, vector<1x128x128xbf16>
    %40 = vector.shape_cast %39 : vector<1x128x128xbf16> to vector<128x128xbf16>
    %cst_44 = arith.constant dense<0.000000e+00> : vector<91x128xf32>
    %41 = tpu.matmul %38, %40, %cst_44 {dimension_numbers = #tpu.dot_dimension_numbers<[1], [0], [0], [1], [0, 0, 1, 1], [], []>} : vector<91x128xbf16>, vector<128x128xbf16>, vector<91x128xf32> -> vector<91x128xf32>
    %42 = arith.addf %36, %41 : vector<91x128xf32>
    %c0_45 = arith.constant 0 : index
    %c0_46 = arith.constant 0 : index
    %c21 = arith.constant 21 : index
    %c0_47 = arith.constant 0 : index
    %43 = vector.load %arg2[%c0_45, %c0_46, %c21, %c0_47] : memref<1x1x120x128xbf16, #tpu.memory_space<vmem>>, vector<1x1x91x128xbf16>
    %44 = vector.shape_cast %43 : vector<1x1x91x128xbf16> to vector<91x128xbf16>
    %c7 = arith.constant 7 : index
    %c0_48 = arith.constant 0 : index
    %c0_49 = arith.constant 0 : index
    %45 = vector.load %arg3[%c7, %c0_48, %c0_49] : memref<9x128x128xbf16, #tpu.memory_space<vmem>>, vector<1x128x128xbf16>
    %46 = vector.shape_cast %45 : vector<1x128x128xbf16> to vector<128x128xbf16>
    %cst_50 = arith.constant dense<0.000000e+00> : vector<91x128xf32>
    %47 = tpu.matmul %44, %46, %cst_50 {dimension_numbers = #tpu.dot_dimension_numbers<[1], [0], [0], [1], [0, 0, 1, 1], [], []>} : vector<91x128xbf16>, vector<128x128xbf16>, vector<91x128xf32> -> vector<91x128xf32>
    %48 = arith.addf %42, %47 : vector<91x128xf32>
    %c0_51 = arith.constant 0 : index
    %c0_52 = arith.constant 0 : index
    %c22 = arith.constant 22 : index
    %c0_53 = arith.constant 0 : index
    %49 = vector.load %arg2[%c0_51, %c0_52, %c22, %c0_53] : memref<1x1x120x128xbf16, #tpu.memory_space<vmem>>, vector<1x1x91x128xbf16>
    %50 = vector.shape_cast %49 : vector<1x1x91x128xbf16> to vector<91x128xbf16>
    %c8 = arith.constant 8 : index
    %c0_54 = arith.constant 0 : index
    %c0_55 = arith.constant 0 : index
    %51 = vector.load %arg3[%c8, %c0_54, %c0_55] : memref<9x128x128xbf16, #tpu.memory_space<vmem>>, vector<1x128x128xbf16>
    %52 = vector.shape_cast %51 : vector<1x128x128xbf16> to vector<128x128xbf16>
    %cst_56 = arith.constant dense<0.000000e+00> : vector<91x128xf32>
    %53 = tpu.matmul %50, %52, %cst_56 {dimension_numbers = #tpu.dot_dimension_numbers<[1], [0], [0], [1], [0, 0, 1, 1], [], []>} : vector<91x128xbf16>, vector<128x128xbf16>, vector<91x128xf32> -> vector<91x128xf32>
    %54 = arith.addf %48, %53 : vector<91x128xf32>
    %c0_57 = arith.constant 0 : index
    %c0_58 = arith.constant 0 : index
    %55 = vector.load %arg4[%c0_57, %c0_58] : memref<1x128xf32, #tpu.memory_space<vmem>>, vector<1x128xf32>
    %56 = vector.broadcast %55 : vector<1x128xf32> to vector<91x128xf32>
    %57 = arith.addf %54, %56 : vector<91x128xf32>
    %cst_59 = arith.constant 0.000000e+00 : f32
    %58 = vector.broadcast %cst_59 : f32 to vector<91x128xf32>
    %59 = arith.maximumf %57, %58 : vector<91x128xf32>
    %60 = vector.extract_strided_slice %59 {offsets = [0, 0], sizes = [80, 128], strides = [1, 1]} : vector<91x128xf32> to vector<80x128xf32>
    %61 = vector.extract_strided_slice %59 {offsets = [1, 0], sizes = [80, 128], strides = [1, 1]} : vector<91x128xf32> to vector<80x128xf32>
    %62 = arith.maximumf %60, %61 : vector<80x128xf32>
    %63 = vector.extract_strided_slice %59 {offsets = [10, 0], sizes = [80, 128], strides = [1, 1]} : vector<91x128xf32> to vector<80x128xf32>
    %64 = vector.extract_strided_slice %59 {offsets = [11, 0], sizes = [80, 128], strides = [1, 1]} : vector<91x128xf32> to vector<80x128xf32>
    %65 = arith.maximumf %63, %64 : vector<80x128xf32>
    %66 = arith.maximumf %62, %65 : vector<80x128xf32>
    %67 = arith.truncf %66 : vector<80x128xf32> to vector<80x128xbf16>
    %c0_60 = arith.constant 0 : index
    %c0_61 = arith.constant 0 : index
    %c0_62 = arith.constant 0 : index
    %c0_63 = arith.constant 0 : index
    %68 = vector.load %arg5[%c0_60, %c0_61, %c0_62, %c0_63] : memref<1x1x80x128xbf16, #tpu.memory_space<vmem>>, vector<1x1x80x128xbf16>
    %69 = vector.shape_cast %68 : vector<1x1x80x128xbf16> to vector<80x128xbf16>
    %70 = vector.shape_cast %67 : vector<80x128xbf16> to vector<1x1x80x128xbf16>
    tpu.vector_store %arg5[%c0_60, %c0_61, %c0_62, %c0_63], %70 {strides = array<i32>} : memref<1x1x80x128xbf16, #tpu.memory_space<vmem>>, vector<1x1x80x128xbf16>,
    return
  }
  func.func @transform_0(%arg0: i32, %arg1: i32) -> (i32, i32, i32, i32) {
    %c0_i32 = arith.constant 0 : i32
    %c0_i32_0 = arith.constant 0 : i32
    %c0_i32_1 = arith.constant 0 : i32
    return %arg0, %arg1, %c0_i32, %c0_i32_0 : i32, i32, i32, i32
  }
  func.func @transform_1(%arg0: i32, %arg1: i32) -> (i32, i32, i32) {
    %c0_i32 = arith.constant 0 : i32
    %c0_i32_0 = arith.constant 0 : i32
    %c0_i32_1 = arith.constant 0 : i32
    %c0_i32_2 = arith.constant 0 : i32
    return %c0_i32, %c0_i32_0, %c0_i32_1 : i32, i32, i32
  }
  func.func @transform_2(%arg0: i32, %arg1: i32) -> (i32, i32) {
    %c0_i32 = arith.constant 0 : i32
    %c0_i32_0 = arith.constant 0 : i32
    %c0_i32_1 = arith.constant 0 : i32
    return %c0_i32, %c0_i32_0 : i32, i32
  }
  func.func @transform_3(%arg0: i32, %arg1: i32) -> (i32, i32, i32, i32) {
    %c0_i32 = arith.constant 0 : i32
    %c0_i32_0 = arith.constant 0 : i32
    %c0_i32_1 = arith.constant 0 : i32
    return %arg0, %arg1, %c0_i32, %c0_i32_0 : i32, i32, i32, i32
  }
}

module attributes {stable_mosaic.version = 11 : i64} {
  func.func @_conv3x3_kernel(%arg0: i32, %arg1: i32, %arg2: memref<1x1x42x128xbf16, #tpu.memory_space<vmem>>, %arg3: memref<9x128x256xbf16, #tpu.memory_space<vmem>>, %arg4: memref<1x256xf32, #tpu.memory_space<vmem>>, %arg5: memref<1x1x24x256xf32, #tpu.memory_space<vmem>>) attributes {dimension_semantics = [#tpu.dimension_semantics<parallel>, #tpu.dimension_semantics<parallel>], iteration_bounds = array<i64: 2, 1>, scalar_prefetch = 0 : i64, scratch_operands = 0 : i64, tpu.core_type = #tpu.core_type<tc>, window_params = [{transform_indices = @transform_0, window_bounds = array<i64: 1, 1, 42, 128>}, {pipeline_mode = #tpu.pipeline_mode<synchronous>, transform_indices = @transform_1, window_bounds = array<i64: 9, 128, 256>}, {pipeline_mode = #tpu.pipeline_mode<synchronous>, transform_indices = @transform_2, window_bounds = array<i64: 1, 256>}, {transform_indices = @transform_3, window_bounds = array<i64: 1, 1, 24, 256>}]} {
    %cst = arith.constant 0.000000e+00 : f32
    %0 = vector.broadcast %cst : f32 to vector<24x256xf32>
    %c0 = arith.constant 0 : index
    %c0_0 = arith.constant 0 : index
    %c0_1 = arith.constant 0 : index
    %c0_2 = arith.constant 0 : index
    %1 = vector.load %arg2[%c0, %c0_0, %c0_1, %c0_2] : memref<1x1x42x128xbf16, #tpu.memory_space<vmem>>, vector<1x1x24x128xbf16>
    %2 = vector.shape_cast %1 : vector<1x1x24x128xbf16> to vector<24x128xbf16>
    %c0_3 = arith.constant 0 : index
    %c0_4 = arith.constant 0 : index
    %c0_5 = arith.constant 0 : index
    %3 = vector.load %arg3[%c0_3, %c0_4, %c0_5] : memref<9x128x256xbf16, #tpu.memory_space<vmem>>, vector<1x128x256xbf16>
    %4 = vector.shape_cast %3 : vector<1x128x256xbf16> to vector<128x256xbf16>
    %cst_6 = arith.constant dense<0.000000e+00> : vector<24x256xf32>
    %5 = tpu.matmul %2, %4, %cst_6 {dimension_numbers = #tpu.dot_dimension_numbers<[1], [0], [0], [1], [0, 0, 1, 1], [], []>} : vector<24x128xbf16>, vector<128x256xbf16>, vector<24x256xf32> -> vector<24x256xf32>
    %6 = arith.addf %0, %5 : vector<24x256xf32>
    %c0_7 = arith.constant 0 : index
    %c0_8 = arith.constant 0 : index
    %c1 = arith.constant 1 : index
    %c0_9 = arith.constant 0 : index
    %7 = vector.load %arg2[%c0_7, %c0_8, %c1, %c0_9] : memref<1x1x42x128xbf16, #tpu.memory_space<vmem>>, vector<1x1x24x128xbf16>
    %8 = vector.shape_cast %7 : vector<1x1x24x128xbf16> to vector<24x128xbf16>
    %c1_10 = arith.constant 1 : index
    %c0_11 = arith.constant 0 : index
    %c0_12 = arith.constant 0 : index
    %9 = vector.load %arg3[%c1_10, %c0_11, %c0_12] : memref<9x128x256xbf16, #tpu.memory_space<vmem>>, vector<1x128x256xbf16>
    %10 = vector.shape_cast %9 : vector<1x128x256xbf16> to vector<128x256xbf16>
    %cst_13 = arith.constant dense<0.000000e+00> : vector<24x256xf32>
    %11 = tpu.matmul %8, %10, %cst_13 {dimension_numbers = #tpu.dot_dimension_numbers<[1], [0], [0], [1], [0, 0, 1, 1], [], []>} : vector<24x128xbf16>, vector<128x256xbf16>, vector<24x256xf32> -> vector<24x256xf32>
    %12 = arith.addf %6, %11 : vector<24x256xf32>
    %c0_14 = arith.constant 0 : index
    %c0_15 = arith.constant 0 : index
    %c2 = arith.constant 2 : index
    %c0_16 = arith.constant 0 : index
    %13 = vector.load %arg2[%c0_14, %c0_15, %c2, %c0_16] : memref<1x1x42x128xbf16, #tpu.memory_space<vmem>>, vector<1x1x24x128xbf16>
    %14 = vector.shape_cast %13 : vector<1x1x24x128xbf16> to vector<24x128xbf16>
    %c2_17 = arith.constant 2 : index
    %c0_18 = arith.constant 0 : index
    %c0_19 = arith.constant 0 : index
    %15 = vector.load %arg3[%c2_17, %c0_18, %c0_19] : memref<9x128x256xbf16, #tpu.memory_space<vmem>>, vector<1x128x256xbf16>
    %16 = vector.shape_cast %15 : vector<1x128x256xbf16> to vector<128x256xbf16>
    %cst_20 = arith.constant dense<0.000000e+00> : vector<24x256xf32>
    %17 = tpu.matmul %14, %16, %cst_20 {dimension_numbers = #tpu.dot_dimension_numbers<[1], [0], [0], [1], [0, 0, 1, 1], [], []>} : vector<24x128xbf16>, vector<128x256xbf16>, vector<24x256xf32> -> vector<24x256xf32>
    %18 = arith.addf %12, %17 : vector<24x256xf32>
    %c0_21 = arith.constant 0 : index
    %c0_22 = arith.constant 0 : index
    %c6 = arith.constant 6 : index
    %c0_23 = arith.constant 0 : index
    %19 = vector.load %arg2[%c0_21, %c0_22, %c6, %c0_23] : memref<1x1x42x128xbf16, #tpu.memory_space<vmem>>, vector<1x1x24x128xbf16>
    %20 = vector.shape_cast %19 : vector<1x1x24x128xbf16> to vector<24x128xbf16>
    %c3 = arith.constant 3 : index
    %c0_24 = arith.constant 0 : index
    %c0_25 = arith.constant 0 : index
    %21 = vector.load %arg3[%c3, %c0_24, %c0_25] : memref<9x128x256xbf16, #tpu.memory_space<vmem>>, vector<1x128x256xbf16>
    %22 = vector.shape_cast %21 : vector<1x128x256xbf16> to vector<128x256xbf16>
    %cst_26 = arith.constant dense<0.000000e+00> : vector<24x256xf32>
    %23 = tpu.matmul %20, %22, %cst_26 {dimension_numbers = #tpu.dot_dimension_numbers<[1], [0], [0], [1], [0, 0, 1, 1], [], []>} : vector<24x128xbf16>, vector<128x256xbf16>, vector<24x256xf32> -> vector<24x256xf32>
    %24 = arith.addf %18, %23 : vector<24x256xf32>
    %c0_27 = arith.constant 0 : index
    %c0_28 = arith.constant 0 : index
    %c7 = arith.constant 7 : index
    %c0_29 = arith.constant 0 : index
    %25 = vector.load %arg2[%c0_27, %c0_28, %c7, %c0_29] : memref<1x1x42x128xbf16, #tpu.memory_space<vmem>>, vector<1x1x24x128xbf16>
    %26 = vector.shape_cast %25 : vector<1x1x24x128xbf16> to vector<24x128xbf16>
    %c4 = arith.constant 4 : index
    %c0_30 = arith.constant 0 : index
    %c0_31 = arith.constant 0 : index
    %27 = vector.load %arg3[%c4, %c0_30, %c0_31] : memref<9x128x256xbf16, #tpu.memory_space<vmem>>, vector<1x128x256xbf16>
    %28 = vector.shape_cast %27 : vector<1x128x256xbf16> to vector<128x256xbf16>
    %cst_32 = arith.constant dense<0.000000e+00> : vector<24x256xf32>
    %29 = tpu.matmul %26, %28, %cst_32 {dimension_numbers = #tpu.dot_dimension_numbers<[1], [0], [0], [1], [0, 0, 1, 1], [], []>} : vector<24x128xbf16>, vector<128x256xbf16>, vector<24x256xf32> -> vector<24x256xf32>
    %30 = arith.addf %24, %29 : vector<24x256xf32>
    %c0_33 = arith.constant 0 : index
    %c0_34 = arith.constant 0 : index
    %c8 = arith.constant 8 : index
    %c0_35 = arith.constant 0 : index
    %31 = vector.load %arg2[%c0_33, %c0_34, %c8, %c0_35] : memref<1x1x42x128xbf16, #tpu.memory_space<vmem>>, vector<1x1x24x128xbf16>
    %32 = vector.shape_cast %31 : vector<1x1x24x128xbf16> to vector<24x128xbf16>
    %c5 = arith.constant 5 : index
    %c0_36 = arith.constant 0 : index
    %c0_37 = arith.constant 0 : index
    %33 = vector.load %arg3[%c5, %c0_36, %c0_37] : memref<9x128x256xbf16, #tpu.memory_space<vmem>>, vector<1x128x256xbf16>
    %34 = vector.shape_cast %33 : vector<1x128x256xbf16> to vector<128x256xbf16>
    %cst_38 = arith.constant dense<0.000000e+00> : vector<24x256xf32>
    %35 = tpu.matmul %32, %34, %cst_38 {dimension_numbers = #tpu.dot_dimension_numbers<[1], [0], [0], [1], [0, 0, 1, 1], [], []>} : vector<24x128xbf16>, vector<128x256xbf16>, vector<24x256xf32> -> vector<24x256xf32>
    %36 = arith.addf %30, %35 : vector<24x256xf32>
    %c0_39 = arith.constant 0 : index
    %c0_40 = arith.constant 0 : index
    %c12 = arith.constant 12 : index
    %c0_41 = arith.constant 0 : index
    %37 = vector.load %arg2[%c0_39, %c0_40, %c12, %c0_41] : memref<1x1x42x128xbf16, #tpu.memory_space<vmem>>, vector<1x1x24x128xbf16>
    %38 = vector.shape_cast %37 : vector<1x1x24x128xbf16> to vector<24x128xbf16>
    %c6_42 = arith.constant 6 : index
    %c0_43 = arith.constant 0 : index
    %c0_44 = arith.constant 0 : index
    %39 = vector.load %arg3[%c6_42, %c0_43, %c0_44] : memref<9x128x256xbf16, #tpu.memory_space<vmem>>, vector<1x128x256xbf16>
    %40 = vector.shape_cast %39 : vector<1x128x256xbf16> to vector<128x256xbf16>
    %cst_45 = arith.constant dense<0.000000e+00> : vector<24x256xf32>
    %41 = tpu.matmul %38, %40, %cst_45 {dimension_numbers = #tpu.dot_dimension_numbers<[1], [0], [0], [1], [0, 0, 1, 1], [], []>} : vector<24x128xbf16>, vector<128x256xbf16>, vector<24x256xf32> -> vector<24x256xf32>
    %42 = arith.addf %36, %41 : vector<24x256xf32>
    %c0_46 = arith.constant 0 : index
    %c0_47 = arith.constant 0 : index
    %c13 = arith.constant 13 : index
    %c0_48 = arith.constant 0 : index
    %43 = vector.load %arg2[%c0_46, %c0_47, %c13, %c0_48] : memref<1x1x42x128xbf16, #tpu.memory_space<vmem>>, vector<1x1x24x128xbf16>
    %44 = vector.shape_cast %43 : vector<1x1x24x128xbf16> to vector<24x128xbf16>
    %c7_49 = arith.constant 7 : index
    %c0_50 = arith.constant 0 : index
    %c0_51 = arith.constant 0 : index
    %45 = vector.load %arg3[%c7_49, %c0_50, %c0_51] : memref<9x128x256xbf16, #tpu.memory_space<vmem>>, vector<1x128x256xbf16>
    %46 = vector.shape_cast %45 : vector<1x128x256xbf16> to vector<128x256xbf16>
    %cst_52 = arith.constant dense<0.000000e+00> : vector<24x256xf32>
    %47 = tpu.matmul %44, %46, %cst_52 {dimension_numbers = #tpu.dot_dimension_numbers<[1], [0], [0], [1], [0, 0, 1, 1], [], []>} : vector<24x128xbf16>, vector<128x256xbf16>, vector<24x256xf32> -> vector<24x256xf32>
    %48 = arith.addf %42, %47 : vector<24x256xf32>
    %c0_53 = arith.constant 0 : index
    %c0_54 = arith.constant 0 : index
    %c14 = arith.constant 14 : index
    %c0_55 = arith.constant 0 : index
    %49 = vector.load %arg2[%c0_53, %c0_54, %c14, %c0_55] : memref<1x1x42x128xbf16, #tpu.memory_space<vmem>>, vector<1x1x24x128xbf16>
    %50 = vector.shape_cast %49 : vector<1x1x24x128xbf16> to vector<24x128xbf16>
    %c8_56 = arith.constant 8 : index
    %c0_57 = arith.constant 0 : index
    %c0_58 = arith.constant 0 : index
    %51 = vector.load %arg3[%c8_56, %c0_57, %c0_58] : memref<9x128x256xbf16, #tpu.memory_space<vmem>>, vector<1x128x256xbf16>
    %52 = vector.shape_cast %51 : vector<1x128x256xbf16> to vector<128x256xbf16>
    %cst_59 = arith.constant dense<0.000000e+00> : vector<24x256xf32>
    %53 = tpu.matmul %50, %52, %cst_59 {dimension_numbers = #tpu.dot_dimension_numbers<[1], [0], [0], [1], [0, 0, 1, 1], [], []>} : vector<24x128xbf16>, vector<128x256xbf16>, vector<24x256xf32> -> vector<24x256xf32>
    %54 = arith.addf %48, %53 : vector<24x256xf32>
    %c0_60 = arith.constant 0 : index
    %c0_61 = arith.constant 0 : index
    %55 = vector.load %arg4[%c0_60, %c0_61] : memref<1x256xf32, #tpu.memory_space<vmem>>, vector<1x256xf32>
    %56 = vector.broadcast %55 : vector<1x256xf32> to vector<24x256xf32>
    %57 = arith.addf %54, %56 : vector<24x256xf32>
    %cst_62 = arith.constant 0.000000e+00 : f32
    %58 = vector.broadcast %cst_62 : f32 to vector<24x256xf32>
    %59 = arith.maximumf %57, %58 : vector<24x256xf32>
    %c0_63 = arith.constant 0 : index
    %c0_64 = arith.constant 0 : index
    %c0_65 = arith.constant 0 : index
    %c0_66 = arith.constant 0 : index
    %60 = vector.load %arg5[%c0_63, %c0_64, %c0_65, %c0_66] : memref<1x1x24x256xf32, #tpu.memory_space<vmem>>, vector<1x1x24x256xf32>
    %61 = vector.shape_cast %60 : vector<1x1x24x256xf32> to vector<24x256xf32>
    %62 = vector.shape_cast %59 : vector<24x256xf32> to vector<1x1x24x256xf32>
    tpu.vector_store %arg5[%c0_63, %c0_64, %c0_65, %c0_66], %62 {strides = array<i32>} : memref<1x1x24x256xf32, #tpu.memory_space<vmem>>, vector<1x1x24x256xf32>,
    return
  }
  func.func @transform_0(%arg0: i32, %arg1: i32) -> (i32, i32, i32, i32) {
    %c0_i32 = arith.constant 0 : i32
    %c0_i32_0 = arith.constant 0 : i32
    %c0_i32_1 = arith.constant 0 : i32
    return %arg0, %arg1, %c0_i32, %c0_i32_0 : i32, i32, i32, i32
  }
  func.func @transform_1(%arg0: i32, %arg1: i32) -> (i32, i32, i32) {
    %c0_i32 = arith.constant 0 : i32
    %c0_i32_0 = arith.constant 0 : i32
    %c0_i32_1 = arith.constant 0 : i32
    %c0_i32_2 = arith.constant 0 : i32
    return %c0_i32, %c0_i32_0, %c0_i32_1 : i32, i32, i32
  }
  func.func @transform_2(%arg0: i32, %arg1: i32) -> (i32, i32) {
    %c0_i32 = arith.constant 0 : i32
    %c0_i32_0 = arith.constant 0 : i32
    %c0_i32_1 = arith.constant 0 : i32
    return %c0_i32, %c0_i32_0 : i32, i32
  }
  func.func @transform_3(%arg0: i32, %arg1: i32) -> (i32, i32, i32, i32) {
    %c0_i32 = arith.constant 0 : i32
    %c0_i32_0 = arith.constant 0 : i32
    %c0_i32_1 = arith.constant 0 : i32
    return %arg0, %arg1, %c0_i32, %c0_i32_0 : i32, i32, i32, i32
  }
}

</mosaic_0001>

<llo_original>
// kernel: encoder3_forward_pallas.5
$region0: #{encoder3_forward_pallas.5}
  #allocation0 [shape = 'u32[]', space=smem, size = 0x4, offset = 0x4, fixed_abs, tag = 'smem constant byte address 0x4 - core index']
  #allocation1 [shape = 'u32[144,128]{1,0:T(1,128)}', space=vmem, size = 0x12000, scoped, tag = 'internal scratch']
  %s0 = inlined_call_operand.vmem [shape: bf16[2,256,27], index: 0, kind: input, shape index: {}]
  %s1 = inlined_call_operand.vmem [shape: bf16[27,64], index: 1, kind: input, shape index: {}]
  %s2 = inlined_call_operand.vmem [shape: f32[1,64], index: 2, kind: input, shape index: {}]
  %s3 = inlined_call_operand.vmem [shape: bf16[2,256,64], index: 3, kind: output, shape index: {}]
  %s4 = sld [smem:[#allocation0]]
  $region45: #{encoder3_forward_pallas.5} parent=0
    _
  %s6 = ssub.s32 1, %s4
  %s7 = scalar_select 0, %s6, %s4
  loop: start=0, step=1, limit=4
  $region2: #{encoder3_forward_pallas.5} parent=0 // loop_pre_header
    _
  $region3: #{encoder3_forward_pallas.5} parent=0 // loop_header
    %s9 = sphi 0, %s13
    %p10 = scmp.ge.s32.totalorder %s9, 4
    %s16 = sphi 0, %s28
    %s17 = sphi 0, %s24
    %s18 = sphi 0, %s16
    %s19 = sphi 0, %s17
    %s20 = sphi 0, %s18
    %s21 = sphi 0, %s19
    %s33 = sphi 0, %s35
    %s36 = sphi 0, %s33
    %s37 = sphi 0, %s36
    %s53 = sphi 0, %s37
    %s57 = sphi 0, %s57
    %s59 = sphi 0, %s57
    %s60 = sphi 0, %s59
    %s74 = sphi 0, %s60
    %s78 = sphi 0, %s78
    %s80 = sphi 0, %s78
    %s81 = sphi 0, %s80
    %s95 = sphi 0, %s81
    %s103 = sphi 0, %s105
    %s106 = sphi 0, %s103
    %s107 = sphi 0, %s106
    %s123 = sphi 0, %s107
  $region4: #{encoder3_forward_pallas.5} parent=0 // loop_header_branch
    %12 = sbr.rel (%p10) target = $region8
  $region5: #{encoder3_forward_pallas.5} parent=0 // loop_body
    %s14 = ssub.s32 %s9, 1
    %s15 = ssub.s32 %s9, 2
    %s22 = sadd.s32 1, %s17
    %p23 = scmp.ge.s32.totalorder %s22, 1
    %s24 = scalar_select %p23, 0, %s22
    %s25 = sadd.s32 1, %s16
    %s26 = scalar_select %p23, %s25, %s16
    %p27 = scmp.ge.s32.totalorder %s26, 2
    %s28 = scalar_select %p27, 0, %s26
    %s29 = ssub.s32 %s16, %s28
    %s30 = ssub.s32 %s17, %s24
    %s31 = sor.u32 %s29, %s30
    %p32 = scmp.eq.s32.totalorder %s31, 0
    %s34 = sadd.s32 %s33, 1
    %s35 = scalar_select %p32, %s33, %s34
    %p38 = pneg %p32
    %p39 = scmp.eq.s32.totalorder %s9, 1
    %p40 = por %p38, %p39
    %p41 = scmp.ne.s32.totalorder %s33, %s36
    %p42 = scmp.eq.s32.totalorder %s9, 0
    %p43 = por %p41, %p42
    %p44 = scmp.ne.s32.totalorder %s33, %s36
    %p45 = scmp.eq.s32.totalorder %s14, 1
    %p46 = por %p44, %p45
    %p47 = scmp.ne.s32.totalorder %s36, %s37
    %p48 = scmp.eq.s32.totalorder %s14, 0
    %p49 = por %p47, %p48
    %p50 = scmp.ne.s32.totalorder %s36, %s37
    %p51 = scmp.eq.s32.totalorder %s15, 1
    %p52 = por %p50, %p51
    %p54 = scmp.ne.s32.totalorder %s37, %s53
    %p55 = scmp.eq.s32.totalorder %s15, 0
    %p56 = por %p54, %p55
    %s58 = sadd.s32 %s57, 1
    %p61 = scmp.eq.s32.totalorder %s9, 1
    %p62 = scmp.ne.s32.totalorder %s57, %s59
    %p63 = scmp.eq.s32.totalorder %s9, 0
    %p64 = por %p62, %p63
    %p65 = scmp.ne.s32.totalorder %s57, %s59
    %p66 = scmp.eq.s32.totalorder %s14, 1
    %p67 = por %p65, %p66
    %p68 = scmp.ne.s32.totalorder %s59, %s60
    %p69 = scmp.eq.s32.totalorder %s14, 0
    %p70 = por %p68, %p69
    %p71 = scmp.ne.s32.totalorder %s59, %s60
    %p72 = scmp.eq.s32.totalorder %s15, 1
    %p73 = por %p71, %p72
    %p75 = scmp.ne.s32.totalorder %s60, %s74
    %p76 = scmp.eq.s32.totalorder %s15, 0
    %p77 = por %p75, %p76
    %s79 = sadd.s32 %s78, 1
    %p82 = scmp.eq.s32.totalorder %s9, 1
    %p83 = scmp.ne.s32.totalorder %s78, %s80
    %p84 = scmp.eq.s32.totalorder %s9, 0
    %p85 = por %p83, %p84
    %p86 = scmp.ne.s32.totalorder %s78, %s80
    %p87 = scmp.eq.s32.totalorder %s14, 1
    %p88 = por %p86, %p87
    %p89 = scmp.ne.s32.totalorder %s80, %s81
    %p90 = scmp.eq.s32.totalorder %s14, 0
    %p91 = por %p89, %p90
    %p92 = scmp.ne.s32.totalorder %s80, %s81
    %p93 = scmp.eq.s32.totalorder %s15, 1
    %p94 = por %p92, %p93
    %p96 = scmp.ne.s32.totalorder %s81, %s95
    %p97 = scmp.eq.s32.totalorder %s15, 0
    %p98 = por %p96, %p97
    %s99 = ssub.s32 %s16, %s28
    %s100 = ssub.s32 %s17, %s24
    %s101 = sor.u32 %s99, %s100
    %p102 = scmp.eq.s32.totalorder %s101, 0
    %s104 = sadd.s32 %s103, 1
    %s105 = scalar_select %p102, %s103, %s104
    %p108 = pneg %p102
    %p109 = scmp.eq.s32.totalorder %s9, 1
    %p110 = por %p108, %p109
    %p111 = scmp.ne.s32.totalorder %s103, %s106
    %p112 = scmp.eq.s32.totalorder %s9, 0
    %p113 = por %p111, %p112
    %p114 = scmp.ne.s32.totalorder %s103, %s106
    %p115 = scmp.eq.s32.totalorder %s14, 1
    %p116 = por %p114, %p115
    %p117 = scmp.ne.s32.totalorder %s106, %s107
    %p118 = scmp.eq.s32.totalorder %s14, 0
    %p119 = por %p117, %p118
    %p120 = scmp.ne.s32.totalorder %s106, %s107
    %p121 = scmp.eq.s32.totalorder %s15, 1
    %p122 = por %p120, %p121
    %p124 = scmp.ne.s32.totalorder %s107, %s123
    %p125 = scmp.eq.s32.totalorder %s15, 0
    %p126 = por %p124, %p125
    %p127 = scmp.le.s32.totalorder 1, %s9
    %p128 = scmp.lt.s32.totalorder %s9, 3
    %p129 = pnand %p127, %p128
    %p130 = pneg %p129
    // Predicated region
    $region9: #{encoder3_forward_pallas.5} parent=5 // pred_check
      _
    $region10: #{encoder3_forward_pallas.5} parent=5 // pred_check_branch
      %132 = sbr.rel (%p129) target = $region12
    $region11: #{encoder3_forward_pallas.5} parent=5 // pred_region
      %s133 = ssub.s32 %s9, 1
      // Predicated region
      $region13: #{encoder3_forward_pallas.5} parent=11 // pred_check
        %p134 = pneg %p70
      $region14: #{encoder3_forward_pallas.5} parent=11 // pred_check_branch
        %136 = sbr.rel (%p134) target = $region16
      $region15: #{encoder3_forward_pallas.5} parent=11 // pred_region
        _
      $region16: #{encoder3_forward_pallas.5} parent=11 // pred_fallthru
        _
      // Predicated region
      $region17: #{encoder3_forward_pallas.5} parent=11 // pred_check
        %p137 = pneg %p91
      $region18: #{encoder3_forward_pallas.5} parent=11 // pred_check_branch
        %139 = sbr.rel (%p137) target = $region20
      $region19: #{encoder3_forward_pallas.5} parent=11 // pred_region
        _
      $region20: #{encoder3_forward_pallas.5} parent=11 // pred_fallthru
        _
    $region12: #{encoder3_forward_pallas.5} parent=5 // pred_fallthru
      _
    %p140 = scmp.lt.s32.totalorder %s9, 2
    // Predicated region
    $region21: #{encoder3_forward_pallas.5} parent=5 // pred_check
      %p141 = pneg %p140
    $region22: #{encoder3_forward_pallas.5} parent=5 // pred_check_branch
      %143 = sbr.rel (%p141) target = $region24
    $region23: #{encoder3_forward_pallas.5} parent=5 // pred_region
      // Predicated region
      $region25: #{encoder3_forward_pallas.5} parent=23 // pred_check
        %p144 = pneg %p43
      $region26: #{encoder3_forward_pallas.5} parent=23 // pred_check_branch
        %146 = sbr.rel (%p144) target = $region28
      $region27: #{encoder3_forward_pallas.5} parent=23 // pred_region
        %s147 = smul.u32 32, %s17
        %p148 = scmp.lt.s32.totalorder %s16, 1
        %s149 = scalar_select %p148, %s16, 1
        %p150 = scmp.lt.s32.totalorder %s147, 31
        %s151 = scalar_select %p150, %s147, 31
        %s152 = smul.addr %s149, 32
        %s153 = sadd.s32 %s151, %s152
        %s154 = smul.addr %s153, 4
        %s155 = scalar_lea.vmem %s0, %s154
        %s156 = smul.u32 32, %s17
      $region28: #{encoder3_forward_pallas.5} parent=23 // pred_fallthru
        _
    $region24: #{encoder3_forward_pallas.5} parent=5 // pred_fallthru
      _
    %p157 = scmp.le.s32.totalorder 1, %s9
    %p158 = scmp.lt.s32.totalorder %s9, 3
    %p159 = pnand %p157, %p158
    %p160 = pneg %p159
    // Predicated region
    $region29: #{encoder3_forward_pallas.5} parent=5 // pred_check
      _
    $region30: #{encoder3_forward_pallas.5} parent=5 // pred_check_branch
      %162 = sbr.rel (%p159) target = $region32
    $region31: #{encoder3_forward_pallas.5} parent=5 // pred_region
      %s163 = ssub.s32 %s9, 1
      %s164 = smul.u32 32, %s19
      %p165 = scmp.lt.s32.totalorder %s18, 1
      %s166 = scalar_select %p165, %s18, 1
      %p167 = scmp.lt.s32.totalorder %s164, 31
      %s168 = scalar_select %p167, %s164, 31
      %s169 = smul.addr %s166, 32
      %s170 = sadd.s32 %s168, %s169
      %s171 = smul.addr %s170, 4
      %s172 = scalar_lea.vmem %s0, %s171
      %p173 = pneg %p49
      %p174 = pneg %p46
      %p175 = pneg %p70
      %p176 = pneg %p67
      %p177 = pneg %p91
      %p178 = pneg %p88
      %p179 = pneg %p119
      %p180 = pneg %p116
      %s181 = smul.u32 32, %s19
      %p182 = scmp.lt.s32.totalorder %s18, 1
      %s183 = scalar_select %p182, %s18, 1
      %p184 = scmp.lt.s32.totalorder %s181, 31
      %s185 = scalar_select %p184, %s181, 31
      %s186 = smul.addr %s183, 32
      %s187 = sadd.s32 %s185, %s186
      %s188 = smul.addr %s187, 4
      %s189 = scalar_lea.vmem %s3, %s188
      %s190 = smul.u32 32, %s19
      %p191 = scmp.lt.s32.totalorder %s18, 1
      %s192 = scalar_select %p191, %s18, 1
      %p193 = scmp.lt.s32.totalorder %s190, 31
      %s194 = scalar_select %p193, %s190, 31
      %s195 = smul.addr %s192, 32
      %s196 = sadd.s32 %s194, %s195
      %s197 = smul.addr %s196, 4
      %s198 = scalar_lea.vmem %s0, %s197
      %s199 = smul.u32 32, %s19
      %s200 = smul.u32 32, %s19
      %p201 = scmp.lt.s32.totalorder %s18, 1
      %s202 = scalar_select %p201, %s18, 1
      %p203 = scmp.lt.s32.totalorder %s200, 31
      %s204 = scalar_select %p203, %s200, 31
      %s205 = smul.addr %s202, 32
      %s206 = sadd.s32 %s204, %s205
      %s207 = smul.addr %s206, 4
      %s208 = scalar_lea.vmem %s3, %s207
      %s209 = smul.u32 32, %s19
      %v211 = vld [vmem:[%s198] sm:$0xf]
      %v212 = vld [vmem:[%s198 + $0x4] sm:$0xf]
      %v213 = vld [vmem:[%s198 + $0x8] sm:$0xf]
      %v214 = vld [vmem:[%s198 + $0xc] sm:$0xf]
      %v215 = vld [vmem:[%s198 + $0x10] sm:$0xf]
      %v216 = vld [vmem:[%s198 + $0x14] sm:$0xf]
      %v217 = vld [vmem:[%s198 + $0x18] sm:$0xf]
      %v218 = vld [vmem:[%s198 + $0x1c] sm:$0xf]
      %v219 = vld [vmem:[%s198 + $0x20] sm:$0xf]
      %v220 = vld [vmem:[%s198 + $0x24] sm:$0xf]
      %v221 = vld [vmem:[%s198 + $0x28] sm:$0xf]
      %v222 = vld [vmem:[%s198 + $0x2c] sm:$0xf]
      %v223 = vld [vmem:[%s198 + $0x30] sm:$0xf]
      %v224 = vld [vmem:[%s198 + $0x34] sm:$0xf]
      %v225 = vld [vmem:[%s198 + $0x38] sm:$0xf]
      %v226 = vld [vmem:[%s198 + $0x3c] sm:$0xf]
      %v227 = vld [vmem:[%s198 + $0x40] sm:$0xf]
      %v228 = vld [vmem:[%s198 + $0x44] sm:$0xf]
      %v229 = vld [vmem:[%s198 + $0x48] sm:$0xf]
      %v230 = vld [vmem:[%s198 + $0x4c] sm:$0xf]
      %v231 = vld [vmem:[%s198 + $0x50] sm:$0xf]
      %v232 = vld [vmem:[%s198 + $0x54] sm:$0xf]
      %v233 = vld [vmem:[%s198 + $0x58] sm:$0xf]
      %v234 = vld [vmem:[%s198 + $0x5c] sm:$0xf]
      %v235 = vld [vmem:[%s198 + $0x60] sm:$0xf]
      %v236 = vld [vmem:[%s198 + $0x64] sm:$0xf]
      %v237 = vld [vmem:[%s198 + $0x68] sm:$0xf]
      %v238 = vld [vmem:[%s198 + $0x6c] sm:$0xf]
      %v239 = vld [vmem:[%s198 + $0x70] sm:$0xf]
      %v240 = vld [vmem:[%s198 + $0x74] sm:$0xf]
      %v241 = vld [vmem:[%s198 + $0x78] sm:$0xf]
      %v242 = vld [vmem:[%s198 + $0x7c] sm:$0xf]
      %v243 = vld [vmem:[%s1] sm:$0xf]
      %v244 = vld [vmem:[%s1 + $0x4] sm:$0xf]
      %v245 = vld [vmem:[%s1 + $0x8] sm:$0xf]
      %v246 = vld [vmem:[%s1 + $0xc] sm:$0x3]
      %v247 = vld [vmem:[%s2] sm:$0x1]
      %v249 = vlaneseq
      %v250 = vshrl.u32 %v249, 7
      %v251 = vsub.s32 0, %v250
      %v252 = vrot.slane %v247, %v251
      %v286 = vunpack.c.l.b16 %v211
      %v287 = vunpack.c.l.b16 %v212
      %v288 = vunpack.c.l.b16 %v213
      %v289 = vunpack.c.l.b16 %v214
      %v290 = vunpack.c.l.b16 %v215
      %v291 = vunpack.c.l.b16 %v216
      %v292 = vunpack.c.l.b16 %v217
      %v293 = vunpack.c.l.b16 %v218
      %v294 = vunpack.c.l.b16 %v219
      %v295 = vunpack.c.l.b16 %v220
      %v296 = vunpack.c.l.b16 %v221
      %v297 = vunpack.c.l.b16 %v222
      %v298 = vunpack.c.l.b16 %v223
      %v299 = vunpack.c.l.b16 %v224
      %v300 = vunpack.c.l.b16 %v225
      %v301 = vunpack.c.l.b16 %v226
      %v302 = vunpack.c.l.b16 %v227
      %v303 = vunpack.c.l.b16 %v228
      %v304 = vunpack.c.l.b16 %v229
      %v305 = vunpack.c.l.b16 %v230
      %v306 = vunpack.c.l.b16 %v231
      %v307 = vunpack.c.l.b16 %v232
      %v308 = vunpack.c.l.b16 %v233
      %v309 = vunpack.c.l.b16 %v234
      %v310 = vunpack.c.l.b16 %v235
      %v311 = vunpack.c.l.b16 %v236
      %v312 = vunpack.c.l.b16 %v237
      %v313 = vunpack.c.l.b16 %v238
      %v314 = vunpack.c.l.b16 %v239
      %v315 = vunpack.c.l.b16 %v240
      %v316 = vunpack.c.l.b16 %v241
      %v317 = vunpack.c.l.b16 %v242
      %v318 = vpack.c.b16 %v287, %v286
      %v319 = vpack.c.b16 %v289, %v288
      %v320 = vpack.c.b16 %v291, %v290
      %v321 = vpack.c.b16 %v293, %v292
      %v322 = vpack.c.b16 %v295, %v294
      %v323 = vpack.c.b16 %v297, %v296
      %v324 = vpack.c.b16 %v299, %v298
      %v325 = vpack.c.b16 %v301, %v300
      %v326 = vpack.c.b16 %v303, %v302
      %v327 = vpack.c.b16 %v305, %v304
      %v328 = vpack.c.b16 %v307, %v306
      %v329 = vpack.c.b16 %v309, %v308
      %v330 = vpack.c.b16 %v311, %v310
      %v331 = vpack.c.b16 %v313, %v312
      %v332 = vpack.c.b16 %v315, %v314
      %v333 = vpack.c.b16 %v317, %v316
      %v338 = vunpack.c.l.b16 %v243
      %v339 = vunpack.c.l.b16 %v244
      %v340 = vunpack.c.l.b16 %v245
      %v341 = vunpack.c.l.b16 %v246
      %v342 = vpack.c.b16 %v339, %v338
      %v343 = vpack.c.b16 %v341, %v340
      %vm345 = vcmask 220160
      %v347 = vsel %vm345, %v318, 0
      %v350 = vsel %vm345, %v319, 0
      %v353 = vsel %vm345, %v320, 0
      %v356 = vsel %vm345, %v321, 0
      %v359 = vsel %vm345, %v322, 0
      %v362 = vsel %vm345, %v323, 0
      %v365 = vsel %vm345, %v324, 0
      %v368 = vsel %vm345, %v325, 0
      %v371 = vsel %vm345, %v326, 0
      %v374 = vsel %vm345, %v327, 0
      %v377 = vsel %vm345, %v328, 0
      %v380 = vsel %vm345, %v329, 0
      %v383 = vsel %vm345, %v330, 0
      %v386 = vsel %vm345, %v331, 0
      %v389 = vsel %vm345, %v332, 0
      %v392 = vsel %vm345, %v333, 0
      %vm394 = vcmask 1044480
      %vm395 = vcmask 1045504
      %v396 = vsel %vm394, 4294967295, 65535
      %v397 = vsel %vm395, %v396, 0
      %v399 = vand.u32 %v343, %v397
      %401 = vmatprep.subr.bf16.mxu0 0
      %402 = vmatpush1.bf16.msra.mxu0 %v342
      %403 = vmatprep.subr.bf16.mxu0 0
      %404 = vmatpush1.bf16.msra.mxu0 %v399
      %405 = vmatprep.subr.bf16.mxu0 0
      %406 = vmatpush1.bf16.msra.mxu0 0
      %407 = vmatprep.subr.bf16.mxu0 0
      %408 = vmatpush1.bf16.msra.mxu0 0
      %409 = vmatprep.subr.bf16.mxu0 0
      %410 = vmatpush1.bf16.msra.mxu0 0
      %411 = vmatprep.subr.bf16.mxu0 0
      %412 = vmatpush1.bf16.msra.mxu0 0
      %413 = vmatprep.subr.bf16.mxu0 0
      %414 = vmatpush1.bf16.msra.mxu0 0
      %415 = vmatprep.subr.bf16.mxu0 0
      %416 = vmatpush1.bf16.msra.mxu0 0
      %417 = vmatprep.subr.bf16.mxu0 0
      %418 = vmatpush1.bf16.msra.mxu0 0
      %419 = vmatprep.subr.bf16.mxu0 0
      %420 = vmatpush1.bf16.msra.mxu0 0
      %421 = vmatprep.subr.bf16.mxu0 0
      %422 = vmatpush1.bf16.msra.mxu0 0
      %423 = vmatprep.subr.bf16.mxu0 0
      %424 = vmatpush1.bf16.msra.mxu0 0
      %425 = vmatprep.subr.bf16.mxu0 0
      %426 = vmatpush1.bf16.msra.mxu0 0
      %427 = vmatprep.subr.bf16.mxu0 0
      %428 = vmatpush1.bf16.msra.mxu0 0
      %429 = vmatprep.subr.bf16.mxu0 0
      %430 = vmatpush1.bf16.msra.mxu0 0
      %431 = vmatprep.subr.bf16.mxu0 0
      %432 = vmatpush1.bf16.msra.mxu0 0
      %433 = vmatprep.mubr.bf16.mxu0 0
      %434 = vmatmul.mubr.bf16.gmra.mrb[0].mxu0 %v347
      %v435 = vpop.f32.mrb[0].mxu0
      %v436 = vadd.f32 %v252, %v435
      %v437 = vpop.f32.mrb[0].mxu0
      %v438 = vpop.f32.mrb[0].mxu0
      %v439 = vadd.f32 %v252, %v438
      %v440 = vpop.f32.mrb[0].mxu0
      %441 = vmatprep.mubr.bf16.mxu0 0
      %442 = vmatmul.mubr.bf16.gmra.mrb[0].mxu0 %v350
      %v443 = vpop.f32.mrb[0].mxu0
      %v444 = vadd.f32 %v252, %v443
      %v445 = vpop.f32.mrb[0].mxu0
      %v446 = vpop.f32.mrb[0].mxu0
      %v447 = vadd.f32 %v252, %v446
      %v448 = vpop.f32.mrb[0].mxu0
      %449 = vmatprep.mubr.bf16.mxu0 0
      %450 = vmatmul.mubr.bf16.gmra.mrb[0].mxu0 %v353
      %v451 = vpop.f32.mrb[0].mxu0
      %v452 = vadd.f32 %v252, %v451
      %v453 = vpop.f32.mrb[0].mxu0
      %v454 = vpop.f32.mrb[0].mxu0
      %v455 = vadd.f32 %v252, %v454
      %v456 = vpop.f32.mrb[0].mxu0
      %457 = vmatprep.mubr.bf16.mxu0 0
      %458 = vmatmul.mubr.bf16.gmra.mrb[0].mxu0 %v356
      %v459 = vpop.f32.mrb[0].mxu0
      %v460 = vadd.f32 %v252, %v459
      %v461 = vpop.f32.mrb[0].mxu0
      %v462 = vpop.f32.mrb[0].mxu0
      %v463 = vadd.f32 %v252, %v462
      %v464 = vpop.f32.mrb[0].mxu0
      %465 = vmatprep.mubr.bf16.mxu0 0
      %466 = vmatmul.mubr.bf16.gmra.mrb[0].mxu0 %v359
      %v467 = vpop.f32.mrb[0].mxu0
      %v468 = vadd.f32 %v252, %v467
      %v469 = vpop.f32.mrb[0].mxu0
      %v470 = vpop.f32.mrb[0].mxu0
      %v471 = vadd.f32 %v252, %v470
      %v472 = vpop.f32.mrb[0].mxu0
      %473 = vmatprep.mubr.bf16.mxu0 0
      %474 = vmatmul.mubr.bf16.gmra.mrb[0].mxu0 %v362
      %v475 = vpop.f32.mrb[0].mxu0
      %v476 = vadd.f32 %v252, %v475
      %v477 = vpop.f32.mrb[0].mxu0
      %v478 = vpop.f32.mrb[0].mxu0
      %v479 = vadd.f32 %v252, %v478
      %v480 = vpop.f32.mrb[0].mxu0
      %481 = vmatprep.mubr.bf16.mxu0 0
      %482 = vmatmul.mubr.bf16.gmra.mrb[0].mxu0 %v365
      %v483 = vpop.f32.mrb[0].mxu0
      %v484 = vadd.f32 %v252, %v483
      %v485 = vpop.f32.mrb[0].mxu0
      %v486 = vpop.f32.mrb[0].mxu0
      %v487 = vadd.f32 %v252, %v486
      %v488 = vpop.f32.mrb[0].mxu0
      %489 = vmatprep.mubr.bf16.mxu0 0
      %490 = vmatmul.mubr.bf16.gmra.mrb[0].mxu0 %v368
      %v491 = vpop.f32.mrb[0].mxu0
      %v492 = vadd.f32 %v252, %v491
      %v493 = vpop.f32.mrb[0].mxu0
      %v494 = vpop.f32.mrb[0].mxu0
      %v495 = vadd.f32 %v252, %v494
      %v496 = vpop.f32.mrb[0].mxu0
      %497 = vmatprep.mubr.bf16.mxu0 0
      %498 = vmatmul.mubr.bf16.gmra.mrb[0].mxu0 %v371
      %v499 = vpop.f32.mrb[0].mxu0
      %v500 = vadd.f32 %v252, %v499
      %v501 = vpop.f32.mrb[0].mxu0
      %v502 = vpop.f32.mrb[0].mxu0
      %v503 = vadd.f32 %v252, %v502
      %v504 = vpop.f32.mrb[0].mxu0
      %505 = vmatprep.mubr.bf16.mxu0 0
      %506 = vmatmul.mubr.bf16.gmra.mrb[0].mxu0 %v374
      %v507 = vpop.f32.mrb[0].mxu0
      %v508 = vadd.f32 %v252, %v507
      %v509 = vpop.f32.mrb[0].mxu0
      %v510 = vpop.f32.mrb[0].mxu0
      %v511 = vadd.f32 %v252, %v510
      %v512 = vpop.f32.mrb[0].mxu0
      %513 = vmatprep.mubr.bf16.mxu0 0
      %514 = vmatmul.mubr.bf16.gmra.mrb[0].mxu0 %v377
      %v515 = vpop.f32.mrb[0].mxu0
      %v516 = vadd.f32 %v252, %v515
      %v517 = vpop.f32.mrb[0].mxu0
      %v518 = vpop.f32.mrb[0].mxu0
      %v519 = vadd.f32 %v252, %v518
      %v520 = vpop.f32.mrb[0].mxu0
      %521 = vmatprep.mubr.bf16.mxu0 0
      %522 = vmatmul.mubr.bf16.gmra.mrb[0].mxu0 %v380
      %v523 = vpop.f32.mrb[0].mxu0
      %v524 = vadd.f32 %v252, %v523
      %v525 = vpop.f32.mrb[0].mxu0
      %v526 = vpop.f32.mrb[0].mxu0
      %v527 = vadd.f32 %v252, %v526
      %v528 = vpop.f32.mrb[0].mxu0
      %529 = vmatprep.mubr.bf16.mxu0 0
      %530 = vmatmul.mubr.bf16.gmra.mrb[0].mxu0 %v383
      %v531 = vpop.f32.mrb[0].mxu0
      %v532 = vadd.f32 %v252, %v531
      %v533 = vpop.f32.mrb[0].mxu0
      %v534 = vpop.f32.mrb[0].mxu0
      %v535 = vadd.f32 %v252, %v534
      %v536 = vpop.f32.mrb[0].mxu0
      %537 = vmatprep.mubr.bf16.mxu0 0
      %538 = vmatmul.mubr.bf16.gmra.mrb[0].mxu0 %v386
      %v539 = vpop.f32.mrb[0].mxu0
      %v540 = vadd.f32 %v252, %v539
      %v541 = vpop.f32.mrb[0].mxu0
      %v542 = vpop.f32.mrb[0].mxu0
      %v543 = vadd.f32 %v252, %v542
      %v544 = vpop.f32.mrb[0].mxu0
      %545 = vmatprep.mubr.bf16.mxu0 0
      %546 = vmatmul.mubr.bf16.gmra.mrb[0].mxu0 %v389
      %v547 = vpop.f32.mrb[0].mxu0
      %v548 = vadd.f32 %v252, %v547
      %v549 = vpop.f32.mrb[0].mxu0
      %v550 = vpop.f32.mrb[0].mxu0
      %v551 = vadd.f32 %v252, %v550
      %v552 = vpop.f32.mrb[0].mxu0
      %553 = vmatprep.mubr.bf16.mxu0 0
      %554 = vmatmul.mubr.bf16.gmra.mrb[0].mxu0 %v392
      %v555 = vpop.f32.mrb[0].mxu0
      %v556 = vadd.f32 %v252, %v555
      %v557 = vpop.f32.mrb[0].mxu0
      %v558 = vpop.f32.mrb[0].mxu0
      %v559 = vadd.f32 %v252, %v558
      %v560 = vpop.f32.mrb[0].mxu0
      %561 = vdwg.mxu0
      %v562 = vmax.f32 %v436, 0.0
      %v563 = vmax.f32 %v439, 0.0
      %v564 = vmax.f32 %v444, 0.0
      %v565 = vmax.f32 %v447, 0.0
      %v566 = vmax.f32 %v452, 0.0
      %v567 = vmax.f32 %v455, 0.0
      %v568 = vmax.f32 %v460, 0.0
      %v569 = vmax.f32 %v463, 0.0
      %v570 = vmax.f32 %v468, 0.0
      %v571 = vmax.f32 %v471, 0.0
      %v572 = vmax.f32 %v476, 0.0
      %v573 = vmax.f32 %v479, 0.0
      %v574 = vmax.f32 %v484, 0.0
      %v575 = vmax.f32 %v487, 0.0
      %v576 = vmax.f32 %v492, 0.0
      %v577 = vmax.f32 %v495, 0.0
      %v578 = vmax.f32 %v500, 0.0
      %v579 = vmax.f32 %v503, 0.0
      %v580 = vmax.f32 %v508, 0.0
      %v581 = vmax.f32 %v511, 0.0
      %v582 = vmax.f32 %v516, 0.0
      %v583 = vmax.f32 %v519, 0.0
      %v584 = vmax.f32 %v524, 0.0
      %v585 = vmax.f32 %v527, 0.0
      %v586 = vmax.f32 %v532, 0.0
      %v587 = vmax.f32 %v535, 0.0
      %v588 = vmax.f32 %v540, 0.0
      %v589 = vmax.f32 %v543, 0.0
      %v590 = vmax.f32 %v548, 0.0
      %v591 = vmax.f32 %v551, 0.0
      %v592 = vmax.f32 %v556, 0.0
      %v593 = vmax.f32 %v559, 0.0
      %v594 = vpack.c.bf16 %v563, %v562
      %v595 = vpack.c.bf16 %v565, %v564
      %v596 = vpack.c.bf16 %v567, %v566
      %v597 = vpack.c.bf16 %v569, %v568
      %v598 = vpack.c.bf16 %v571, %v570
      %v599 = vpack.c.bf16 %v573, %v572
      %v600 = vpack.c.bf16 %v575, %v574
      %v601 = vpack.c.bf16 %v577, %v576
      %v602 = vpack.c.bf16 %v579, %v578
      %v603 = vpack.c.bf16 %v581, %v580
      %v604 = vpack.c.bf16 %v583, %v582
      %v605 = vpack.c.bf16 %v585, %v584
      %v606 = vpack.c.bf16 %v587, %v586
      %v607 = vpack.c.bf16 %v589, %v588
      %v608 = vpack.c.bf16 %v591, %v590
      %v609 = vpack.c.bf16 %v593, %v592
      %v626 = vunpack.c.l.b16 %v594
      %v627 = vunpack.c.h.b16 %v594
      %v628 = vunpack.c.l.b16 %v595
      %v629 = vunpack.c.h.b16 %v595
      %v630 = vunpack.c.l.b16 %v596
      %v631 = vunpack.c.h.b16 %v596
      %v632 = vunpack.c.l.b16 %v597
      %v633 = vunpack.c.h.b16 %v597
      %v634 = vunpack.c.l.b16 %v598
      %v635 = vunpack.c.h.b16 %v598
      %v636 = vunpack.c.l.b16 %v599
      %v637 = vunpack.c.h.b16 %v599
      %v638 = vunpack.c.l.b16 %v600
      %v639 = vunpack.c.h.b16 %v600
      %v640 = vunpack.c.l.b16 %v601
      %v641 = vunpack.c.h.b16 %v601
      %v642 = vunpack.c.l.b16 %v602
      %v643 = vunpack.c.h.b16 %v602
      %v644 = vunpack.c.l.b16 %v603
      %v645 = vunpack.c.h.b16 %v603
      %v646 = vunpack.c.l.b16 %v604
      %v647 = vunpack.c.h.b16 %v604
      %v648 = vunpack.c.l.b16 %v605
      %v649 = vunpack.c.h.b16 %v605
      %v650 = vunpack.c.l.b16 %v606
      %v651 = vunpack.c.h.b16 %v606
      %v652 = vunpack.c.l.b16 %v607
      %v653 = vunpack.c.h.b16 %v607
      %v654 = vunpack.c.l.b16 %v608
      %v655 = vunpack.c.h.b16 %v608
      %v656 = vunpack.c.l.b16 %v609
      %v657 = vunpack.c.h.b16 %v609
      %v658 = vpack.c.b16 %v626, %v626
      %v659 = vpack.c.b16 %v627, %v627
      %v660 = vpack.c.b16 %v628, %v628
      %v661 = vpack.c.b16 %v629, %v629
      %v662 = vpack.c.b16 %v630, %v630
      %v663 = vpack.c.b16 %v631, %v631
      %v664 = vpack.c.b16 %v632, %v632
      %v665 = vpack.c.b16 %v633, %v633
      %v666 = vpack.c.b16 %v634, %v634
      %v667 = vpack.c.b16 %v635, %v635
      %v668 = vpack.c.b16 %v636, %v636
      %v669 = vpack.c.b16 %v637, %v637
      %v670 = vpack.c.b16 %v638, %v638
      %v671 = vpack.c.b16 %v639, %v639
      %v672 = vpack.c.b16 %v640, %v640
      %v673 = vpack.c.b16 %v641, %v641
      %v674 = vpack.c.b16 %v642, %v642
      %v675 = vpack.c.b16 %v643, %v643
      %v676 = vpack.c.b16 %v644, %v644
      %v677 = vpack.c.b16 %v645, %v645
      %v678 = vpack.c.b16 %v646, %v646
      %v679 = vpack.c.b16 %v647, %v647
      %v680 = vpack.c.b16 %v648, %v648
      %v681 = vpack.c.b16 %v649, %v649
      %v682 = vpack.c.b16 %v650, %v650
      %v683 = vpack.c.b16 %v651, %v651
      %v684 = vpack.c.b16 %v652, %v652
      %v685 = vpack.c.b16 %v653, %v653
      %v686 = vpack.c.b16 %v654, %v654
      %v687 = vpack.c.b16 %v655, %v655
      %v688 = vpack.c.b16 %v656, %v656
      %v689 = vpack.c.b16 %v657, %v657
      %vm722 = vcmask 519168
      %723 = vst.msk [vmem:[%s208] sm:$0xf] %vm722, %v658
      %724 = vst.msk [vmem:[%s208 + $0x4] sm:$0xf] %vm722, %v659
      %725 = vst.msk [vmem:[%s208 + $0x8] sm:$0xf] %vm722, %v660
      %726 = vst.msk [vmem:[%s208 + $0xc] sm:$0xf] %vm722, %v661
      %727 = vst.msk [vmem:[%s208 + $0x10] sm:$0xf] %vm722, %v662
      %728 = vst.msk [vmem:[%s208 + $0x14] sm:$0xf] %vm722, %v663
      %729 = vst.msk [vmem:[%s208 + $0x18] sm:$0xf] %vm722, %v664
      %730 = vst.msk [vmem:[%s208 + $0x1c] sm:$0xf] %vm722, %v665
      %731 = vst.msk [vmem:[%s208 + $0x20] sm:$0xf] %vm722, %v666
      %732 = vst.msk [vmem:[%s208 + $0x24] sm:$0xf] %vm722, %v667
      %733 = vst.msk [vmem:[%s208 + $0x28] sm:$0xf] %vm722, %v668
      %734 = vst.msk [vmem:[%s208 + $0x2c] sm:$0xf] %vm722, %v669
      %735 = vst.msk [vmem:[%s208 + $0x30] sm:$0xf] %vm722, %v670
      %736 = vst.msk [vmem:[%s208 + $0x34] sm:$0xf] %vm722, %v671
      %737 = vst.msk [vmem:[%s208 + $0x38] sm:$0xf] %vm722, %v672
      %738 = vst.msk [vmem:[%s208 + $0x3c] sm:$0xf] %vm722, %v673
      %739 = vst.msk [vmem:[%s208 + $0x40] sm:$0xf] %vm722, %v674
      %740 = vst.msk [vmem:[%s208 + $0x44] sm:$0xf] %vm722, %v675
      %741 = vst.msk [vmem:[%s208 + $0x48] sm:$0xf] %vm722, %v676
      %742 = vst.msk [vmem:[%s208 + $0x4c] sm:$0xf] %vm722, %v677
      %743 = vst.msk [vmem:[%s208 + $0x50] sm:$0xf] %vm722, %v678
      %744 = vst.msk [vmem:[%s208 + $0x54] sm:$0xf] %vm722, %v679
      %745 = vst.msk [vmem:[%s208 + $0x58] sm:$0xf] %vm722, %v680
      %746 = vst.msk [vmem:[%s208 + $0x5c] sm:$0xf] %vm722, %v681
      %747 = vst.msk [vmem:[%s208 + $0x60] sm:$0xf] %vm722, %v682
      %748 = vst.msk [vmem:[%s208 + $0x64] sm:$0xf] %vm722, %v683
      %749 = vst.msk [vmem:[%s208 + $0x68] sm:$0xf] %vm722, %v684
      %750 = vst.msk [vmem:[%s208 + $0x6c] sm:$0xf] %vm722, %v685
      %751 = vst.msk [vmem:[%s208 + $0x70] sm:$0xf] %vm722, %v686
      %752 = vst.msk [vmem:[%s208 + $0x74] sm:$0xf] %vm722, %v687
      %753 = vst.msk [vmem:[%s208 + $0x78] sm:$0xf] %vm722, %v688
      %754 = vst.msk [vmem:[%s208 + $0x7c] sm:$0xf] %vm722, %v689
      %s755 = smul.u32 32, %s19
      %p756 = scmp.lt.s32.totalorder %s18, 1
      %s757 = scalar_select %p756, %s18, 1
      %p758 = scmp.lt.s32.totalorder %s755, 31
      %s759 = scalar_select %p758, %s755, 31
      %s760 = smul.addr %s757, 32
      %s761 = sadd.s32 %s759, %s760
      %s762 = smul.addr %s761, 4
      %s763 = scalar_lea.vmem %s3, %s762
      // Predicated region
      $region33: #{encoder3_forward_pallas.5} parent=31 // pred_check
        %p764 = pneg %p116
      $region34: #{encoder3_forward_pallas.5} parent=31 // pred_check_branch
        %766 = sbr.rel (%p764) target = $region36
      $region35: #{encoder3_forward_pallas.5} parent=31 // pred_region
        %s767 = smul.u32 32, %s19
      $region36: #{encoder3_forward_pallas.5} parent=31 // pred_fallthru
        _
    $region32: #{encoder3_forward_pallas.5} parent=5 // pred_fallthru
      _
    %p768 = scmp.le.s32.totalorder 2, %s9
    // Predicated region
    $region37: #{encoder3_forward_pallas.5} parent=5 // pred_check
      %p769 = pneg %p768
    $region38: #{encoder3_forward_pallas.5} parent=5 // pred_check_branch
      %771 = sbr.rel (%p769) target = $region40
    $region39: #{encoder3_forward_pallas.5} parent=5 // pred_region
      %s772 = ssub.s32 %s9, 2
      // Predicated region
      $region41: #{encoder3_forward_pallas.5} parent=39 // pred_check
        %p773 = pneg %p122
      $region42: #{encoder3_forward_pallas.5} parent=39 // pred_check_branch
        %775 = sbr.rel (%p773) target = $region44
      $region43: #{encoder3_forward_pallas.5} parent=39 // pred_region
        %s776 = smul.u32 32, %s21
        %p777 = scmp.lt.s32.totalorder %s20, 1
        %s778 = scalar_select %p777, %s20, 1
        %p779 = scmp.lt.s32.totalorder %s776, 31
        %s780 = scalar_select %p779, %s776, 31
        %s781 = smul.addr %s778, 32
        %s782 = sadd.s32 %s780, %s781
        %s783 = smul.addr %s782, 4
        %s784 = scalar_lea.vmem %s3, %s783
      $region44: #{encoder3_forward_pallas.5} parent=39 // pred_fallthru
        _
    $region40: #{encoder3_forward_pallas.5} parent=5 // pred_fallthru
      _
  $region6: #{encoder3_forward_pallas.5} parent=0 // loop_footer
    %s13 = sadd.s32 1, %s9
  $region7: #{encoder3_forward_pallas.5} parent=0 // loop_footer_branch
    %8 = sbr.rel target = $region3
  $region8: #{encoder3_forward_pallas.5} parent=0 // loop_exit
    _

// kernel: encoder3_forward_pallas.7
$region0: #{encoder3_forward_pallas.7}
  #allocation0 [shape = 'u32[]', space=smem, size = 0x4, offset = 0x4, fixed_abs, tag = 'smem constant byte address 0x4 - core index']
  #allocation1 [shape = 'u32[144,128]{1,0:T(1,128)}', space=vmem, size = 0x12000, scoped, tag = 'internal scratch']
  %s0 = inlined_call_operand.vmem [shape: bf16[2,1,110,64], index: 0, kind: input, shape index: {}]
  %s1 = inlined_call_operand.vmem [shape: bf16[9,64,128], index: 1, kind: input, shape index: {}]
  %s2 = inlined_call_operand.vmem [shape: f32[1,128], index: 2, kind: input, shape index: {}]
  %s3 = inlined_call_operand.vmem [shape: bf16[2,1,80,128], index: 3, kind: output, shape index: {}]
  %s4 = sld [smem:[#allocation0]]
  $region45: #{encoder3_forward_pallas.7} parent=0
    _
  %s6 = ssub.s32 1, %s4
  %s7 = scalar_select 0, %s6, %s4
  loop: start=0, step=1, limit=4
  $region2: #{encoder3_forward_pallas.7} parent=0 // loop_pre_header
    _
  $region3: #{encoder3_forward_pallas.7} parent=0 // loop_header
    %s9 = sphi 0, %s13
    %p10 = scmp.ge.s32.totalorder %s9, 4
    %s16 = sphi 0, %s28
    %s17 = sphi 0, %s24
    %s18 = sphi 0, %s16
    %s19 = sphi 0, %s17
    %s20 = sphi 0, %s18
    %s21 = sphi 0, %s19
    %s33 = sphi 0, %s35
    %s36 = sphi 0, %s33
    %s37 = sphi 0, %s36
    %s53 = sphi 0, %s37
    %s57 = sphi 0, %s57
    %s59 = sphi 0, %s57
    %s60 = sphi 0, %s59
    %s74 = sphi 0, %s60
    %s78 = sphi 0, %s78
    %s80 = sphi 0, %s78
    %s81 = sphi 0, %s80
    %s95 = sphi 0, %s81
    %s103 = sphi 0, %s105
    %s106 = sphi 0, %s103
    %s107 = sphi 0, %s106
    %s123 = sphi 0, %s107
  $region4: #{encoder3_forward_pallas.7} parent=0 // loop_header_branch
    %12 = sbr.rel (%p10) target = $region8
  $region5: #{encoder3_forward_pallas.7} parent=0 // loop_body
    %s14 = ssub.s32 %s9, 1
    %s15 = ssub.s32 %s9, 2
    %s22 = sadd.s32 1, %s17
    %p23 = scmp.ge.s32.totalorder %s22, 1
    %s24 = scalar_select %p23, 0, %s22
    %s25 = sadd.s32 1, %s16
    %s26 = scalar_select %p23, %s25, %s16
    %p27 = scmp.ge.s32.totalorder %s26, 2
    %s28 = scalar_select %p27, 0, %s26
    %s29 = ssub.s32 %s16, %s28
    %s30 = ssub.s32 %s17, %s24
    %s31 = sor.u32 %s29, %s30
    %p32 = scmp.eq.s32.totalorder %s31, 0
    %s34 = sadd.s32 %s33, 1
    %s35 = scalar_select %p32, %s33, %s34
    %p38 = pneg %p32
    %p39 = scmp.eq.s32.totalorder %s9, 1
    %p40 = por %p38, %p39
    %p41 = scmp.ne.s32.totalorder %s33, %s36
    %p42 = scmp.eq.s32.totalorder %s9, 0
    %p43 = por %p41, %p42
    %p44 = scmp.ne.s32.totalorder %s33, %s36
    %p45 = scmp.eq.s32.totalorder %s14, 1
    %p46 = por %p44, %p45
    %p47 = scmp.ne.s32.totalorder %s36, %s37
    %p48 = scmp.eq.s32.totalorder %s14, 0
    %p49 = por %p47, %p48
    %p50 = scmp.ne.s32.totalorder %s36, %s37
    %p51 = scmp.eq.s32.totalorder %s15, 1
    %p52 = por %p50, %p51
    %p54 = scmp.ne.s32.totalorder %s37, %s53
    %p55 = scmp.eq.s32.totalorder %s15, 0
    %p56 = por %p54, %p55
    %s58 = sadd.s32 %s57, 1
    %p61 = scmp.eq.s32.totalorder %s9, 1
    %p62 = scmp.ne.s32.totalorder %s57, %s59
    %p63 = scmp.eq.s32.totalorder %s9, 0
    %p64 = por %p62, %p63
    %p65 = scmp.ne.s32.totalorder %s57, %s59
    %p66 = scmp.eq.s32.totalorder %s14, 1
    %p67 = por %p65, %p66
    %p68 = scmp.ne.s32.totalorder %s59, %s60
    %p69 = scmp.eq.s32.totalorder %s14, 0
    %p70 = por %p68, %p69
    %p71 = scmp.ne.s32.totalorder %s59, %s60
    %p72 = scmp.eq.s32.totalorder %s15, 1
    %p73 = por %p71, %p72
    %p75 = scmp.ne.s32.totalorder %s60, %s74
    %p76 = scmp.eq.s32.totalorder %s15, 0
    %p77 = por %p75, %p76
    %s79 = sadd.s32 %s78, 1
    %p82 = scmp.eq.s32.totalorder %s9, 1
    %p83 = scmp.ne.s32.totalorder %s78, %s80
    %p84 = scmp.eq.s32.totalorder %s9, 0
    %p85 = por %p83, %p84
    %p86 = scmp.ne.s32.totalorder %s78, %s80
    %p87 = scmp.eq.s32.totalorder %s14, 1
    %p88 = por %p86, %p87
    %p89 = scmp.ne.s32.totalorder %s80, %s81
    %p90 = scmp.eq.s32.totalorder %s14, 0
    %p91 = por %p89, %p90
    %p92 = scmp.ne.s32.totalorder %s80, %s81
    %p93 = scmp.eq.s32.totalorder %s15, 1
    %p94 = por %p92, %p93
    %p96 = scmp.ne.s32.totalorder %s81, %s95
    %p97 = scmp.eq.s32.totalorder %s15, 0
    %p98 = por %p96, %p97
    %s99 = ssub.s32 %s16, %s28
    %s100 = ssub.s32 %s17, %s24
    %s101 = sor.u32 %s99, %s100
    %p102 = scmp.eq.s32.totalorder %s101, 0
    %s104 = sadd.s32 %s103, 1
    %s105 = scalar_select %p102, %s103, %s104
    %p108 = pneg %p102
    %p109 = scmp.eq.s32.totalorder %s9, 1
    %p110 = por %p108, %p109
    %p111 = scmp.ne.s32.totalorder %s103, %s106
    %p112 = scmp.eq.s32.totalorder %s9, 0
    %p113 = por %p111, %p112
    %p114 = scmp.ne.s32.totalorder %s103, %s106
    %p115 = scmp.eq.s32.totalorder %s14, 1
    %p116 = por %p114, %p115
    %p117 = scmp.ne.s32.totalorder %s106, %s107
    %p118 = scmp.eq.s32.totalorder %s14, 0
    %p119 = por %p117, %p118
    %p120 = scmp.ne.s32.totalorder %s106, %s107
    %p121 = scmp.eq.s32.totalorder %s15, 1
    %p122 = por %p120, %p121
    %p124 = scmp.ne.s32.totalorder %s107, %s123
    %p125 = scmp.eq.s32.totalorder %s15, 0
    %p126 = por %p124, %p125
    %p127 = scmp.le.s32.totalorder 1, %s9
    %p128 = scmp.lt.s32.totalorder %s9, 3
    %p129 = pnand %p127, %p128
    %p130 = pneg %p129
    // Predicated region
    $region9: #{encoder3_forward_pallas.7} parent=5 // pred_check
      _
    $region10: #{encoder3_forward_pallas.7} parent=5 // pred_check_branch
      %132 = sbr.rel (%p129) target = $region12
    $region11: #{encoder3_forward_pallas.7} parent=5 // pred_region
      %s133 = ssub.s32 %s9, 1
      // Predicated region
      $region13: #{encoder3_forward_pallas.7} parent=11 // pred_check
        %p134 = pneg %p70
      $region14: #{encoder3_forward_pallas.7} parent=11 // pred_check_branch
        %136 = sbr.rel (%p134) target = $region16
      $region15: #{encoder3_forward_pallas.7} parent=11 // pred_region
        _
      $region16: #{encoder3_forward_pallas.7} parent=11 // pred_fallthru
        _
      // Predicated region
      $region17: #{encoder3_forward_pallas.7} parent=11 // pred_check
        %p137 = pneg %p91
      $region18: #{encoder3_forward_pallas.7} parent=11 // pred_check_branch
        %139 = sbr.rel (%p137) target = $region20
      $region19: #{encoder3_forward_pallas.7} parent=11 // pred_region
        _
      $region20: #{encoder3_forward_pallas.7} parent=11 // pred_fallthru
        _
    $region12: #{encoder3_forward_pallas.7} parent=5 // pred_fallthru
      _
    %p140 = scmp.lt.s32.totalorder %s9, 2
    // Predicated region
    $region21: #{encoder3_forward_pallas.7} parent=5 // pred_check
      %p141 = pneg %p140
    $region22: #{encoder3_forward_pallas.7} parent=5 // pred_check_branch
      %143 = sbr.rel (%p141) target = $region24
    $region23: #{encoder3_forward_pallas.7} parent=5 // pred_region
      // Predicated region
      $region25: #{encoder3_forward_pallas.7} parent=23 // pred_check
        %p144 = pneg %p43
      $region26: #{encoder3_forward_pallas.7} parent=23 // pred_check_branch
        %146 = sbr.rel (%p144) target = $region28
      $region27: #{encoder3_forward_pallas.7} parent=23 // pred_region
        %p147 = scmp.lt.s32.totalorder %s16, 1
        %s148 = scalar_select %p147, %s16, 1
        %p149 = scmp.lt.s32.totalorder %s17, 0
        %s150 = scalar_select %p149, %s17, 0
        %s151 = smul.addr %s150, 14
        %s152 = smul.addr %s148, 14
        %s153 = sadd.s32 %s151, %s152
        %s154 = smul.addr %s153, 4
        %s155 = scalar_lea.vmem %s0, %s154
      $region28: #{encoder3_forward_pallas.7} parent=23 // pred_fallthru
        _
    $region24: #{encoder3_forward_pallas.7} parent=5 // pred_fallthru
      _
    %p156 = scmp.le.s32.totalorder 1, %s9
    %p157 = scmp.lt.s32.totalorder %s9, 3
    %p158 = pnand %p156, %p157
    %p159 = pneg %p158
    // Predicated region
    $region29: #{encoder3_forward_pallas.7} parent=5 // pred_check
      _
    $region30: #{encoder3_forward_pallas.7} parent=5 // pred_check_branch
      %161 = sbr.rel (%p158) target = $region32
    $region31: #{encoder3_forward_pallas.7} parent=5 // pred_region
      %s162 = ssub.s32 %s9, 1
      %p163 = scmp.lt.s32.totalorder %s18, 1
      %s164 = scalar_select %p163, %s18, 1
      %p165 = scmp.lt.s32.totalorder %s19, 0
      %s166 = scalar_select %p165, %s19, 0
      %s167 = smul.addr %s166, 14
      %s168 = smul.addr %s164, 14
      %s169 = sadd.s32 %s167, %s168
      %s170 = smul.addr %s169, 4
      %s171 = scalar_lea.vmem %s0, %s170
      %p172 = pneg %p49
      %p173 = pneg %p46
      %p174 = pneg %p70
      %p175 = pneg %p67
      %p176 = pneg %p91
      %p177 = pneg %p88
      %p178 = pneg %p119
      %p179 = pneg %p116
      %p180 = scmp.lt.s32.totalorder %s18, 1
      %s181 = scalar_select %p180, %s18, 1
      %p182 = scmp.lt.s32.totalorder %s19, 0
      %s183 = scalar_select %p182, %s19, 0
      %s184 = smul.addr %s183, 10
      %s185 = smul.addr %s181, 10
      %s186 = sadd.s32 %s184, %s185
      %s187 = smul.addr %s186, 4
      %s188 = scalar_lea.vmem %s3, %s187
      %p189 = scmp.lt.s32.totalorder %s18, 1
      %s190 = scalar_select %p189, %s18, 1
      %p191 = scmp.lt.s32.totalorder %s19, 0
      %s192 = scalar_select %p191, %s19, 0
      %s193 = smul.addr %s192, 14
      %s194 = smul.addr %s190, 14
      %s195 = sadd.s32 %s193, %s194
      %s196 = smul.addr %s195, 4
      %s197 = scalar_lea.vmem %s0, %s196
      %p198 = scmp.lt.s32.totalorder %s18, 1
      %s199 = scalar_select %p198, %s18, 1
      %p200 = scmp.lt.s32.totalorder %s19, 0
      %s201 = scalar_select %p200, %s19, 0
      %s202 = smul.addr %s201, 10
      %s203 = smul.addr %s199, 10
      %s204 = sadd.s32 %s202, %s203
      %s205 = smul.addr %s204, 4
      %s206 = scalar_lea.vmem %s3, %s205
      %v208 = vld [vmem:[%s197] sm:$0xf]
      %v209 = vld [vmem:[%s197 + $0x4] sm:$0xf]
      %v210 = vld [vmem:[%s197 + $0x8] sm:$0xf]
      %v211 = vld [vmem:[%s197 + $0xc] sm:$0xf]
      %v212 = vld [vmem:[%s197 + $0x10] sm:$0xf]
      %v213 = vld [vmem:[%s197 + $0x14] sm:$0xf]
      %v214 = vld [vmem:[%s197 + $0x18] sm:$0xf]
      %v215 = vld [vmem:[%s197 + $0x1c] sm:$0xf]
      %v216 = vld [vmem:[%s197 + $0x20] sm:$0xf]
      %v217 = vld [vmem:[%s197 + $0x24] sm:$0xf]
      %v218 = vld [vmem:[%s1] sm:$0xf]
      %v219 = vld [vmem:[%s1 + $0x4] sm:$0xf]
      %v220 = vld [vmem:[%s1 + $0x8] sm:$0xf]
      %v221 = vld [vmem:[%s1 + $0xc] sm:$0xf]
      %v222 = vld [vmem:[%s1 + $0x10] sm:$0xf]
      %v223 = vld [vmem:[%s1 + $0x14] sm:$0xf]
      %v224 = vld [vmem:[%s1 + $0x18] sm:$0xf]
      %v225 = vld [vmem:[%s1 + $0x1c] sm:$0xf]
      %v226 = vld [vmem:[%s197 + $0x28] sm:$0x1]
      %s227 = scalar_lea.vmem %s1, 32
      %v228 = vld [vmem:[%s227] sm:$0xf]
      %v229 = vld [vmem:[%s227 + $0x4] sm:$0xf]
      %v230 = vld [vmem:[%s227 + $0x8] sm:$0xf]
      %v231 = vld [vmem:[%s227 + $0xc] sm:$0xf]
      %v232 = vld [vmem:[%s227 + $0x10] sm:$0xf]
      %v233 = vld [vmem:[%s227 + $0x14] sm:$0xf]
      %v234 = vld [vmem:[%s227 + $0x18] sm:$0xf]
      %v235 = vld [vmem:[%s227 + $0x1c] sm:$0xf]
      %v247 = vunpack.c.l.b16 %v208
      %v248 = vunpack.c.l.b16 %v209
      %v249 = vunpack.c.l.b16 %v210
      %v250 = vunpack.c.l.b16 %v211
      %v251 = vunpack.c.l.b16 %v212
      %v252 = vunpack.c.l.b16 %v213
      %v253 = vunpack.c.l.b16 %v214
      %v254 = vunpack.c.l.b16 %v215
      %v255 = vunpack.c.l.b16 %v216
      %v256 = vunpack.c.l.b16 %v217
      %v257 = vunpack.c.l.b16 %v226
      %v258 = vpack.c.b16 %v248, %v247
      %v259 = vpack.c.b16 %v250, %v249
      %v260 = vpack.c.b16 %v252, %v251
      %v261 = vpack.c.b16 %v254, %v253
      %v262 = vpack.c.b16 %v256, %v255
      %v263 = vpack.c.b16 %v257, %v257
      %vm264 = vsmask.f32 7424
      %v266 = vshrl.u32 %v258, 16
      %v268 = vshll.u32 %v258, 16
      %v270 = vrot.slane %v268, 1
      %v271 = vor.u32 %v266, %v270
      %v273 = vshll.u32 %v259, 16
      %v275 = vrot.slane %v273, 1
      %v276 = vsel %vm264, %v271, %v275
      %v277 = vshrl.u32 %v259, 16
      %v279 = vor.u32 %v277, %v275
      %v281 = vshll.u32 %v260, 16
      %v283 = vrot.slane %v281, 1
      %v284 = vsel %vm264, %v279, %v283
      %v285 = vshrl.u32 %v260, 16
      %v287 = vor.u32 %v285, %v283
      %v289 = vshll.u32 %v261, 16
      %v291 = vrot.slane %v289, 1
      %v292 = vsel %vm264, %v287, %v291
      %v293 = vshrl.u32 %v261, 16
      %v295 = vor.u32 %v293, %v291
      %v297 = vshll.u32 %v262, 16
      %v299 = vrot.slane %v297, 1
      %v300 = vsel %vm264, %v295, %v299
      %v301 = vshrl.u32 %v262, 16
      %v303 = vor.u32 %v301, %v299
      %v305 = vshll.u32 %v263, 16
      %v307 = vrot.slane %v305, 1
      %v308 = vsel %vm264, %v303, %v307
      %v317 = vunpack.c.l.b16 %v228
      %v318 = vunpack.c.l.b16 %v229
      %v319 = vunpack.c.l.b16 %v230
      %v320 = vunpack.c.l.b16 %v231
      %v321 = vunpack.c.l.b16 %v232
      %v322 = vunpack.c.l.b16 %v233
      %v323 = vunpack.c.l.b16 %v234
      %v324 = vunpack.c.l.b16 %v235
      %v325 = vpack.c.b16 %v318, %v317
      %v326 = vpack.c.b16 %v320, %v319
      %v327 = vpack.c.b16 %v322, %v321
      %v328 = vpack.c.b16 %v324, %v323
      %vm333 = vcmask 523264
      %v335 = vsel %vm333, %v276, 0
      %v338 = vsel %vm333, %v284, 0
      %v341 = vsel %vm333, %v292, 0
      %v344 = vsel %vm333, %v300, 0
      %v347 = vsel %vm333, %v308, 0
      %349 = vmatprep.subr.bf16.mxu0 0
      %350 = vmatpush1.bf16.msra.mxu0 %v325
      %351 = vmatprep.subr.bf16.mxu0 0
      %352 = vmatpush1.bf16.msra.mxu0 %v326
      %353 = vmatprep.subr.bf16.mxu0 0
      %354 = vmatpush1.bf16.msra.mxu0 %v327
      %355 = vmatprep.subr.bf16.mxu0 0
      %356 = vmatpush1.bf16.msra.mxu0 %v328
      %357 = vmatprep.subr.bf16.mxu0 0
      %358 = vmatpush1.bf16.msra.mxu0 0
      %359 = vmatprep.subr.bf16.mxu0 0
      %360 = vmatpush1.bf16.msra.mxu0 0
      %361 = vmatprep.subr.bf16.mxu0 0
      %362 = vmatpush1.bf16.msra.mxu0 0
      %363 = vmatprep.subr.bf16.mxu0 0
      %364 = vmatpush1.bf16.msra.mxu0 0
      %365 = vmatprep.subr.bf16.mxu0 0
      %366 = vmatpush1.bf16.msra.mxu0 0
      %367 = vmatprep.subr.bf16.mxu0 0
      %368 = vmatpush1.bf16.msra.mxu0 0
      %369 = vmatprep.subr.bf16.mxu0 0
      %370 = vmatpush1.bf16.msra.mxu0 0
      %371 = vmatprep.subr.bf16.mxu0 0
      %372 = vmatpush1.bf16.msra.mxu0 0
      %373 = vmatprep.subr.bf16.mxu0 0
      %374 = vmatpush1.bf16.msra.mxu0 0
      %375 = vmatprep.subr.bf16.mxu0 0
      %376 = vmatpush1.bf16.msra.mxu0 0
      %377 = vmatprep.subr.bf16.mxu0 0
      %378 = vmatpush1.bf16.msra.mxu0 0
      %379 = vmatprep.subr.bf16.mxu0 0
      %380 = vmatpush1.bf16.msra.mxu0 0
      %381 = vmatprep.mubr.bf16.mxu0 0
      %382 = vmatmul.mubr.bf16.gmra.mrb[0].mxu0 %v335
      %v383 = vpop.f32.mrb[0].mxu0
      %v384 = vadd.f32 0.0, %v383
      %v385 = vpop.f32.mrb[0].mxu0
      %v386 = vpop.f32.mrb[0].mxu0
      %v387 = vadd.f32 0.0, %v386
      %v388 = vpop.f32.mrb[0].mxu0
      %389 = vmatprep.mubr.bf16.mxu0 0
      %390 = vmatmul.mubr.bf16.gmra.mrb[0].mxu0 %v338
      %v391 = vpop.f32.mrb[0].mxu0
      %v392 = vadd.f32 0.0, %v391
      %v393 = vpop.f32.mrb[0].mxu0
      %v394 = vpop.f32.mrb[0].mxu0
      %v395 = vadd.f32 0.0, %v394
      %v396 = vpop.f32.mrb[0].mxu0
      %397 = vmatprep.mubr.bf16.mxu0 0
      %398 = vmatmul.mubr.bf16.gmra.mrb[0].mxu0 %v341
      %v399 = vpop.f32.mrb[0].mxu0
      %v400 = vadd.f32 0.0, %v399
      %v401 = vpop.f32.mrb[0].mxu0
      %v402 = vpop.f32.mrb[0].mxu0
      %v403 = vadd.f32 0.0, %v402
      %v404 = vpop.f32.mrb[0].mxu0
      %405 = vmatprep.mubr.bf16.mxu0 0
      %406 = vmatmul.mubr.bf16.gmra.mrb[0].mxu0 %v344
      %v407 = vpop.f32.mrb[0].mxu0
      %v408 = vadd.f32 0.0, %v407
      %v409 = vpop.f32.mrb[0].mxu0
      %v410 = vpop.f32.mrb[0].mxu0
      %v411 = vadd.f32 0.0, %v410
      %v412 = vpop.f32.mrb[0].mxu0
      %413 = vmatprep.mubr.bf16.mxu0 0
      %414 = vmatmul.mubr.bf16.gmra.mrb[0].mxu0 %v347
      %v415 = vpop.f32.mrb[0].mxu0
      %v416 = vadd.f32 0.0, %v415
      %v417 = vpop.f32.mrb[0].mxu0
      %v418 = vpop.f32.mrb[0].mxu0
      %v419 = vadd.f32 0.0, %v418
      %v420 = vpop.f32.mrb[0].mxu0
      %421 = vdwg.mxu0
      %v430 = vunpack.c.l.b16 %v218
      %v431 = vunpack.c.l.b16 %v219
      %v432 = vunpack.c.l.b16 %v220
      %v433 = vunpack.c.l.b16 %v221
      %v434 = vunpack.c.l.b16 %v222
      %v435 = vunpack.c.l.b16 %v223
      %v436 = vunpack.c.l.b16 %v224
      %v437 = vunpack.c.l.b16 %v225
      %v438 = vpack.c.b16 %v431, %v430
      %v439 = vpack.c.b16 %v433, %v432
      %v440 = vpack.c.b16 %v435, %v434
      %v441 = vpack.c.b16 %v437, %v436
      %v446 = vsel %vm333, %v258, 0
      %v448 = vsel %vm333, %v259, 0
      %v450 = vsel %vm333, %v260, 0
      %v452 = vsel %vm333, %v261, 0
      %v454 = vsel %vm333, %v262, 0
      %456 = vmatprep.subr.bf16.mxu0 0
      %457 = vmatpush1.bf16.msra.mxu0 %v438
      %458 = vmatprep.subr.bf16.mxu0 0
      %459 = vmatpush1.bf16.msra.mxu0 %v439
      %460 = vmatprep.subr.bf16.mxu0 0
      %461 = vmatpush1.bf16.msra.mxu0 %v440
      %462 = vmatprep.subr.bf16.mxu0 0
      %463 = vmatpush1.bf16.msra.mxu0 %v441
      %464 = vmatprep.subr.bf16.mxu0 0
      %465 = vmatpush1.bf16.msra.mxu0 0
      %466 = vmatprep.subr.bf16.mxu0 0
      %467 = vmatpush1.bf16.msra.mxu0 0
      %468 = vmatprep.subr.bf16.mxu0 0
      %469 = vmatpush1.bf16.msra.mxu0 0
      %470 = vmatprep.subr.bf16.mxu0 0
      %471 = vmatpush1.bf16.msra.mxu0 0
      %472 = vmatprep.subr.bf16.mxu0 0
      %473 = vmatpush1.bf16.msra.mxu0 0
      %474 = vmatprep.subr.bf16.mxu0 0
      %475 = vmatpush1.bf16.msra.mxu0 0
      %476 = vmatprep.subr.bf16.mxu0 0
      %477 = vmatpush1.bf16.msra.mxu0 0
      %478 = vmatprep.subr.bf16.mxu0 0
      %479 = vmatpush1.bf16.msra.mxu0 0
      %480 = vmatprep.subr.bf16.mxu0 0
      %481 = vmatpush1.bf16.msra.mxu0 0
      %482 = vmatprep.subr.bf16.mxu0 0
      %483 = vmatpush1.bf16.msra.mxu0 0
      %484 = vmatprep.subr.bf16.mxu0 0
      %485 = vmatpush1.bf16.msra.mxu0 0
      %486 = vmatprep.subr.bf16.mxu0 0
      %487 = vmatpush1.bf16.msra.mxu0 0
      %488 = vmatprep.mubr.bf16.mxu0 0
      %489 = vmatmul.mubr.bf16.gmra.mrb[0].mxu0 %v446
      %v490 = vpop.f32.mrb[0].mxu0
      %v491 = vadd.f32 %v384, %v490
      %v492 = vpop.f32.mrb[0].mxu0
      %v493 = vpop.f32.mrb[0].mxu0
      %v494 = vadd.f32 %v387, %v493
      %v495 = vpop.f32.mrb[0].mxu0
      %496 = vmatprep.mubr.bf16.mxu0 0
      %497 = vmatmul.mubr.bf16.gmra.mrb[0].mxu0 %v448
      %v498 = vpop.f32.mrb[0].mxu0
      %v499 = vadd.f32 %v392, %v498
      %v500 = vpop.f32.mrb[0].mxu0
      %v501 = vpop.f32.mrb[0].mxu0
      %v502 = vadd.f32 %v395, %v501
      %v503 = vpop.f32.mrb[0].mxu0
      %504 = vmatprep.mubr.bf16.mxu0 0
      %505 = vmatmul.mubr.bf16.gmra.mrb[0].mxu0 %v450
      %v506 = vpop.f32.mrb[0].mxu0
      %v507 = vadd.f32 %v400, %v506
      %v508 = vpop.f32.mrb[0].mxu0
      %v509 = vpop.f32.mrb[0].mxu0
      %v510 = vadd.f32 %v403, %v509
      %v511 = vpop.f32.mrb[0].mxu0
      %512 = vmatprep.mubr.bf16.mxu0 0
      %513 = vmatmul.mubr.bf16.gmra.mrb[0].mxu0 %v452
      %v514 = vpop.f32.mrb[0].mxu0
      %v515 = vadd.f32 %v408, %v514
      %v516 = vpop.f32.mrb[0].mxu0
      %v517 = vpop.f32.mrb[0].mxu0
      %v518 = vadd.f32 %v411, %v517
      %v519 = vpop.f32.mrb[0].mxu0
      %520 = vmatprep.mubr.bf16.mxu0 0
      %521 = vmatmul.mubr.bf16.gmra.mrb[0].mxu0 %v454
      %v522 = vpop.f32.mrb[0].mxu0
      %v523 = vadd.f32 %v416, %v522
      %v524 = vpop.f32.mrb[0].mxu0
      %v525 = vpop.f32.mrb[0].mxu0
      %v526 = vadd.f32 %v419, %v525
      %v527 = vpop.f32.mrb[0].mxu0
      %528 = vdwg.mxu0
      %v529 = vld [vmem:[%s197] sm:$0xe]
      %s530 = scalar_lea.vmem %s1, 64
      %v531 = vld [vmem:[%s530] sm:$0xf]
      %v532 = vld [vmem:[%s530 + $0x4] sm:$0xf]
      %v533 = vld [vmem:[%s530 + $0x8] sm:$0xf]
      %v534 = vld [vmem:[%s530 + $0xc] sm:$0xf]
      %v535 = vld [vmem:[%s530 + $0x10] sm:$0xf]
      %v536 = vld [vmem:[%s530 + $0x14] sm:$0xf]
      %v537 = vld [vmem:[%s530 + $0x18] sm:$0xf]
      %v538 = vld [vmem:[%s530 + $0x1c] sm:$0xf]
      %v540 = vunpack.c.l.b16 %v529
      %v541 = vpack.c.b16 %v248, %v540
      %vm542 = vcmask 1046528
      %v543 = vrot.slane %v541, 1
      %v544 = vrot.slane %v259, 1
      %v545 = vsel %vm542, %v543, %v544
      %v546 = vrot.slane %v260, 1
      %v547 = vsel %vm542, %v544, %v546
      %v548 = vrot.slane %v261, 1
      %v549 = vsel %vm542, %v546, %v548
      %v550 = vrot.slane %v262, 1
      %v551 = vsel %vm542, %v548, %v550
      %v552 = vrot.slane %v263, 1
      %v553 = vsel %vm542, %v550, %v552
      %v562 = vunpack.c.l.b16 %v531
      %v563 = vunpack.c.l.b16 %v532
      %v564 = vunpack.c.l.b16 %v533
      %v565 = vunpack.c.l.b16 %v534
      %v566 = vunpack.c.l.b16 %v535
      %v567 = vunpack.c.l.b16 %v536
      %v568 = vunpack.c.l.b16 %v537
      %v569 = vunpack.c.l.b16 %v538
      %v570 = vpack.c.b16 %v563, %v562
      %v571 = vpack.c.b16 %v565, %v564
      %v572 = vpack.c.b16 %v567, %v566
      %v573 = vpack.c.b16 %v569, %v568
      %v579 = vsel %vm333, %v545, 0
      %v582 = vsel %vm333, %v547, 0
      %v585 = vsel %vm333, %v549, 0
      %v588 = vsel %vm333, %v551, 0
      %v591 = vsel %vm333, %v553, 0
      %593 = vmatprep.subr.bf16.mxu0 0
      %594 = vmatpush1.bf16.msra.mxu0 %v570
      %595 = vmatprep.subr.bf16.mxu0 0
      %596 = vmatpush1.bf16.msra.mxu0 %v571
      %597 = vmatprep.subr.bf16.mxu0 0
      %598 = vmatpush1.bf16.msra.mxu0 %v572
      %599 = vmatprep.subr.bf16.mxu0 0
      %600 = vmatpush1.bf16.msra.mxu0 %v573
      %601 = vmatprep.subr.bf16.mxu0 0
      %602 = vmatpush1.bf16.msra.mxu0 0
      %603 = vmatprep.subr.bf16.mxu0 0
      %604 = vmatpush1.bf16.msra.mxu0 0
      %605 = vmatprep.subr.bf16.mxu0 0
      %606 = vmatpush1.bf16.msra.mxu0 0
      %607 = vmatprep.subr.bf16.mxu0 0
      %608 = vmatpush1.bf16.msra.mxu0 0
      %609 = vmatprep.subr.bf16.mxu0 0
      %610 = vmatpush1.bf16.msra.mxu0 0
      %611 = vmatprep.subr.bf16.mxu0 0
      %612 = vmatpush1.bf16.msra.mxu0 0
      %613 = vmatprep.subr.bf16.mxu0 0
      %614 = vmatpush1.bf16.msra.mxu0 0
      %615 = vmatprep.subr.bf16.mxu0 0
      %616 = vmatpush1.bf16.msra.mxu0 0
      %617 = vmatprep.subr.bf16.mxu0 0
      %618 = vmatpush1.bf16.msra.mxu0 0
      %619 = vmatprep.subr.bf16.mxu0 0
      %620 = vmatpush1.bf16.msra.mxu0 0
      %621 = vmatprep.subr.bf16.mxu0 0
      %622 = vmatpush1.bf16.msra.mxu0 0
      %623 = vmatprep.subr.bf16.mxu0 0
      %624 = vmatpush1.bf16.msra.mxu0 0
      %625 = vmatprep.mubr.bf16.mxu0 0
      %626 = vmatmul.mubr.bf16.gmra.mrb[0].mxu0 %v579
      %v627 = vpop.f32.mrb[0].mxu0
      %v628 = vadd.f32 0.0, %v627
      %v629 = vpop.f32.mrb[0].mxu0
      %v630 = vpop.f32.mrb[0].mxu0
      %v631 = vadd.f32 0.0, %v630
      %v632 = vpop.f32.mrb[0].mxu0
      %633 = vmatprep.mubr.bf16.mxu0 0
      %634 = vmatmul.mubr.bf16.gmra.mrb[0].mxu0 %v582
      %v635 = vpop.f32.mrb[0].mxu0
      %v636 = vadd.f32 0.0, %v635
      %v637 = vpop.f32.mrb[0].mxu0
      %v638 = vpop.f32.mrb[0].mxu0
      %v639 = vadd.f32 0.0, %v638
      %v640 = vpop.f32.mrb[0].mxu0
      %641 = vmatprep.mubr.bf16.mxu0 0
      %642 = vmatmul.mubr.bf16.gmra.mrb[0].mxu0 %v585
      %v643 = vpop.f32.mrb[0].mxu0
      %v644 = vadd.f32 0.0, %v643
      %v645 = vpop.f32.mrb[0].mxu0
      %v646 = vpop.f32.mrb[0].mxu0
      %v647 = vadd.f32 0.0, %v646
      %v648 = vpop.f32.mrb[0].mxu0
      %649 = vmatprep.mubr.bf16.mxu0 0
      %650 = vmatmul.mubr.bf16.gmra.mrb[0].mxu0 %v588
      %v651 = vpop.f32.mrb[0].mxu0
      %v652 = vadd.f32 0.0, %v651
      %v653 = vpop.f32.mrb[0].mxu0
      %v654 = vpop.f32.mrb[0].mxu0
      %v655 = vadd.f32 0.0, %v654
      %v656 = vpop.f32.mrb[0].mxu0
      %657 = vmatprep.mubr.bf16.mxu0 0
      %658 = vmatmul.mubr.bf16.gmra.mrb[0].mxu0 %v591
      %v659 = vpop.f32.mrb[0].mxu0
      %v660 = vadd.f32 0.0, %v659
      %v661 = vpop.f32.mrb[0].mxu0
      %v662 = vpop.f32.mrb[0].mxu0
      %v663 = vadd.f32 0.0, %v662
      %v664 = vpop.f32.mrb[0].mxu0
      %665 = vdwg.mxu0
      %v666 = vadd.f32 %v491, %v628
      %v667 = vadd.f32 %v494, %v631
      %v668 = vadd.f32 %v499, %v636
      %v669 = vadd.f32 %v502, %v639
      %v670 = vadd.f32 %v507, %v644
      %v671 = vadd.f32 %v510, %v647
      %v672 = vadd.f32 %v515, %v652
      %v673 = vadd.f32 %v518, %v655
      %v674 = vadd.f32 %v523, %v660
      %v675 = vadd.f32 %v526, %v663
      %v676 = vld [vmem:[%s197 + $0x4] sm:$0xe]
      %v677 = vld [vmem:[%s197 + $0x8] sm:$0xf]
      %v678 = vld [vmem:[%s197 + $0xc] sm:$0xf]
      %v679 = vld [vmem:[%s197 + $0x10] sm:$0xf]
      %v680 = vld [vmem:[%s197 + $0x14] sm:$0xf]
      %v681 = vld [vmem:[%s197 + $0x18] sm:$0xf]
      %v682 = vld [vmem:[%s197 + $0x1c] sm:$0xf]
      %v683 = vld [vmem:[%s197 + $0x20] sm:$0xf]
      %v684 = vld [vmem:[%s197 + $0x24] sm:$0xf]
      %v685 = vld [vmem:[%s197 + $0x28] sm:$0xf]
      %v686 = vld [vmem:[%s197 + $0x2c] sm:$0x1]
      %s687 = scalar_lea.vmem %s1, 96
      %v688 = vld [vmem:[%s687] sm:$0xf]
      %v689 = vld [vmem:[%s687 + $0x4] sm:$0xf]
      %v690 = vld [vmem:[%s687 + $0x8] sm:$0xf]
      %v691 = vld [vmem:[%s687 + $0xc] sm:$0xf]
      %v692 = vld [vmem:[%s687 + $0x10] sm:$0xf]
      %v693 = vld [vmem:[%s687 + $0x14] sm:$0xf]
      %v694 = vld [vmem:[%s687 + $0x18] sm:$0xf]
      %v695 = vld [vmem:[%s687 + $0x1c] sm:$0xf]
      %v707 = vunpack.c.l.b16 %v676
      %v708 = vunpack.c.l.b16 %v677
      %v709 = vunpack.c.l.b16 %v678
      %v710 = vunpack.c.l.b16 %v679
      %v711 = vunpack.c.l.b16 %v680
      %v712 = vunpack.c.l.b16 %v681
      %v713 = vunpack.c.l.b16 %v682
      %v714 = vunpack.c.l.b16 %v683
      %v715 = vunpack.c.l.b16 %v684
      %v716 = vunpack.c.l.b16 %v685
      %v717 = vunpack.c.l.b16 %v686
      %v718 = vpack.c.b16 %v708, %v707
      %v719 = vpack.c.b16 %v710, %v709
      %v720 = vpack.c.b16 %v712, %v711
      %v721 = vpack.c.b16 %v714, %v713
      %v722 = vpack.c.b16 %v716, %v715
      %v723 = vpack.c.b16 %v717, %v717
      %v724 = vrot.slane %v718, 1
      %v725 = vrot.slane %v719, 1
      %v726 = vsel %vm542, %v724, %v725
      %v727 = vrot.slane %v720, 1
      %v728 = vsel %vm542, %v725, %v727
      %v729 = vrot.slane %v721, 1
      %v730 = vsel %vm542, %v727, %v729
      %v731 = vrot.slane %v722, 1
      %v732 = vsel %vm542, %v729, %v731
      %v733 = vrot.slane %v723, 1
      %v734 = vsel %vm542, %v731, %v733
      %v743 = vunpack.c.l.b16 %v688
      %v744 = vunpack.c.l.b16 %v689
      %v745 = vunpack.c.l.b16 %v690
      %v746 = vunpack.c.l.b16 %v691
      %v747 = vunpack.c.l.b16 %v692
      %v748 = vunpack.c.l.b16 %v693
      %v749 = vunpack.c.l.b16 %v694
      %v750 = vunpack.c.l.b16 %v695
      %v751 = vpack.c.b16 %v744, %v743
      %v752 = vpack.c.b16 %v746, %v745
      %v753 = vpack.c.b16 %v748, %v747
      %v754 = vpack.c.b16 %v750, %v749
      %v760 = vsel %vm333, %v726, 0
      %v763 = vsel %vm333, %v728, 0
      %v766 = vsel %vm333, %v730, 0
      %v769 = vsel %vm333, %v732, 0
      %v772 = vsel %vm333, %v734, 0
      %774 = vmatprep.subr.bf16.mxu0 0
      %775 = vmatpush1.bf16.msra.mxu0 %v751
      %776 = vmatprep.subr.bf16.mxu0 0
      %777 = vmatpush1.bf16.msra.mxu0 %v752
      %778 = vmatprep.subr.bf16.mxu0 0
      %779 = vmatpush1.bf16.msra.mxu0 %v753
      %780 = vmatprep.subr.bf16.mxu0 0
      %781 = vmatpush1.bf16.msra.mxu0 %v754
      %782 = vmatprep.subr.bf16.mxu0 0
      %783 = vmatpush1.bf16.msra.mxu0 0
      %784 = vmatprep.subr.bf16.mxu0 0
      %785 = vmatpush1.bf16.msra.mxu0 0
      %786 = vmatprep.subr.bf16.mxu0 0
      %787 = vmatpush1.bf16.msra.mxu0 0
      %788 = vmatprep.subr.bf16.mxu0 0
      %789 = vmatpush1.bf16.msra.mxu0 0
      %790 = vmatprep.subr.bf16.mxu0 0
      %791 = vmatpush1.bf16.msra.mxu0 0
      %792 = vmatprep.subr.bf16.mxu0 0
      %793 = vmatpush1.bf16.msra.mxu0 0
      %794 = vmatprep.subr.bf16.mxu0 0
      %795 = vmatpush1.bf16.msra.mxu0 0
      %796 = vmatprep.subr.bf16.mxu0 0
      %797 = vmatpush1.bf16.msra.mxu0 0
      %798 = vmatprep.subr.bf16.mxu0 0
      %799 = vmatpush1.bf16.msra.mxu0 0
      %800 = vmatprep.subr.bf16.mxu0 0
      %801 = vmatpush1.bf16.msra.mxu0 0
      %802 = vmatprep.subr.bf16.mxu0 0
      %803 = vmatpush1.bf16.msra.mxu0 0
      %804 = vmatprep.subr.bf16.mxu0 0
      %805 = vmatpush1.bf16.msra.mxu0 0
      %806 = vmatprep.mubr.bf16.mxu0 0
      %807 = vmatmul.mubr.bf16.gmra.mrb[0].mxu0 %v760
      %v808 = vpop.f32.mrb[0].mxu0
      %v809 = vadd.f32 0.0, %v808
      %v810 = vpop.f32.mrb[0].mxu0
      %v811 = vpop.f32.mrb[0].mxu0
      %v812 = vadd.f32 0.0, %v811
      %v813 = vpop.f32.mrb[0].mxu0
      %814 = vmatprep.mubr.bf16.mxu0 0
      %815 = vmatmul.mubr.bf16.gmra.mrb[0].mxu0 %v763
      %v816 = vpop.f32.mrb[0].mxu0
      %v817 = vadd.f32 0.0, %v816
      %v818 = vpop.f32.mrb[0].mxu0
      %v819 = vpop.f32.mrb[0].mxu0
      %v820 = vadd.f32 0.0, %v819
      %v821 = vpop.f32.mrb[0].mxu0
      %822 = vmatprep.mubr.bf16.mxu0 0
      %823 = vmatmul.mubr.bf16.gmra.mrb[0].mxu0 %v766
      %v824 = vpop.f32.mrb[0].mxu0
      %v825 = vadd.f32 0.0, %v824
      %v826 = vpop.f32.mrb[0].mxu0
      %v827 = vpop.f32.mrb[0].mxu0
      %v828 = vadd.f32 0.0, %v827
      %v829 = vpop.f32.mrb[0].mxu0
      %830 = vmatprep.mubr.bf16.mxu0 0
      %831 = vmatmul.mubr.bf16.gmra.mrb[0].mxu0 %v769
      %v832 = vpop.f32.mrb[0].mxu0
      %v833 = vadd.f32 0.0, %v832
      %v834 = vpop.f32.mrb[0].mxu0
      %v835 = vpop.f32.mrb[0].mxu0
      %v836 = vadd.f32 0.0, %v835
      %v837 = vpop.f32.mrb[0].mxu0
      %838 = vmatprep.mubr.bf16.mxu0 0
      %839 = vmatmul.mubr.bf16.gmra.mrb[0].mxu0 %v772
      %v840 = vpop.f32.mrb[0].mxu0
      %v841 = vadd.f32 0.0, %v840
      %v842 = vpop.f32.mrb[0].mxu0
      %v843 = vpop.f32.mrb[0].mxu0
      %v844 = vadd.f32 0.0, %v843
      %v845 = vpop.f32.mrb[0].mxu0
      %846 = vdwg.mxu0
      %v847 = vadd.f32 %v666, %v809
      %v848 = vadd.f32 %v667, %v812
      %v849 = vadd.f32 %v668, %v817
      %v850 = vadd.f32 %v669, %v820
      %v851 = vadd.f32 %v670, %v825
      %v852 = vadd.f32 %v671, %v828
      %v853 = vadd.f32 %v672, %v833
      %v854 = vadd.f32 %v673, %v836
      %v855 = vadd.f32 %v674, %v841
      %v856 = vadd.f32 %v675, %v844
      %v857 = vld [vmem:[%s197 + $0x2c] sm:$0x3]
      %s858 = scalar_lea.vmem %s1, 128
      %v859 = vld [vmem:[%s858] sm:$0xf]
      %v860 = vld [vmem:[%s858 + $0x4] sm:$0xf]
      %v861 = vld [vmem:[%s858 + $0x8] sm:$0xf]
      %v862 = vld [vmem:[%s858 + $0xc] sm:$0xf]
      %v863 = vld [vmem:[%s858 + $0x10] sm:$0xf]
      %v864 = vld [vmem:[%s858 + $0x14] sm:$0xf]
      %v865 = vld [vmem:[%s858 + $0x18] sm:$0xf]
      %v866 = vld [vmem:[%s858 + $0x1c] sm:$0xf]
      %v868 = vunpack.c.l.b16 %v857
      %v869 = vpack.c.b16 %v868, %v868
      %vm870 = vsmask.f32 6400
      %v872 = vshrl.u32 %v718, 16
      %v874 = vrot.slane %v872, 1
      %v875 = vshll.u32 %v718, 16
      %v877 = vrot.slane %v875, 2
      %v878 = vor.u32 %v874, %v877
      %v880 = vshrl.u32 %v719, 16
      %v882 = vrot.slane %v880, 1
      %v883 = vshll.u32 %v719, 16
      %v885 = vrot.slane %v883, 2
      %v886 = vor.u32 %v882, %v885
      %v887 = vsel %vm870, %v878, %v886
      %v889 = vshrl.u32 %v720, 16
      %v891 = vrot.slane %v889, 1
      %v892 = vshll.u32 %v720, 16
      %v894 = vrot.slane %v892, 2
      %v895 = vor.u32 %v891, %v894
      %v896 = vsel %vm870, %v886, %v895
      %v898 = vshrl.u32 %v721, 16
      %v900 = vrot.slane %v898, 1
      %v901 = vshll.u32 %v721, 16
      %v903 = vrot.slane %v901, 2
      %v904 = vor.u32 %v900, %v903
      %v905 = vsel %vm870, %v895, %v904
      %v907 = vshrl.u32 %v722, 16
      %v909 = vrot.slane %v907, 1
      %v910 = vshll.u32 %v722, 16
      %v912 = vrot.slane %v910, 2
      %v913 = vor.u32 %v909, %v912
      %v914 = vsel %vm870, %v904, %v913
      %v916 = vshrl.u32 %v869, 16
      %v918 = vrot.slane %v916, 1
      %v919 = vshll.u32 %v869, 16
      %v921 = vrot.slane %v919, 2
      %v922 = vor.u32 %v918, %v921
      %v923 = vsel %vm870, %v913, %v922
      %v932 = vunpack.c.l.b16 %v859
      %v933 = vunpack.c.l.b16 %v860
      %v934 = vunpack.c.l.b16 %v861
      %v935 = vunpack.c.l.b16 %v862
      %v936 = vunpack.c.l.b16 %v863
      %v937 = vunpack.c.l.b16 %v864
      %v938 = vunpack.c.l.b16 %v865
      %v939 = vunpack.c.l.b16 %v866
      %v940 = vpack.c.b16 %v933, %v932
      %v941 = vpack.c.b16 %v935, %v934
      %v942 = vpack.c.b16 %v937, %v936
      %v943 = vpack.c.b16 %v939, %v938
      %v949 = vsel %vm333, %v887, 0
      %v952 = vsel %vm333, %v896, 0
      %v955 = vsel %vm333, %v905, 0
      %v958 = vsel %vm333, %v914, 0
      %v961 = vsel %vm333, %v923, 0
      %963 = vmatprep.subr.bf16.mxu0 0
      %964 = vmatpush1.bf16.msra.mxu0 %v940
      %965 = vmatprep.subr.bf16.mxu0 0
      %966 = vmatpush1.bf16.msra.mxu0 %v941
      %967 = vmatprep.subr.bf16.mxu0 0
      %968 = vmatpush1.bf16.msra.mxu0 %v942
      %969 = vmatprep.subr.bf16.mxu0 0
      %970 = vmatpush1.bf16.msra.mxu0 %v943
      %971 = vmatprep.subr.bf16.mxu0 0
      %972 = vmatpush1.bf16.msra.mxu0 0
      %973 = vmatprep.subr.bf16.mxu0 0
      %974 = vmatpush1.bf16.msra.mxu0 0
      %975 = vmatprep.subr.bf16.mxu0 0
      %976 = vmatpush1.bf16.msra.mxu0 0
      %977 = vmatprep.subr.bf16.mxu0 0
      %978 = vmatpush1.bf16.msra.mxu0 0
      %979 = vmatprep.subr.bf16.mxu0 0
      %980 = vmatpush1.bf16.msra.mxu0 0
      %981 = vmatprep.subr.bf16.mxu0 0
      %982 = vmatpush1.bf16.msra.mxu0 0
      %983 = vmatprep.subr.bf16.mxu0 0
      %984 = vmatpush1.bf16.msra.mxu0 0
      %985 = vmatprep.subr.bf16.mxu0 0
      %986 = vmatpush1.bf16.msra.mxu0 0
      %987 = vmatprep.subr.bf16.mxu0 0
      %988 = vmatpush1.bf16.msra.mxu0 0
      %989 = vmatprep.subr.bf16.mxu0 0
      %990 = vmatpush1.bf16.msra.mxu0 0
      %991 = vmatprep.subr.bf16.mxu0 0
      %992 = vmatpush1.bf16.msra.mxu0 0
      %993 = vmatprep.subr.bf16.mxu0 0
      %994 = vmatpush1.bf16.msra.mxu0 0
      %995 = vmatprep.mubr.bf16.mxu0 0
      %996 = vmatmul.mubr.bf16.gmra.mrb[0].mxu0 %v949
      %v997 = vpop.f32.mrb[0].mxu0
      %v998 = vadd.f32 0.0, %v997
      %v999 = vpop.f32.mrb[0].mxu0
      %v1000 = vpop.f32.mrb[0].mxu0
      %v1001 = vadd.f32 0.0, %v1000
      %v1002 = vpop.f32.mrb[0].mxu0
      %1003 = vmatprep.mubr.bf16.mxu0 0
      %1004 = vmatmul.mubr.bf16.gmra.mrb[0].mxu0 %v952
      %v1005 = vpop.f32.mrb[0].mxu0
      %v1006 = vadd.f32 0.0, %v1005
      %v1007 = vpop.f32.mrb[0].mxu0
      %v1008 = vpop.f32.mrb[0].mxu0
      %v1009 = vadd.f32 0.0, %v1008
      %v1010 = vpop.f32.mrb[0].mxu0
      %1011 = vmatprep.mubr.bf16.mxu0 0
      %1012 = vmatmul.mubr.bf16.gmra.mrb[0].mxu0 %v955
      %v1013 = vpop.f32.mrb[0].mxu0
      %v1014 = vadd.f32 0.0, %v1013
      %v1015 = vpop.f32.mrb[0].mxu0
      %v1016 = vpop.f32.mrb[0].mxu0
      %v1017 = vadd.f32 0.0, %v1016
      %v1018 = vpop.f32.mrb[0].mxu0
      %1019 = vmatprep.mubr.bf16.mxu0 0
      %1020 = vmatmul.mubr.bf16.gmra.mrb[0].mxu0 %v958
      %v1021 = vpop.f32.mrb[0].mxu0
      %v1022 = vadd.f32 0.0, %v1021
      %v1023 = vpop.f32.mrb[0].mxu0
      %v1024 = vpop.f32.mrb[0].mxu0
      %v1025 = vadd.f32 0.0, %v1024
      %v1026 = vpop.f32.mrb[0].mxu0
      %1027 = vmatprep.mubr.bf16.mxu0 0
      %1028 = vmatmul.mubr.bf16.gmra.mrb[0].mxu0 %v961
      %v1029 = vpop.f32.mrb[0].mxu0
      %v1030 = vadd.f32 0.0, %v1029
      %v1031 = vpop.f32.mrb[0].mxu0
      %v1032 = vpop.f32.mrb[0].mxu0
      %v1033 = vadd.f32 0.0, %v1032
      %v1034 = vpop.f32.mrb[0].mxu0
      %1035 = vdwg.mxu0
      %v1036 = vadd.f32 %v847, %v998
      %v1037 = vadd.f32 %v848, %v1001
      %v1038 = vadd.f32 %v849, %v1006
      %v1039 = vadd.f32 %v850, %v1009
      %v1040 = vadd.f32 %v851, %v1014
      %v1041 = vadd.f32 %v852, %v1017
      %v1042 = vadd.f32 %v853, %v1022
      %v1043 = vadd.f32 %v854, %v1025
      %v1044 = vadd.f32 %v855, %v1030
      %v1045 = vadd.f32 %v856, %v1033
      %v1046 = vld [vmem:[%s197 + $0x4] sm:$0xc]
      %s1047 = scalar_lea.vmem %s1, 160
      %v1048 = vld [vmem:[%s1047] sm:$0xf]
      %v1049 = vld [vmem:[%s1047 + $0x4] sm:$0xf]
      %v1050 = vld [vmem:[%s1047 + $0x8] sm:$0xf]
      %v1051 = vld [vmem:[%s1047 + $0xc] sm:$0xf]
      %v1052 = vld [vmem:[%s1047 + $0x10] sm:$0xf]
      %v1053 = vld [vmem:[%s1047 + $0x14] sm:$0xf]
      %v1054 = vld [vmem:[%s1047 + $0x18] sm:$0xf]
      %v1055 = vld [vmem:[%s1047 + $0x1c] sm:$0xf]
      %v1057 = vunpack.c.l.b16 %v1046
      %v1058 = vpack.c.b16 %v708, %v1057
      %vm1059 = vcmask 1045504
      %v1060 = vrot.slane %v1058, 2
      %v1061 = vrot.slane %v719, 2
      %v1062 = vsel %vm1059, %v1060, %v1061
      %v1063 = vrot.slane %v720, 2
      %v1064 = vsel %vm1059, %v1061, %v1063
      %v1065 = vrot.slane %v721, 2
      %v1066 = vsel %vm1059, %v1063, %v1065
      %v1067 = vrot.slane %v722, 2
      %v1068 = vsel %vm1059, %v1065, %v1067
      %v1069 = vrot.slane %v869, 2
      %v1070 = vsel %vm1059, %v1067, %v1069
      %v1079 = vunpack.c.l.b16 %v1048
      %v1080 = vunpack.c.l.b16 %v1049
      %v1081 = vunpack.c.l.b16 %v1050
      %v1082 = vunpack.c.l.b16 %v1051
      %v1083 = vunpack.c.l.b16 %v1052
      %v1084 = vunpack.c.l.b16 %v1053
      %v1085 = vunpack.c.l.b16 %v1054
      %v1086 = vunpack.c.l.b16 %v1055
      %v1087 = vpack.c.b16 %v1080, %v1079
      %v1088 = vpack.c.b16 %v1082, %v1081
      %v1089 = vpack.c.b16 %v1084, %v1083
      %v1090 = vpack.c.b16 %v1086, %v1085
      %v1096 = vsel %vm333, %v1062, 0
      %v1099 = vsel %vm333, %v1064, 0
      %v1102 = vsel %vm333, %v1066, 0
      %v1105 = vsel %vm333, %v1068, 0
      %v1108 = vsel %vm333, %v1070, 0
      %1110 = vmatprep.subr.bf16.mxu0 0
      %1111 = vmatpush1.bf16.msra.mxu0 %v1087
      %1112 = vmatprep.subr.bf16.mxu0 0
      %1113 = vmatpush1.bf16.msra.mxu0 %v1088
      %1114 = vmatprep.subr.bf16.mxu0 0
      %1115 = vmatpush1.bf16.msra.mxu0 %v1089
      %1116 = vmatprep.subr.bf16.mxu0 0
      %1117 = vmatpush1.bf16.msra.mxu0 %v1090
      %1118 = vmatprep.subr.bf16.mxu0 0
      %1119 = vmatpush1.bf16.msra.mxu0 0
      %1120 = vmatprep.subr.bf16.mxu0 0
      %1121 = vmatpush1.bf16.msra.mxu0 0
      %1122 = vmatprep.subr.bf16.mxu0 0
      %1123 = vmatpush1.bf16.msra.mxu0 0
      %1124 = vmatprep.subr.bf16.mxu0 0
      %1125 = vmatpush1.bf16.msra.mxu0 0
      %1126 = vmatprep.subr.bf16.mxu0 0
      %1127 = vmatpush1.bf16.msra.mxu0 0
      %1128 = vmatprep.subr.bf16.mxu0 0
      %1129 = vmatpush1.bf16.msra.mxu0 0
      %1130 = vmatprep.subr.bf16.mxu0 0
      %1131 = vmatpush1.bf16.msra.mxu0 0
      %1132 = vmatprep.subr.bf16.mxu0 0
      %1133 = vmatpush1.bf16.msra.mxu0 0
      %1134 = vmatprep.subr.bf16.mxu0 0
      %1135 = vmatpush1.bf16.msra.mxu0 0
      %1136 = vmatprep.subr.bf16.mxu0 0
      %1137 = vmatpush1.bf16.msra.mxu0 0
      %1138 = vmatprep.subr.bf16.mxu0 0
      %1139 = vmatpush1.bf16.msra.mxu0 0
      %1140 = vmatprep.subr.bf16.mxu0 0
      %1141 = vmatpush1.bf16.msra.mxu0 0
      %1142 = vmatprep.mubr.bf16.mxu0 0
      %1143 = vmatmul.mubr.bf16.gmra.mrb[0].mxu0 %v1096
      %v1144 = vpop.f32.mrb[0].mxu0
      %v1145 = vadd.f32 0.0, %v1144
      %v1146 = vpop.f32.mrb[0].mxu0
      %v1147 = vpop.f32.mrb[0].mxu0
      %v1148 = vadd.f32 0.0, %v1147
      %v1149 = vpop.f32.mrb[0].mxu0
      %1150 = vmatprep.mubr.bf16.mxu0 0
      %1151 = vmatmul.mubr.bf16.gmra.mrb[0].mxu0 %v1099
      %v1152 = vpop.f32.mrb[0].mxu0
      %v1153 = vadd.f32 0.0, %v1152
      %v1154 = vpop.f32.mrb[0].mxu0
      %v1155 = vpop.f32.mrb[0].mxu0
      %v1156 = vadd.f32 0.0, %v1155
      %v1157 = vpop.f32.mrb[0].mxu0
      %1158 = vmatprep.mubr.bf16.mxu0 0
      %1159 = vmatmul.mubr.bf16.gmra.mrb[0].mxu0 %v1102
      %v1160 = vpop.f32.mrb[0].mxu0
      %v1161 = vadd.f32 0.0, %v1160
      %v1162 = vpop.f32.mrb[0].mxu0
      %v1163 = vpop.f32.mrb[0].mxu0
      %v1164 = vadd.f32 0.0, %v1163
      %v1165 = vpop.f32.mrb[0].mxu0
      %1166 = vmatprep.mubr.bf16.mxu0 0
      %1167 = vmatmul.mubr.bf16.gmra.mrb[0].mxu0 %v1105
      %v1168 = vpop.f32.mrb[0].mxu0
      %v1169 = vadd.f32 0.0, %v1168
      %v1170 = vpop.f32.mrb[0].mxu0
      %v1171 = vpop.f32.mrb[0].mxu0
      %v1172 = vadd.f32 0.0, %v1171
      %v1173 = vpop.f32.mrb[0].mxu0
      %1174 = vmatprep.mubr.bf16.mxu0 0
      %1175 = vmatmul.mubr.bf16.gmra.mrb[0].mxu0 %v1108
      %v1176 = vpop.f32.mrb[0].mxu0
      %v1177 = vadd.f32 0.0, %v1176
      %v1178 = vpop.f32.mrb[0].mxu0
      %v1179 = vpop.f32.mrb[0].mxu0
      %v1180 = vadd.f32 0.0, %v1179
      %v1181 = vpop.f32.mrb[0].mxu0
      %1182 = vdwg.mxu0
      %v1183 = vadd.f32 %v1036, %v1145
      %v1184 = vadd.f32 %v1037, %v1148
      %v1185 = vadd.f32 %v1038, %v1153
      %v1186 = vadd.f32 %v1039, %v1156
      %v1187 = vadd.f32 %v1040, %v1161
      %v1188 = vadd.f32 %v1041, %v1164
      %v1189 = vadd.f32 %v1042, %v1169
      %v1190 = vadd.f32 %v1043, %v1172
      %v1191 = vadd.f32 %v1044, %v1177
      %v1192 = vadd.f32 %v1045, %v1180
      %v1193 = vld [vmem:[%s197 + $0x8] sm:$0xc]
      %v1194 = vld [vmem:[%s197 + $0xc] sm:$0xf]
      %v1195 = vld [vmem:[%s197 + $0x10] sm:$0xf]
      %v1196 = vld [vmem:[%s197 + $0x14] sm:$0xf]
      %v1197 = vld [vmem:[%s197 + $0x18] sm:$0xf]
      %v1198 = vld [vmem:[%s197 + $0x1c] sm:$0xf]
      %v1199 = vld [vmem:[%s197 + $0x20] sm:$0xf]
      %v1200 = vld [vmem:[%s197 + $0x24] sm:$0xf]
      %v1201 = vld [vmem:[%s197 + $0x28] sm:$0xf]
      %v1202 = vld [vmem:[%s197 + $0x2c] sm:$0xf]
      %v1203 = vld [vmem:[%s197 + $0x30] sm:$0x3]
      %s1204 = scalar_lea.vmem %s1, 192
      %v1205 = vld [vmem:[%s1204] sm:$0xf]
      %v1206 = vld [vmem:[%s1204 + $0x4] sm:$0xf]
      %v1207 = vld [vmem:[%s1204 + $0x8] sm:$0xf]
      %v1208 = vld [vmem:[%s1204 + $0xc] sm:$0xf]
      %v1209 = vld [vmem:[%s1204 + $0x10] sm:$0xf]
      %v1210 = vld [vmem:[%s1204 + $0x14] sm:$0xf]
      %v1211 = vld [vmem:[%s1204 + $0x18] sm:$0xf]
      %v1212 = vld [vmem:[%s1204 + $0x1c] sm:$0xf]
      %v1224 = vunpack.c.l.b16 %v1193
      %v1225 = vunpack.c.l.b16 %v1194
      %v1226 = vunpack.c.l.b16 %v1195
      %v1227 = vunpack.c.l.b16 %v1196
      %v1228 = vunpack.c.l.b16 %v1197
      %v1229 = vunpack.c.l.b16 %v1198
      %v1230 = vunpack.c.l.b16 %v1199
      %v1231 = vunpack.c.l.b16 %v1200
      %v1232 = vunpack.c.l.b16 %v1201
      %v1233 = vunpack.c.l.b16 %v1202
      %v1234 = vunpack.c.l.b16 %v1203
      %v1235 = vpack.c.b16 %v1225, %v1224
      %v1236 = vpack.c.b16 %v1227, %v1226
      %v1237 = vpack.c.b16 %v1229, %v1228
      %v1238 = vpack.c.b16 %v1231, %v1230
      %v1239 = vpack.c.b16 %v1233, %v1232
      %v1240 = vpack.c.b16 %v1234, %v1234
      %v1241 = vrot.slane %v1235, 2
      %v1242 = vrot.slane %v1236, 2
      %v1243 = vsel %vm1059, %v1241, %v1242
      %v1244 = vrot.slane %v1237, 2
      %v1245 = vsel %vm1059, %v1242, %v1244
      %v1246 = vrot.slane %v1238, 2
      %v1247 = vsel %vm1059, %v1244, %v1246
      %v1248 = vrot.slane %v1239, 2
      %v1249 = vsel %vm1059, %v1246, %v1248
      %v1250 = vrot.slane %v1240, 2
      %v1251 = vsel %vm1059, %v1248, %v1250
      %v1260 = vunpack.c.l.b16 %v1205
      %v1261 = vunpack.c.l.b16 %v1206
      %v1262 = vunpack.c.l.b16 %v1207
      %v1263 = vunpack.c.l.b16 %v1208
      %v1264 = vunpack.c.l.b16 %v1209
      %v1265 = vunpack.c.l.b16 %v1210
      %v1266 = vunpack.c.l.b16 %v1211
      %v1267 = vunpack.c.l.b16 %v1212
      %v1268 = vpack.c.b16 %v1261, %v1260
      %v1269 = vpack.c.b16 %v1263, %v1262
      %v1270 = vpack.c.b16 %v1265, %v1264
      %v1271 = vpack.c.b16 %v1267, %v1266
      %v1277 = vsel %vm333, %v1243, 0
      %v1280 = vsel %vm333, %v1245, 0
      %v1283 = vsel %vm333, %v1247, 0
      %v1286 = vsel %vm333, %v1249, 0
      %v1289 = vsel %vm333, %v1251, 0
      %1291 = vmatprep.subr.bf16.mxu0 0
      %1292 = vmatpush1.bf16.msra.mxu0 %v1268
      %1293 = vmatprep.subr.bf16.mxu0 0
      %1294 = vmatpush1.bf16.msra.mxu0 %v1269
      %1295 = vmatprep.subr.bf16.mxu0 0
      %1296 = vmatpush1.bf16.msra.mxu0 %v1270
      %1297 = vmatprep.subr.bf16.mxu0 0
      %1298 = vmatpush1.bf16.msra.mxu0 %v1271
      %1299 = vmatprep.subr.bf16.mxu0 0
      %1300 = vmatpush1.bf16.msra.mxu0 0
      %1301 = vmatprep.subr.bf16.mxu0 0
      %1302 = vmatpush1.bf16.msra.mxu0 0
      %1303 = vmatprep.subr.bf16.mxu0 0
      %1304 = vmatpush1.bf16.msra.mxu0 0
      %1305 = vmatprep.subr.bf16.mxu0 0
      %1306 = vmatpush1.bf16.msra.mxu0 0
      %1307 = vmatprep.subr.bf16.mxu0 0
      %1308 = vmatpush1.bf16.msra.mxu0 0
      %1309 = vmatprep.subr.bf16.mxu0 0
      %1310 = vmatpush1.bf16.msra.mxu0 0
      %1311 = vmatprep.subr.bf16.mxu0 0
      %1312 = vmatpush1.bf16.msra.mxu0 0
      %1313 = vmatprep.subr.bf16.mxu0 0
      %1314 = vmatpush1.bf16.msra.mxu0 0
      %1315 = vmatprep.subr.bf16.mxu0 0
      %1316 = vmatpush1.bf16.msra.mxu0 0
      %1317 = vmatprep.subr.bf16.mxu0 0
      %1318 = vmatpush1.bf16.msra.mxu0 0
      %1319 = vmatprep.subr.bf16.mxu0 0
      %1320 = vmatpush1.bf16.msra.mxu0 0
      %1321 = vmatprep.subr.bf16.mxu0 0
      %1322 = vmatpush1.bf16.msra.mxu0 0
      %1323 = vmatprep.mubr.bf16.mxu0 0
      %1324 = vmatmul.mubr.bf16.gmra.mrb[0].mxu0 %v1277
      %v1325 = vpop.f32.mrb[0].mxu0
      %v1326 = vadd.f32 0.0, %v1325
      %v1327 = vpop.f32.mrb[0].mxu0
      %v1328 = vpop.f32.mrb[0].mxu0
      %v1329 = vadd.f32 0.0, %v1328
      %v1330 = vpop.f32.mrb[0].mxu0
      %1331 = vmatprep.mubr.bf16.mxu0 0
      %1332 = vmatmul.mubr.bf16.gmra.mrb[0].mxu0 %v1280
      %v1333 = vpop.f32.mrb[0].mxu0
      %v1334 = vadd.f32 0.0, %v1333
      %v1335 = vpop.f32.mrb[0].mxu0
      %v1336 = vpop.f32.mrb[0].mxu0
      %v1337 = vadd.f32 0.0, %v1336
      %v1338 = vpop.f32.mrb[0].mxu0
      %1339 = vmatprep.mubr.bf16.mxu0 0
      %1340 = vmatmul.mubr.bf16.gmra.mrb[0].mxu0 %v1283
      %v1341 = vpop.f32.mrb[0].mxu0
      %v1342 = vadd.f32 0.0, %v1341
      %v1343 = vpop.f32.mrb[0].mxu0
      %v1344 = vpop.f32.mrb[0].mxu0
      %v1345 = vadd.f32 0.0, %v1344
      %v1346 = vpop.f32.mrb[0].mxu0
      %1347 = vmatprep.mubr.bf16.mxu0 0
      %1348 = vmatmul.mubr.bf16.gmra.mrb[0].mxu0 %v1286
      %v1349 = vpop.f32.mrb[0].mxu0
      %v1350 = vadd.f32 0.0, %v1349
      %v1351 = vpop.f32.mrb[0].mxu0
      %v1352 = vpop.f32.mrb[0].mxu0
      %v1353 = vadd.f32 0.0, %v1352
      %v1354 = vpop.f32.mrb[0].mxu0
      %1355 = vmatprep.mubr.bf16.mxu0 0
      %1356 = vmatmul.mubr.bf16.gmra.mrb[0].mxu0 %v1289
      %v1357 = vpop.f32.mrb[0].mxu0
      %v1358 = vadd.f32 0.0, %v1357
      %v1359 = vpop.f32.mrb[0].mxu0
      %v1360 = vpop.f32.mrb[0].mxu0
      %v1361 = vadd.f32 0.0, %v1360
      %v1362 = vpop.f32.mrb[0].mxu0
      %1363 = vdwg.mxu0
      %v1364 = vadd.f32 %v1183, %v1326
      %v1365 = vadd.f32 %v1184, %v1329
      %v1366 = vadd.f32 %v1185, %v1334
      %v1367 = vadd.f32 %v1186, %v1337
      %v1368 = vadd.f32 %v1187, %v1342
      %v1369 = vadd.f32 %v1188, %v1345
      %v1370 = vadd.f32 %v1189, %v1350
      %v1371 = vadd.f32 %v1190, %v1353
      %v1372 = vadd.f32 %v1191, %v1358
      %v1373 = vadd.f32 %v1192, %v1361
      %v1374 = vld [vmem:[%s197 + $0x30] sm:$0x7]
      %s1375 = scalar_lea.vmem %s1, 224
      %v1376 = vld [vmem:[%s1375] sm:$0xf]
      %v1377 = vld [vmem:[%s1375 + $0x4] sm:$0xf]
      %v1378 = vld [vmem:[%s1375 + $0x8] sm:$0xf]
      %v1379 = vld [vmem:[%s1375 + $0xc] sm:$0xf]
      %v1380 = vld [vmem:[%s1375 + $0x10] sm:$0xf]
      %v1381 = vld [vmem:[%s1375 + $0x14] sm:$0xf]
      %v1382 = vld [vmem:[%s1375 + $0x18] sm:$0xf]
      %v1383 = vld [vmem:[%s1375 + $0x1c] sm:$0xf]
      %v1385 = vunpack.c.l.b16 %v1374
      %v1386 = vpack.c.b16 %v1385, %v1385
      %vm1387 = vsmask.f32 5376
      %v1389 = vshrl.u32 %v1235, 16
      %v1391 = vrot.slane %v1389, 2
      %v1392 = vshll.u32 %v1235, 16
      %v1394 = vrot.slane %v1392, 3
      %v1395 = vor.u32 %v1391, %v1394
      %v1397 = vshrl.u32 %v1236, 16
      %v1399 = vrot.slane %v1397, 2
      %v1400 = vshll.u32 %v1236, 16
      %v1402 = vrot.slane %v1400, 3
      %v1403 = vor.u32 %v1399, %v1402
      %v1404 = vsel %vm1387, %v1395, %v1403
      %v1406 = vshrl.u32 %v1237, 16
      %v1408 = vrot.slane %v1406, 2
      %v1409 = vshll.u32 %v1237, 16
      %v1411 = vrot.slane %v1409, 3
      %v1412 = vor.u32 %v1408, %v1411
      %v1413 = vsel %vm1387, %v1403, %v1412
      %v1415 = vshrl.u32 %v1238, 16
      %v1417 = vrot.slane %v1415, 2
      %v1418 = vshll.u32 %v1238, 16
      %v1420 = vrot.slane %v1418, 3
      %v1421 = vor.u32 %v1417, %v1420
      %v1422 = vsel %vm1387, %v1412, %v1421
      %v1424 = vshrl.u32 %v1239, 16
      %v1426 = vrot.slane %v1424, 2
      %v1427 = vshll.u32 %v1239, 16
      %v1429 = vrot.slane %v1427, 3
      %v1430 = vor.u32 %v1426, %v1429
      %v1431 = vsel %vm1387, %v1421, %v1430
      %v1433 = vshrl.u32 %v1386, 16
      %v1435 = vrot.slane %v1433, 2
      %v1436 = vshll.u32 %v1386, 16
      %v1438 = vrot.slane %v1436, 3
      %v1439 = vor.u32 %v1435, %v1438
      %v1440 = vsel %vm1387, %v1430, %v1439
      %v1449 = vunpack.c.l.b16 %v1376
      %v1450 = vunpack.c.l.b16 %v1377
      %v1451 = vunpack.c.l.b16 %v1378
      %v1452 = vunpack.c.l.b16 %v1379
      %v1453 = vunpack.c.l.b16 %v1380
      %v1454 = vunpack.c.l.b16 %v1381
      %v1455 = vunpack.c.l.b16 %v1382
      %v1456 = vunpack.c.l.b16 %v1383
      %v1457 = vpack.c.b16 %v1450, %v1449
      %v1458 = vpack.c.b16 %v1452, %v1451
      %v1459 = vpack.c.b16 %v1454, %v1453
      %v1460 = vpack.c.b16 %v1456, %v1455
      %v1466 = vsel %vm333, %v1404, 0
      %v1469 = vsel %vm333, %v1413, 0
      %v1472 = vsel %vm333, %v1422, 0
      %v1475 = vsel %vm333, %v1431, 0
      %v1478 = vsel %vm333, %v1440, 0
      %1480 = vmatprep.subr.bf16.mxu0 0
      %1481 = vmatpush1.bf16.msra.mxu0 %v1457
      %1482 = vmatprep.subr.bf16.mxu0 0
      %1483 = vmatpush1.bf16.msra.mxu0 %v1458
      %1484 = vmatprep.subr.bf16.mxu0 0
      %1485 = vmatpush1.bf16.msra.mxu0 %v1459
      %1486 = vmatprep.subr.bf16.mxu0 0
      %1487 = vmatpush1.bf16.msra.mxu0 %v1460
      %1488 = vmatprep.subr.bf16.mxu0 0
      %1489 = vmatpush1.bf16.msra.mxu0 0
      %1490 = vmatprep.subr.bf16.mxu0 0
      %1491 = vmatpush1.bf16.msra.mxu0 0
      %1492 = vmatprep.subr.bf16.mxu0 0
      %1493 = vmatpush1.bf16.msra.mxu0 0
      %1494 = vmatprep.subr.bf16.mxu0 0
      %1495 = vmatpush1.bf16.msra.mxu0 0
      %1496 = vmatprep.subr.bf16.mxu0 0
      %1497 = vmatpush1.bf16.msra.mxu0 0
      %1498 = vmatprep.subr.bf16.mxu0 0
      %1499 = vmatpush1.bf16.msra.mxu0 0
      %1500 = vmatprep.subr.bf16.mxu0 0
      %1501 = vmatpush1.bf16.msra.mxu0 0
      %1502 = vmatprep.subr.bf16.mxu0 0
      %1503 = vmatpush1.bf16.msra.mxu0 0
      %1504 = vmatprep.subr.bf16.mxu0 0
      %1505 = vmatpush1.bf16.msra.mxu0 0
      %1506 = vmatprep.subr.bf16.mxu0 0
      %1507 = vmatpush1.bf16.msra.mxu0 0
      %1508 = vmatprep.subr.bf16.mxu0 0
      %1509 = vmatpush1.bf16.msra.mxu0 0
      %1510 = vmatprep.subr.bf16.mxu0 0
      %1511 = vmatpush1.bf16.msra.mxu0 0
      %1512 = vmatprep.mubr.bf16.mxu0 0
      %1513 = vmatmul.mubr.bf16.gmra.mrb[0].mxu0 %v1466
      %v1514 = vpop.f32.mrb[0].mxu0
      %v1515 = vadd.f32 0.0, %v1514
      %v1516 = vpop.f32.mrb[0].mxu0
      %v1517 = vpop.f32.mrb[0].mxu0
      %v1518 = vadd.f32 0.0, %v1517
      %v1519 = vpop.f32.mrb[0].mxu0
      %1520 = vmatprep.mubr.bf16.mxu0 0
      %1521 = vmatmul.mubr.bf16.gmra.mrb[0].mxu0 %v1469
      %v1522 = vpop.f32.mrb[0].mxu0
      %v1523 = vadd.f32 0.0, %v1522
      %v1524 = vpop.f32.mrb[0].mxu0
      %v1525 = vpop.f32.mrb[0].mxu0
      %v1526 = vadd.f32 0.0, %v1525
      %v1527 = vpop.f32.mrb[0].mxu0
      %1528 = vmatprep.mubr.bf16.mxu0 0
      %1529 = vmatmul.mubr.bf16.gmra.mrb[0].mxu0 %v1472
      %v1530 = vpop.f32.mrb[0].mxu0
      %v1531 = vadd.f32 0.0, %v1530
      %v1532 = vpop.f32.mrb[0].mxu0
      %v1533 = vpop.f32.mrb[0].mxu0
      %v1534 = vadd.f32 0.0, %v1533
      %v1535 = vpop.f32.mrb[0].mxu0
      %1536 = vmatprep.mubr.bf16.mxu0 0
      %1537 = vmatmul.mubr.bf16.gmra.mrb[0].mxu0 %v1475
      %v1538 = vpop.f32.mrb[0].mxu0
      %v1539 = vadd.f32 0.0, %v1538
      %v1540 = vpop.f32.mrb[0].mxu0
      %v1541 = vpop.f32.mrb[0].mxu0
      %v1542 = vadd.f32 0.0, %v1541
      %v1543 = vpop.f32.mrb[0].mxu0
      %1544 = vmatprep.mubr.bf16.mxu0 0
      %1545 = vmatmul.mubr.bf16.gmra.mrb[0].mxu0 %v1478
      %v1546 = vpop.f32.mrb[0].mxu0
      %v1547 = vadd.f32 0.0, %v1546
      %v1548 = vpop.f32.mrb[0].mxu0
      %v1549 = vpop.f32.mrb[0].mxu0
      %v1550 = vadd.f32 0.0, %v1549
      %v1551 = vpop.f32.mrb[0].mxu0
      %1552 = vdwg.mxu0
      %v1553 = vadd.f32 %v1364, %v1515
      %v1554 = vadd.f32 %v1365, %v1518
      %v1555 = vadd.f32 %v1366, %v1523
      %v1556 = vadd.f32 %v1367, %v1526
      %v1557 = vadd.f32 %v1368, %v1531
      %v1558 = vadd.f32 %v1369, %v1534
      %v1559 = vadd.f32 %v1370, %v1539
      %v1560 = vadd.f32 %v1371, %v1542
      %v1561 = vadd.f32 %v1372, %v1547
      %v1562 = vadd.f32 %v1373, %v1550
      %v1563 = vld [vmem:[%s197 + $0x8] sm:$0x8]
      %s1564 = scalar_lea.vmem %s1, 256
      %v1565 = vld [vmem:[%s1564] sm:$0xf]
      %v1566 = vld [vmem:[%s1564 + $0x4] sm:$0xf]
      %v1567 = vld [vmem:[%s1564 + $0x8] sm:$0xf]
      %v1568 = vld [vmem:[%s1564 + $0xc] sm:$0xf]
      %v1569 = vld [vmem:[%s1564 + $0x10] sm:$0xf]
      %v1570 = vld [vmem:[%s1564 + $0x14] sm:$0xf]
      %v1571 = vld [vmem:[%s1564 + $0x18] sm:$0xf]
      %v1572 = vld [vmem:[%s1564 + $0x1c] sm:$0xf]
      %v1574 = vunpack.c.l.b16 %v1563
      %v1575 = vpack.c.b16 %v1225, %v1574
      %vm1576 = vcmask 1044480
      %v1577 = vrot.slane %v1575, 3
      %v1578 = vrot.slane %v1236, 3
      %v1579 = vsel %vm1576, %v1577, %v1578
      %v1580 = vrot.slane %v1237, 3
      %v1581 = vsel %vm1576, %v1578, %v1580
      %v1582 = vrot.slane %v1238, 3
      %v1583 = vsel %vm1576, %v1580, %v1582
      %v1584 = vrot.slane %v1239, 3
      %v1585 = vsel %vm1576, %v1582, %v1584
      %v1586 = vrot.slane %v1386, 3
      %v1587 = vsel %vm1576, %v1584, %v1586
      %v1596 = vunpack.c.l.b16 %v1565
      %v1597 = vunpack.c.l.b16 %v1566
      %v1598 = vunpack.c.l.b16 %v1567
      %v1599 = vunpack.c.l.b16 %v1568
      %v1600 = vunpack.c.l.b16 %v1569
      %v1601 = vunpack.c.l.b16 %v1570
      %v1602 = vunpack.c.l.b16 %v1571
      %v1603 = vunpack.c.l.b16 %v1572
      %v1604 = vpack.c.b16 %v1597, %v1596
      %v1605 = vpack.c.b16 %v1599, %v1598
      %v1606 = vpack.c.b16 %v1601, %v1600
      %v1607 = vpack.c.b16 %v1603, %v1602
      %v1613 = vsel %vm333, %v1579, 0
      %v1616 = vsel %vm333, %v1581, 0
      %v1619 = vsel %vm333, %v1583, 0
      %v1622 = vsel %vm333, %v1585, 0
      %v1625 = vsel %vm333, %v1587, 0
      %1627 = vmatprep.subr.bf16.mxu0 0
      %1628 = vmatpush1.bf16.msra.mxu0 %v1604
      %1629 = vmatprep.subr.bf16.mxu0 0
      %1630 = vmatpush1.bf16.msra.mxu0 %v1605
      %1631 = vmatprep.subr.bf16.mxu0 0
      %1632 = vmatpush1.bf16.msra.mxu0 %v1606
      %1633 = vmatprep.subr.bf16.mxu0 0
      %1634 = vmatpush1.bf16.msra.mxu0 %v1607
      %1635 = vmatprep.subr.bf16.mxu0 0
      %1636 = vmatpush1.bf16.msra.mxu0 0
      %1637 = vmatprep.subr.bf16.mxu0 0
      %1638 = vmatpush1.bf16.msra.mxu0 0
      %1639 = vmatprep.subr.bf16.mxu0 0
      %1640 = vmatpush1.bf16.msra.mxu0 0
      %1641 = vmatprep.subr.bf16.mxu0 0
      %1642 = vmatpush1.bf16.msra.mxu0 0
      %1643 = vmatprep.subr.bf16.mxu0 0
      %1644 = vmatpush1.bf16.msra.mxu0 0
      %1645 = vmatprep.subr.bf16.mxu0 0
      %1646 = vmatpush1.bf16.msra.mxu0 0
      %1647 = vmatprep.subr.bf16.mxu0 0
      %1648 = vmatpush1.bf16.msra.mxu0 0
      %1649 = vmatprep.subr.bf16.mxu0 0
      %1650 = vmatpush1.bf16.msra.mxu0 0
      %1651 = vmatprep.subr.bf16.mxu0 0
      %1652 = vmatpush1.bf16.msra.mxu0 0
      %1653 = vmatprep.subr.bf16.mxu0 0
      %1654 = vmatpush1.bf16.msra.mxu0 0
      %1655 = vmatprep.subr.bf16.mxu0 0
      %1656 = vmatpush1.bf16.msra.mxu0 0
      %1657 = vmatprep.subr.bf16.mxu0 0
      %1658 = vmatpush1.bf16.msra.mxu0 0
      %1659 = vmatprep.mubr.bf16.mxu0 0
      %1660 = vmatmul.mubr.bf16.gmra.mrb[0].mxu0 %v1613
      %v1661 = vpop.f32.mrb[0].mxu0
      %v1662 = vadd.f32 0.0, %v1661
      %v1663 = vpop.f32.mrb[0].mxu0
      %v1664 = vpop.f32.mrb[0].mxu0
      %v1665 = vadd.f32 0.0, %v1664
      %v1666 = vpop.f32.mrb[0].mxu0
      %1667 = vmatprep.mubr.bf16.mxu0 0
      %1668 = vmatmul.mubr.bf16.gmra.mrb[0].mxu0 %v1616
      %v1669 = vpop.f32.mrb[0].mxu0
      %v1670 = vadd.f32 0.0, %v1669
      %v1671 = vpop.f32.mrb[0].mxu0
      %v1672 = vpop.f32.mrb[0].mxu0
      %v1673 = vadd.f32 0.0, %v1672
      %v1674 = vpop.f32.mrb[0].mxu0
      %1675 = vmatprep.mubr.bf16.mxu0 0
      %1676 = vmatmul.mubr.bf16.gmra.mrb[0].mxu0 %v1619
      %v1677 = vpop.f32.mrb[0].mxu0
      %v1678 = vadd.f32 0.0, %v1677
      %v1679 = vpop.f32.mrb[0].mxu0
      %v1680 = vpop.f32.mrb[0].mxu0
      %v1681 = vadd.f32 0.0, %v1680
      %v1682 = vpop.f32.mrb[0].mxu0
      %1683 = vmatprep.mubr.bf16.mxu0 0
      %1684 = vmatmul.mubr.bf16.gmra.mrb[0].mxu0 %v1622
      %v1685 = vpop.f32.mrb[0].mxu0
      %v1686 = vadd.f32 0.0, %v1685
      %v1687 = vpop.f32.mrb[0].mxu0
      %v1688 = vpop.f32.mrb[0].mxu0
      %v1689 = vadd.f32 0.0, %v1688
      %v1690 = vpop.f32.mrb[0].mxu0
      %1691 = vmatprep.mubr.bf16.mxu0 0
      %1692 = vmatmul.mubr.bf16.gmra.mrb[0].mxu0 %v1625
      %v1693 = vpop.f32.mrb[0].mxu0
      %v1694 = vadd.f32 0.0, %v1693
      %v1695 = vpop.f32.mrb[0].mxu0
      %v1696 = vpop.f32.mrb[0].mxu0
      %v1697 = vadd.f32 0.0, %v1696
      %v1698 = vpop.f32.mrb[0].mxu0
      %1699 = vdwg.mxu0
      %v1700 = vadd.f32 %v1553, %v1662
      %v1701 = vadd.f32 %v1554, %v1665
      %v1702 = vadd.f32 %v1555, %v1670
      %v1703 = vadd.f32 %v1556, %v1673
      %v1704 = vadd.f32 %v1557, %v1678
      %v1705 = vadd.f32 %v1558, %v1681
      %v1706 = vadd.f32 %v1559, %v1686
      %v1707 = vadd.f32 %v1560, %v1689
      %v1708 = vadd.f32 %v1561, %v1694
      %v1709 = vadd.f32 %v1562, %v1697
      %v1710 = vld [vmem:[%s2] sm:$0x1]
      %v1712 = vlaneseq
      %v1713 = vshrl.u32 %v1712, 7
      %v1714 = vsub.s32 0, %v1713
      %v1715 = vrot.slane %v1710, %v1714
      %v1717 = vadd.f32 %v1700, %v1715
      %v1718 = vadd.f32 %v1701, %v1715
      %v1719 = vadd.f32 %v1702, %v1715
      %v1720 = vadd.f32 %v1703, %v1715
      %v1721 = vadd.f32 %v1704, %v1715
      %v1722 = vadd.f32 %v1705, %v1715
      %v1723 = vadd.f32 %v1706, %v1715
      %v1724 = vadd.f32 %v1707, %v1715
      %v1725 = vadd.f32 %v1708, %v1715
      %v1726 = vadd.f32 %v1709, %v1715
      %v1727 = vmax.f32 %v1717, 0.0
      %v1728 = vmax.f32 %v1718, 0.0
      %v1729 = vmax.f32 %v1719, 0.0
      %v1730 = vmax.f32 %v1720, 0.0
      %v1731 = vmax.f32 %v1721, 0.0
      %v1732 = vmax.f32 %v1722, 0.0
      %v1733 = vmax.f32 %v1723, 0.0
      %v1734 = vmax.f32 %v1724, 0.0
      %v1735 = vmax.f32 %v1725, 0.0
      %v1736 = vmax.f32 %v1726, 0.0
      %v1737 = vpack.c.bf16 %v1728, %v1727
      %v1738 = vpack.c.bf16 %v1730, %v1729
      %v1739 = vpack.c.bf16 %v1732, %v1731
      %v1740 = vpack.c.bf16 %v1734, %v1733
      %v1741 = vpack.c.bf16 %v1736, %v1735
      %v1747 = vunpack.c.l.b16 %v1737
      %v1748 = vunpack.c.h.b16 %v1737
      %v1749 = vunpack.c.l.b16 %v1738
      %v1750 = vunpack.c.h.b16 %v1738
      %v1751 = vunpack.c.l.b16 %v1739
      %v1752 = vunpack.c.h.b16 %v1739
      %v1753 = vunpack.c.l.b16 %v1740
      %v1754 = vunpack.c.h.b16 %v1740
      %v1755 = vunpack.c.l.b16 %v1741
      %v1756 = vunpack.c.h.b16 %v1741
      %v1757 = vpack.c.b16 %v1747, %v1747
      %v1758 = vpack.c.b16 %v1748, %v1748
      %v1759 = vpack.c.b16 %v1749, %v1749
      %v1760 = vpack.c.b16 %v1750, %v1750
      %v1761 = vpack.c.b16 %v1751, %v1751
      %v1762 = vpack.c.b16 %v1752, %v1752
      %v1763 = vpack.c.b16 %v1753, %v1753
      %v1764 = vpack.c.b16 %v1754, %v1754
      %v1765 = vpack.c.b16 %v1755, %v1755
      %v1766 = vpack.c.b16 %v1756, %v1756
      %1777 = vst [vmem:[%s206] sm:$0xf] %v1757
      %1778 = vst [vmem:[%s206 + $0x4] sm:$0xf] %v1758
      %1779 = vst [vmem:[%s206 + $0x8] sm:$0xf] %v1759
      %1780 = vst [vmem:[%s206 + $0xc] sm:$0xf] %v1760
      %1781 = vst [vmem:[%s206 + $0x10] sm:$0xf] %v1761
      %1782 = vst [vmem:[%s206 + $0x14] sm:$0xf] %v1762
      %1783 = vst [vmem:[%s206 + $0x18] sm:$0xf] %v1763
      %1784 = vst [vmem:[%s206 + $0x1c] sm:$0xf] %v1764
      %1785 = vst [vmem:[%s206 + $0x20] sm:$0xf] %v1765
      %1786 = vst [vmem:[%s206 + $0x24] sm:$0xf] %v1766
      %p1787 = scmp.lt.s32.totalorder %s18, 1
      %s1788 = scalar_select %p1787, %s18, 1
      %p1789 = scmp.lt.s32.totalorder %s19, 0
      %s1790 = scalar_select %p1789, %s19, 0
      %s1791 = smul.addr %s1790, 10
      %s1792 = smul.addr %s1788, 10
      %s1793 = sadd.s32 %s1791, %s1792
      %s1794 = smul.addr %s1793, 4
      %s1795 = scalar_lea.vmem %s3, %s1794
      // Predicated region
      $region33: #{encoder3_forward_pallas.7} parent=31 // pred_check
        %p1796 = pneg %p116
      $region34: #{encoder3_forward_pallas.7} parent=31 // pred_check_branch
        %1798 = sbr.rel (%p1796) target = $region36
      $region35: #{encoder3_forward_pallas.7} parent=31 // pred_region
        _
      $region36: #{encoder3_forward_pallas.7} parent=31 // pred_fallthru
        _
    $region32: #{encoder3_forward_pallas.7} parent=5 // pred_fallthru
      _
    %p1799 = scmp.le.s32.totalorder 2, %s9
    // Predicated region
    $region37: #{encoder3_forward_pallas.7} parent=5 // pred_check
      %p1800 = pneg %p1799
    $region38: #{encoder3_forward_pallas.7} parent=5 // pred_check_branch
      %1802 = sbr.rel (%p1800) target = $region40
    $region39: #{encoder3_forward_pallas.7} parent=5 // pred_region
      %s1803 = ssub.s32 %s9, 2
      // Predicated region
      $region41: #{encoder3_forward_pallas.7} parent=39 // pred_check
        %p1804 = pneg %p122
      $region42: #{encoder3_forward_pallas.7} parent=39 // pred_check_branch
        %1806 = sbr.rel (%p1804) target = $region44
      $region43: #{encoder3_forward_pallas.7} parent=39 // pred_region
        %p1807 = scmp.lt.s32.totalorder %s20, 1
        %s1808 = scalar_select %p1807, %s20, 1
        %p1809 = scmp.lt.s32.totalorder %s21, 0
        %s1810 = scalar_select %p1809, %s21, 0
        %s1811 = smul.addr %s1810, 10
        %s1812 = smul.addr %s1808, 10
        %s1813 = sadd.s32 %s1811, %s1812
        %s1814 = smul.addr %s1813, 4
        %s1815 = scalar_lea.vmem %s3, %s1814
      $region44: #{encoder3_forward_pallas.7} parent=39 // pred_fallthru
        _
    $region40: #{encoder3_forward_pallas.7} parent=5 // pred_fallthru
      _
  $region6: #{encoder3_forward_pallas.7} parent=0 // loop_footer
    %s13 = sadd.s32 1, %s9
  $region7: #{encoder3_forward_pallas.7} parent=0 // loop_footer_branch
    %8 = sbr.rel target = $region3
  $region8: #{encoder3_forward_pallas.7} parent=0 // loop_exit
    _

// kernel: encoder3_forward_pallas.6
$region0: #{encoder3_forward_pallas.6}
  #allocation0 [shape = 'u32[]', space=smem, size = 0x4, offset = 0x4, fixed_abs, tag = 'smem constant byte address 0x4 - core index']
  #allocation1 [shape = 'u32[144,128]{1,0:T(1,128)}', space=vmem, size = 0x12000, scoped, tag = 'internal scratch']
  %s0 = inlined_call_operand.vmem [shape: bf16[2,1,360,64], index: 0, kind: input, shape index: {}]
  %s1 = inlined_call_operand.vmem [shape: bf16[9,64,64], index: 1, kind: input, shape index: {}]
  %s2 = inlined_call_operand.vmem [shape: f32[1,64], index: 2, kind: input, shape index: {}]
  %s3 = inlined_call_operand.vmem [shape: bf16[2,1,288,64], index: 3, kind: output, shape index: {}]
  %s4 = sld [smem:[#allocation0]]
  $region45: #{encoder3_forward_pallas.6} parent=0
    _
  %s6 = ssub.s32 1, %s4
  %s7 = scalar_select 0, %s6, %s4
  loop: start=0, step=1, limit=4
  $region2: #{encoder3_forward_pallas.6} parent=0 // loop_pre_header
    _
  $region3: #{encoder3_forward_pallas.6} parent=0 // loop_header
    %s9 = sphi 0, %s13
    %p10 = scmp.ge.s32.totalorder %s9, 4
    %s16 = sphi 0, %s28
    %s17 = sphi 0, %s24
    %s18 = sphi 0, %s16
    %s19 = sphi 0, %s17
    %s20 = sphi 0, %s18
    %s21 = sphi 0, %s19
    %s33 = sphi 0, %s35
    %s36 = sphi 0, %s33
    %s37 = sphi 0, %s36
    %s53 = sphi 0, %s37
    %s57 = sphi 0, %s57
    %s59 = sphi 0, %s57
    %s60 = sphi 0, %s59
    %s74 = sphi 0, %s60
    %s78 = sphi 0, %s78
    %s80 = sphi 0, %s78
    %s81 = sphi 0, %s80
    %s95 = sphi 0, %s81
    %s103 = sphi 0, %s105
    %s106 = sphi 0, %s103
    %s107 = sphi 0, %s106
    %s123 = sphi 0, %s107
  $region4: #{encoder3_forward_pallas.6} parent=0 // loop_header_branch
    %12 = sbr.rel (%p10) target = $region8
  $region5: #{encoder3_forward_pallas.6} parent=0 // loop_body
    %s14 = ssub.s32 %s9, 1
    %s15 = ssub.s32 %s9, 2
    %s22 = sadd.s32 1, %s17
    %p23 = scmp.ge.s32.totalorder %s22, 1
    %s24 = scalar_select %p23, 0, %s22
    %s25 = sadd.s32 1, %s16
    %s26 = scalar_select %p23, %s25, %s16
    %p27 = scmp.ge.s32.totalorder %s26, 2
    %s28 = scalar_select %p27, 0, %s26
    %s29 = ssub.s32 %s16, %s28
    %s30 = ssub.s32 %s17, %s24
    %s31 = sor.u32 %s29, %s30
    %p32 = scmp.eq.s32.totalorder %s31, 0
    %s34 = sadd.s32 %s33, 1
    %s35 = scalar_select %p32, %s33, %s34
    %p38 = pneg %p32
    %p39 = scmp.eq.s32.totalorder %s9, 1
    %p40 = por %p38, %p39
    %p41 = scmp.ne.s32.totalorder %s33, %s36
    %p42 = scmp.eq.s32.totalorder %s9, 0
    %p43 = por %p41, %p42
    %p44 = scmp.ne.s32.totalorder %s33, %s36
    %p45 = scmp.eq.s32.totalorder %s14, 1
    %p46 = por %p44, %p45
    %p47 = scmp.ne.s32.totalorder %s36, %s37
    %p48 = scmp.eq.s32.totalorder %s14, 0
    %p49 = por %p47, %p48
    %p50 = scmp.ne.s32.totalorder %s36, %s37
    %p51 = scmp.eq.s32.totalorder %s15, 1
    %p52 = por %p50, %p51
    %p54 = scmp.ne.s32.totalorder %s37, %s53
    %p55 = scmp.eq.s32.totalorder %s15, 0
    %p56 = por %p54, %p55
    %s58 = sadd.s32 %s57, 1
    %p61 = scmp.eq.s32.totalorder %s9, 1
    %p62 = scmp.ne.s32.totalorder %s57, %s59
    %p63 = scmp.eq.s32.totalorder %s9, 0
    %p64 = por %p62, %p63
    %p65 = scmp.ne.s32.totalorder %s57, %s59
    %p66 = scmp.eq.s32.totalorder %s14, 1
    %p67 = por %p65, %p66
    %p68 = scmp.ne.s32.totalorder %s59, %s60
    %p69 = scmp.eq.s32.totalorder %s14, 0
    %p70 = por %p68, %p69
    %p71 = scmp.ne.s32.totalorder %s59, %s60
    %p72 = scmp.eq.s32.totalorder %s15, 1
    %p73 = por %p71, %p72
    %p75 = scmp.ne.s32.totalorder %s60, %s74
    %p76 = scmp.eq.s32.totalorder %s15, 0
    %p77 = por %p75, %p76
    %s79 = sadd.s32 %s78, 1
    %p82 = scmp.eq.s32.totalorder %s9, 1
    %p83 = scmp.ne.s32.totalorder %s78, %s80
    %p84 = scmp.eq.s32.totalorder %s9, 0
    %p85 = por %p83, %p84
    %p86 = scmp.ne.s32.totalorder %s78, %s80
    %p87 = scmp.eq.s32.totalorder %s14, 1
    %p88 = por %p86, %p87
    %p89 = scmp.ne.s32.totalorder %s80, %s81
    %p90 = scmp.eq.s32.totalorder %s14, 0
    %p91 = por %p89, %p90
    %p92 = scmp.ne.s32.totalorder %s80, %s81
    %p93 = scmp.eq.s32.totalorder %s15, 1
    %p94 = por %p92, %p93
    %p96 = scmp.ne.s32.totalorder %s81, %s95
    %p97 = scmp.eq.s32.totalorder %s15, 0
    %p98 = por %p96, %p97
    %s99 = ssub.s32 %s16, %s28
    %s100 = ssub.s32 %s17, %s24
    %s101 = sor.u32 %s99, %s100
    %p102 = scmp.eq.s32.totalorder %s101, 0
    %s104 = sadd.s32 %s103, 1
    %s105 = scalar_select %p102, %s103, %s104
    %p108 = pneg %p102
    %p109 = scmp.eq.s32.totalorder %s9, 1
    %p110 = por %p108, %p109
    %p111 = scmp.ne.s32.totalorder %s103, %s106
    %p112 = scmp.eq.s32.totalorder %s9, 0
    %p113 = por %p111, %p112
    %p114 = scmp.ne.s32.totalorder %s103, %s106
    %p115 = scmp.eq.s32.totalorder %s14, 1
    %p116 = por %p114, %p115
    %p117 = scmp.ne.s32.totalorder %s106, %s107
    %p118 = scmp.eq.s32.totalorder %s14, 0
    %p119 = por %p117, %p118
    %p120 = scmp.ne.s32.totalorder %s106, %s107
    %p121 = scmp.eq.s32.totalorder %s15, 1
    %p122 = por %p120, %p121
    %p124 = scmp.ne.s32.totalorder %s107, %s123
    %p125 = scmp.eq.s32.totalorder %s15, 0
    %p126 = por %p124, %p125
    %p127 = scmp.le.s32.totalorder 1, %s9
    %p128 = scmp.lt.s32.totalorder %s9, 3
    %p129 = pnand %p127, %p128
    %p130 = pneg %p129
    // Predicated region
    $region9: #{encoder3_forward_pallas.6} parent=5 // pred_check
      _
    $region10: #{encoder3_forward_pallas.6} parent=5 // pred_check_branch
      %132 = sbr.rel (%p129) target = $region12
    $region11: #{encoder3_forward_pallas.6} parent=5 // pred_region
      %s133 = ssub.s32 %s9, 1
      // Predicated region
      $region13: #{encoder3_forward_pallas.6} parent=11 // pred_check
        %p134 = pneg %p70
      $region14: #{encoder3_forward_pallas.6} parent=11 // pred_check_branch
        %136 = sbr.rel (%p134) target = $region16
      $region15: #{encoder3_forward_pallas.6} parent=11 // pred_region
        _
      $region16: #{encoder3_forward_pallas.6} parent=11 // pred_fallthru
        _
      // Predicated region
      $region17: #{encoder3_forward_pallas.6} parent=11 // pred_check
        %p137 = pneg %p91
      $region18: #{encoder3_forward_pallas.6} parent=11 // pred_check_branch
        %139 = sbr.rel (%p137) target = $region20
      $region19: #{encoder3_forward_pallas.6} parent=11 // pred_region
        _
      $region20: #{encoder3_forward_pallas.6} parent=11 // pred_fallthru
        _
    $region12: #{encoder3_forward_pallas.6} parent=5 // pred_fallthru
      _
    %p140 = scmp.lt.s32.totalorder %s9, 2
    // Predicated region
    $region21: #{encoder3_forward_pallas.6} parent=5 // pred_check
      %p141 = pneg %p140
    $region22: #{encoder3_forward_pallas.6} parent=5 // pred_check_branch
      %143 = sbr.rel (%p141) target = $region24
    $region23: #{encoder3_forward_pallas.6} parent=5 // pred_region
      // Predicated region
      $region25: #{encoder3_forward_pallas.6} parent=23 // pred_check
        %p144 = pneg %p43
      $region26: #{encoder3_forward_pallas.6} parent=23 // pred_check_branch
        %146 = sbr.rel (%p144) target = $region28
      $region27: #{encoder3_forward_pallas.6} parent=23 // pred_region
        %p147 = scmp.lt.s32.totalorder %s16, 1
        %s148 = scalar_select %p147, %s16, 1
        %p149 = scmp.lt.s32.totalorder %s17, 0
        %s150 = scalar_select %p149, %s17, 0
        %s151 = smul.addr %s150, 45
        %s152 = smul.addr %s148, 45
        %s153 = sadd.s32 %s151, %s152
        %s154 = smul.addr %s153, 4
        %s155 = scalar_lea.vmem %s0, %s154
      $region28: #{encoder3_forward_pallas.6} parent=23 // pred_fallthru
        _
    $region24: #{encoder3_forward_pallas.6} parent=5 // pred_fallthru
      _
    %p156 = scmp.le.s32.totalorder 1, %s9
    %p157 = scmp.lt.s32.totalorder %s9, 3
    %p158 = pnand %p156, %p157
    %p159 = pneg %p158
    // Predicated region
    $region29: #{encoder3_forward_pallas.6} parent=5 // pred_check
      _
    $region30: #{encoder3_forward_pallas.6} parent=5 // pred_check_branch
      %161 = sbr.rel (%p158) target = $region32
    $region31: #{encoder3_forward_pallas.6} parent=5 // pred_region
      %s162 = ssub.s32 %s9, 1
      %p163 = scmp.lt.s32.totalorder %s18, 1
      %s164 = scalar_select %p163, %s18, 1
      %p165 = scmp.lt.s32.totalorder %s19, 0
      %s166 = scalar_select %p165, %s19, 0
      %s167 = smul.addr %s166, 45
      %s168 = smul.addr %s164, 45
      %s169 = sadd.s32 %s167, %s168
      %s170 = smul.addr %s169, 4
      %s171 = scalar_lea.vmem %s0, %s170
      %p172 = pneg %p49
      %p173 = pneg %p46
      %p174 = pneg %p70
      %p175 = pneg %p67
      %p176 = pneg %p91
      %p177 = pneg %p88
      %p178 = pneg %p119
      %p179 = pneg %p116
      %p180 = scmp.lt.s32.totalorder %s18, 1
      %s181 = scalar_select %p180, %s18, 1
      %p182 = scmp.lt.s32.totalorder %s19, 0
      %s183 = scalar_select %p182, %s19, 0
      %s184 = smul.addr %s183, 36
      %s185 = smul.addr %s181, 36
      %s186 = sadd.s32 %s184, %s185
      %s187 = smul.addr %s186, 4
      %s188 = scalar_lea.vmem %s3, %s187
      %p189 = scmp.lt.s32.totalorder %s18, 1
      %s190 = scalar_select %p189, %s18, 1
      %p191 = scmp.lt.s32.totalorder %s19, 0
      %s192 = scalar_select %p191, %s19, 0
      %s193 = smul.addr %s192, 45
      %s194 = smul.addr %s190, 45
      %s195 = sadd.s32 %s193, %s194
      %s196 = smul.addr %s195, 4
      %s197 = scalar_lea.vmem %s0, %s196
      %p198 = scmp.lt.s32.totalorder %s18, 1
      %s199 = scalar_select %p198, %s18, 1
      %p200 = scmp.lt.s32.totalorder %s19, 0
      %s201 = scalar_select %p200, %s19, 0
      %s202 = smul.addr %s201, 36
      %s203 = smul.addr %s199, 36
      %s204 = sadd.s32 %s202, %s203
      %s205 = smul.addr %s204, 4
      %s206 = scalar_lea.vmem %s3, %s205
      %v208 = vld [vmem:[%s197] sm:$0xf]
      %v209 = vld [vmem:[%s197 + $0x4] sm:$0xf]
      %v210 = vld [vmem:[%s197 + $0x8] sm:$0xf]
      %v211 = vld [vmem:[%s197 + $0xc] sm:$0xf]
      %v212 = vld [vmem:[%s197 + $0x10] sm:$0xf]
      %v213 = vld [vmem:[%s197 + $0x14] sm:$0xf]
      %v214 = vld [vmem:[%s197 + $0x18] sm:$0xf]
      %v215 = vld [vmem:[%s197 + $0x1c] sm:$0xf]
      %v216 = vld [vmem:[%s197 + $0x20] sm:$0xf]
      %v217 = vld [vmem:[%s197 + $0x24] sm:$0xf]
      %v218 = vld [vmem:[%s197 + $0x28] sm:$0xf]
      %v219 = vld [vmem:[%s197 + $0x2c] sm:$0xf]
      %v220 = vld [vmem:[%s197 + $0x30] sm:$0xf]
      %v221 = vld [vmem:[%s197 + $0x34] sm:$0xf]
      %v222 = vld [vmem:[%s197 + $0x38] sm:$0xf]
      %v223 = vld [vmem:[%s197 + $0x3c] sm:$0xf]
      %v224 = vld [vmem:[%s197 + $0x40] sm:$0xf]
      %v225 = vld [vmem:[%s197 + $0x44] sm:$0xf]
      %v226 = vld [vmem:[%s197 + $0x48] sm:$0xf]
      %v227 = vld [vmem:[%s197 + $0x4c] sm:$0xf]
      %v228 = vld [vmem:[%s197 + $0x50] sm:$0xf]
      %v229 = vld [vmem:[%s197 + $0x54] sm:$0xf]
      %v230 = vld [vmem:[%s197 + $0x58] sm:$0xf]
      %v231 = vld [vmem:[%s197 + $0x5c] sm:$0xf]
      %v232 = vld [vmem:[%s197 + $0x60] sm:$0xf]
      %v233 = vld [vmem:[%s197 + $0x64] sm:$0xf]
      %v234 = vld [vmem:[%s197 + $0x68] sm:$0xf]
      %v235 = vld [vmem:[%s197 + $0x6c] sm:$0xf]
      %v236 = vld [vmem:[%s197 + $0x70] sm:$0xf]
      %v237 = vld [vmem:[%s197 + $0x74] sm:$0xf]
      %v238 = vld [vmem:[%s197 + $0x78] sm:$0xf]
      %v239 = vld [vmem:[%s197 + $0x7c] sm:$0xf]
      %v240 = vld [vmem:[%s197 + $0x80] sm:$0xf]
      %v241 = vld [vmem:[%s197 + $0x84] sm:$0xf]
      %v242 = vld [vmem:[%s197 + $0x88] sm:$0xf]
      %v243 = vld [vmem:[%s197 + $0x8c] sm:$0xf]
      %v244 = vld [vmem:[%s197 + $0x90] sm:$0xf]
      %v245 = vld [vmem:[%s197 + $0x94] sm:$0xf]
      %v246 = vld [vmem:[%s197 + $0x98] sm:$0x3]
      %v247 = vld [vmem:[%s1] sm:$0xf]
      %v248 = vld [vmem:[%s1 + $0x4] sm:$0xf]
      %v249 = vld [vmem:[%s1 + $0x8] sm:$0xf]
      %v250 = vld [vmem:[%s1 + $0xc] sm:$0xf]
      %v251 = vld [vmem:[%s1 + $0x10] sm:$0xf]
      %v252 = vld [vmem:[%s1 + $0x14] sm:$0xf]
      %v253 = vld [vmem:[%s1 + $0x18] sm:$0xf]
      %v254 = vld [vmem:[%s1 + $0x1c] sm:$0xf]
      %s255 = scalar_lea.vmem %s1, 32
      %v256 = vld [vmem:[%s255] sm:$0xf]
      %v257 = vld [vmem:[%s255 + $0x4] sm:$0xf]
      %v258 = vld [vmem:[%s255 + $0x8] sm:$0xf]
      %v259 = vld [vmem:[%s255 + $0xc] sm:$0xf]
      %v260 = vld [vmem:[%s255 + $0x10] sm:$0xf]
      %v261 = vld [vmem:[%s255 + $0x14] sm:$0xf]
      %v262 = vld [vmem:[%s255 + $0x18] sm:$0xf]
      %v263 = vld [vmem:[%s255 + $0x1c] sm:$0xf]
      %v303 = vunpack.c.l.b16 %v208
      %v304 = vunpack.c.l.b16 %v209
      %v305 = vunpack.c.l.b16 %v210
      %v306 = vunpack.c.l.b16 %v211
      %v307 = vunpack.c.l.b16 %v212
      %v308 = vunpack.c.l.b16 %v213
      %v309 = vunpack.c.l.b16 %v214
      %v310 = vunpack.c.l.b16 %v215
      %v311 = vunpack.c.l.b16 %v216
      %v312 = vunpack.c.l.b16 %v217
      %v313 = vunpack.c.l.b16 %v218
      %v314 = vunpack.c.l.b16 %v219
      %v315 = vunpack.c.l.b16 %v220
      %v316 = vunpack.c.l.b16 %v221
      %v317 = vunpack.c.l.b16 %v222
      %v318 = vunpack.c.l.b16 %v223
      %v319 = vunpack.c.l.b16 %v224
      %v320 = vunpack.c.l.b16 %v225
      %v321 = vunpack.c.l.b16 %v226
      %v322 = vunpack.c.l.b16 %v227
      %v323 = vunpack.c.l.b16 %v228
      %v324 = vunpack.c.l.b16 %v229
      %v325 = vunpack.c.l.b16 %v230
      %v326 = vunpack.c.l.b16 %v231
      %v327 = vunpack.c.l.b16 %v232
      %v328 = vunpack.c.l.b16 %v233
      %v329 = vunpack.c.l.b16 %v234
      %v330 = vunpack.c.l.b16 %v235
      %v331 = vunpack.c.l.b16 %v236
      %v332 = vunpack.c.l.b16 %v237
      %v333 = vunpack.c.l.b16 %v238
      %v334 = vunpack.c.l.b16 %v239
      %v335 = vunpack.c.l.b16 %v240
      %v336 = vunpack.c.l.b16 %v241
      %v337 = vunpack.c.l.b16 %v242
      %v338 = vunpack.c.l.b16 %v243
      %v339 = vunpack.c.l.b16 %v244
      %v340 = vunpack.c.l.b16 %v245
      %v341 = vunpack.c.l.b16 %v246
      %v342 = vpack.c.b16 %v304, %v303
      %v343 = vpack.c.b16 %v306, %v305
      %v344 = vpack.c.b16 %v308, %v307
      %v345 = vpack.c.b16 %v310, %v309
      %v346 = vpack.c.b16 %v312, %v311
      %v347 = vpack.c.b16 %v314, %v313
      %v348 = vpack.c.b16 %v316, %v315
      %v349 = vpack.c.b16 %v318, %v317
      %v350 = vpack.c.b16 %v320, %v319
      %v351 = vpack.c.b16 %v322, %v321
      %v352 = vpack.c.b16 %v324, %v323
      %v353 = vpack.c.b16 %v326, %v325
      %v354 = vpack.c.b16 %v328, %v327
      %v355 = vpack.c.b16 %v330, %v329
      %v356 = vpack.c.b16 %v332, %v331
      %v357 = vpack.c.b16 %v334, %v333
      %v358 = vpack.c.b16 %v336, %v335
      %v359 = vpack.c.b16 %v338, %v337
      %v360 = vpack.c.b16 %v340, %v339
      %v361 = vpack.c.b16 %v341, %v341
      %vm362 = vsmask.f32 7424
      %v364 = vshrl.u32 %v342, 16
      %v366 = vshll.u32 %v342, 16
      %v368 = vrot.slane %v366, 1
      %v369 = vor.u32 %v364, %v368
      %v371 = vshll.u32 %v343, 16
      %v373 = vrot.slane %v371, 1
      %v374 = vsel %vm362, %v369, %v373
      %v375 = vshrl.u32 %v343, 16
      %v377 = vor.u32 %v375, %v373
      %v379 = vshll.u32 %v344, 16
      %v381 = vrot.slane %v379, 1
      %v382 = vsel %vm362, %v377, %v381
      %v383 = vshrl.u32 %v344, 16
      %v385 = vor.u32 %v383, %v381
      %v387 = vshll.u32 %v345, 16
      %v389 = vrot.slane %v387, 1
      %v390 = vsel %vm362, %v385, %v389
      %v391 = vshrl.u32 %v345, 16
      %v393 = vor.u32 %v391, %v389
      %v395 = vshll.u32 %v346, 16
      %v397 = vrot.slane %v395, 1
      %v398 = vsel %vm362, %v393, %v397
      %v399 = vshrl.u32 %v346, 16
      %v401 = vor.u32 %v399, %v397
      %v403 = vshll.u32 %v347, 16
      %v405 = vrot.slane %v403, 1
      %v406 = vsel %vm362, %v401, %v405
      %v407 = vshrl.u32 %v347, 16
      %v409 = vor.u32 %v407, %v405
      %v411 = vshll.u32 %v348, 16
      %v413 = vrot.slane %v411, 1
      %v414 = vsel %vm362, %v409, %v413
      %v415 = vshrl.u32 %v348, 16
      %v417 = vor.u32 %v415, %v413
      %v419 = vshll.u32 %v349, 16
      %v421 = vrot.slane %v419, 1
      %v422 = vsel %vm362, %v417, %v421
      %v423 = vshrl.u32 %v349, 16
      %v425 = vor.u32 %v423, %v421
      %v427 = vshll.u32 %v350, 16
      %v429 = vrot.slane %v427, 1
      %v430 = vsel %vm362, %v425, %v429
      %v431 = vshrl.u32 %v350, 16
      %v433 = vor.u32 %v431, %v429
      %v435 = vshll.u32 %v351, 16
      %v437 = vrot.slane %v435, 1
      %v438 = vsel %vm362, %v433, %v437
      %v439 = vshrl.u32 %v351, 16
      %v441 = vor.u32 %v439, %v437
      %v443 = vshll.u32 %v352, 16
      %v445 = vrot.slane %v443, 1
      %v446 = vsel %vm362, %v441, %v445
      %v447 = vshrl.u32 %v352, 16
      %v449 = vor.u32 %v447, %v445
      %v451 = vshll.u32 %v353, 16
      %v453 = vrot.slane %v451, 1
      %v454 = vsel %vm362, %v449, %v453
      %v455 = vshrl.u32 %v353, 16
      %v457 = vor.u32 %v455, %v453
      %v459 = vshll.u32 %v354, 16
      %v461 = vrot.slane %v459, 1
      %v462 = vsel %vm362, %v457, %v461
      %v463 = vshrl.u32 %v354, 16
      %v465 = vor.u32 %v463, %v461
      %v467 = vshll.u32 %v355, 16
      %v469 = vrot.slane %v467, 1
      %v470 = vsel %vm362, %v465, %v469
      %v471 = vshrl.u32 %v355, 16
      %v473 = vor.u32 %v471, %v469
      %v475 = vshll.u32 %v356, 16
      %v477 = vrot.slane %v475, 1
      %v478 = vsel %vm362, %v473, %v477
      %v479 = vshrl.u32 %v356, 16
      %v481 = vor.u32 %v479, %v477
      %v483 = vshll.u32 %v357, 16
      %v485 = vrot.slane %v483, 1
      %v486 = vsel %vm362, %v481, %v485
      %v487 = vshrl.u32 %v357, 16
      %v489 = vor.u32 %v487, %v485
      %v491 = vshll.u32 %v358, 16
      %v493 = vrot.slane %v491, 1
      %v494 = vsel %vm362, %v489, %v493
      %v495 = vshrl.u32 %v358, 16
      %v497 = vor.u32 %v495, %v493
      %v499 = vshll.u32 %v359, 16
      %v501 = vrot.slane %v499, 1
      %v502 = vsel %vm362, %v497, %v501
      %v503 = vshrl.u32 %v359, 16
      %v505 = vor.u32 %v503, %v501
      %v507 = vshll.u32 %v360, 16
      %v509 = vrot.slane %v507, 1
      %v510 = vsel %vm362, %v505, %v509
      %v511 = vshrl.u32 %v360, 16
      %v513 = vor.u32 %v511, %v509
      %v515 = vshll.u32 %v361, 16
      %v517 = vrot.slane %v515, 1
      %v518 = vsel %vm362, %v513, %v517
      %v519 = vshrl.u32 %v361, 16
      %v521 = vor.u32 %v519, %v517
      %v530 = vunpack.c.l.b16 %v256
      %v531 = vunpack.c.l.b16 %v257
      %v532 = vunpack.c.l.b16 %v258
      %v533 = vunpack.c.l.b16 %v259
      %v534 = vunpack.c.l.b16 %v260
      %v535 = vunpack.c.l.b16 %v261
      %v536 = vunpack.c.l.b16 %v262
      %v537 = vunpack.c.l.b16 %v263
      %v538 = vpack.c.b16 %v531, %v530
      %v539 = vpack.c.b16 %v533, %v532
      %v540 = vpack.c.b16 %v535, %v534
      %v541 = vpack.c.b16 %v537, %v536
      %vm546 = vcmask 523264
      %v548 = vsel %vm546, %v374, 0
      %v551 = vsel %vm546, %v382, 0
      %v554 = vsel %vm546, %v390, 0
      %v557 = vsel %vm546, %v398, 0
      %v560 = vsel %vm546, %v406, 0
      %v563 = vsel %vm546, %v414, 0
      %v566 = vsel %vm546, %v422, 0
      %v569 = vsel %vm546, %v430, 0
      %v572 = vsel %vm546, %v438, 0
      %v575 = vsel %vm546, %v446, 0
      %v578 = vsel %vm546, %v454, 0
      %v581 = vsel %vm546, %v462, 0
      %v584 = vsel %vm546, %v470, 0
      %v587 = vsel %vm546, %v478, 0
      %v590 = vsel %vm546, %v486, 0
      %v593 = vsel %vm546, %v494, 0
      %v596 = vsel %vm546, %v502, 0
      %v599 = vsel %vm546, %v510, 0
      %v602 = vsel %vm546, %v518, 0
      %v605 = vsel %vm546, %v521, 0
      %607 = vmatprep.subr.bf16.mxu0 0
      %608 = vmatpush1.bf16.msra.mxu0 %v538
      %609 = vmatprep.subr.bf16.mxu0 0
      %610 = vmatpush1.bf16.msra.mxu0 %v539
      %611 = vmatprep.subr.bf16.mxu0 0
      %612 = vmatpush1.bf16.msra.mxu0 %v540
      %613 = vmatprep.subr.bf16.mxu0 0
      %614 = vmatpush1.bf16.msra.mxu0 %v541
      %615 = vmatprep.subr.bf16.mxu0 0
      %616 = vmatpush1.bf16.msra.mxu0 0
      %617 = vmatprep.subr.bf16.mxu0 0
      %618 = vmatpush1.bf16.msra.mxu0 0
      %619 = vmatprep.subr.bf16.mxu0 0
      %620 = vmatpush1.bf16.msra.mxu0 0
      %621 = vmatprep.subr.bf16.mxu0 0
      %622 = vmatpush1.bf16.msra.mxu0 0
      %623 = vmatprep.subr.bf16.mxu0 0
      %624 = vmatpush1.bf16.msra.mxu0 0
      %625 = vmatprep.subr.bf16.mxu0 0
      %626 = vmatpush1.bf16.msra.mxu0 0
      %627 = vmatprep.subr.bf16.mxu0 0
      %628 = vmatpush1.bf16.msra.mxu0 0
      %629 = vmatprep.subr.bf16.mxu0 0
      %630 = vmatpush1.bf16.msra.mxu0 0
      %631 = vmatprep.subr.bf16.mxu0 0
      %632 = vmatpush1.bf16.msra.mxu0 0
      %633 = vmatprep.subr.bf16.mxu0 0
      %634 = vmatpush1.bf16.msra.mxu0 0
      %635 = vmatprep.subr.bf16.mxu0 0
      %636 = vmatpush1.bf16.msra.mxu0 0
      %637 = vmatprep.subr.bf16.mxu0 0
      %638 = vmatpush1.bf16.msra.mxu0 0
      %639 = vmatprep.mubr.bf16.mxu0 0
      %640 = vmatmul.mubr.bf16.gmra.mrb[0].mxu0 %v548
      %v641 = vpop.f32.mrb[0].mxu0
      %v642 = vadd.f32 0.0, %v641
      %v643 = vpop.f32.mrb[0].mxu0
      %v644 = vpop.f32.mrb[0].mxu0
      %v645 = vadd.f32 0.0, %v644
      %v646 = vpop.f32.mrb[0].mxu0
      %647 = vmatprep.mubr.bf16.mxu0 0
      %648 = vmatmul.mubr.bf16.gmra.mrb[0].mxu0 %v551
      %v649 = vpop.f32.mrb[0].mxu0
      %v650 = vadd.f32 0.0, %v649
      %v651 = vpop.f32.mrb[0].mxu0
      %v652 = vpop.f32.mrb[0].mxu0
      %v653 = vadd.f32 0.0, %v652
      %v654 = vpop.f32.mrb[0].mxu0
      %655 = vmatprep.mubr.bf16.mxu0 0
      %656 = vmatmul.mubr.bf16.gmra.mrb[0].mxu0 %v554
      %v657 = vpop.f32.mrb[0].mxu0
      %v658 = vadd.f32 0.0, %v657
      %v659 = vpop.f32.mrb[0].mxu0
      %v660 = vpop.f32.mrb[0].mxu0
      %v661 = vadd.f32 0.0, %v660
      %v662 = vpop.f32.mrb[0].mxu0
      %663 = vmatprep.mubr.bf16.mxu0 0
      %664 = vmatmul.mubr.bf16.gmra.mrb[0].mxu0 %v557
      %v665 = vpop.f32.mrb[0].mxu0
      %v666 = vadd.f32 0.0, %v665
      %v667 = vpop.f32.mrb[0].mxu0
      %v668 = vpop.f32.mrb[0].mxu0
      %v669 = vadd.f32 0.0, %v668
      %v670 = vpop.f32.mrb[0].mxu0
      %671 = vmatprep.mubr.bf16.mxu0 0
      %672 = vmatmul.mubr.bf16.gmra.mrb[0].mxu0 %v560
      %v673 = vpop.f32.mrb[0].mxu0
      %v674 = vadd.f32 0.0, %v673
      %v675 = vpop.f32.mrb[0].mxu0
      %v676 = vpop.f32.mrb[0].mxu0
      %v677 = vadd.f32 0.0, %v676
      %v678 = vpop.f32.mrb[0].mxu0
      %679 = vmatprep.mubr.bf16.mxu0 0
      %680 = vmatmul.mubr.bf16.gmra.mrb[0].mxu0 %v563
      %v681 = vpop.f32.mrb[0].mxu0
      %v682 = vadd.f32 0.0, %v681
      %v683 = vpop.f32.mrb[0].mxu0
      %v684 = vpop.f32.mrb[0].mxu0
      %v685 = vadd.f32 0.0, %v684
      %v686 = vpop.f32.mrb[0].mxu0
      %687 = vmatprep.mubr.bf16.mxu0 0
      %688 = vmatmul.mubr.bf16.gmra.mrb[0].mxu0 %v566
      %v689 = vpop.f32.mrb[0].mxu0
      %v690 = vadd.f32 0.0, %v689
      %v691 = vpop.f32.mrb[0].mxu0
      %v692 = vpop.f32.mrb[0].mxu0
      %v693 = vadd.f32 0.0, %v692
      %v694 = vpop.f32.mrb[0].mxu0
      %695 = vmatprep.mubr.bf16.mxu0 0
      %696 = vmatmul.mubr.bf16.gmra.mrb[0].mxu0 %v569
      %v697 = vpop.f32.mrb[0].mxu0
      %v698 = vadd.f32 0.0, %v697
      %v699 = vpop.f32.mrb[0].mxu0
      %v700 = vpop.f32.mrb[0].mxu0
      %v701 = vadd.f32 0.0, %v700
      %v702 = vpop.f32.mrb[0].mxu0
      %703 = vmatprep.mubr.bf16.mxu0 0
      %704 = vmatmul.mubr.bf16.gmra.mrb[0].mxu0 %v572
      %v705 = vpop.f32.mrb[0].mxu0
      %v706 = vadd.f32 0.0, %v705
      %v707 = vpop.f32.mrb[0].mxu0
      %v708 = vpop.f32.mrb[0].mxu0
      %v709 = vadd.f32 0.0, %v708
      %v710 = vpop.f32.mrb[0].mxu0
      %711 = vmatprep.mubr.bf16.mxu0 0
      %712 = vmatmul.mubr.bf16.gmra.mrb[0].mxu0 %v575
      %v713 = vpop.f32.mrb[0].mxu0
      %v714 = vadd.f32 0.0, %v713
      %v715 = vpop.f32.mrb[0].mxu0
      %v716 = vpop.f32.mrb[0].mxu0
      %v717 = vadd.f32 0.0, %v716
      %v718 = vpop.f32.mrb[0].mxu0
      %719 = vmatprep.mubr.bf16.mxu0 0
      %720 = vmatmul.mubr.bf16.gmra.mrb[0].mxu0 %v578
      %v721 = vpop.f32.mrb[0].mxu0
      %v722 = vadd.f32 0.0, %v721
      %v723 = vpop.f32.mrb[0].mxu0
      %v724 = vpop.f32.mrb[0].mxu0
      %v725 = vadd.f32 0.0, %v724
      %v726 = vpop.f32.mrb[0].mxu0
      %727 = vmatprep.mubr.bf16.mxu0 0
      %728 = vmatmul.mubr.bf16.gmra.mrb[0].mxu0 %v581
      %v729 = vpop.f32.mrb[0].mxu0
      %v730 = vadd.f32 0.0, %v729
      %v731 = vpop.f32.mrb[0].mxu0
      %v732 = vpop.f32.mrb[0].mxu0
      %v733 = vadd.f32 0.0, %v732
      %v734 = vpop.f32.mrb[0].mxu0
      %735 = vmatprep.mubr.bf16.mxu0 0
      %736 = vmatmul.mubr.bf16.gmra.mrb[0].mxu0 %v584
      %v737 = vpop.f32.mrb[0].mxu0
      %v738 = vadd.f32 0.0, %v737
      %v739 = vpop.f32.mrb[0].mxu0
      %v740 = vpop.f32.mrb[0].mxu0
      %v741 = vadd.f32 0.0, %v740
      %v742 = vpop.f32.mrb[0].mxu0
      %743 = vmatprep.mubr.bf16.mxu0 0
      %744 = vmatmul.mubr.bf16.gmra.mrb[0].mxu0 %v587
      %v745 = vpop.f32.mrb[0].mxu0
      %v746 = vadd.f32 0.0, %v745
      %v747 = vpop.f32.mrb[0].mxu0
      %v748 = vpop.f32.mrb[0].mxu0
      %v749 = vadd.f32 0.0, %v748
      %v750 = vpop.f32.mrb[0].mxu0
      %751 = vmatprep.mubr.bf16.mxu0 0
      %752 = vmatmul.mubr.bf16.gmra.mrb[0].mxu0 %v590
      %v753 = vpop.f32.mrb[0].mxu0
      %v754 = vadd.f32 0.0, %v753
      %v755 = vpop.f32.mrb[0].mxu0
      %v756 = vpop.f32.mrb[0].mxu0
      %v757 = vadd.f32 0.0, %v756
      %v758 = vpop.f32.mrb[0].mxu0
      %759 = vmatprep.mubr.bf16.mxu0 0
      %760 = vmatmul.mubr.bf16.gmra.mrb[0].mxu0 %v593
      %v761 = vpop.f32.mrb[0].mxu0
      %v762 = vadd.f32 0.0, %v761
      %v763 = vpop.f32.mrb[0].mxu0
      %v764 = vpop.f32.mrb[0].mxu0
      %v765 = vadd.f32 0.0, %v764
      %v766 = vpop.f32.mrb[0].mxu0
      %767 = vmatprep.mubr.bf16.mxu0 0
      %768 = vmatmul.mubr.bf16.gmra.mrb[0].mxu0 %v596
      %v769 = vpop.f32.mrb[0].mxu0
      %v770 = vadd.f32 0.0, %v769
      %v771 = vpop.f32.mrb[0].mxu0
      %v772 = vpop.f32.mrb[0].mxu0
      %v773 = vadd.f32 0.0, %v772
      %v774 = vpop.f32.mrb[0].mxu0
      %775 = vmatprep.mubr.bf16.mxu0 0
      %776 = vmatmul.mubr.bf16.gmra.mrb[0].mxu0 %v599
      %v777 = vpop.f32.mrb[0].mxu0
      %v778 = vadd.f32 0.0, %v777
      %v779 = vpop.f32.mrb[0].mxu0
      %v780 = vpop.f32.mrb[0].mxu0
      %v781 = vadd.f32 0.0, %v780
      %v782 = vpop.f32.mrb[0].mxu0
      %783 = vmatprep.mubr.bf16.mxu0 0
      %784 = vmatmul.mubr.bf16.gmra.mrb[0].mxu0 %v602
      %v785 = vpop.f32.mrb[0].mxu0
      %v786 = vadd.f32 0.0, %v785
      %v787 = vpop.f32.mrb[0].mxu0
      %v788 = vpop.f32.mrb[0].mxu0
      %v789 = vadd.f32 0.0, %v788
      %v790 = vpop.f32.mrb[0].mxu0
      %791 = vmatprep.mubr.bf16.mxu0 0
      %792 = vmatmul.mubr.bf16.gmra.mrb[0].mxu0 %v605
      %v793 = vpop.f32.mrb[0].mxu0
      %v794 = vadd.f32 0.0, %v793
      %v795 = vpop.f32.mrb[0].mxu0
      %v796 = vpop.f32.mrb[0].mxu0
      %v797 = vpop.f32.mrb[0].mxu0
      %798 = vdwg.mxu0
      %v807 = vunpack.c.l.b16 %v247
      %v808 = vunpack.c.l.b16 %v248
      %v809 = vunpack.c.l.b16 %v249
      %v810 = vunpack.c.l.b16 %v250
      %v811 = vunpack.c.l.b16 %v251
      %v812 = vunpack.c.l.b16 %v252
      %v813 = vunpack.c.l.b16 %v253
      %v814 = vunpack.c.l.b16 %v254
      %v815 = vpack.c.b16 %v808, %v807
      %v816 = vpack.c.b16 %v810, %v809
      %v817 = vpack.c.b16 %v812, %v811
      %v818 = vpack.c.b16 %v814, %v813
      %v823 = vsel %vm546, %v342, 0
      %v825 = vsel %vm546, %v343, 0
      %v827 = vsel %vm546, %v344, 0
      %v829 = vsel %vm546, %v345, 0
      %v831 = vsel %vm546, %v346, 0
      %v833 = vsel %vm546, %v347, 0
      %v835 = vsel %vm546, %v348, 0
      %v837 = vsel %vm546, %v349, 0
      %v839 = vsel %vm546, %v350, 0
      %v841 = vsel %vm546, %v351, 0
      %v843 = vsel %vm546, %v352, 0
      %v845 = vsel %vm546, %v353, 0
      %v847 = vsel %vm546, %v354, 0
      %v849 = vsel %vm546, %v355, 0
      %v851 = vsel %vm546, %v356, 0
      %v853 = vsel %vm546, %v357, 0
      %v855 = vsel %vm546, %v358, 0
      %v857 = vsel %vm546, %v359, 0
      %v859 = vsel %vm546, %v360, 0
      %v861 = vsel %vm546, %v361, 0
      %863 = vmatprep.subr.bf16.mxu0 0
      %864 = vmatpush1.bf16.msra.mxu0 %v815
      %865 = vmatprep.subr.bf16.mxu0 0
      %866 = vmatpush1.bf16.msra.mxu0 %v816
      %867 = vmatprep.subr.bf16.mxu0 0
      %868 = vmatpush1.bf16.msra.mxu0 %v817
      %869 = vmatprep.subr.bf16.mxu0 0
      %870 = vmatpush1.bf16.msra.mxu0 %v818
      %871 = vmatprep.subr.bf16.mxu0 0
      %872 = vmatpush1.bf16.msra.mxu0 0
      %873 = vmatprep.subr.bf16.mxu0 0
      %874 = vmatpush1.bf16.msra.mxu0 0
      %875 = vmatprep.subr.bf16.mxu0 0
      %876 = vmatpush1.bf16.msra.mxu0 0
      %877 = vmatprep.subr.bf16.mxu0 0
      %878 = vmatpush1.bf16.msra.mxu0 0
      %879 = vmatprep.subr.bf16.mxu0 0
      %880 = vmatpush1.bf16.msra.mxu0 0
      %881 = vmatprep.subr.bf16.mxu0 0
      %882 = vmatpush1.bf16.msra.mxu0 0
      %883 = vmatprep.subr.bf16.mxu0 0
      %884 = vmatpush1.bf16.msra.mxu0 0
      %885 = vmatprep.subr.bf16.mxu0 0
      %886 = vmatpush1.bf16.msra.mxu0 0
      %887 = vmatprep.subr.bf16.mxu0 0
      %888 = vmatpush1.bf16.msra.mxu0 0
      %889 = vmatprep.subr.bf16.mxu0 0
      %890 = vmatpush1.bf16.msra.mxu0 0
      %891 = vmatprep.subr.bf16.mxu0 0
      %892 = vmatpush1.bf16.msra.mxu0 0
      %893 = vmatprep.subr.bf16.mxu0 0
      %894 = vmatpush1.bf16.msra.mxu0 0
      %895 = vmatprep.mubr.bf16.mxu0 0
      %896 = vmatmul.mubr.bf16.gmra.mrb[0].mxu0 %v823
      %v897 = vpop.f32.mrb[0].mxu0
      %v898 = vadd.f32 %v642, %v897
      %v899 = vpop.f32.mrb[0].mxu0
      %v900 = vpop.f32.mrb[0].mxu0
      %v901 = vadd.f32 %v645, %v900
      %v902 = vpop.f32.mrb[0].mxu0
      %903 = vmatprep.mubr.bf16.mxu0 0
      %904 = vmatmul.mubr.bf16.gmra.mrb[0].mxu0 %v825
      %v905 = vpop.f32.mrb[0].mxu0
      %v906 = vadd.f32 %v650, %v905
      %v907 = vpop.f32.mrb[0].mxu0
      %v908 = vpop.f32.mrb[0].mxu0
      %v909 = vadd.f32 %v653, %v908
      %v910 = vpop.f32.mrb[0].mxu0
      %911 = vmatprep.mubr.bf16.mxu0 0
      %912 = vmatmul.mubr.bf16.gmra.mrb[0].mxu0 %v827
      %v913 = vpop.f32.mrb[0].mxu0
      %v914 = vadd.f32 %v658, %v913
      %v915 = vpop.f32.mrb[0].mxu0
      %v916 = vpop.f32.mrb[0].mxu0
      %v917 = vadd.f32 %v661, %v916
      %v918 = vpop.f32.mrb[0].mxu0
      %919 = vmatprep.mubr.bf16.mxu0 0
      %920 = vmatmul.mubr.bf16.gmra.mrb[0].mxu0 %v829
      %v921 = vpop.f32.mrb[0].mxu0
      %v922 = vadd.f32 %v666, %v921
      %v923 = vpop.f32.mrb[0].mxu0
      %v924 = vpop.f32.mrb[0].mxu0
      %v925 = vadd.f32 %v669, %v924
      %v926 = vpop.f32.mrb[0].mxu0
      %927 = vmatprep.mubr.bf16.mxu0 0
      %928 = vmatmul.mubr.bf16.gmra.mrb[0].mxu0 %v831
      %v929 = vpop.f32.mrb[0].mxu0
      %v930 = vadd.f32 %v674, %v929
      %v931 = vpop.f32.mrb[0].mxu0
      %v932 = vpop.f32.mrb[0].mxu0
      %v933 = vadd.f32 %v677, %v932
      %v934 = vpop.f32.mrb[0].mxu0
      %935 = vmatprep.mubr.bf16.mxu0 0
      %936 = vmatmul.mubr.bf16.gmra.mrb[0].mxu0 %v833
      %v937 = vpop.f32.mrb[0].mxu0
      %v938 = vadd.f32 %v682, %v937
      %v939 = vpop.f32.mrb[0].mxu0
      %v940 = vpop.f32.mrb[0].mxu0
      %v941 = vadd.f32 %v685, %v940
      %v942 = vpop.f32.mrb[0].mxu0
      %943 = vmatprep.mubr.bf16.mxu0 0
      %944 = vmatmul.mubr.bf16.gmra.mrb[0].mxu0 %v835
      %v945 = vpop.f32.mrb[0].mxu0
      %v946 = vadd.f32 %v690, %v945
      %v947 = vpop.f32.mrb[0].mxu0
      %v948 = vpop.f32.mrb[0].mxu0
      %v949 = vadd.f32 %v693, %v948
      %v950 = vpop.f32.mrb[0].mxu0
      %951 = vmatprep.mubr.bf16.mxu0 0
      %952 = vmatmul.mubr.bf16.gmra.mrb[0].mxu0 %v837
      %v953 = vpop.f32.mrb[0].mxu0
      %v954 = vadd.f32 %v698, %v953
      %v955 = vpop.f32.mrb[0].mxu0
      %v956 = vpop.f32.mrb[0].mxu0
      %v957 = vadd.f32 %v701, %v956
      %v958 = vpop.f32.mrb[0].mxu0
      %959 = vmatprep.mubr.bf16.mxu0 0
      %960 = vmatmul.mubr.bf16.gmra.mrb[0].mxu0 %v839
      %v961 = vpop.f32.mrb[0].mxu0
      %v962 = vadd.f32 %v706, %v961
      %v963 = vpop.f32.mrb[0].mxu0
      %v964 = vpop.f32.mrb[0].mxu0
      %v965 = vadd.f32 %v709, %v964
      %v966 = vpop.f32.mrb[0].mxu0
      %967 = vmatprep.mubr.bf16.mxu0 0
      %968 = vmatmul.mubr.bf16.gmra.mrb[0].mxu0 %v841
      %v969 = vpop.f32.mrb[0].mxu0
      %v970 = vadd.f32 %v714, %v969
      %v971 = vpop.f32.mrb[0].mxu0
      %v972 = vpop.f32.mrb[0].mxu0
      %v973 = vadd.f32 %v717, %v972
      %v974 = vpop.f32.mrb[0].mxu0
      %975 = vmatprep.mubr.bf16.mxu0 0
      %976 = vmatmul.mubr.bf16.gmra.mrb[0].mxu0 %v843
      %v977 = vpop.f32.mrb[0].mxu0
      %v978 = vadd.f32 %v722, %v977
      %v979 = vpop.f32.mrb[0].mxu0
      %v980 = vpop.f32.mrb[0].mxu0
      %v981 = vadd.f32 %v725, %v980
      %v982 = vpop.f32.mrb[0].mxu0
      %983 = vmatprep.mubr.bf16.mxu0 0
      %984 = vmatmul.mubr.bf16.gmra.mrb[0].mxu0 %v845
      %v985 = vpop.f32.mrb[0].mxu0
      %v986 = vadd.f32 %v730, %v985
      %v987 = vpop.f32.mrb[0].mxu0
      %v988 = vpop.f32.mrb[0].mxu0
      %v989 = vadd.f32 %v733, %v988
      %v990 = vpop.f32.mrb[0].mxu0
      %991 = vmatprep.mubr.bf16.mxu0 0
      %992 = vmatmul.mubr.bf16.gmra.mrb[0].mxu0 %v847
      %v993 = vpop.f32.mrb[0].mxu0
      %v994 = vadd.f32 %v738, %v993
      %v995 = vpop.f32.mrb[0].mxu0
      %v996 = vpop.f32.mrb[0].mxu0
      %v997 = vadd.f32 %v741, %v996
      %v998 = vpop.f32.mrb[0].mxu0
      %999 = vmatprep.mubr.bf16.mxu0 0
      %1000 = vmatmul.mubr.bf16.gmra.mrb[0].mxu0 %v849
      %v1001 = vpop.f32.mrb[0].mxu0
      %v1002 = vadd.f32 %v746, %v1001
      %v1003 = vpop.f32.mrb[0].mxu0
      %v1004 = vpop.f32.mrb[0].mxu0
      %v1005 = vadd.f32 %v749, %v1004
      %v1006 = vpop.f32.mrb[0].mxu0
      %1007 = vmatprep.mubr.bf16.mxu0 0
      %1008 = vmatmul.mubr.bf16.gmra.mrb[0].mxu0 %v851
      %v1009 = vpop.f32.mrb[0].mxu0
      %v1010 = vadd.f32 %v754, %v1009
      %v1011 = vpop.f32.mrb[0].mxu0
      %v1012 = vpop.f32.mrb[0].mxu0
      %v1013 = vadd.f32 %v757, %v1012
      %v1014 = vpop.f32.mrb[0].mxu0
      %1015 = vmatprep.mubr.bf16.mxu0 0
      %1016 = vmatmul.mubr.bf16.gmra.mrb[0].mxu0 %v853
      %v1017 = vpop.f32.mrb[0].mxu0
      %v1018 = vadd.f32 %v762, %v1017
      %v1019 = vpop.f32.mrb[0].mxu0
      %v1020 = vpop.f32.mrb[0].mxu0
      %v1021 = vadd.f32 %v765, %v1020
      %v1022 = vpop.f32.mrb[0].mxu0
      %1023 = vmatprep.mubr.bf16.mxu0 0
      %1024 = vmatmul.mubr.bf16.gmra.mrb[0].mxu0 %v855
      %v1025 = vpop.f32.mrb[0].mxu0
      %v1026 = vadd.f32 %v770, %v1025
      %v1027 = vpop.f32.mrb[0].mxu0
      %v1028 = vpop.f32.mrb[0].mxu0
      %v1029 = vadd.f32 %v773, %v1028
      %v1030 = vpop.f32.mrb[0].mxu0
      %1031 = vmatprep.mubr.bf16.mxu0 0
      %1032 = vmatmul.mubr.bf16.gmra.mrb[0].mxu0 %v857
      %v1033 = vpop.f32.mrb[0].mxu0
      %v1034 = vadd.f32 %v778, %v1033
      %v1035 = vpop.f32.mrb[0].mxu0
      %v1036 = vpop.f32.mrb[0].mxu0
      %v1037 = vadd.f32 %v781, %v1036
      %v1038 = vpop.f32.mrb[0].mxu0
      %1039 = vmatprep.mubr.bf16.mxu0 0
      %1040 = vmatmul.mubr.bf16.gmra.mrb[0].mxu0 %v859
      %v1041 = vpop.f32.mrb[0].mxu0
      %v1042 = vadd.f32 %v786, %v1041
      %v1043 = vpop.f32.mrb[0].mxu0
      %v1044 = vpop.f32.mrb[0].mxu0
      %v1045 = vadd.f32 %v789, %v1044
      %v1046 = vpop.f32.mrb[0].mxu0
      %1047 = vmatprep.mubr.bf16.mxu0 0
      %1048 = vmatmul.mubr.bf16.gmra.mrb[0].mxu0 %v861
      %v1049 = vpop.f32.mrb[0].mxu0
      %v1050 = vadd.f32 %v794, %v1049
      %v1051 = vpop.f32.mrb[0].mxu0
      %v1052 = vpop.f32.mrb[0].mxu0
      %v1053 = vpop.f32.mrb[0].mxu0
      %1054 = vdwg.mxu0
      %v1055 = vld [vmem:[%s197] sm:$0xe]
      %v1056 = vld [vmem:[%s197 + $0x98] sm:$0x7]
      %s1057 = scalar_lea.vmem %s1, 64
      %v1058 = vld [vmem:[%s1057] sm:$0xf]
      %v1059 = vld [vmem:[%s1057 + $0x4] sm:$0xf]
      %v1060 = vld [vmem:[%s1057 + $0x8] sm:$0xf]
      %v1061 = vld [vmem:[%s1057 + $0xc] sm:$0xf]
      %v1062 = vld [vmem:[%s1057 + $0x10] sm:$0xf]
      %v1063 = vld [vmem:[%s1057 + $0x14] sm:$0xf]
      %v1064 = vld [vmem:[%s1057 + $0x18] sm:$0xf]
      %v1065 = vld [vmem:[%s1057 + $0x1c] sm:$0xf]
      %v1068 = vunpack.c.l.b16 %v1055
      %v1069 = vunpack.c.l.b16 %v1056
      %v1070 = vpack.c.b16 %v304, %v1068
      %v1071 = vpack.c.b16 %v1069, %v1069
      %vm1072 = vcmask 1046528
      %v1073 = vrot.slane %v1070, 1
      %v1074 = vrot.slane %v343, 1
      %v1075 = vsel %vm1072, %v1073, %v1074
      %v1076 = vrot.slane %v344, 1
      %v1077 = vsel %vm1072, %v1074, %v1076
      %v1078 = vrot.slane %v345, 1
      %v1079 = vsel %vm1072, %v1076, %v1078
      %v1080 = vrot.slane %v346, 1
      %v1081 = vsel %vm1072, %v1078, %v1080
      %v1082 = vrot.slane %v347, 1
      %v1083 = vsel %vm1072, %v1080, %v1082
      %v1084 = vrot.slane %v348, 1
      %v1085 = vsel %vm1072, %v1082, %v1084
      %v1086 = vrot.slane %v349, 1
      %v1087 = vsel %vm1072, %v1084, %v1086
      %v1088 = vrot.slane %v350, 1
      %v1089 = vsel %vm1072, %v1086, %v1088
      %v1090 = vrot.slane %v351, 1
      %v1091 = vsel %vm1072, %v1088, %v1090
      %v1092 = vrot.slane %v352, 1
      %v1093 = vsel %vm1072, %v1090, %v1092
      %v1094 = vrot.slane %v353, 1
      %v1095 = vsel %vm1072, %v1092, %v1094
      %v1096 = vrot.slane %v354, 1
      %v1097 = vsel %vm1072, %v1094, %v1096
      %v1098 = vrot.slane %v355, 1
      %v1099 = vsel %vm1072, %v1096, %v1098
      %v1100 = vrot.slane %v356, 1
      %v1101 = vsel %vm1072, %v1098, %v1100
      %v1102 = vrot.slane %v357, 1
      %v1103 = vsel %vm1072, %v1100, %v1102
      %v1104 = vrot.slane %v358, 1
      %v1105 = vsel %vm1072, %v1102, %v1104
      %v1106 = vrot.slane %v359, 1
      %v1107 = vsel %vm1072, %v1104, %v1106
      %v1108 = vrot.slane %v360, 1
      %v1109 = vsel %vm1072, %v1106, %v1108
      %v1110 = vrot.slane %v1071, 1
      %v1111 = vsel %vm1072, %v1108, %v1110
      %v1120 = vunpack.c.l.b16 %v1058
      %v1121 = vunpack.c.l.b16 %v1059
      %v1122 = vunpack.c.l.b16 %v1060
      %v1123 = vunpack.c.l.b16 %v1061
      %v1124 = vunpack.c.l.b16 %v1062
      %v1125 = vunpack.c.l.b16 %v1063
      %v1126 = vunpack.c.l.b16 %v1064
      %v1127 = vunpack.c.l.b16 %v1065
      %v1128 = vpack.c.b16 %v1121, %v1120
      %v1129 = vpack.c.b16 %v1123, %v1122
      %v1130 = vpack.c.b16 %v1125, %v1124
      %v1131 = vpack.c.b16 %v1127, %v1126
      %v1137 = vsel %vm546, %v1075, 0
      %v1140 = vsel %vm546, %v1077, 0
      %v1143 = vsel %vm546, %v1079, 0
      %v1146 = vsel %vm546, %v1081, 0
      %v1149 = vsel %vm546, %v1083, 0
      %v1152 = vsel %vm546, %v1085, 0
      %v1155 = vsel %vm546, %v1087, 0
      %v1158 = vsel %vm546, %v1089, 0
      %v1161 = vsel %vm546, %v1091, 0
      %v1164 = vsel %vm546, %v1093, 0
      %v1167 = vsel %vm546, %v1095, 0
      %v1170 = vsel %vm546, %v1097, 0
      %v1173 = vsel %vm546, %v1099, 0
      %v1176 = vsel %vm546, %v1101, 0
      %v1179 = vsel %vm546, %v1103, 0
      %v1182 = vsel %vm546, %v1105, 0
      %v1185 = vsel %vm546, %v1107, 0
      %v1188 = vsel %vm546, %v1109, 0
      %v1191 = vsel %vm546, %v1111, 0
      %v1194 = vsel %vm546, %v1110, 0
      %1196 = vmatprep.subr.bf16.mxu0 0
      %1197 = vmatpush1.bf16.msra.mxu0 %v1128
      %1198 = vmatprep.subr.bf16.mxu0 0
      %1199 = vmatpush1.bf16.msra.mxu0 %v1129
      %1200 = vmatprep.subr.bf16.mxu0 0
      %1201 = vmatpush1.bf16.msra.mxu0 %v1130
      %1202 = vmatprep.subr.bf16.mxu0 0
      %1203 = vmatpush1.bf16.msra.mxu0 %v1131
      %1204 = vmatprep.subr.bf16.mxu0 0
      %1205 = vmatpush1.bf16.msra.mxu0 0
      %1206 = vmatprep.subr.bf16.mxu0 0
      %1207 = vmatpush1.bf16.msra.mxu0 0
      %1208 = vmatprep.subr.bf16.mxu0 0
      %1209 = vmatpush1.bf16.msra.mxu0 0
      %1210 = vmatprep.subr.bf16.mxu0 0
      %1211 = vmatpush1.bf16.msra.mxu0 0
      %1212 = vmatprep.subr.bf16.mxu0 0
      %1213 = vmatpush1.bf16.msra.mxu0 0
      %1214 = vmatprep.subr.bf16.mxu0 0
      %1215 = vmatpush1.bf16.msra.mxu0 0
      %1216 = vmatprep.subr.bf16.mxu0 0
      %1217 = vmatpush1.bf16.msra.mxu0 0
      %1218 = vmatprep.subr.bf16.mxu0 0
      %1219 = vmatpush1.bf16.msra.mxu0 0
      %1220 = vmatprep.subr.bf16.mxu0 0
      %1221 = vmatpush1.bf16.msra.mxu0 0
      %1222 = vmatprep.subr.bf16.mxu0 0
      %1223 = vmatpush1.bf16.msra.mxu0 0
      %1224 = vmatprep.subr.bf16.mxu0 0
      %1225 = vmatpush1.bf16.msra.mxu0 0
      %1226 = vmatprep.subr.bf16.mxu0 0
      %1227 = vmatpush1.bf16.msra.mxu0 0
      %1228 = vmatprep.mubr.bf16.mxu0 0
      %1229 = vmatmul.mubr.bf16.gmra.mrb[0].mxu0 %v1137
      %v1230 = vpop.f32.mrb[0].mxu0
      %v1231 = vadd.f32 0.0, %v1230
      %v1232 = vpop.f32.mrb[0].mxu0
      %v1233 = vpop.f32.mrb[0].mxu0
      %v1234 = vadd.f32 0.0, %v1233
      %v1235 = vpop.f32.mrb[0].mxu0
      %1236 = vmatprep.mubr.bf16.mxu0 0
      %1237 = vmatmul.mubr.bf16.gmra.mrb[0].mxu0 %v1140
      %v1238 = vpop.f32.mrb[0].mxu0
      %v1239 = vadd.f32 0.0, %v1238
      %v1240 = vpop.f32.mrb[0].mxu0
      %v1241 = vpop.f32.mrb[0].mxu0
      %v1242 = vadd.f32 0.0, %v1241
      %v1243 = vpop.f32.mrb[0].mxu0
      %1244 = vmatprep.mubr.bf16.mxu0 0
      %1245 = vmatmul.mubr.bf16.gmra.mrb[0].mxu0 %v1143
      %v1246 = vpop.f32.mrb[0].mxu0
      %v1247 = vadd.f32 0.0, %v1246
      %v1248 = vpop.f32.mrb[0].mxu0
      %v1249 = vpop.f32.mrb[0].mxu0
      %v1250 = vadd.f32 0.0, %v1249
      %v1251 = vpop.f32.mrb[0].mxu0
      %1252 = vmatprep.mubr.bf16.mxu0 0
      %1253 = vmatmul.mubr.bf16.gmra.mrb[0].mxu0 %v1146
      %v1254 = vpop.f32.mrb[0].mxu0
      %v1255 = vadd.f32 0.0, %v1254
      %v1256 = vpop.f32.mrb[0].mxu0
      %v1257 = vpop.f32.mrb[0].mxu0
      %v1258 = vadd.f32 0.0, %v1257
      %v1259 = vpop.f32.mrb[0].mxu0
      %1260 = vmatprep.mubr.bf16.mxu0 0
      %1261 = vmatmul.mubr.bf16.gmra.mrb[0].mxu0 %v1149
      %v1262 = vpop.f32.mrb[0].mxu0
      %v1263 = vadd.f32 0.0, %v1262
      %v1264 = vpop.f32.mrb[0].mxu0
      %v1265 = vpop.f32.mrb[0].mxu0
      %v1266 = vadd.f32 0.0, %v1265
      %v1267 = vpop.f32.mrb[0].mxu0
      %1268 = vmatprep.mubr.bf16.mxu0 0
      %1269 = vmatmul.mubr.bf16.gmra.mrb[0].mxu0 %v1152
      %v1270 = vpop.f32.mrb[0].mxu0
      %v1271 = vadd.f32 0.0, %v1270
      %v1272 = vpop.f32.mrb[0].mxu0
      %v1273 = vpop.f32.mrb[0].mxu0
      %v1274 = vadd.f32 0.0, %v1273
      %v1275 = vpop.f32.mrb[0].mxu0
      %1276 = vmatprep.mubr.bf16.mxu0 0
      %1277 = vmatmul.mubr.bf16.gmra.mrb[0].mxu0 %v1155
      %v1278 = vpop.f32.mrb[0].mxu0
      %v1279 = vadd.f32 0.0, %v1278
      %v1280 = vpop.f32.mrb[0].mxu0
      %v1281 = vpop.f32.mrb[0].mxu0
      %v1282 = vadd.f32 0.0, %v1281
      %v1283 = vpop.f32.mrb[0].mxu0
      %1284 = vmatprep.mubr.bf16.mxu0 0
      %1285 = vmatmul.mubr.bf16.gmra.mrb[0].mxu0 %v1158
      %v1286 = vpop.f32.mrb[0].mxu0
      %v1287 = vadd.f32 0.0, %v1286
      %v1288 = vpop.f32.mrb[0].mxu0
      %v1289 = vpop.f32.mrb[0].mxu0
      %v1290 = vadd.f32 0.0, %v1289
      %v1291 = vpop.f32.mrb[0].mxu0
      %1292 = vmatprep.mubr.bf16.mxu0 0
      %1293 = vmatmul.mubr.bf16.gmra.mrb[0].mxu0 %v1161
      %v1294 = vpop.f32.mrb[0].mxu0
      %v1295 = vadd.f32 0.0, %v1294
      %v1296 = vpop.f32.mrb[0].mxu0
      %v1297 = vpop.f32.mrb[0].mxu0
      %v1298 = vadd.f32 0.0, %v1297
      %v1299 = vpop.f32.mrb[0].mxu0
      %1300 = vmatprep.mubr.bf16.mxu0 0
      %1301 = vmatmul.mubr.bf16.gmra.mrb[0].mxu0 %v1164
      %v1302 = vpop.f32.mrb[0].mxu0
      %v1303 = vadd.f32 0.0, %v1302
      %v1304 = vpop.f32.mrb[0].mxu0
      %v1305 = vpop.f32.mrb[0].mxu0
      %v1306 = vadd.f32 0.0, %v1305
      %v1307 = vpop.f32.mrb[0].mxu0
      %1308 = vmatprep.mubr.bf16.mxu0 0
      %1309 = vmatmul.mubr.bf16.gmra.mrb[0].mxu0 %v1167
      %v1310 = vpop.f32.mrb[0].mxu0
      %v1311 = vadd.f32 0.0, %v1310
      %v1312 = vpop.f32.mrb[0].mxu0
      %v1313 = vpop.f32.mrb[0].mxu0
      %v1314 = vadd.f32 0.0, %v1313
      %v1315 = vpop.f32.mrb[0].mxu0
      %1316 = vmatprep.mubr.bf16.mxu0 0
      %1317 = vmatmul.mubr.bf16.gmra.mrb[0].mxu0 %v1170
      %v1318 = vpop.f32.mrb[0].mxu0
      %v1319 = vadd.f32 0.0, %v1318
      %v1320 = vpop.f32.mrb[0].mxu0
      %v1321 = vpop.f32.mrb[0].mxu0
      %v1322 = vadd.f32 0.0, %v1321
      %v1323 = vpop.f32.mrb[0].mxu0
      %1324 = vmatprep.mubr.bf16.mxu0 0
      %1325 = vmatmul.mubr.bf16.gmra.mrb[0].mxu0 %v1173
      %v1326 = vpop.f32.mrb[0].mxu0
      %v1327 = vadd.f32 0.0, %v1326
      %v1328 = vpop.f32.mrb[0].mxu0
      %v1329 = vpop.f32.mrb[0].mxu0
      %v1330 = vadd.f32 0.0, %v1329
      %v1331 = vpop.f32.mrb[0].mxu0
      %1332 = vmatprep.mubr.bf16.mxu0 0
      %1333 = vmatmul.mubr.bf16.gmra.mrb[0].mxu0 %v1176
      %v1334 = vpop.f32.mrb[0].mxu0
      %v1335 = vadd.f32 0.0, %v1334
      %v1336 = vpop.f32.mrb[0].mxu0
      %v1337 = vpop.f32.mrb[0].mxu0
      %v1338 = vadd.f32 0.0, %v1337
      %v1339 = vpop.f32.mrb[0].mxu0
      %1340 = vmatprep.mubr.bf16.mxu0 0
      %1341 = vmatmul.mubr.bf16.gmra.mrb[0].mxu0 %v1179
      %v1342 = vpop.f32.mrb[0].mxu0
      %v1343 = vadd.f32 0.0, %v1342
      %v1344 = vpop.f32.mrb[0].mxu0
      %v1345 = vpop.f32.mrb[0].mxu0
      %v1346 = vadd.f32 0.0, %v1345
      %v1347 = vpop.f32.mrb[0].mxu0
      %1348 = vmatprep.mubr.bf16.mxu0 0
      %1349 = vmatmul.mubr.bf16.gmra.mrb[0].mxu0 %v1182
      %v1350 = vpop.f32.mrb[0].mxu0
      %v1351 = vadd.f32 0.0, %v1350
      %v1352 = vpop.f32.mrb[0].mxu0
      %v1353 = vpop.f32.mrb[0].mxu0
      %v1354 = vadd.f32 0.0, %v1353
      %v1355 = vpop.f32.mrb[0].mxu0
      %1356 = vmatprep.mubr.bf16.mxu0 0
      %1357 = vmatmul.mubr.bf16.gmra.mrb[0].mxu0 %v1185
      %v1358 = vpop.f32.mrb[0].mxu0
      %v1359 = vadd.f32 0.0, %v1358
      %v1360 = vpop.f32.mrb[0].mxu0
      %v1361 = vpop.f32.mrb[0].mxu0
      %v1362 = vadd.f32 0.0, %v1361
      %v1363 = vpop.f32.mrb[0].mxu0
      %1364 = vmatprep.mubr.bf16.mxu0 0
      %1365 = vmatmul.mubr.bf16.gmra.mrb[0].mxu0 %v1188
      %v1366 = vpop.f32.mrb[0].mxu0
      %v1367 = vadd.f32 0.0, %v1366
      %v1368 = vpop.f32.mrb[0].mxu0
      %v1369 = vpop.f32.mrb[0].mxu0
      %v1370 = vadd.f32 0.0, %v1369
      %v1371 = vpop.f32.mrb[0].mxu0
      %1372 = vmatprep.mubr.bf16.mxu0 0
      %1373 = vmatmul.mubr.bf16.gmra.mrb[0].mxu0 %v1191
      %v1374 = vpop.f32.mrb[0].mxu0
      %v1375 = vadd.f32 0.0, %v1374
      %v1376 = vpop.f32.mrb[0].mxu0
      %v1377 = vpop.f32.mrb[0].mxu0
      %v1378 = vadd.f32 0.0, %v1377
      %v1379 = vpop.f32.mrb[0].mxu0
      %1380 = vmatprep.mubr.bf16.mxu0 0
      %1381 = vmatmul.mubr.bf16.gmra.mrb[0].mxu0 %v1194
      %v1382 = vpop.f32.mrb[0].mxu0
      %v1383 = vadd.f32 0.0, %v1382
      %v1384 = vpop.f32.mrb[0].mxu0
      %v1385 = vpop.f32.mrb[0].mxu0
      %v1386 = vpop.f32.mrb[0].mxu0
      %1387 = vdwg.mxu0
      %v1388 = vadd.f32 %v898, %v1231
      %v1389 = vadd.f32 %v901, %v1234
      %v1390 = vadd.f32 %v906, %v1239
      %v1391 = vadd.f32 %v909, %v1242
      %v1392 = vadd.f32 %v914, %v1247
      %v1393 = vadd.f32 %v917, %v1250
      %v1394 = vadd.f32 %v922, %v1255
      %v1395 = vadd.f32 %v925, %v1258
      %v1396 = vadd.f32 %v930, %v1263
      %v1397 = vadd.f32 %v933, %v1266
      %v1398 = vadd.f32 %v938, %v1271
      %v1399 = vadd.f32 %v941, %v1274
      %v1400 = vadd.f32 %v946, %v1279
      %v1401 = vadd.f32 %v949, %v1282
      %v1402 = vadd.f32 %v954, %v1287
      %v1403 = vadd.f32 %v957, %v1290
      %v1404 = vadd.f32 %v962, %v1295
      %v1405 = vadd.f32 %v965, %v1298
      %v1406 = vadd.f32 %v970, %v1303
      %v1407 = vadd.f32 %v973, %v1306
      %v1408 = vadd.f32 %v978, %v1311
      %v1409 = vadd.f32 %v981, %v1314
      %v1410 = vadd.f32 %v986, %v1319
      %v1411 = vadd.f32 %v989, %v1322
      %v1412 = vadd.f32 %v994, %v1327
      %v1413 = vadd.f32 %v997, %v1330
      %v1414 = vadd.f32 %v1002, %v1335
      %v1415 = vadd.f32 %v1005, %v1338
      %v1416 = vadd.f32 %v1010, %v1343
      %v1417 = vadd.f32 %v1013, %v1346
      %v1418 = vadd.f32 %v1018, %v1351
      %v1419 = vadd.f32 %v1021, %v1354
      %v1420 = vadd.f32 %v1026, %v1359
      %v1421 = vadd.f32 %v1029, %v1362
      %v1422 = vadd.f32 %v1034, %v1367
      %v1423 = vadd.f32 %v1037, %v1370
      %v1424 = vadd.f32 %v1042, %v1375
      %v1425 = vadd.f32 %v1045, %v1378
      %v1426 = vadd.f32 %v1050, %v1383
      %v1427 = vld [vmem:[%s197 + $0x8] sm:$0xe]
      %v1428 = vld [vmem:[%s197 + $0xc] sm:$0xf]
      %v1429 = vld [vmem:[%s197 + $0x10] sm:$0xf]
      %v1430 = vld [vmem:[%s197 + $0x14] sm:$0xf]
      %v1431 = vld [vmem:[%s197 + $0x18] sm:$0xf]
      %v1432 = vld [vmem:[%s197 + $0x1c] sm:$0xf]
      %v1433 = vld [vmem:[%s197 + $0x20] sm:$0xf]
      %v1434 = vld [vmem:[%s197 + $0x24] sm:$0xf]
      %v1435 = vld [vmem:[%s197 + $0x28] sm:$0xf]
      %v1436 = vld [vmem:[%s197 + $0x2c] sm:$0xf]
      %v1437 = vld [vmem:[%s197 + $0x30] sm:$0xf]
      %v1438 = vld [vmem:[%s197 + $0x34] sm:$0xf]
      %v1439 = vld [vmem:[%s197 + $0x38] sm:$0xf]
      %v1440 = vld [vmem:[%s197 + $0x3c] sm:$0xf]
      %v1441 = vld [vmem:[%s197 + $0x40] sm:$0xf]
      %v1442 = vld [vmem:[%s197 + $0x44] sm:$0xf]
      %v1443 = vld [vmem:[%s197 + $0x48] sm:$0xf]
      %v1444 = vld [vmem:[%s197 + $0x4c] sm:$0xf]
      %v1445 = vld [vmem:[%s197 + $0x50] sm:$0xf]
      %v1446 = vld [vmem:[%s197 + $0x54] sm:$0xf]
      %v1447 = vld [vmem:[%s197 + $0x58] sm:$0xf]
      %v1448 = vld [vmem:[%s197 + $0x5c] sm:$0xf]
      %v1449 = vld [vmem:[%s197 + $0x60] sm:$0xf]
      %v1450 = vld [vmem:[%s197 + $0x64] sm:$0xf]
      %v1451 = vld [vmem:[%s197 + $0x68] sm:$0xf]
      %v1452 = vld [vmem:[%s197 + $0x6c] sm:$0xf]
      %v1453 = vld [vmem:[%s197 + $0x70] sm:$0xf]
      %v1454 = vld [vmem:[%s197 + $0x74] sm:$0xf]
      %v1455 = vld [vmem:[%s197 + $0x78] sm:$0xf]
      %v1456 = vld [vmem:[%s197 + $0x7c] sm:$0xf]
      %v1457 = vld [vmem:[%s197 + $0x80] sm:$0xf]
      %v1458 = vld [vmem:[%s197 + $0x84] sm:$0xf]
      %v1459 = vld [vmem:[%s197 + $0x88] sm:$0xf]
      %v1460 = vld [vmem:[%s197 + $0x8c] sm:$0xf]
      %v1461 = vld [vmem:[%s197 + $0x90] sm:$0xf]
      %v1462 = vld [vmem:[%s197 + $0x94] sm:$0xf]
      %v1463 = vld [vmem:[%s197 + $0x98] sm:$0xf]
      %v1464 = vld [vmem:[%s197 + $0x9c] sm:$0xf]
      %v1465 = vld [vmem:[%s197 + $0xa0] sm:$0x7]
      %s1466 = scalar_lea.vmem %s1, 96
      %v1467 = vld [vmem:[%s1466] sm:$0xf]
      %v1468 = vld [vmem:[%s1466 + $0x4] sm:$0xf]
      %v1469 = vld [vmem:[%s1466 + $0x8] sm:$0xf]
      %v1470 = vld [vmem:[%s1466 + $0xc] sm:$0xf]
      %v1471 = vld [vmem:[%s1466 + $0x10] sm:$0xf]
      %v1472 = vld [vmem:[%s1466 + $0x14] sm:$0xf]
      %v1473 = vld [vmem:[%s1466 + $0x18] sm:$0xf]
      %v1474 = vld [vmem:[%s1466 + $0x1c] sm:$0xf]
      %v1514 = vunpack.c.l.b16 %v1427
      %v1515 = vunpack.c.l.b16 %v1428
      %v1516 = vunpack.c.l.b16 %v1429
      %v1517 = vunpack.c.l.b16 %v1430
      %v1518 = vunpack.c.l.b16 %v1431
      %v1519 = vunpack.c.l.b16 %v1432
      %v1520 = vunpack.c.l.b16 %v1433
      %v1521 = vunpack.c.l.b16 %v1434
      %v1522 = vunpack.c.l.b16 %v1435
      %v1523 = vunpack.c.l.b16 %v1436
      %v1524 = vunpack.c.l.b16 %v1437
      %v1525 = vunpack.c.l.b16 %v1438
      %v1526 = vunpack.c.l.b16 %v1439
      %v1527 = vunpack.c.l.b16 %v1440
      %v1528 = vunpack.c.l.b16 %v1441
      %v1529 = vunpack.c.l.b16 %v1442
      %v1530 = vunpack.c.l.b16 %v1443
      %v1531 = vunpack.c.l.b16 %v1444
      %v1532 = vunpack.c.l.b16 %v1445
      %v1533 = vunpack.c.l.b16 %v1446
      %v1534 = vunpack.c.l.b16 %v1447
      %v1535 = vunpack.c.l.b16 %v1448
      %v1536 = vunpack.c.l.b16 %v1449
      %v1537 = vunpack.c.l.b16 %v1450
      %v1538 = vunpack.c.l.b16 %v1451
      %v1539 = vunpack.c.l.b16 %v1452
      %v1540 = vunpack.c.l.b16 %v1453
      %v1541 = vunpack.c.l.b16 %v1454
      %v1542 = vunpack.c.l.b16 %v1455
      %v1543 = vunpack.c.l.b16 %v1456
      %v1544 = vunpack.c.l.b16 %v1457
      %v1545 = vunpack.c.l.b16 %v1458
      %v1546 = vunpack.c.l.b16 %v1459
      %v1547 = vunpack.c.l.b16 %v1460
      %v1548 = vunpack.c.l.b16 %v1461
      %v1549 = vunpack.c.l.b16 %v1462
      %v1550 = vunpack.c.l.b16 %v1463
      %v1551 = vunpack.c.l.b16 %v1464
      %v1552 = vunpack.c.l.b16 %v1465
      %v1553 = vpack.c.b16 %v1515, %v1514
      %v1554 = vpack.c.b16 %v1517, %v1516
      %v1555 = vpack.c.b16 %v1519, %v1518
      %v1556 = vpack.c.b16 %v1521, %v1520
      %v1557 = vpack.c.b16 %v1523, %v1522
      %v1558 = vpack.c.b16 %v1525, %v1524
      %v1559 = vpack.c.b16 %v1527, %v1526
      %v1560 = vpack.c.b16 %v1529, %v1528
      %v1561 = vpack.c.b16 %v1531, %v1530
      %v1562 = vpack.c.b16 %v1533, %v1532
      %v1563 = vpack.c.b16 %v1535, %v1534
      %v1564 = vpack.c.b16 %v1537, %v1536
      %v1565 = vpack.c.b16 %v1539, %v1538
      %v1566 = vpack.c.b16 %v1541, %v1540
      %v1567 = vpack.c.b16 %v1543, %v1542
      %v1568 = vpack.c.b16 %v1545, %v1544
      %v1569 = vpack.c.b16 %v1547, %v1546
      %v1570 = vpack.c.b16 %v1549, %v1548
      %v1571 = vpack.c.b16 %v1551, %v1550
      %v1572 = vpack.c.b16 %v1552, %v1552
      %v1573 = vrot.slane %v1553, 1
      %v1574 = vrot.slane %v1554, 1
      %v1575 = vsel %vm1072, %v1573, %v1574
      %v1576 = vrot.slane %v1555, 1
      %v1577 = vsel %vm1072, %v1574, %v1576
      %v1578 = vrot.slane %v1556, 1
      %v1579 = vsel %vm1072, %v1576, %v1578
      %v1580 = vrot.slane %v1557, 1
      %v1581 = vsel %vm1072, %v1578, %v1580
      %v1582 = vrot.slane %v1558, 1
      %v1583 = vsel %vm1072, %v1580, %v1582
      %v1584 = vrot.slane %v1559, 1
      %v1585 = vsel %vm1072, %v1582, %v1584
      %v1586 = vrot.slane %v1560, 1
      %v1587 = vsel %vm1072, %v1584, %v1586
      %v1588 = vrot.slane %v1561, 1
      %v1589 = vsel %vm1072, %v1586, %v1588
      %v1590 = vrot.slane %v1562, 1
      %v1591 = vsel %vm1072, %v1588, %v1590
      %v1592 = vrot.slane %v1563, 1
      %v1593 = vsel %vm1072, %v1590, %v1592
      %v1594 = vrot.slane %v1564, 1
      %v1595 = vsel %vm1072, %v1592, %v1594
      %v1596 = vrot.slane %v1565, 1
      %v1597 = vsel %vm1072, %v1594, %v1596
      %v1598 = vrot.slane %v1566, 1
      %v1599 = vsel %vm1072, %v1596, %v1598
      %v1600 = vrot.slane %v1567, 1
      %v1601 = vsel %vm1072, %v1598, %v1600
      %v1602 = vrot.slane %v1568, 1
      %v1603 = vsel %vm1072, %v1600, %v1602
      %v1604 = vrot.slane %v1569, 1
      %v1605 = vsel %vm1072, %v1602, %v1604
      %v1606 = vrot.slane %v1570, 1
      %v1607 = vsel %vm1072, %v1604, %v1606
      %v1608 = vrot.slane %v1571, 1
      %v1609 = vsel %vm1072, %v1606, %v1608
      %v1610 = vrot.slane %v1572, 1
      %v1611 = vsel %vm1072, %v1608, %v1610
      %v1620 = vunpack.c.l.b16 %v1467
      %v1621 = vunpack.c.l.b16 %v1468
      %v1622 = vunpack.c.l.b16 %v1469
      %v1623 = vunpack.c.l.b16 %v1470
      %v1624 = vunpack.c.l.b16 %v1471
      %v1625 = vunpack.c.l.b16 %v1472
      %v1626 = vunpack.c.l.b16 %v1473
      %v1627 = vunpack.c.l.b16 %v1474
      %v1628 = vpack.c.b16 %v1621, %v1620
      %v1629 = vpack.c.b16 %v1623, %v1622
      %v1630 = vpack.c.b16 %v1625, %v1624
      %v1631 = vpack.c.b16 %v1627, %v1626
      %v1637 = vsel %vm546, %v1575, 0
      %v1640 = vsel %vm546, %v1577, 0
      %v1643 = vsel %vm546, %v1579, 0
      %v1646 = vsel %vm546, %v1581, 0
      %v1649 = vsel %vm546, %v1583, 0
      %v1652 = vsel %vm546, %v1585, 0
      %v1655 = vsel %vm546, %v1587, 0
      %v1658 = vsel %vm546, %v1589, 0
      %v1661 = vsel %vm546, %v1591, 0
      %v1664 = vsel %vm546, %v1593, 0
      %v1667 = vsel %vm546, %v1595, 0
      %v1670 = vsel %vm546, %v1597, 0
      %v1673 = vsel %vm546, %v1599, 0
      %v1676 = vsel %vm546, %v1601, 0
      %v1679 = vsel %vm546, %v1603, 0
      %v1682 = vsel %vm546, %v1605, 0
      %v1685 = vsel %vm546, %v1607, 0
      %v1688 = vsel %vm546, %v1609, 0
      %v1691 = vsel %vm546, %v1611, 0
      %v1694 = vsel %vm546, %v1610, 0
      %1696 = vmatprep.subr.bf16.mxu0 0
      %1697 = vmatpush1.bf16.msra.mxu0 %v1628
      %1698 = vmatprep.subr.bf16.mxu0 0
      %1699 = vmatpush1.bf16.msra.mxu0 %v1629
      %1700 = vmatprep.subr.bf16.mxu0 0
      %1701 = vmatpush1.bf16.msra.mxu0 %v1630
      %1702 = vmatprep.subr.bf16.mxu0 0
      %1703 = vmatpush1.bf16.msra.mxu0 %v1631
      %1704 = vmatprep.subr.bf16.mxu0 0
      %1705 = vmatpush1.bf16.msra.mxu0 0
      %1706 = vmatprep.subr.bf16.mxu0 0
      %1707 = vmatpush1.bf16.msra.mxu0 0
      %1708 = vmatprep.subr.bf16.mxu0 0
      %1709 = vmatpush1.bf16.msra.mxu0 0
      %1710 = vmatprep.subr.bf16.mxu0 0
      %1711 = vmatpush1.bf16.msra.mxu0 0
      %1712 = vmatprep.subr.bf16.mxu0 0
      %1713 = vmatpush1.bf16.msra.mxu0 0
      %1714 = vmatprep.subr.bf16.mxu0 0
      %1715 = vmatpush1.bf16.msra.mxu0 0
      %1716 = vmatprep.subr.bf16.mxu0 0
      %1717 = vmatpush1.bf16.msra.mxu0 0
      %1718 = vmatprep.subr.bf16.mxu0 0
      %1719 = vmatpush1.bf16.msra.mxu0 0
      %1720 = vmatprep.subr.bf16.mxu0 0
      %1721 = vmatpush1.bf16.msra.mxu0 0
      %1722 = vmatprep.subr.bf16.mxu0 0
      %1723 = vmatpush1.bf16.msra.mxu0 0
      %1724 = vmatprep.subr.bf16.mxu0 0
      %1725 = vmatpush1.bf16.msra.mxu0 0
      %1726 = vmatprep.subr.bf16.mxu0 0
      %1727 = vmatpush1.bf16.msra.mxu0 0
      %1728 = vmatprep.mubr.bf16.mxu0 0
      %1729 = vmatmul.mubr.bf16.gmra.mrb[0].mxu0 %v1637
      %v1730 = vpop.f32.mrb[0].mxu0
      %v1731 = vadd.f32 0.0, %v1730
      %v1732 = vpop.f32.mrb[0].mxu0
      %v1733 = vpop.f32.mrb[0].mxu0
      %v1734 = vadd.f32 0.0, %v1733
      %v1735 = vpop.f32.mrb[0].mxu0
      %1736 = vmatprep.mubr.bf16.mxu0 0
      %1737 = vmatmul.mubr.bf16.gmra.mrb[0].mxu0 %v1640
      %v1738 = vpop.f32.mrb[0].mxu0
      %v1739 = vadd.f32 0.0, %v1738
      %v1740 = vpop.f32.mrb[0].mxu0
      %v1741 = vpop.f32.mrb[0].mxu0
      %v1742 = vadd.f32 0.0, %v1741
      %v1743 = vpop.f32.mrb[0].mxu0
      %1744 = vmatprep.mubr.bf16.mxu0 0
      %1745 = vmatmul.mubr.bf16.gmra.mrb[0].mxu0 %v1643
      %v1746 = vpop.f32.mrb[0].mxu0
      %v1747 = vadd.f32 0.0, %v1746
      %v1748 = vpop.f32.mrb[0].mxu0
      %v1749 = vpop.f32.mrb[0].mxu0
      %v1750 = vadd.f32 0.0, %v1749
      %v1751 = vpop.f32.mrb[0].mxu0
      %1752 = vmatprep.mubr.bf16.mxu0 0
      %1753 = vmatmul.mubr.bf16.gmra.mrb[0].mxu0 %v1646
      %v1754 = vpop.f32.mrb[0].mxu0
      %v1755 = vadd.f32 0.0, %v1754
      %v1756 = vpop.f32.mrb[0].mxu0
      %v1757 = vpop.f32.mrb[0].mxu0
      %v1758 = vadd.f32 0.0, %v1757
      %v1759 = vpop.f32.mrb[0].mxu0
      %1760 = vmatprep.mubr.bf16.mxu0 0
      %1761 = vmatmul.mubr.bf16.gmra.mrb[0].mxu0 %v1649
      %v1762 = vpop.f32.mrb[0].mxu0
      %v1763 = vadd.f32 0.0, %v1762
      %v1764 = vpop.f32.mrb[0].mxu0
      %v1765 = vpop.f32.mrb[0].mxu0
      %v1766 = vadd.f32 0.0, %v1765
      %v1767 = vpop.f32.mrb[0].mxu0
      %1768 = vmatprep.mubr.bf16.mxu0 0
      %1769 = vmatmul.mubr.bf16.gmra.mrb[0].mxu0 %v1652
      %v1770 = vpop.f32.mrb[0].mxu0
      %v1771 = vadd.f32 0.0, %v1770
      %v1772 = vpop.f32.mrb[0].mxu0
      %v1773 = vpop.f32.mrb[0].mxu0
      %v1774 = vadd.f32 0.0, %v1773
      %v1775 = vpop.f32.mrb[0].mxu0
      %1776 = vmatprep.mubr.bf16.mxu0 0
      %1777 = vmatmul.mubr.bf16.gmra.mrb[0].mxu0 %v1655
      %v1778 = vpop.f32.mrb[0].mxu0
      %v1779 = vadd.f32 0.0, %v1778
      %v1780 = vpop.f32.mrb[0].mxu0
      %v1781 = vpop.f32.mrb[0].mxu0
      %v1782 = vadd.f32 0.0, %v1781
      %v1783 = vpop.f32.mrb[0].mxu0
      %1784 = vmatprep.mubr.bf16.mxu0 0
      %1785 = vmatmul.mubr.bf16.gmra.mrb[0].mxu0 %v1658
      %v1786 = vpop.f32.mrb[0].mxu0
      %v1787 = vadd.f32 0.0, %v1786
      %v1788 = vpop.f32.mrb[0].mxu0
      %v1789 = vpop.f32.mrb[0].mxu0
      %v1790 = vadd.f32 0.0, %v1789
      %v1791 = vpop.f32.mrb[0].mxu0
      %1792 = vmatprep.mubr.bf16.mxu0 0
      %1793 = vmatmul.mubr.bf16.gmra.mrb[0].mxu0 %v1661
      %v1794 = vpop.f32.mrb[0].mxu0
      %v1795 = vadd.f32 0.0, %v1794
      %v1796 = vpop.f32.mrb[0].mxu0
      %v1797 = vpop.f32.mrb[0].mxu0
      %v1798 = vadd.f32 0.0, %v1797
      %v1799 = vpop.f32.mrb[0].mxu0
      %1800 = vmatprep.mubr.bf16.mxu0 0
      %1801 = vmatmul.mubr.bf16.gmra.mrb[0].mxu0 %v1664
      %v1802 = vpop.f32.mrb[0].mxu0
      %v1803 = vadd.f32 0.0, %v1802
      %v1804 = vpop.f32.mrb[0].mxu0
      %v1805 = vpop.f32.mrb[0].mxu0
      %v1806 = vadd.f32 0.0, %v1805
      %v1807 = vpop.f32.mrb[0].mxu0
      %1808 = vmatprep.mubr.bf16.mxu0 0
      %1809 = vmatmul.mubr.bf16.gmra.mrb[0].mxu0 %v1667
      %v1810 = vpop.f32.mrb[0].mxu0
      %v1811 = vadd.f32 0.0, %v1810
      %v1812 = vpop.f32.mrb[0].mxu0
      %v1813 = vpop.f32.mrb[0].mxu0
      %v1814 = vadd.f32 0.0, %v1813
      %v1815 = vpop.f32.mrb[0].mxu0
      %1816 = vmatprep.mubr.bf16.mxu0 0
      %1817 = vmatmul.mubr.bf16.gmra.mrb[0].mxu0 %v1670
      %v1818 = vpop.f32.mrb[0].mxu0
      %v1819 = vadd.f32 0.0, %v1818
      %v1820 = vpop.f32.mrb[0].mxu0
      %v1821 = vpop.f32.mrb[0].mxu0
      %v1822 = vadd.f32 0.0, %v1821
      %v1823 = vpop.f32.mrb[0].mxu0
      %1824 = vmatprep.mubr.bf16.mxu0 0
      %1825 = vmatmul.mubr.bf16.gmra.mrb[0].mxu0 %v1673
      %v1826 = vpop.f32.mrb[0].mxu0
      %v1827 = vadd.f32 0.0, %v1826
      %v1828 = vpop.f32.mrb[0].mxu0
      %v1829 = vpop.f32.mrb[0].mxu0
      %v1830 = vadd.f32 0.0, %v1829
      %v1831 = vpop.f32.mrb[0].mxu0
      %1832 = vmatprep.mubr.bf16.mxu0 0
      %1833 = vmatmul.mubr.bf16.gmra.mrb[0].mxu0 %v1676
      %v1834 = vpop.f32.mrb[0].mxu0
      %v1835 = vadd.f32 0.0, %v1834
      %v1836 = vpop.f32.mrb[0].mxu0
      %v1837 = vpop.f32.mrb[0].mxu0
      %v1838 = vadd.f32 0.0, %v1837
      %v1839 = vpop.f32.mrb[0].mxu0
      %1840 = vmatprep.mubr.bf16.mxu0 0
      %1841 = vmatmul.mubr.bf16.gmra.mrb[0].mxu0 %v1679
      %v1842 = vpop.f32.mrb[0].mxu0
      %v1843 = vadd.f32 0.0, %v1842
      %v1844 = vpop.f32.mrb[0].mxu0
      %v1845 = vpop.f32.mrb[0].mxu0
      %v1846 = vadd.f32 0.0, %v1845
      %v1847 = vpop.f32.mrb[0].mxu0
      %1848 = vmatprep.mubr.bf16.mxu0 0
      %1849 = vmatmul.mubr.bf16.gmra.mrb[0].mxu0 %v1682
      %v1850 = vpop.f32.mrb[0].mxu0
      %v1851 = vadd.f32 0.0, %v1850
      %v1852 = vpop.f32.mrb[0].mxu0
      %v1853 = vpop.f32.mrb[0].mxu0
      %v1854 = vadd.f32 0.0, %v1853
      %v1855 = vpop.f32.mrb[0].mxu0
      %1856 = vmatprep.mubr.bf16.mxu0 0
      %1857 = vmatmul.mubr.bf16.gmra.mrb[0].mxu0 %v1685
      %v1858 = vpop.f32.mrb[0].mxu0
      %v1859 = vadd.f32 0.0, %v1858
      %v1860 = vpop.f32.mrb[0].mxu0
      %v1861 = vpop.f32.mrb[0].mxu0
      %v1862 = vadd.f32 0.0, %v1861
      %v1863 = vpop.f32.mrb[0].mxu0
      %1864 = vmatprep.mubr.bf16.mxu0 0
      %1865 = vmatmul.mubr.bf16.gmra.mrb[0].mxu0 %v1688
      %v1866 = vpop.f32.mrb[0].mxu0
      %v1867 = vadd.f32 0.0, %v1866
      %v1868 = vpop.f32.mrb[0].mxu0
      %v1869 = vpop.f32.mrb[0].mxu0
      %v1870 = vadd.f32 0.0, %v1869
      %v1871 = vpop.f32.mrb[0].mxu0
      %1872 = vmatprep.mubr.bf16.mxu0 0
      %1873 = vmatmul.mubr.bf16.gmra.mrb[0].mxu0 %v1691
      %v1874 = vpop.f32.mrb[0].mxu0
      %v1875 = vadd.f32 0.0, %v1874
      %v1876 = vpop.f32.mrb[0].mxu0
      %v1877 = vpop.f32.mrb[0].mxu0
      %v1878 = vadd.f32 0.0, %v1877
      %v1879 = vpop.f32.mrb[0].mxu0
      %1880 = vmatprep.mubr.bf16.mxu0 0
      %1881 = vmatmul.mubr.bf16.gmra.mrb[0].mxu0 %v1694
      %v1882 = vpop.f32.mrb[0].mxu0
      %v1883 = vadd.f32 0.0, %v1882
      %v1884 = vpop.f32.mrb[0].mxu0
      %v1885 = vpop.f32.mrb[0].mxu0
      %v1886 = vpop.f32.mrb[0].mxu0
      %1887 = vdwg.mxu0
      %v1888 = vadd.f32 %v1388, %v1731
      %v1889 = vadd.f32 %v1389, %v1734
      %v1890 = vadd.f32 %v1390, %v1739
      %v1891 = vadd.f32 %v1391, %v1742
      %v1892 = vadd.f32 %v1392, %v1747
      %v1893 = vadd.f32 %v1393, %v1750
      %v1894 = vadd.f32 %v1394, %v1755
      %v1895 = vadd.f32 %v1395, %v1758
      %v1896 = vadd.f32 %v1396, %v1763
      %v1897 = vadd.f32 %v1397, %v1766
      %v1898 = vadd.f32 %v1398, %v1771
      %v1899 = vadd.f32 %v1399, %v1774
      %v1900 = vadd.f32 %v1400, %v1779
      %v1901 = vadd.f32 %v1401, %v1782
      %v1902 = vadd.f32 %v1402, %v1787
      %v1903 = vadd.f32 %v1403, %v1790
      %v1904 = vadd.f32 %v1404, %v1795
      %v1905 = vadd.f32 %v1405, %v1798
      %v1906 = vadd.f32 %v1406, %v1803
      %v1907 = vadd.f32 %v1407, %v1806
      %v1908 = vadd.f32 %v1408, %v1811
      %v1909 = vadd.f32 %v1409, %v1814
      %v1910 = vadd.f32 %v1410, %v1819
      %v1911 = vadd.f32 %v1411, %v1822
      %v1912 = vadd.f32 %v1412, %v1827
      %v1913 = vadd.f32 %v1413, %v1830
      %v1914 = vadd.f32 %v1414, %v1835
      %v1915 = vadd.f32 %v1415, %v1838
      %v1916 = vadd.f32 %v1416, %v1843
      %v1917 = vadd.f32 %v1417, %v1846
      %v1918 = vadd.f32 %v1418, %v1851
      %v1919 = vadd.f32 %v1419, %v1854
      %v1920 = vadd.f32 %v1420, %v1859
      %v1921 = vadd.f32 %v1421, %v1862
      %v1922 = vadd.f32 %v1422, %v1867
      %v1923 = vadd.f32 %v1423, %v1870
      %v1924 = vadd.f32 %v1424, %v1875
      %v1925 = vadd.f32 %v1425, %v1878
      %v1926 = vadd.f32 %v1426, %v1883
      %s1927 = scalar_lea.vmem %s1, 128
      %v1928 = vld [vmem:[%s1927] sm:$0xf]
      %v1929 = vld [vmem:[%s1927 + $0x4] sm:$0xf]
      %v1930 = vld [vmem:[%s1927 + $0x8] sm:$0xf]
      %v1931 = vld [vmem:[%s1927 + $0xc] sm:$0xf]
      %v1932 = vld [vmem:[%s1927 + $0x10] sm:$0xf]
      %v1933 = vld [vmem:[%s1927 + $0x14] sm:$0xf]
      %v1934 = vld [vmem:[%s1927 + $0x18] sm:$0xf]
      %v1935 = vld [vmem:[%s1927 + $0x1c] sm:$0xf]
      %vm1936 = vsmask.f32 6400
      %v1938 = vshrl.u32 %v1553, 16
      %v1940 = vrot.slane %v1938, 1
      %v1941 = vshll.u32 %v1553, 16
      %v1943 = vrot.slane %v1941, 2
      %v1944 = vor.u32 %v1940, %v1943
      %v1946 = vshrl.u32 %v1554, 16
      %v1948 = vrot.slane %v1946, 1
      %v1949 = vshll.u32 %v1554, 16
      %v1951 = vrot.slane %v1949, 2
      %v1952 = vor.u32 %v1948, %v1951
      %v1953 = vsel %vm1936, %v1944, %v1952
      %v1955 = vshrl.u32 %v1555, 16
      %v1957 = vrot.slane %v1955, 1
      %v1958 = vshll.u32 %v1555, 16
      %v1960 = vrot.slane %v1958, 2
      %v1961 = vor.u32 %v1957, %v1960
      %v1962 = vsel %vm1936, %v1952, %v1961
      %v1964 = vshrl.u32 %v1556, 16
      %v1966 = vrot.slane %v1964, 1
      %v1967 = vshll.u32 %v1556, 16
      %v1969 = vrot.slane %v1967, 2
      %v1970 = vor.u32 %v1966, %v1969
      %v1971 = vsel %vm1936, %v1961, %v1970
      %v1973 = vshrl.u32 %v1557, 16
      %v1975 = vrot.slane %v1973, 1
      %v1976 = vshll.u32 %v1557, 16
      %v1978 = vrot.slane %v1976, 2
      %v1979 = vor.u32 %v1975, %v1978
      %v1980 = vsel %vm1936, %v1970, %v1979
      %v1982 = vshrl.u32 %v1558, 16
      %v1984 = vrot.slane %v1982, 1
      %v1985 = vshll.u32 %v1558, 16
      %v1987 = vrot.slane %v1985, 2
      %v1988 = vor.u32 %v1984, %v1987
      %v1989 = vsel %vm1936, %v1979, %v1988
      %v1991 = vshrl.u32 %v1559, 16
      %v1993 = vrot.slane %v1991, 1
      %v1994 = vshll.u32 %v1559, 16
      %v1996 = vrot.slane %v1994, 2
      %v1997 = vor.u32 %v1993, %v1996
      %v1998 = vsel %vm1936, %v1988, %v1997
      %v2000 = vshrl.u32 %v1560, 16
      %v2002 = vrot.slane %v2000, 1
      %v2003 = vshll.u32 %v1560, 16
      %v2005 = vrot.slane %v2003, 2
      %v2006 = vor.u32 %v2002, %v2005
      %v2007 = vsel %vm1936, %v1997, %v2006
      %v2009 = vshrl.u32 %v1561, 16
      %v2011 = vrot.slane %v2009, 1
      %v2012 = vshll.u32 %v1561, 16
      %v2014 = vrot.slane %v2012, 2
      %v2015 = vor.u32 %v2011, %v2014
      %v2016 = vsel %vm1936, %v2006, %v2015
      %v2018 = vshrl.u32 %v1562, 16
      %v2020 = vrot.slane %v2018, 1
      %v2021 = vshll.u32 %v1562, 16
      %v2023 = vrot.slane %v2021, 2
      %v2024 = vor.u32 %v2020, %v2023
      %v2025 = vsel %vm1936, %v2015, %v2024
      %v2027 = vshrl.u32 %v1563, 16
      %v2029 = vrot.slane %v2027, 1
      %v2030 = vshll.u32 %v1563, 16
      %v2032 = vrot.slane %v2030, 2
      %v2033 = vor.u32 %v2029, %v2032
      %v2034 = vsel %vm1936, %v2024, %v2033
      %v2036 = vshrl.u32 %v1564, 16
      %v2038 = vrot.slane %v2036, 1
      %v2039 = vshll.u32 %v1564, 16
      %v2041 = vrot.slane %v2039, 2
      %v2042 = vor.u32 %v2038, %v2041
      %v2043 = vsel %vm1936, %v2033, %v2042
      %v2045 = vshrl.u32 %v1565, 16
      %v2047 = vrot.slane %v2045, 1
      %v2048 = vshll.u32 %v1565, 16
      %v2050 = vrot.slane %v2048, 2
      %v2051 = vor.u32 %v2047, %v2050
      %v2052 = vsel %vm1936, %v2042, %v2051
      %v2054 = vshrl.u32 %v1566, 16
      %v2056 = vrot.slane %v2054, 1
      %v2057 = vshll.u32 %v1566, 16
      %v2059 = vrot.slane %v2057, 2
      %v2060 = vor.u32 %v2056, %v2059
      %v2061 = vsel %vm1936, %v2051, %v2060
      %v2063 = vshrl.u32 %v1567, 16
      %v2065 = vrot.slane %v2063, 1
      %v2066 = vshll.u32 %v1567, 16
      %v2068 = vrot.slane %v2066, 2
      %v2069 = vor.u32 %v2065, %v2068
      %v2070 = vsel %vm1936, %v2060, %v2069
      %v2072 = vshrl.u32 %v1568, 16
      %v2074 = vrot.slane %v2072, 1
      %v2075 = vshll.u32 %v1568, 16
      %v2077 = vrot.slane %v2075, 2
      %v2078 = vor.u32 %v2074, %v2077
      %v2079 = vsel %vm1936, %v2069, %v2078
      %v2081 = vshrl.u32 %v1569, 16
      %v2083 = vrot.slane %v2081, 1
      %v2084 = vshll.u32 %v1569, 16
      %v2086 = vrot.slane %v2084, 2
      %v2087 = vor.u32 %v2083, %v2086
      %v2088 = vsel %vm1936, %v2078, %v2087
      %v2090 = vshrl.u32 %v1570, 16
      %v2092 = vrot.slane %v2090, 1
      %v2093 = vshll.u32 %v1570, 16
      %v2095 = vrot.slane %v2093, 2
      %v2096 = vor.u32 %v2092, %v2095
      %v2097 = vsel %vm1936, %v2087, %v2096
      %v2099 = vshrl.u32 %v1571, 16
      %v2101 = vrot.slane %v2099, 1
      %v2102 = vshll.u32 %v1571, 16
      %v2104 = vrot.slane %v2102, 2
      %v2105 = vor.u32 %v2101, %v2104
      %v2106 = vsel %vm1936, %v2096, %v2105
      %v2108 = vshrl.u32 %v1572, 16
      %v2110 = vrot.slane %v2108, 1
      %v2111 = vshll.u32 %v1572, 16
      %v2113 = vrot.slane %v2111, 2
      %v2114 = vor.u32 %v2110, %v2113
      %v2115 = vsel %vm1936, %v2105, %v2114
      %v2124 = vunpack.c.l.b16 %v1928
      %v2125 = vunpack.c.l.b16 %v1929
      %v2126 = vunpack.c.l.b16 %v1930
      %v2127 = vunpack.c.l.b16 %v1931
      %v2128 = vunpack.c.l.b16 %v1932
      %v2129 = vunpack.c.l.b16 %v1933
      %v2130 = vunpack.c.l.b16 %v1934
      %v2131 = vunpack.c.l.b16 %v1935
      %v2132 = vpack.c.b16 %v2125, %v2124
      %v2133 = vpack.c.b16 %v2127, %v2126
      %v2134 = vpack.c.b16 %v2129, %v2128
      %v2135 = vpack.c.b16 %v2131, %v2130
      %v2141 = vsel %vm546, %v1953, 0
      %v2144 = vsel %vm546, %v1962, 0
      %v2147 = vsel %vm546, %v1971, 0
      %v2150 = vsel %vm546, %v1980, 0
      %v2153 = vsel %vm546, %v1989, 0
      %v2156 = vsel %vm546, %v1998, 0
      %v2159 = vsel %vm546, %v2007, 0
      %v2162 = vsel %vm546, %v2016, 0
      %v2165 = vsel %vm546, %v2025, 0
      %v2168 = vsel %vm546, %v2034, 0
      %v2171 = vsel %vm546, %v2043, 0
      %v2174 = vsel %vm546, %v2052, 0
      %v2177 = vsel %vm546, %v2061, 0
      %v2180 = vsel %vm546, %v2070, 0
      %v2183 = vsel %vm546, %v2079, 0
      %v2186 = vsel %vm546, %v2088, 0
      %v2189 = vsel %vm546, %v2097, 0
      %v2192 = vsel %vm546, %v2106, 0
      %v2195 = vsel %vm546, %v2115, 0
      %v2198 = vsel %vm546, %v2114, 0
      %2200 = vmatprep.subr.bf16.mxu0 0
      %2201 = vmatpush1.bf16.msra.mxu0 %v2132
      %2202 = vmatprep.subr.bf16.mxu0 0
      %2203 = vmatpush1.bf16.msra.mxu0 %v2133
      %2204 = vmatprep.subr.bf16.mxu0 0
      %2205 = vmatpush1.bf16.msra.mxu0 %v2134
      %2206 = vmatprep.subr.bf16.mxu0 0
      %2207 = vmatpush1.bf16.msra.mxu0 %v2135
      %2208 = vmatprep.subr.bf16.mxu0 0
      %2209 = vmatpush1.bf16.msra.mxu0 0
      %2210 = vmatprep.subr.bf16.mxu0 0
      %2211 = vmatpush1.bf16.msra.mxu0 0
      %2212 = vmatprep.subr.bf16.mxu0 0
      %2213 = vmatpush1.bf16.msra.mxu0 0
      %2214 = vmatprep.subr.bf16.mxu0 0
      %2215 = vmatpush1.bf16.msra.mxu0 0
      %2216 = vmatprep.subr.bf16.mxu0 0
      %2217 = vmatpush1.bf16.msra.mxu0 0
      %2218 = vmatprep.subr.bf16.mxu0 0
      %2219 = vmatpush1.bf16.msra.mxu0 0
      %2220 = vmatprep.subr.bf16.mxu0 0
      %2221 = vmatpush1.bf16.msra.mxu0 0
      %2222 = vmatprep.subr.bf16.mxu0 0
      %2223 = vmatpush1.bf16.msra.mxu0 0
      %2224 = vmatprep.subr.bf16.mxu0 0
      %2225 = vmatpush1.bf16.msra.mxu0 0
      %2226 = vmatprep.subr.bf16.mxu0 0
      %2227 = vmatpush1.bf16.msra.mxu0 0
      %2228 = vmatprep.subr.bf16.mxu0 0
      %2229 = vmatpush1.bf16.msra.mxu0 0
      %2230 = vmatprep.subr.bf16.mxu0 0
      %2231 = vmatpush1.bf16.msra.mxu0 0
      %2232 = vmatprep.mubr.bf16.mxu0 0
      %2233 = vmatmul.mubr.bf16.gmra.mrb[0].mxu0 %v2141
      %v2234 = vpop.f32.mrb[0].mxu0
      %v2235 = vadd.f32 0.0, %v2234
      %v2236 = vpop.f32.mrb[0].mxu0
      %v2237 = vpop.f32.mrb[0].mxu0
      %v2238 = vadd.f32 0.0, %v2237
      %v2239 = vpop.f32.mrb[0].mxu0
      %2240 = vmatprep.mubr.bf16.mxu0 0
      %2241 = vmatmul.mubr.bf16.gmra.mrb[0].mxu0 %v2144
      %v2242 = vpop.f32.mrb[0].mxu0
      %v2243 = vadd.f32 0.0, %v2242
      %v2244 = vpop.f32.mrb[0].mxu0
      %v2245 = vpop.f32.mrb[0].mxu0
      %v2246 = vadd.f32 0.0, %v2245
      %v2247 = vpop.f32.mrb[0].mxu0
      %2248 = vmatprep.mubr.bf16.mxu0 0
      %2249 = vmatmul.mubr.bf16.gmra.mrb[0].mxu0 %v2147
      %v2250 = vpop.f32.mrb[0].mxu0
      %v2251 = vadd.f32 0.0, %v2250
      %v2252 = vpop.f32.mrb[0].mxu0
      %v2253 = vpop.f32.mrb[0].mxu0
      %v2254 = vadd.f32 0.0, %v2253
      %v2255 = vpop.f32.mrb[0].mxu0
      %2256 = vmatprep.mubr.bf16.mxu0 0
      %2257 = vmatmul.mubr.bf16.gmra.mrb[0].mxu0 %v2150
      %v2258 = vpop.f32.mrb[0].mxu0
      %v2259 = vadd.f32 0.0, %v2258
      %v2260 = vpop.f32.mrb[0].mxu0
      %v2261 = vpop.f32.mrb[0].mxu0
      %v2262 = vadd.f32 0.0, %v2261
      %v2263 = vpop.f32.mrb[0].mxu0
      %2264 = vmatprep.mubr.bf16.mxu0 0
      %2265 = vmatmul.mubr.bf16.gmra.mrb[0].mxu0 %v2153
      %v2266 = vpop.f32.mrb[0].mxu0
      %v2267 = vadd.f32 0.0, %v2266
      %v2268 = vpop.f32.mrb[0].mxu0
      %v2269 = vpop.f32.mrb[0].mxu0
      %v2270 = vadd.f32 0.0, %v2269
      %v2271 = vpop.f32.mrb[0].mxu0
      %2272 = vmatprep.mubr.bf16.mxu0 0
      %2273 = vmatmul.mubr.bf16.gmra.mrb[0].mxu0 %v2156
      %v2274 = vpop.f32.mrb[0].mxu0
      %v2275 = vadd.f32 0.0, %v2274
      %v2276 = vpop.f32.mrb[0].mxu0
      %v2277 = vpop.f32.mrb[0].mxu0
      %v2278 = vadd.f32 0.0, %v2277
      %v2279 = vpop.f32.mrb[0].mxu0
      %2280 = vmatprep.mubr.bf16.mxu0 0
      %2281 = vmatmul.mubr.bf16.gmra.mrb[0].mxu0 %v2159
      %v2282 = vpop.f32.mrb[0].mxu0
      %v2283 = vadd.f32 0.0, %v2282
      %v2284 = vpop.f32.mrb[0].mxu0
      %v2285 = vpop.f32.mrb[0].mxu0
      %v2286 = vadd.f32 0.0, %v2285
      %v2287 = vpop.f32.mrb[0].mxu0
      %2288 = vmatprep.mubr.bf16.mxu0 0
      %2289 = vmatmul.mubr.bf16.gmra.mrb[0].mxu0 %v2162
      %v2290 = vpop.f32.mrb[0].mxu0
      %v2291 = vadd.f32 0.0, %v2290
      %v2292 = vpop.f32.mrb[0].mxu0
      %v2293 = vpop.f32.mrb[0].mxu0
      %v2294 = vadd.f32 0.0, %v2293
      %v2295 = vpop.f32.mrb[0].mxu0
      %2296 = vmatprep.mubr.bf16.mxu0 0
      %2297 = vmatmul.mubr.bf16.gmra.mrb[0].mxu0 %v2165
      %v2298 = vpop.f32.mrb[0].mxu0
      %v2299 = vadd.f32 0.0, %v2298
      %v2300 = vpop.f32.mrb[0].mxu0
      %v2301 = vpop.f32.mrb[0].mxu0
      %v2302 = vadd.f32 0.0, %v2301
      %v2303 = vpop.f32.mrb[0].mxu0
      %2304 = vmatprep.mubr.bf16.mxu0 0
      %2305 = vmatmul.mubr.bf16.gmra.mrb[0].mxu0 %v2168
      %v2306 = vpop.f32.mrb[0].mxu0
      %v2307 = vadd.f32 0.0, %v2306
      %v2308 = vpop.f32.mrb[0].mxu0
      %v2309 = vpop.f32.mrb[0].mxu0
      %v2310 = vadd.f32 0.0, %v2309
      %v2311 = vpop.f32.mrb[0].mxu0
      %2312 = vmatprep.mubr.bf16.mxu0 0
      %2313 = vmatmul.mubr.bf16.gmra.mrb[0].mxu0 %v2171
      %v2314 = vpop.f32.mrb[0].mxu0
      %v2315 = vadd.f32 0.0, %v2314
      %v2316 = vpop.f32.mrb[0].mxu0
      %v2317 = vpop.f32.mrb[0].mxu0
      %v2318 = vadd.f32 0.0, %v2317
      %v2319 = vpop.f32.mrb[0].mxu0
      %2320 = vmatprep.mubr.bf16.mxu0 0
      %2321 = vmatmul.mubr.bf16.gmra.mrb[0].mxu0 %v2174
      %v2322 = vpop.f32.mrb[0].mxu0
      %v2323 = vadd.f32 0.0, %v2322
      %v2324 = vpop.f32.mrb[0].mxu0
      %v2325 = vpop.f32.mrb[0].mxu0
      %v2326 = vadd.f32 0.0, %v2325
      %v2327 = vpop.f32.mrb[0].mxu0
      %2328 = vmatprep.mubr.bf16.mxu0 0
      %2329 = vmatmul.mubr.bf16.gmra.mrb[0].mxu0 %v2177
      %v2330 = vpop.f32.mrb[0].mxu0
      %v2331 = vadd.f32 0.0, %v2330
      %v2332 = vpop.f32.mrb[0].mxu0
      %v2333 = vpop.f32.mrb[0].mxu0
      %v2334 = vadd.f32 0.0, %v2333
      %v2335 = vpop.f32.mrb[0].mxu0
      %2336 = vmatprep.mubr.bf16.mxu0 0
      %2337 = vmatmul.mubr.bf16.gmra.mrb[0].mxu0 %v2180
      %v2338 = vpop.f32.mrb[0].mxu0
      %v2339 = vadd.f32 0.0, %v2338
      %v2340 = vpop.f32.mrb[0].mxu0
      %v2341 = vpop.f32.mrb[0].mxu0
      %v2342 = vadd.f32 0.0, %v2341
      %v2343 = vpop.f32.mrb[0].mxu0
      %2344 = vmatprep.mubr.bf16.mxu0 0
      %2345 = vmatmul.mubr.bf16.gmra.mrb[0].mxu0 %v2183
      %v2346 = vpop.f32.mrb[0].mxu0
      %v2347 = vadd.f32 0.0, %v2346
      %v2348 = vpop.f32.mrb[0].mxu0
      %v2349 = vpop.f32.mrb[0].mxu0
      %v2350 = vadd.f32 0.0, %v2349
      %v2351 = vpop.f32.mrb[0].mxu0
      %2352 = vmatprep.mubr.bf16.mxu0 0
      %2353 = vmatmul.mubr.bf16.gmra.mrb[0].mxu0 %v2186
      %v2354 = vpop.f32.mrb[0].mxu0
      %v2355 = vadd.f32 0.0, %v2354
      %v2356 = vpop.f32.mrb[0].mxu0
      %v2357 = vpop.f32.mrb[0].mxu0
      %v2358 = vadd.f32 0.0, %v2357
      %v2359 = vpop.f32.mrb[0].mxu0
      %2360 = vmatprep.mubr.bf16.mxu0 0
      %2361 = vmatmul.mubr.bf16.gmra.mrb[0].mxu0 %v2189
      %v2362 = vpop.f32.mrb[0].mxu0
      %v2363 = vadd.f32 0.0, %v2362
      %v2364 = vpop.f32.mrb[0].mxu0
      %v2365 = vpop.f32.mrb[0].mxu0
      %v2366 = vadd.f32 0.0, %v2365
      %v2367 = vpop.f32.mrb[0].mxu0
      %2368 = vmatprep.mubr.bf16.mxu0 0
      %2369 = vmatmul.mubr.bf16.gmra.mrb[0].mxu0 %v2192
      %v2370 = vpop.f32.mrb[0].mxu0
      %v2371 = vadd.f32 0.0, %v2370
      %v2372 = vpop.f32.mrb[0].mxu0
      %v2373 = vpop.f32.mrb[0].mxu0
      %v2374 = vadd.f32 0.0, %v2373
      %v2375 = vpop.f32.mrb[0].mxu0
      %2376 = vmatprep.mubr.bf16.mxu0 0
      %2377 = vmatmul.mubr.bf16.gmra.mrb[0].mxu0 %v2195
      %v2378 = vpop.f32.mrb[0].mxu0
      %v2379 = vadd.f32 0.0, %v2378
      %v2380 = vpop.f32.mrb[0].mxu0
      %v2381 = vpop.f32.mrb[0].mxu0
      %v2382 = vadd.f32 0.0, %v2381
      %v2383 = vpop.f32.mrb[0].mxu0
      %2384 = vmatprep.mubr.bf16.mxu0 0
      %2385 = vmatmul.mubr.bf16.gmra.mrb[0].mxu0 %v2198
      %v2386 = vpop.f32.mrb[0].mxu0
      %v2387 = vadd.f32 0.0, %v2386
      %v2388 = vpop.f32.mrb[0].mxu0
      %v2389 = vpop.f32.mrb[0].mxu0
      %v2390 = vpop.f32.mrb[0].mxu0
      %2391 = vdwg.mxu0
      %v2392 = vadd.f32 %v1888, %v2235
      %v2393 = vadd.f32 %v1889, %v2238
      %v2394 = vadd.f32 %v1890, %v2243
      %v2395 = vadd.f32 %v1891, %v2246
      %v2396 = vadd.f32 %v1892, %v2251
      %v2397 = vadd.f32 %v1893, %v2254
      %v2398 = vadd.f32 %v1894, %v2259
      %v2399 = vadd.f32 %v1895, %v2262
      %v2400 = vadd.f32 %v1896, %v2267
      %v2401 = vadd.f32 %v1897, %v2270
      %v2402 = vadd.f32 %v1898, %v2275
      %v2403 = vadd.f32 %v1899, %v2278
      %v2404 = vadd.f32 %v1900, %v2283
      %v2405 = vadd.f32 %v1901, %v2286
      %v2406 = vadd.f32 %v1902, %v2291
      %v2407 = vadd.f32 %v1903, %v2294
      %v2408 = vadd.f32 %v1904, %v2299
      %v2409 = vadd.f32 %v1905, %v2302
      %v2410 = vadd.f32 %v1906, %v2307
      %v2411 = vadd.f32 %v1907, %v2310
      %v2412 = vadd.f32 %v1908, %v2315
      %v2413 = vadd.f32 %v1909, %v2318
      %v2414 = vadd.f32 %v1910, %v2323
      %v2415 = vadd.f32 %v1911, %v2326
      %v2416 = vadd.f32 %v1912, %v2331
      %v2417 = vadd.f32 %v1913, %v2334
      %v2418 = vadd.f32 %v1914, %v2339
      %v2419 = vadd.f32 %v1915, %v2342
      %v2420 = vadd.f32 %v1916, %v2347
      %v2421 = vadd.f32 %v1917, %v2350
      %v2422 = vadd.f32 %v1918, %v2355
      %v2423 = vadd.f32 %v1919, %v2358
      %v2424 = vadd.f32 %v1920, %v2363
      %v2425 = vadd.f32 %v1921, %v2366
      %v2426 = vadd.f32 %v1922, %v2371
      %v2427 = vadd.f32 %v1923, %v2374
      %v2428 = vadd.f32 %v1924, %v2379
      %v2429 = vadd.f32 %v1925, %v2382
      %v2430 = vadd.f32 %v1926, %v2387
      %v2431 = vld [vmem:[%s197 + $0x8] sm:$0xc]
      %v2432 = vld [vmem:[%s197 + $0xa0] sm:$0xf]
      %s2433 = scalar_lea.vmem %s1, 160
      %v2434 = vld [vmem:[%s2433] sm:$0xf]
      %v2435 = vld [vmem:[%s2433 + $0x4] sm:$0xf]
      %v2436 = vld [vmem:[%s2433 + $0x8] sm:$0xf]
      %v2437 = vld [vmem:[%s2433 + $0xc] sm:$0xf]
      %v2438 = vld [vmem:[%s2433 + $0x10] sm:$0xf]
      %v2439 = vld [vmem:[%s2433 + $0x14] sm:$0xf]
      %v2440 = vld [vmem:[%s2433 + $0x18] sm:$0xf]
      %v2441 = vld [vmem:[%s2433 + $0x1c] sm:$0xf]
      %v2444 = vunpack.c.l.b16 %v2431
      %v2445 = vunpack.c.l.b16 %v2432
      %v2446 = vpack.c.b16 %v1515, %v2444
      %v2447 = vpack.c.b16 %v2445, %v2445
      %vm2448 = vcmask 1045504
      %v2449 = vrot.slane %v2446, 2
      %v2450 = vrot.slane %v1554, 2
      %v2451 = vsel %vm2448, %v2449, %v2450
      %v2452 = vrot.slane %v1555, 2
      %v2453 = vsel %vm2448, %v2450, %v2452
      %v2454 = vrot.slane %v1556, 2
      %v2455 = vsel %vm2448, %v2452, %v2454
      %v2456 = vrot.slane %v1557, 2
      %v2457 = vsel %vm2448, %v2454, %v2456
      %v2458 = vrot.slane %v1558, 2
      %v2459 = vsel %vm2448, %v2456, %v2458
      %v2460 = vrot.slane %v1559, 2
      %v2461 = vsel %vm2448, %v2458, %v2460
      %v2462 = vrot.slane %v1560, 2
      %v2463 = vsel %vm2448, %v2460, %v2462
      %v2464 = vrot.slane %v1561, 2
      %v2465 = vsel %vm2448, %v2462, %v2464
      %v2466 = vrot.slane %v1562, 2
      %v2467 = vsel %vm2448, %v2464, %v2466
      %v2468 = vrot.slane %v1563, 2
      %v2469 = vsel %vm2448, %v2466, %v2468
      %v2470 = vrot.slane %v1564, 2
      %v2471 = vsel %vm2448, %v2468, %v2470
      %v2472 = vrot.slane %v1565, 2
      %v2473 = vsel %vm2448, %v2470, %v2472
      %v2474 = vrot.slane %v1566, 2
      %v2475 = vsel %vm2448, %v2472, %v2474
      %v2476 = vrot.slane %v1567, 2
      %v2477 = vsel %vm2448, %v2474, %v2476
      %v2478 = vrot.slane %v1568, 2
      %v2479 = vsel %vm2448, %v2476, %v2478
      %v2480 = vrot.slane %v1569, 2
      %v2481 = vsel %vm2448, %v2478, %v2480
      %v2482 = vrot.slane %v1570, 2
      %v2483 = vsel %vm2448, %v2480, %v2482
      %v2484 = vrot.slane %v1571, 2
      %v2485 = vsel %vm2448, %v2482, %v2484
      %v2486 = vrot.slane %v2447, 2
      %v2487 = vsel %vm2448, %v2484, %v2486
      %v2496 = vunpack.c.l.b16 %v2434
      %v2497 = vunpack.c.l.b16 %v2435
      %v2498 = vunpack.c.l.b16 %v2436
      %v2499 = vunpack.c.l.b16 %v2437
      %v2500 = vunpack.c.l.b16 %v2438
      %v2501 = vunpack.c.l.b16 %v2439
      %v2502 = vunpack.c.l.b16 %v2440
      %v2503 = vunpack.c.l.b16 %v2441
      %v2504 = vpack.c.b16 %v2497, %v2496
      %v2505 = vpack.c.b16 %v2499, %v2498
      %v2506 = vpack.c.b16 %v2501, %v2500
      %v2507 = vpack.c.b16 %v2503, %v2502
      %v2513 = vsel %vm546, %v2451, 0
      %v2516 = vsel %vm546, %v2453, 0
      %v2519 = vsel %vm546, %v2455, 0
      %v2522 = vsel %vm546, %v2457, 0
      %v2525 = vsel %vm546, %v2459, 0
      %v2528 = vsel %vm546, %v2461, 0
      %v2531 = vsel %vm546, %v2463, 0
      %v2534 = vsel %vm546, %v2465, 0
      %v2537 = vsel %vm546, %v2467, 0
      %v2540 = vsel %vm546, %v2469, 0
      %v2543 = vsel %vm546, %v2471, 0
      %v2546 = vsel %vm546, %v2473, 0
      %v2549 = vsel %vm546, %v2475, 0
      %v2552 = vsel %vm546, %v2477, 0
      %v2555 = vsel %vm546, %v2479, 0
      %v2558 = vsel %vm546, %v2481, 0
      %v2561 = vsel %vm546, %v2483, 0
      %v2564 = vsel %vm546, %v2485, 0
      %v2567 = vsel %vm546, %v2487, 0
      %v2570 = vsel %vm546, %v2486, 0
      %2572 = vmatprep.subr.bf16.mxu0 0
      %2573 = vmatpush1.bf16.msra.mxu0 %v2504
      %2574 = vmatprep.subr.bf16.mxu0 0
      %2575 = vmatpush1.bf16.msra.mxu0 %v2505
      %2576 = vmatprep.subr.bf16.mxu0 0
      %2577 = vmatpush1.bf16.msra.mxu0 %v2506
      %2578 = vmatprep.subr.bf16.mxu0 0
      %2579 = vmatpush1.bf16.msra.mxu0 %v2507
      %2580 = vmatprep.subr.bf16.mxu0 0
      %2581 = vmatpush1.bf16.msra.mxu0 0
      %2582 = vmatprep.subr.bf16.mxu0 0
      %2583 = vmatpush1.bf16.msra.mxu0 0
      %2584 = vmatprep.subr.bf16.mxu0 0
      %2585 = vmatpush1.bf16.msra.mxu0 0
      %2586 = vmatprep.subr.bf16.mxu0 0
      %2587 = vmatpush1.bf16.msra.mxu0 0
      %2588 = vmatprep.subr.bf16.mxu0 0
      %2589 = vmatpush1.bf16.msra.mxu0 0
      %2590 = vmatprep.subr.bf16.mxu0 0
      %2591 = vmatpush1.bf16.msra.mxu0 0
      %2592 = vmatprep.subr.bf16.mxu0 0
      %2593 = vmatpush1.bf16.msra.mxu0 0
      %2594 = vmatprep.subr.bf16.mxu0 0
      %2595 = vmatpush1.bf16.msra.mxu0 0
      %2596 = vmatprep.subr.bf16.mxu0 0
      %2597 = vmatpush1.bf16.msra.mxu0 0
      %2598 = vmatprep.subr.bf16.mxu0 0
      %2599 = vmatpush1.bf16.msra.mxu0 0
      %2600 = vmatprep.subr.bf16.mxu0 0
      %2601 = vmatpush1.bf16.msra.mxu0 0
      %2602 = vmatprep.subr.bf16.mxu0 0
      %2603 = vmatpush1.bf16.msra.mxu0 0
      %2604 = vmatprep.mubr.bf16.mxu0 0
      %2605 = vmatmul.mubr.bf16.gmra.mrb[0].mxu0 %v2513
      %v2606 = vpop.f32.mrb[0].mxu0
      %v2607 = vadd.f32 0.0, %v2606
      %v2608 = vpop.f32.mrb[0].mxu0
      %v2609 = vpop.f32.mrb[0].mxu0
      %v2610 = vadd.f32 0.0, %v2609
      %v2611 = vpop.f32.mrb[0].mxu0
      %2612 = vmatprep.mubr.bf16.mxu0 0
      %2613 = vmatmul.mubr.bf16.gmra.mrb[0].mxu0 %v2516
      %v2614 = vpop.f32.mrb[0].mxu0
      %v2615 = vadd.f32 0.0, %v2614
      %v2616 = vpop.f32.mrb[0].mxu0
      %v2617 = vpop.f32.mrb[0].mxu0
      %v2618 = vadd.f32 0.0, %v2617
      %v2619 = vpop.f32.mrb[0].mxu0
      %2620 = vmatprep.mubr.bf16.mxu0 0
      %2621 = vmatmul.mubr.bf16.gmra.mrb[0].mxu0 %v2519
      %v2622 = vpop.f32.mrb[0].mxu0
      %v2623 = vadd.f32 0.0, %v2622
      %v2624 = vpop.f32.mrb[0].mxu0
      %v2625 = vpop.f32.mrb[0].mxu0
      %v2626 = vadd.f32 0.0, %v2625
      %v2627 = vpop.f32.mrb[0].mxu0
      %2628 = vmatprep.mubr.bf16.mxu0 0
      %2629 = vmatmul.mubr.bf16.gmra.mrb[0].mxu0 %v2522
      %v2630 = vpop.f32.mrb[0].mxu0
      %v2631 = vadd.f32 0.0, %v2630
      %v2632 = vpop.f32.mrb[0].mxu0
      %v2633 = vpop.f32.mrb[0].mxu0
      %v2634 = vadd.f32 0.0, %v2633
      %v2635 = vpop.f32.mrb[0].mxu0
      %2636 = vmatprep.mubr.bf16.mxu0 0
      %2637 = vmatmul.mubr.bf16.gmra.mrb[0].mxu0 %v2525
      %v2638 = vpop.f32.mrb[0].mxu0
      %v2639 = vadd.f32 0.0, %v2638
      %v2640 = vpop.f32.mrb[0].mxu0
      %v2641 = vpop.f32.mrb[0].mxu0
      %v2642 = vadd.f32 0.0, %v2641
      %v2643 = vpop.f32.mrb[0].mxu0
      %2644 = vmatprep.mubr.bf16.mxu0 0
      %2645 = vmatmul.mubr.bf16.gmra.mrb[0].mxu0 %v2528
      %v2646 = vpop.f32.mrb[0].mxu0
      %v2647 = vadd.f32 0.0, %v2646
      %v2648 = vpop.f32.mrb[0].mxu0
      %v2649 = vpop.f32.mrb[0].mxu0
      %v2650 = vadd.f32 0.0, %v2649
      %v2651 = vpop.f32.mrb[0].mxu0
      %2652 = vmatprep.mubr.bf16.mxu0 0
      %2653 = vmatmul.mubr.bf16.gmra.mrb[0].mxu0 %v2531
      %v2654 = vpop.f32.mrb[0].mxu0
      %v2655 = vadd.f32 0.0, %v2654
      %v2656 = vpop.f32.mrb[0].mxu0
      %v2657 = vpop.f32.mrb[0].mxu0
      %v2658 = vadd.f32 0.0, %v2657
      %v2659 = vpop.f32.mrb[0].mxu0
      %2660 = vmatprep.mubr.bf16.mxu0 0
      %2661 = vmatmul.mubr.bf16.gmra.mrb[0].mxu0 %v2534
      %v2662 = vpop.f32.mrb[0].mxu0
      %v2663 = vadd.f32 0.0, %v2662
      %v2664 = vpop.f32.mrb[0].mxu0
      %v2665 = vpop.f32.mrb[0].mxu0
      %v2666 = vadd.f32 0.0, %v2665
      %v2667 = vpop.f32.mrb[0].mxu0
      %2668 = vmatprep.mubr.bf16.mxu0 0
      %2669 = vmatmul.mubr.bf16.gmra.mrb[0].mxu0 %v2537
      %v2670 = vpop.f32.mrb[0].mxu0
      %v2671 = vadd.f32 0.0, %v2670
      %v2672 = vpop.f32.mrb[0].mxu0
      %v2673 = vpop.f32.mrb[0].mxu0
      %v2674 = vadd.f32 0.0, %v2673
      %v2675 = vpop.f32.mrb[0].mxu0
      %2676 = vmatprep.mubr.bf16.mxu0 0
      %2677 = vmatmul.mubr.bf16.gmra.mrb[0].mxu0 %v2540
      %v2678 = vpop.f32.mrb[0].mxu0
      %v2679 = vadd.f32 0.0, %v2678
      %v2680 = vpop.f32.mrb[0].mxu0
      %v2681 = vpop.f32.mrb[0].mxu0
      %v2682 = vadd.f32 0.0, %v2681
      %v2683 = vpop.f32.mrb[0].mxu0
      %2684 = vmatprep.mubr.bf16.mxu0 0
      %2685 = vmatmul.mubr.bf16.gmra.mrb[0].mxu0 %v2543
      %v2686 = vpop.f32.mrb[0].mxu0
      %v2687 = vadd.f32 0.0, %v2686
      %v2688 = vpop.f32.mrb[0].mxu0
      %v2689 = vpop.f32.mrb[0].mxu0
      %v2690 = vadd.f32 0.0, %v2689
      %v2691 = vpop.f32.mrb[0].mxu0
      %2692 = vmatprep.mubr.bf16.mxu0 0
      %2693 = vmatmul.mubr.bf16.gmra.mrb[0].mxu0 %v2546
      %v2694 = vpop.f32.mrb[0].mxu0
      %v2695 = vadd.f32 0.0, %v2694
      %v2696 = vpop.f32.mrb[0].mxu0
      %v2697 = vpop.f32.mrb[0].mxu0
      %v2698 = vadd.f32 0.0, %v2697
      %v2699 = vpop.f32.mrb[0].mxu0
      %2700 = vmatprep.mubr.bf16.mxu0 0
      %2701 = vmatmul.mubr.bf16.gmra.mrb[0].mxu0 %v2549
      %v2702 = vpop.f32.mrb[0].mxu0
      %v2703 = vadd.f32 0.0, %v2702
      %v2704 = vpop.f32.mrb[0].mxu0
      %v2705 = vpop.f32.mrb[0].mxu0
      %v2706 = vadd.f32 0.0, %v2705
      %v2707 = vpop.f32.mrb[0].mxu0
      %2708 = vmatprep.mubr.bf16.mxu0 0
      %2709 = vmatmul.mubr.bf16.gmra.mrb[0].mxu0 %v2552
      %v2710 = vpop.f32.mrb[0].mxu0
      %v2711 = vadd.f32 0.0, %v2710
      %v2712 = vpop.f32.mrb[0].mxu0
      %v2713 = vpop.f32.mrb[0].mxu0
      %v2714 = vadd.f32 0.0, %v2713
      %v2715 = vpop.f32.mrb[0].mxu0
      %2716 = vmatprep.mubr.bf16.mxu0 0
      %2717 = vmatmul.mubr.bf16.gmra.mrb[0].mxu0 %v2555
      %v2718 = vpop.f32.mrb[0].mxu0
      %v2719 = vadd.f32 0.0, %v2718
      %v2720 = vpop.f32.mrb[0].mxu0
      %v2721 = vpop.f32.mrb[0].mxu0
      %v2722 = vadd.f32 0.0, %v2721
      %v2723 = vpop.f32.mrb[0].mxu0
      %2724 = vmatprep.mubr.bf16.mxu0 0
      %2725 = vmatmul.mubr.bf16.gmra.mrb[0].mxu0 %v2558
      %v2726 = vpop.f32.mrb[0].mxu0
      %v2727 = vadd.f32 0.0, %v2726
      %v2728 = vpop.f32.mrb[0].mxu0
      %v2729 = vpop.f32.mrb[0].mxu0
      %v2730 = vadd.f32 0.0, %v2729
      %v2731 = vpop.f32.mrb[0].mxu0
      %2732 = vmatprep.mubr.bf16.mxu0 0
      %2733 = vmatmul.mubr.bf16.gmra.mrb[0].mxu0 %v2561
      %v2734 = vpop.f32.mrb[0].mxu0
      %v2735 = vadd.f32 0.0, %v2734
      %v2736 = vpop.f32.mrb[0].mxu0
      %v2737 = vpop.f32.mrb[0].mxu0
      %v2738 = vadd.f32 0.0, %v2737
      %v2739 = vpop.f32.mrb[0].mxu0
      %2740 = vmatprep.mubr.bf16.mxu0 0
      %2741 = vmatmul.mubr.bf16.gmra.mrb[0].mxu0 %v2564
      %v2742 = vpop.f32.mrb[0].mxu0
      %v2743 = vadd.f32 0.0, %v2742
      %v2744 = vpop.f32.mrb[0].mxu0
      %v2745 = vpop.f32.mrb[0].mxu0
      %v2746 = vadd.f32 0.0, %v2745
      %v2747 = vpop.f32.mrb[0].mxu0
      %2748 = vmatprep.mubr.bf16.mxu0 0
      %2749 = vmatmul.mubr.bf16.gmra.mrb[0].mxu0 %v2567
      %v2750 = vpop.f32.mrb[0].mxu0
      %v2751 = vadd.f32 0.0, %v2750
      %v2752 = vpop.f32.mrb[0].mxu0
      %v2753 = vpop.f32.mrb[0].mxu0
      %v2754 = vadd.f32 0.0, %v2753
      %v2755 = vpop.f32.mrb[0].mxu0
      %2756 = vmatprep.mubr.bf16.mxu0 0
      %2757 = vmatmul.mubr.bf16.gmra.mrb[0].mxu0 %v2570
      %v2758 = vpop.f32.mrb[0].mxu0
      %v2759 = vadd.f32 0.0, %v2758
      %v2760 = vpop.f32.mrb[0].mxu0
      %v2761 = vpop.f32.mrb[0].mxu0
      %v2762 = vpop.f32.mrb[0].mxu0
      %2763 = vdwg.mxu0
      %v2764 = vadd.f32 %v2392, %v2607
      %v2765 = vadd.f32 %v2393, %v2610
      %v2766 = vadd.f32 %v2394, %v2615
      %v2767 = vadd.f32 %v2395, %v2618
      %v2768 = vadd.f32 %v2396, %v2623
      %v2769 = vadd.f32 %v2397, %v2626
      %v2770 = vadd.f32 %v2398, %v2631
      %v2771 = vadd.f32 %v2399, %v2634
      %v2772 = vadd.f32 %v2400, %v2639
      %v2773 = vadd.f32 %v2401, %v2642
      %v2774 = vadd.f32 %v2402, %v2647
      %v2775 = vadd.f32 %v2403, %v2650
      %v2776 = vadd.f32 %v2404, %v2655
      %v2777 = vadd.f32 %v2405, %v2658
      %v2778 = vadd.f32 %v2406, %v2663
      %v2779 = vadd.f32 %v2407, %v2666
      %v2780 = vadd.f32 %v2408, %v2671
      %v2781 = vadd.f32 %v2409, %v2674
      %v2782 = vadd.f32 %v2410, %v2679
      %v2783 = vadd.f32 %v2411, %v2682
      %v2784 = vadd.f32 %v2412, %v2687
      %v2785 = vadd.f32 %v2413, %v2690
      %v2786 = vadd.f32 %v2414, %v2695
      %v2787 = vadd.f32 %v2415, %v2698
      %v2788 = vadd.f32 %v2416, %v2703
      %v2789 = vadd.f32 %v2417, %v2706
      %v2790 = vadd.f32 %v2418, %v2711
      %v2791 = vadd.f32 %v2419, %v2714
      %v2792 = vadd.f32 %v2420, %v2719
      %v2793 = vadd.f32 %v2421, %v2722
      %v2794 = vadd.f32 %v2422, %v2727
      %v2795 = vadd.f32 %v2423, %v2730
      %v2796 = vadd.f32 %v2424, %v2735
      %v2797 = vadd.f32 %v2425, %v2738
      %v2798 = vadd.f32 %v2426, %v2743
      %v2799 = vadd.f32 %v2427, %v2746
      %v2800 = vadd.f32 %v2428, %v2751
      %v2801 = vadd.f32 %v2429, %v2754
      %v2802 = vadd.f32 %v2430, %v2759
      %v2803 = vld [vmem:[%s197 + $0x10] sm:$0xc]
      %v2804 = vld [vmem:[%s197 + $0x14] sm:$0xf]
      %v2805 = vld [vmem:[%s197 + $0x18] sm:$0xf]
      %v2806 = vld [vmem:[%s197 + $0x1c] sm:$0xf]
      %v2807 = vld [vmem:[%s197 + $0x20] sm:$0xf]
      %v2808 = vld [vmem:[%s197 + $0x24] sm:$0xf]
      %v2809 = vld [vmem:[%s197 + $0x28] sm:$0xf]
      %v2810 = vld [vmem:[%s197 + $0x2c] sm:$0xf]
      %v2811 = vld [vmem:[%s197 + $0x30] sm:$0xf]
      %v2812 = vld [vmem:[%s197 + $0x34] sm:$0xf]
      %v2813 = vld [vmem:[%s197 + $0x38] sm:$0xf]
      %v2814 = vld [vmem:[%s197 + $0x3c] sm:$0xf]
      %v2815 = vld [vmem:[%s197 + $0x40] sm:$0xf]
      %v2816 = vld [vmem:[%s197 + $0x44] sm:$0xf]
      %v2817 = vld [vmem:[%s197 + $0x48] sm:$0xf]
      %v2818 = vld [vmem:[%s197 + $0x4c] sm:$0xf]
      %v2819 = vld [vmem:[%s197 + $0x50] sm:$0xf]
      %v2820 = vld [vmem:[%s197 + $0x54] sm:$0xf]
      %v2821 = vld [vmem:[%s197 + $0x58] sm:$0xf]
      %v2822 = vld [vmem:[%s197 + $0x5c] sm:$0xf]
      %v2823 = vld [vmem:[%s197 + $0x60] sm:$0xf]
      %v2824 = vld [vmem:[%s197 + $0x64] sm:$0xf]
      %v2825 = vld [vmem:[%s197 + $0x68] sm:$0xf]
      %v2826 = vld [vmem:[%s197 + $0x6c] sm:$0xf]
      %v2827 = vld [vmem:[%s197 + $0x70] sm:$0xf]
      %v2828 = vld [vmem:[%s197 + $0x74] sm:$0xf]
      %v2829 = vld [vmem:[%s197 + $0x78] sm:$0xf]
      %v2830 = vld [vmem:[%s197 + $0x7c] sm:$0xf]
      %v2831 = vld [vmem:[%s197 + $0x80] sm:$0xf]
      %v2832 = vld [vmem:[%s197 + $0x84] sm:$0xf]
      %v2833 = vld [vmem:[%s197 + $0x88] sm:$0xf]
      %v2834 = vld [vmem:[%s197 + $0x8c] sm:$0xf]
      %v2835 = vld [vmem:[%s197 + $0x90] sm:$0xf]
      %v2836 = vld [vmem:[%s197 + $0x94] sm:$0xf]
      %v2837 = vld [vmem:[%s197 + $0x98] sm:$0xf]
      %v2838 = vld [vmem:[%s197 + $0x9c] sm:$0xf]
      %v2839 = vld [vmem:[%s197 + $0xa0] sm:$0xf]
      %v2840 = vld [vmem:[%s197 + $0xa4] sm:$0xf]
      %v2841 = vld [vmem:[%s197 + $0xa8] sm:$0xf]
      %s2842 = scalar_lea.vmem %s1, 192
      %v2843 = vld [vmem:[%s2842] sm:$0xf]
      %v2844 = vld [vmem:[%s2842 + $0x4] sm:$0xf]
      %v2845 = vld [vmem:[%s2842 + $0x8] sm:$0xf]
      %v2846 = vld [vmem:[%s2842 + $0xc] sm:$0xf]
      %v2847 = vld [vmem:[%s2842 + $0x10] sm:$0xf]
      %v2848 = vld [vmem:[%s2842 + $0x14] sm:$0xf]
      %v2849 = vld [vmem:[%s2842 + $0x18] sm:$0xf]
      %v2850 = vld [vmem:[%s2842 + $0x1c] sm:$0xf]
      %v2890 = vunpack.c.l.b16 %v2803
      %v2891 = vunpack.c.l.b16 %v2804
      %v2892 = vunpack.c.l.b16 %v2805
      %v2893 = vunpack.c.l.b16 %v2806
      %v2894 = vunpack.c.l.b16 %v2807
      %v2895 = vunpack.c.l.b16 %v2808
      %v2896 = vunpack.c.l.b16 %v2809
      %v2897 = vunpack.c.l.b16 %v2810
      %v2898 = vunpack.c.l.b16 %v2811
      %v2899 = vunpack.c.l.b16 %v2812
      %v2900 = vunpack.c.l.b16 %v2813
      %v2901 = vunpack.c.l.b16 %v2814
      %v2902 = vunpack.c.l.b16 %v2815
      %v2903 = vunpack.c.l.b16 %v2816
      %v2904 = vunpack.c.l.b16 %v2817
      %v2905 = vunpack.c.l.b16 %v2818
      %v2906 = vunpack.c.l.b16 %v2819
      %v2907 = vunpack.c.l.b16 %v2820
      %v2908 = vunpack.c.l.b16 %v2821
      %v2909 = vunpack.c.l.b16 %v2822
      %v2910 = vunpack.c.l.b16 %v2823
      %v2911 = vunpack.c.l.b16 %v2824
      %v2912 = vunpack.c.l.b16 %v2825
      %v2913 = vunpack.c.l.b16 %v2826
      %v2914 = vunpack.c.l.b16 %v2827
      %v2915 = vunpack.c.l.b16 %v2828
      %v2916 = vunpack.c.l.b16 %v2829
      %v2917 = vunpack.c.l.b16 %v2830
      %v2918 = vunpack.c.l.b16 %v2831
      %v2919 = vunpack.c.l.b16 %v2832
      %v2920 = vunpack.c.l.b16 %v2833
      %v2921 = vunpack.c.l.b16 %v2834
      %v2922 = vunpack.c.l.b16 %v2835
      %v2923 = vunpack.c.l.b16 %v2836
      %v2924 = vunpack.c.l.b16 %v2837
      %v2925 = vunpack.c.l.b16 %v2838
      %v2926 = vunpack.c.l.b16 %v2839
      %v2927 = vunpack.c.l.b16 %v2840
      %v2928 = vunpack.c.l.b16 %v2841
      %v2929 = vpack.c.b16 %v2891, %v2890
      %v2930 = vpack.c.b16 %v2893, %v2892
      %v2931 = vpack.c.b16 %v2895, %v2894
      %v2932 = vpack.c.b16 %v2897, %v2896
      %v2933 = vpack.c.b16 %v2899, %v2898
      %v2934 = vpack.c.b16 %v2901, %v2900
      %v2935 = vpack.c.b16 %v2903, %v2902
      %v2936 = vpack.c.b16 %v2905, %v2904
      %v2937 = vpack.c.b16 %v2907, %v2906
      %v2938 = vpack.c.b16 %v2909, %v2908
      %v2939 = vpack.c.b16 %v2911, %v2910
      %v2940 = vpack.c.b16 %v2913, %v2912
      %v2941 = vpack.c.b16 %v2915, %v2914
      %v2942 = vpack.c.b16 %v2917, %v2916
      %v2943 = vpack.c.b16 %v2919, %v2918
      %v2944 = vpack.c.b16 %v2921, %v2920
      %v2945 = vpack.c.b16 %v2923, %v2922
      %v2946 = vpack.c.b16 %v2925, %v2924
      %v2947 = vpack.c.b16 %v2927, %v2926
      %v2948 = vpack.c.b16 %v2928, %v2928
      %v2949 = vrot.slane %v2929, 2
      %v2950 = vrot.slane %v2930, 2
      %v2951 = vsel %vm2448, %v2949, %v2950
      %v2952 = vrot.slane %v2931, 2
      %v2953 = vsel %vm2448, %v2950, %v2952
      %v2954 = vrot.slane %v2932, 2
      %v2955 = vsel %vm2448, %v2952, %v2954
      %v2956 = vrot.slane %v2933, 2
      %v2957 = vsel %vm2448, %v2954, %v2956
      %v2958 = vrot.slane %v2934, 2
      %v2959 = vsel %vm2448, %v2956, %v2958
      %v2960 = vrot.slane %v2935, 2
      %v2961 = vsel %vm2448, %v2958, %v2960
      %v2962 = vrot.slane %v2936, 2
      %v2963 = vsel %vm2448, %v2960, %v2962
      %v2964 = vrot.slane %v2937, 2
      %v2965 = vsel %vm2448, %v2962, %v2964
      %v2966 = vrot.slane %v2938, 2
      %v2967 = vsel %vm2448, %v2964, %v2966
      %v2968 = vrot.slane %v2939, 2
      %v2969 = vsel %vm2448, %v2966, %v2968
      %v2970 = vrot.slane %v2940, 2
      %v2971 = vsel %vm2448, %v2968, %v2970
      %v2972 = vrot.slane %v2941, 2
      %v2973 = vsel %vm2448, %v2970, %v2972
      %v2974 = vrot.slane %v2942, 2
      %v2975 = vsel %vm2448, %v2972, %v2974
      %v2976 = vrot.slane %v2943, 2
      %v2977 = vsel %vm2448, %v2974, %v2976
      %v2978 = vrot.slane %v2944, 2
      %v2979 = vsel %vm2448, %v2976, %v2978
      %v2980 = vrot.slane %v2945, 2
      %v2981 = vsel %vm2448, %v2978, %v2980
      %v2982 = vrot.slane %v2946, 2
      %v2983 = vsel %vm2448, %v2980, %v2982
      %v2984 = vrot.slane %v2947, 2
      %v2985 = vsel %vm2448, %v2982, %v2984
      %v2986 = vrot.slane %v2948, 2
      %v2987 = vsel %vm2448, %v2984, %v2986
      %v2996 = vunpack.c.l.b16 %v2843
      %v2997 = vunpack.c.l.b16 %v2844
      %v2998 = vunpack.c.l.b16 %v2845
      %v2999 = vunpack.c.l.b16 %v2846
      %v3000 = vunpack.c.l.b16 %v2847
      %v3001 = vunpack.c.l.b16 %v2848
      %v3002 = vunpack.c.l.b16 %v2849
      %v3003 = vunpack.c.l.b16 %v2850
      %v3004 = vpack.c.b16 %v2997, %v2996
      %v3005 = vpack.c.b16 %v2999, %v2998
      %v3006 = vpack.c.b16 %v3001, %v3000
      %v3007 = vpack.c.b16 %v3003, %v3002
      %v3013 = vsel %vm546, %v2951, 0
      %v3016 = vsel %vm546, %v2953, 0
      %v3019 = vsel %vm546, %v2955, 0
      %v3022 = vsel %vm546, %v2957, 0
      %v3025 = vsel %vm546, %v2959, 0
      %v3028 = vsel %vm546, %v2961, 0
      %v3031 = vsel %vm546, %v2963, 0
      %v3034 = vsel %vm546, %v2965, 0
      %v3037 = vsel %vm546, %v2967, 0
      %v3040 = vsel %vm546, %v2969, 0
      %v3043 = vsel %vm546, %v2971, 0
      %v3046 = vsel %vm546, %v2973, 0
      %v3049 = vsel %vm546, %v2975, 0
      %v3052 = vsel %vm546, %v2977, 0
      %v3055 = vsel %vm546, %v2979, 0
      %v3058 = vsel %vm546, %v2981, 0
      %v3061 = vsel %vm546, %v2983, 0
      %v3064 = vsel %vm546, %v2985, 0
      %v3067 = vsel %vm546, %v2987, 0
      %v3070 = vsel %vm546, %v2986, 0
      %3072 = vmatprep.subr.bf16.mxu0 0
      %3073 = vmatpush1.bf16.msra.mxu0 %v3004
      %3074 = vmatprep.subr.bf16.mxu0 0
      %3075 = vmatpush1.bf16.msra.mxu0 %v3005
      %3076 = vmatprep.subr.bf16.mxu0 0
      %3077 = vmatpush1.bf16.msra.mxu0 %v3006
      %3078 = vmatprep.subr.bf16.mxu0 0
      %3079 = vmatpush1.bf16.msra.mxu0 %v3007
      %3080 = vmatprep.subr.bf16.mxu0 0
      %3081 = vmatpush1.bf16.msra.mxu0 0
      %3082 = vmatprep.subr.bf16.mxu0 0
      %3083 = vmatpush1.bf16.msra.mxu0 0
      %3084 = vmatprep.subr.bf16.mxu0 0
      %3085 = vmatpush1.bf16.msra.mxu0 0
      %3086 = vmatprep.subr.bf16.mxu0 0
      %3087 = vmatpush1.bf16.msra.mxu0 0
      %3088 = vmatprep.subr.bf16.mxu0 0
      %3089 = vmatpush1.bf16.msra.mxu0 0
      %3090 = vmatprep.subr.bf16.mxu0 0
      %3091 = vmatpush1.bf16.msra.mxu0 0
      %3092 = vmatprep.subr.bf16.mxu0 0
      %3093 = vmatpush1.bf16.msra.mxu0 0
      %3094 = vmatprep.subr.bf16.mxu0 0
      %3095 = vmatpush1.bf16.msra.mxu0 0
      %3096 = vmatprep.subr.bf16.mxu0 0
      %3097 = vmatpush1.bf16.msra.mxu0 0
      %3098 = vmatprep.subr.bf16.mxu0 0
      %3099 = vmatpush1.bf16.msra.mxu0 0
      %3100 = vmatprep.subr.bf16.mxu0 0
      %3101 = vmatpush1.bf16.msra.mxu0 0
      %3102 = vmatprep.subr.bf16.mxu0 0
      %3103 = vmatpush1.bf16.msra.mxu0 0
      %3104 = vmatprep.mubr.bf16.mxu0 0
      %3105 = vmatmul.mubr.bf16.gmra.mrb[0].mxu0 %v3013
      %v3106 = vpop.f32.mrb[0].mxu0
      %v3107 = vadd.f32 0.0, %v3106
      %v3108 = vpop.f32.mrb[0].mxu0
      %v3109 = vpop.f32.mrb[0].mxu0
      %v3110 = vadd.f32 0.0, %v3109
      %v3111 = vpop.f32.mrb[0].mxu0
      %3112 = vmatprep.mubr.bf16.mxu0 0
      %3113 = vmatmul.mubr.bf16.gmra.mrb[0].mxu0 %v3016
      %v3114 = vpop.f32.mrb[0].mxu0
      %v3115 = vadd.f32 0.0, %v3114
      %v3116 = vpop.f32.mrb[0].mxu0
      %v3117 = vpop.f32.mrb[0].mxu0
      %v3118 = vadd.f32 0.0, %v3117
      %v3119 = vpop.f32.mrb[0].mxu0
      %3120 = vmatprep.mubr.bf16.mxu0 0
      %3121 = vmatmul.mubr.bf16.gmra.mrb[0].mxu0 %v3019
      %v3122 = vpop.f32.mrb[0].mxu0
      %v3123 = vadd.f32 0.0, %v3122
      %v3124 = vpop.f32.mrb[0].mxu0
      %v3125 = vpop.f32.mrb[0].mxu0
      %v3126 = vadd.f32 0.0, %v3125
      %v3127 = vpop.f32.mrb[0].mxu0
      %3128 = vmatprep.mubr.bf16.mxu0 0
      %3129 = vmatmul.mubr.bf16.gmra.mrb[0].mxu0 %v3022
      %v3130 = vpop.f32.mrb[0].mxu0
      %v3131 = vadd.f32 0.0, %v3130
      %v3132 = vpop.f32.mrb[0].mxu0
      %v3133 = vpop.f32.mrb[0].mxu0
      %v3134 = vadd.f32 0.0, %v3133
      %v3135 = vpop.f32.mrb[0].mxu0
      %3136 = vmatprep.mubr.bf16.mxu0 0
      %3137 = vmatmul.mubr.bf16.gmra.mrb[0].mxu0 %v3025
      %v3138 = vpop.f32.mrb[0].mxu0
      %v3139 = vadd.f32 0.0, %v3138
      %v3140 = vpop.f32.mrb[0].mxu0
      %v3141 = vpop.f32.mrb[0].mxu0
      %v3142 = vadd.f32 0.0, %v3141
      %v3143 = vpop.f32.mrb[0].mxu0
      %3144 = vmatprep.mubr.bf16.mxu0 0
      %3145 = vmatmul.mubr.bf16.gmra.mrb[0].mxu0 %v3028
      %v3146 = vpop.f32.mrb[0].mxu0
      %v3147 = vadd.f32 0.0, %v3146
      %v3148 = vpop.f32.mrb[0].mxu0
      %v3149 = vpop.f32.mrb[0].mxu0
      %v3150 = vadd.f32 0.0, %v3149
      %v3151 = vpop.f32.mrb[0].mxu0
      %3152 = vmatprep.mubr.bf16.mxu0 0
      %3153 = vmatmul.mubr.bf16.gmra.mrb[0].mxu0 %v3031
      %v3154 = vpop.f32.mrb[0].mxu0
      %v3155 = vadd.f32 0.0, %v3154
      %v3156 = vpop.f32.mrb[0].mxu0
      %v3157 = vpop.f32.mrb[0].mxu0
      %v3158 = vadd.f32 0.0, %v3157
      %v3159 = vpop.f32.mrb[0].mxu0
      %3160 = vmatprep.mubr.bf16.mxu0 0
      %3161 = vmatmul.mubr.bf16.gmra.mrb[0].mxu0 %v3034
      %v3162 = vpop.f32.mrb[0].mxu0
      %v3163 = vadd.f32 0.0, %v3162
      %v3164 = vpop.f32.mrb[0].mxu0
      %v3165 = vpop.f32.mrb[0].mxu0
      %v3166 = vadd.f32 0.0, %v3165
      %v3167 = vpop.f32.mrb[0].mxu0
      %3168 = vmatprep.mubr.bf16.mxu0 0
      %3169 = vmatmul.mubr.bf16.gmra.mrb[0].mxu0 %v3037
      %v3170 = vpop.f32.mrb[0].mxu0
      %v3171 = vadd.f32 0.0, %v3170
      %v3172 = vpop.f32.mrb[0].mxu0
      %v3173 = vpop.f32.mrb[0].mxu0
      %v3174 = vadd.f32 0.0, %v3173
      %v3175 = vpop.f32.mrb[0].mxu0
      %3176 = vmatprep.mubr.bf16.mxu0 0
      %3177 = vmatmul.mubr.bf16.gmra.mrb[0].mxu0 %v3040
      %v3178 = vpop.f32.mrb[0].mxu0
      %v3179 = vadd.f32 0.0, %v3178
      %v3180 = vpop.f32.mrb[0].mxu0
      %v3181 = vpop.f32.mrb[0].mxu0
      %v3182 = vadd.f32 0.0, %v3181
      %v3183 = vpop.f32.mrb[0].mxu0
      %3184 = vmatprep.mubr.bf16.mxu0 0
      %3185 = vmatmul.mubr.bf16.gmra.mrb[0].mxu0 %v3043
      %v3186 = vpop.f32.mrb[0].mxu0
      %v3187 = vadd.f32 0.0, %v3186
      %v3188 = vpop.f32.mrb[0].mxu0
      %v3189 = vpop.f32.mrb[0].mxu0
      %v3190 = vadd.f32 0.0, %v3189
      %v3191 = vpop.f32.mrb[0].mxu0
      %3192 = vmatprep.mubr.bf16.mxu0 0
      %3193 = vmatmul.mubr.bf16.gmra.mrb[0].mxu0 %v3046
      %v3194 = vpop.f32.mrb[0].mxu0
      %v3195 = vadd.f32 0.0, %v3194
      %v3196 = vpop.f32.mrb[0].mxu0
      %v3197 = vpop.f32.mrb[0].mxu0
      %v3198 = vadd.f32 0.0, %v3197
      %v3199 = vpop.f32.mrb[0].mxu0
      %3200 = vmatprep.mubr.bf16.mxu0 0
      %3201 = vmatmul.mubr.bf16.gmra.mrb[0].mxu0 %v3049
      %v3202 = vpop.f32.mrb[0].mxu0
      %v3203 = vadd.f32 0.0, %v3202
      %v3204 = vpop.f32.mrb[0].mxu0
      %v3205 = vpop.f32.mrb[0].mxu0
      %v3206 = vadd.f32 0.0, %v3205
      %v3207 = vpop.f32.mrb[0].mxu0
      %3208 = vmatprep.mubr.bf16.mxu0 0
      %3209 = vmatmul.mubr.bf16.gmra.mrb[0].mxu0 %v3052
      %v3210 = vpop.f32.mrb[0].mxu0
      %v3211 = vadd.f32 0.0, %v3210
      %v3212 = vpop.f32.mrb[0].mxu0
      %v3213 = vpop.f32.mrb[0].mxu0
      %v3214 = vadd.f32 0.0, %v3213
      %v3215 = vpop.f32.mrb[0].mxu0
      %3216 = vmatprep.mubr.bf16.mxu0 0
      %3217 = vmatmul.mubr.bf16.gmra.mrb[0].mxu0 %v3055
      %v3218 = vpop.f32.mrb[0].mxu0
      %v3219 = vadd.f32 0.0, %v3218
      %v3220 = vpop.f32.mrb[0].mxu0
      %v3221 = vpop.f32.mrb[0].mxu0
      %v3222 = vadd.f32 0.0, %v3221
      %v3223 = vpop.f32.mrb[0].mxu0
      %3224 = vmatprep.mubr.bf16.mxu0 0
      %3225 = vmatmul.mubr.bf16.gmra.mrb[0].mxu0 %v3058
      %v3226 = vpop.f32.mrb[0].mxu0
      %v3227 = vadd.f32 0.0, %v3226
      %v3228 = vpop.f32.mrb[0].mxu0
      %v3229 = vpop.f32.mrb[0].mxu0
      %v3230 = vadd.f32 0.0, %v3229
      %v3231 = vpop.f32.mrb[0].mxu0
      %3232 = vmatprep.mubr.bf16.mxu0 0
      %3233 = vmatmul.mubr.bf16.gmra.mrb[0].mxu0 %v3061
      %v3234 = vpop.f32.mrb[0].mxu0
      %v3235 = vadd.f32 0.0, %v3234
      %v3236 = vpop.f32.mrb[0].mxu0
      %v3237 = vpop.f32.mrb[0].mxu0
      %v3238 = vadd.f32 0.0, %v3237
      %v3239 = vpop.f32.mrb[0].mxu0
      %3240 = vmatprep.mubr.bf16.mxu0 0
      %3241 = vmatmul.mubr.bf16.gmra.mrb[0].mxu0 %v3064
      %v3242 = vpop.f32.mrb[0].mxu0
      %v3243 = vadd.f32 0.0, %v3242
      %v3244 = vpop.f32.mrb[0].mxu0
      %v3245 = vpop.f32.mrb[0].mxu0
      %v3246 = vadd.f32 0.0, %v3245
      %v3247 = vpop.f32.mrb[0].mxu0
      %3248 = vmatprep.mubr.bf16.mxu0 0
      %3249 = vmatmul.mubr.bf16.gmra.mrb[0].mxu0 %v3067
      %v3250 = vpop.f32.mrb[0].mxu0
      %v3251 = vadd.f32 0.0, %v3250
      %v3252 = vpop.f32.mrb[0].mxu0
      %v3253 = vpop.f32.mrb[0].mxu0
      %v3254 = vadd.f32 0.0, %v3253
      %v3255 = vpop.f32.mrb[0].mxu0
      %3256 = vmatprep.mubr.bf16.mxu0 0
      %3257 = vmatmul.mubr.bf16.gmra.mrb[0].mxu0 %v3070
      %v3258 = vpop.f32.mrb[0].mxu0
      %v3259 = vadd.f32 0.0, %v3258
      %v3260 = vpop.f32.mrb[0].mxu0
      %v3261 = vpop.f32.mrb[0].mxu0
      %v3262 = vpop.f32.mrb[0].mxu0
      %3263 = vdwg.mxu0
      %v3264 = vadd.f32 %v2764, %v3107
      %v3265 = vadd.f32 %v2765, %v3110
      %v3266 = vadd.f32 %v2766, %v3115
      %v3267 = vadd.f32 %v2767, %v3118
      %v3268 = vadd.f32 %v2768, %v3123
      %v3269 = vadd.f32 %v2769, %v3126
      %v3270 = vadd.f32 %v2770, %v3131
      %v3271 = vadd.f32 %v2771, %v3134
      %v3272 = vadd.f32 %v2772, %v3139
      %v3273 = vadd.f32 %v2773, %v3142
      %v3274 = vadd.f32 %v2774, %v3147
      %v3275 = vadd.f32 %v2775, %v3150
      %v3276 = vadd.f32 %v2776, %v3155
      %v3277 = vadd.f32 %v2777, %v3158
      %v3278 = vadd.f32 %v2778, %v3163
      %v3279 = vadd.f32 %v2779, %v3166
      %v3280 = vadd.f32 %v2780, %v3171
      %v3281 = vadd.f32 %v2781, %v3174
      %v3282 = vadd.f32 %v2782, %v3179
      %v3283 = vadd.f32 %v2783, %v3182
      %v3284 = vadd.f32 %v2784, %v3187
      %v3285 = vadd.f32 %v2785, %v3190
      %v3286 = vadd.f32 %v2786, %v3195
      %v3287 = vadd.f32 %v2787, %v3198
      %v3288 = vadd.f32 %v2788, %v3203
      %v3289 = vadd.f32 %v2789, %v3206
      %v3290 = vadd.f32 %v2790, %v3211
      %v3291 = vadd.f32 %v2791, %v3214
      %v3292 = vadd.f32 %v2792, %v3219
      %v3293 = vadd.f32 %v2793, %v3222
      %v3294 = vadd.f32 %v2794, %v3227
      %v3295 = vadd.f32 %v2795, %v3230
      %v3296 = vadd.f32 %v2796, %v3235
      %v3297 = vadd.f32 %v2797, %v3238
      %v3298 = vadd.f32 %v2798, %v3243
      %v3299 = vadd.f32 %v2799, %v3246
      %v3300 = vadd.f32 %v2800, %v3251
      %v3301 = vadd.f32 %v2801, %v3254
      %v3302 = vadd.f32 %v2802, %v3259
      %s3303 = scalar_lea.vmem %s1, 224
      %v3304 = vld [vmem:[%s3303] sm:$0xf]
      %v3305 = vld [vmem:[%s3303 + $0x4] sm:$0xf]
      %v3306 = vld [vmem:[%s3303 + $0x8] sm:$0xf]
      %v3307 = vld [vmem:[%s3303 + $0xc] sm:$0xf]
      %v3308 = vld [vmem:[%s3303 + $0x10] sm:$0xf]
      %v3309 = vld [vmem:[%s3303 + $0x14] sm:$0xf]
      %v3310 = vld [vmem:[%s3303 + $0x18] sm:$0xf]
      %v3311 = vld [vmem:[%s3303 + $0x1c] sm:$0xf]
      %vm3312 = vsmask.f32 5376
      %v3314 = vshrl.u32 %v2929, 16
      %v3316 = vrot.slane %v3314, 2
      %v3317 = vshll.u32 %v2929, 16
      %v3319 = vrot.slane %v3317, 3
      %v3320 = vor.u32 %v3316, %v3319
      %v3322 = vshrl.u32 %v2930, 16
      %v3324 = vrot.slane %v3322, 2
      %v3325 = vshll.u32 %v2930, 16
      %v3327 = vrot.slane %v3325, 3
      %v3328 = vor.u32 %v3324, %v3327
      %v3329 = vsel %vm3312, %v3320, %v3328
      %v3331 = vshrl.u32 %v2931, 16
      %v3333 = vrot.slane %v3331, 2
      %v3334 = vshll.u32 %v2931, 16
      %v3336 = vrot.slane %v3334, 3
      %v3337 = vor.u32 %v3333, %v3336
      %v3338 = vsel %vm3312, %v3328, %v3337
      %v3340 = vshrl.u32 %v2932, 16
      %v3342 = vrot.slane %v3340, 2
      %v3343 = vshll.u32 %v2932, 16
      %v3345 = vrot.slane %v3343, 3
      %v3346 = vor.u32 %v3342, %v3345
      %v3347 = vsel %vm3312, %v3337, %v3346
      %v3349 = vshrl.u32 %v2933, 16
      %v3351 = vrot.slane %v3349, 2
      %v3352 = vshll.u32 %v2933, 16
      %v3354 = vrot.slane %v3352, 3
      %v3355 = vor.u32 %v3351, %v3354
      %v3356 = vsel %vm3312, %v3346, %v3355
      %v3358 = vshrl.u32 %v2934, 16
      %v3360 = vrot.slane %v3358, 2
      %v3361 = vshll.u32 %v2934, 16
      %v3363 = vrot.slane %v3361, 3
      %v3364 = vor.u32 %v3360, %v3363
      %v3365 = vsel %vm3312, %v3355, %v3364
      %v3367 = vshrl.u32 %v2935, 16
      %v3369 = vrot.slane %v3367, 2
      %v3370 = vshll.u32 %v2935, 16
      %v3372 = vrot.slane %v3370, 3
      %v3373 = vor.u32 %v3369, %v3372
      %v3374 = vsel %vm3312, %v3364, %v3373
      %v3376 = vshrl.u32 %v2936, 16
      %v3378 = vrot.slane %v3376, 2
      %v3379 = vshll.u32 %v2936, 16
      %v3381 = vrot.slane %v3379, 3
      %v3382 = vor.u32 %v3378, %v3381
      %v3383 = vsel %vm3312, %v3373, %v3382
      %v3385 = vshrl.u32 %v2937, 16
      %v3387 = vrot.slane %v3385, 2
      %v3388 = vshll.u32 %v2937, 16
      %v3390 = vrot.slane %v3388, 3
      %v3391 = vor.u32 %v3387, %v3390
      %v3392 = vsel %vm3312, %v3382, %v3391
      %v3394 = vshrl.u32 %v2938, 16
      %v3396 = vrot.slane %v3394, 2
      %v3397 = vshll.u32 %v2938, 16
      %v3399 = vrot.slane %v3397, 3
      %v3400 = vor.u32 %v3396, %v3399
      %v3401 = vsel %vm3312, %v3391, %v3400
      %v3403 = vshrl.u32 %v2939, 16
      %v3405 = vrot.slane %v3403, 2
      %v3406 = vshll.u32 %v2939, 16
      %v3408 = vrot.slane %v3406, 3
      %v3409 = vor.u32 %v3405, %v3408
      %v3410 = vsel %vm3312, %v3400, %v3409
      %v3412 = vshrl.u32 %v2940, 16
      %v3414 = vrot.slane %v3412, 2
      %v3415 = vshll.u32 %v2940, 16
      %v3417 = vrot.slane %v3415, 3
      %v3418 = vor.u32 %v3414, %v3417
      %v3419 = vsel %vm3312, %v3409, %v3418
      %v3421 = vshrl.u32 %v2941, 16
      %v3423 = vrot.slane %v3421, 2
      %v3424 = vshll.u32 %v2941, 16
      %v3426 = vrot.slane %v3424, 3
      %v3427 = vor.u32 %v3423, %v3426
      %v3428 = vsel %vm3312, %v3418, %v3427
      %v3430 = vshrl.u32 %v2942, 16
      %v3432 = vrot.slane %v3430, 2
      %v3433 = vshll.u32 %v2942, 16
      %v3435 = vrot.slane %v3433, 3
      %v3436 = vor.u32 %v3432, %v3435
      %v3437 = vsel %vm3312, %v3427, %v3436
      %v3439 = vshrl.u32 %v2943, 16
      %v3441 = vrot.slane %v3439, 2
      %v3442 = vshll.u32 %v2943, 16
      %v3444 = vrot.slane %v3442, 3
      %v3445 = vor.u32 %v3441, %v3444
      %v3446 = vsel %vm3312, %v3436, %v3445
      %v3448 = vshrl.u32 %v2944, 16
      %v3450 = vrot.slane %v3448, 2
      %v3451 = vshll.u32 %v2944, 16
      %v3453 = vrot.slane %v3451, 3
      %v3454 = vor.u32 %v3450, %v3453
      %v3455 = vsel %vm3312, %v3445, %v3454
      %v3457 = vshrl.u32 %v2945, 16
      %v3459 = vrot.slane %v3457, 2
      %v3460 = vshll.u32 %v2945, 16
      %v3462 = vrot.slane %v3460, 3
      %v3463 = vor.u32 %v3459, %v3462
      %v3464 = vsel %vm3312, %v3454, %v3463
      %v3466 = vshrl.u32 %v2946, 16
      %v3468 = vrot.slane %v3466, 2
      %v3469 = vshll.u32 %v2946, 16
      %v3471 = vrot.slane %v3469, 3
      %v3472 = vor.u32 %v3468, %v3471
      %v3473 = vsel %vm3312, %v3463, %v3472
      %v3475 = vshrl.u32 %v2947, 16
      %v3477 = vrot.slane %v3475, 2
      %v3478 = vshll.u32 %v2947, 16
      %v3480 = vrot.slane %v3478, 3
      %v3481 = vor.u32 %v3477, %v3480
      %v3482 = vsel %vm3312, %v3472, %v3481
      %v3484 = vshrl.u32 %v2948, 16
      %v3486 = vrot.slane %v3484, 2
      %v3487 = vshll.u32 %v2948, 16
      %v3489 = vrot.slane %v3487, 3
      %v3490 = vor.u32 %v3486, %v3489
      %v3491 = vsel %vm3312, %v3481, %v3490
      %v3500 = vunpack.c.l.b16 %v3304
      %v3501 = vunpack.c.l.b16 %v3305
      %v3502 = vunpack.c.l.b16 %v3306
      %v3503 = vunpack.c.l.b16 %v3307
      %v3504 = vunpack.c.l.b16 %v3308
      %v3505 = vunpack.c.l.b16 %v3309
      %v3506 = vunpack.c.l.b16 %v3310
      %v3507 = vunpack.c.l.b16 %v3311
      %v3508 = vpack.c.b16 %v3501, %v3500
      %v3509 = vpack.c.b16 %v3503, %v3502
      %v3510 = vpack.c.b16 %v3505, %v3504
      %v3511 = vpack.c.b16 %v3507, %v3506
      %v3517 = vsel %vm546, %v3329, 0
      %v3520 = vsel %vm546, %v3338, 0
      %v3523 = vsel %vm546, %v3347, 0
      %v3526 = vsel %vm546, %v3356, 0
      %v3529 = vsel %vm546, %v3365, 0
      %v3532 = vsel %vm546, %v3374, 0
      %v3535 = vsel %vm546, %v3383, 0
      %v3538 = vsel %vm546, %v3392, 0
      %v3541 = vsel %vm546, %v3401, 0
      %v3544 = vsel %vm546, %v3410, 0
      %v3547 = vsel %vm546, %v3419, 0
      %v3550 = vsel %vm546, %v3428, 0
      %v3553 = vsel %vm546, %v3437, 0
      %v3556 = vsel %vm546, %v3446, 0
      %v3559 = vsel %vm546, %v3455, 0
      %v3562 = vsel %vm546, %v3464, 0
      %v3565 = vsel %vm546, %v3473, 0
      %v3568 = vsel %vm546, %v3482, 0
      %v3571 = vsel %vm546, %v3491, 0
      %v3574 = vsel %vm546, %v3490, 0
      %3576 = vmatprep.subr.bf16.mxu0 0
      %3577 = vmatpush1.bf16.msra.mxu0 %v3508
      %3578 = vmatprep.subr.bf16.mxu0 0
      %3579 = vmatpush1.bf16.msra.mxu0 %v3509
      %3580 = vmatprep.subr.bf16.mxu0 0
      %3581 = vmatpush1.bf16.msra.mxu0 %v3510
      %3582 = vmatprep.subr.bf16.mxu0 0
      %3583 = vmatpush1.bf16.msra.mxu0 %v3511
      %3584 = vmatprep.subr.bf16.mxu0 0
      %3585 = vmatpush1.bf16.msra.mxu0 0
      %3586 = vmatprep.subr.bf16.mxu0 0
      %3587 = vmatpush1.bf16.msra.mxu0 0
      %3588 = vmatprep.subr.bf16.mxu0 0
      %3589 = vmatpush1.bf16.msra.mxu0 0
      %3590 = vmatprep.subr.bf16.mxu0 0
      %3591 = vmatpush1.bf16.msra.mxu0 0
      %3592 = vmatprep.subr.bf16.mxu0 0
      %3593 = vmatpush1.bf16.msra.mxu0 0
      %3594 = vmatprep.subr.bf16.mxu0 0
      %3595 = vmatpush1.bf16.msra.mxu0 0
      %3596 = vmatprep.subr.bf16.mxu0 0
      %3597 = vmatpush1.bf16.msra.mxu0 0
      %3598 = vmatprep.subr.bf16.mxu0 0
      %3599 = vmatpush1.bf16.msra.mxu0 0
      %3600 = vmatprep.subr.bf16.mxu0 0
      %3601 = vmatpush1.bf16.msra.mxu0 0
      %3602 = vmatprep.subr.bf16.mxu0 0
      %3603 = vmatpush1.bf16.msra.mxu0 0
      %3604 = vmatprep.subr.bf16.mxu0 0
      %3605 = vmatpush1.bf16.msra.mxu0 0
      %3606 = vmatprep.subr.bf16.mxu0 0
      %3607 = vmatpush1.bf16.msra.mxu0 0
      %3608 = vmatprep.mubr.bf16.mxu0 0
      %3609 = vmatmul.mubr.bf16.gmra.mrb[0].mxu0 %v3517
      %v3610 = vpop.f32.mrb[0].mxu0
      %v3611 = vadd.f32 0.0, %v3610
      %v3612 = vpop.f32.mrb[0].mxu0
      %v3613 = vpop.f32.mrb[0].mxu0
      %v3614 = vadd.f32 0.0, %v3613
      %v3615 = vpop.f32.mrb[0].mxu0
      %3616 = vmatprep.mubr.bf16.mxu0 0
      %3617 = vmatmul.mubr.bf16.gmra.mrb[0].mxu0 %v3520
      %v3618 = vpop.f32.mrb[0].mxu0
      %v3619 = vadd.f32 0.0, %v3618
      %v3620 = vpop.f32.mrb[0].mxu0
      %v3621 = vpop.f32.mrb[0].mxu0
      %v3622 = vadd.f32 0.0, %v3621
      %v3623 = vpop.f32.mrb[0].mxu0
      %3624 = vmatprep.mubr.bf16.mxu0 0
      %3625 = vmatmul.mubr.bf16.gmra.mrb[0].mxu0 %v3523
      %v3626 = vpop.f32.mrb[0].mxu0
      %v3627 = vadd.f32 0.0, %v3626
      %v3628 = vpop.f32.mrb[0].mxu0
      %v3629 = vpop.f32.mrb[0].mxu0
      %v3630 = vadd.f32 0.0, %v3629
      %v3631 = vpop.f32.mrb[0].mxu0
      %3632 = vmatprep.mubr.bf16.mxu0 0
      %3633 = vmatmul.mubr.bf16.gmra.mrb[0].mxu0 %v3526
      %v3634 = vpop.f32.mrb[0].mxu0
      %v3635 = vadd.f32 0.0, %v3634
      %v3636 = vpop.f32.mrb[0].mxu0
      %v3637 = vpop.f32.mrb[0].mxu0
      %v3638 = vadd.f32 0.0, %v3637
      %v3639 = vpop.f32.mrb[0].mxu0
      %3640 = vmatprep.mubr.bf16.mxu0 0
      %3641 = vmatmul.mubr.bf16.gmra.mrb[0].mxu0 %v3529
      %v3642 = vpop.f32.mrb[0].mxu0
      %v3643 = vadd.f32 0.0, %v3642
      %v3644 = vpop.f32.mrb[0].mxu0
      %v3645 = vpop.f32.mrb[0].mxu0
      %v3646 = vadd.f32 0.0, %v3645
      %v3647 = vpop.f32.mrb[0].mxu0
      %3648 = vmatprep.mubr.bf16.mxu0 0
      %3649 = vmatmul.mubr.bf16.gmra.mrb[0].mxu0 %v3532
      %v3650 = vpop.f32.mrb[0].mxu0
      %v3651 = vadd.f32 0.0, %v3650
      %v3652 = vpop.f32.mrb[0].mxu0
      %v3653 = vpop.f32.mrb[0].mxu0
      %v3654 = vadd.f32 0.0, %v3653
      %v3655 = vpop.f32.mrb[0].mxu0
      %3656 = vmatprep.mubr.bf16.mxu0 0
      %3657 = vmatmul.mubr.bf16.gmra.mrb[0].mxu0 %v3535
      %v3658 = vpop.f32.mrb[0].mxu0
      %v3659 = vadd.f32 0.0, %v3658
      %v3660 = vpop.f32.mrb[0].mxu0
      %v3661 = vpop.f32.mrb[0].mxu0
      %v3662 = vadd.f32 0.0, %v3661
      %v3663 = vpop.f32.mrb[0].mxu0
      %3664 = vmatprep.mubr.bf16.mxu0 0
      %3665 = vmatmul.mubr.bf16.gmra.mrb[0].mxu0 %v3538
      %v3666 = vpop.f32.mrb[0].mxu0
      %v3667 = vadd.f32 0.0, %v3666
      %v3668 = vpop.f32.mrb[0].mxu0
      %v3669 = vpop.f32.mrb[0].mxu0
      %v3670 = vadd.f32 0.0, %v3669
      %v3671 = vpop.f32.mrb[0].mxu0
      %3672 = vmatprep.mubr.bf16.mxu0 0
      %3673 = vmatmul.mubr.bf16.gmra.mrb[0].mxu0 %v3541
      %v3674 = vpop.f32.mrb[0].mxu0
      %v3675 = vadd.f32 0.0, %v3674
      %v3676 = vpop.f32.mrb[0].mxu0
      %v3677 = vpop.f32.mrb[0].mxu0
      %v3678 = vadd.f32 0.0, %v3677
      %v3679 = vpop.f32.mrb[0].mxu0
      %3680 = vmatprep.mubr.bf16.mxu0 0
      %3681 = vmatmul.mubr.bf16.gmra.mrb[0].mxu0 %v3544
      %v3682 = vpop.f32.mrb[0].mxu0
      %v3683 = vadd.f32 0.0, %v3682
      %v3684 = vpop.f32.mrb[0].mxu0
      %v3685 = vpop.f32.mrb[0].mxu0
      %v3686 = vadd.f32 0.0, %v3685
      %v3687 = vpop.f32.mrb[0].mxu0
      %3688 = vmatprep.mubr.bf16.mxu0 0
      %3689 = vmatmul.mubr.bf16.gmra.mrb[0].mxu0 %v3547
      %v3690 = vpop.f32.mrb[0].mxu0
      %v3691 = vadd.f32 0.0, %v3690
      %v3692 = vpop.f32.mrb[0].mxu0
      %v3693 = vpop.f32.mrb[0].mxu0
      %v3694 = vadd.f32 0.0, %v3693
      %v3695 = vpop.f32.mrb[0].mxu0
      %3696 = vmatprep.mubr.bf16.mxu0 0
      %3697 = vmatmul.mubr.bf16.gmra.mrb[0].mxu0 %v3550
      %v3698 = vpop.f32.mrb[0].mxu0
      %v3699 = vadd.f32 0.0, %v3698
      %v3700 = vpop.f32.mrb[0].mxu0
      %v3701 = vpop.f32.mrb[0].mxu0
      %v3702 = vadd.f32 0.0, %v3701
      %v3703 = vpop.f32.mrb[0].mxu0
      %3704 = vmatprep.mubr.bf16.mxu0 0
      %3705 = vmatmul.mubr.bf16.gmra.mrb[0].mxu0 %v3553
      %v3706 = vpop.f32.mrb[0].mxu0
      %v3707 = vadd.f32 0.0, %v3706
      %v3708 = vpop.f32.mrb[0].mxu0
      %v3709 = vpop.f32.mrb[0].mxu0
      %v3710 = vadd.f32 0.0, %v3709
      %v3711 = vpop.f32.mrb[0].mxu0
      %3712 = vmatprep.mubr.bf16.mxu0 0
      %3713 = vmatmul.mubr.bf16.gmra.mrb[0].mxu0 %v3556
      %v3714 = vpop.f32.mrb[0].mxu0
      %v3715 = vadd.f32 0.0, %v3714
      %v3716 = vpop.f32.mrb[0].mxu0
      %v3717 = vpop.f32.mrb[0].mxu0
      %v3718 = vadd.f32 0.0, %v3717
      %v3719 = vpop.f32.mrb[0].mxu0
      %3720 = vmatprep.mubr.bf16.mxu0 0
      %3721 = vmatmul.mubr.bf16.gmra.mrb[0].mxu0 %v3559
      %v3722 = vpop.f32.mrb[0].mxu0
      %v3723 = vadd.f32 0.0, %v3722
      %v3724 = vpop.f32.mrb[0].mxu0
      %v3725 = vpop.f32.mrb[0].mxu0
      %v3726 = vadd.f32 0.0, %v3725
      %v3727 = vpop.f32.mrb[0].mxu0
      %3728 = vmatprep.mubr.bf16.mxu0 0
      %3729 = vmatmul.mubr.bf16.gmra.mrb[0].mxu0 %v3562
      %v3730 = vpop.f32.mrb[0].mxu0
      %v3731 = vadd.f32 0.0, %v3730
      %v3732 = vpop.f32.mrb[0].mxu0
      %v3733 = vpop.f32.mrb[0].mxu0
      %v3734 = vadd.f32 0.0, %v3733
      %v3735 = vpop.f32.mrb[0].mxu0
      %3736 = vmatprep.mubr.bf16.mxu0 0
      %3737 = vmatmul.mubr.bf16.gmra.mrb[0].mxu0 %v3565
      %v3738 = vpop.f32.mrb[0].mxu0
      %v3739 = vadd.f32 0.0, %v3738
      %v3740 = vpop.f32.mrb[0].mxu0
      %v3741 = vpop.f32.mrb[0].mxu0
      %v3742 = vadd.f32 0.0, %v3741
      %v3743 = vpop.f32.mrb[0].mxu0
      %3744 = vmatprep.mubr.bf16.mxu0 0
      %3745 = vmatmul.mubr.bf16.gmra.mrb[0].mxu0 %v3568
      %v3746 = vpop.f32.mrb[0].mxu0
      %v3747 = vadd.f32 0.0, %v3746
      %v3748 = vpop.f32.mrb[0].mxu0
      %v3749 = vpop.f32.mrb[0].mxu0
      %v3750 = vadd.f32 0.0, %v3749
      %v3751 = vpop.f32.mrb[0].mxu0
      %3752 = vmatprep.mubr.bf16.mxu0 0
      %3753 = vmatmul.mubr.bf16.gmra.mrb[0].mxu0 %v3571
      %v3754 = vpop.f32.mrb[0].mxu0
      %v3755 = vadd.f32 0.0, %v3754
      %v3756 = vpop.f32.mrb[0].mxu0
      %v3757 = vpop.f32.mrb[0].mxu0
      %v3758 = vadd.f32 0.0, %v3757
      %v3759 = vpop.f32.mrb[0].mxu0
      %3760 = vmatprep.mubr.bf16.mxu0 0
      %3761 = vmatmul.mubr.bf16.gmra.mrb[0].mxu0 %v3574
      %v3762 = vpop.f32.mrb[0].mxu0
      %v3763 = vadd.f32 0.0, %v3762
      %v3764 = vpop.f32.mrb[0].mxu0
      %v3765 = vpop.f32.mrb[0].mxu0
      %v3766 = vpop.f32.mrb[0].mxu0
      %3767 = vdwg.mxu0
      %v3768 = vadd.f32 %v3264, %v3611
      %v3769 = vadd.f32 %v3265, %v3614
      %v3770 = vadd.f32 %v3266, %v3619
      %v3771 = vadd.f32 %v3267, %v3622
      %v3772 = vadd.f32 %v3268, %v3627
      %v3773 = vadd.f32 %v3269, %v3630
      %v3774 = vadd.f32 %v3270, %v3635
      %v3775 = vadd.f32 %v3271, %v3638
      %v3776 = vadd.f32 %v3272, %v3643
      %v3777 = vadd.f32 %v3273, %v3646
      %v3778 = vadd.f32 %v3274, %v3651
      %v3779 = vadd.f32 %v3275, %v3654
      %v3780 = vadd.f32 %v3276, %v3659
      %v3781 = vadd.f32 %v3277, %v3662
      %v3782 = vadd.f32 %v3278, %v3667
      %v3783 = vadd.f32 %v3279, %v3670
      %v3784 = vadd.f32 %v3280, %v3675
      %v3785 = vadd.f32 %v3281, %v3678
      %v3786 = vadd.f32 %v3282, %v3683
      %v3787 = vadd.f32 %v3283, %v3686
      %v3788 = vadd.f32 %v3284, %v3691
      %v3789 = vadd.f32 %v3285, %v3694
      %v3790 = vadd.f32 %v3286, %v3699
      %v3791 = vadd.f32 %v3287, %v3702
      %v3792 = vadd.f32 %v3288, %v3707
      %v3793 = vadd.f32 %v3289, %v3710
      %v3794 = vadd.f32 %v3290, %v3715
      %v3795 = vadd.f32 %v3291, %v3718
      %v3796 = vadd.f32 %v3292, %v3723
      %v3797 = vadd.f32 %v3293, %v3726
      %v3798 = vadd.f32 %v3294, %v3731
      %v3799 = vadd.f32 %v3295, %v3734
      %v3800 = vadd.f32 %v3296, %v3739
      %v3801 = vadd.f32 %v3297, %v3742
      %v3802 = vadd.f32 %v3298, %v3747
      %v3803 = vadd.f32 %v3299, %v3750
      %v3804 = vadd.f32 %v3300, %v3755
      %v3805 = vadd.f32 %v3301, %v3758
      %v3806 = vadd.f32 %v3302, %v3763
      %v3807 = vld [vmem:[%s197 + $0x10] sm:$0x8]
      %v3808 = vld [vmem:[%s197 + $0x14] sm:$0xf]
      %v3809 = vld [vmem:[%s197 + $0x18] sm:$0xf]
      %v3810 = vld [vmem:[%s197 + $0x1c] sm:$0xf]
      %v3811 = vld [vmem:[%s197 + $0x20] sm:$0xf]
      %v3812 = vld [vmem:[%s197 + $0x24] sm:$0xf]
      %v3813 = vld [vmem:[%s197 + $0x28] sm:$0xf]
      %v3814 = vld [vmem:[%s197 + $0x2c] sm:$0xf]
      %v3815 = vld [vmem:[%s197 + $0x30] sm:$0xf]
      %v3816 = vld [vmem:[%s197 + $0x34] sm:$0xf]
      %v3817 = vld [vmem:[%s197 + $0x38] sm:$0xf]
      %v3818 = vld [vmem:[%s197 + $0x3c] sm:$0xf]
      %v3819 = vld [vmem:[%s197 + $0x40] sm:$0xf]
      %v3820 = vld [vmem:[%s197 + $0x44] sm:$0xf]
      %v3821 = vld [vmem:[%s197 + $0x48] sm:$0xf]
      %v3822 = vld [vmem:[%s197 + $0x4c] sm:$0xf]
      %v3823 = vld [vmem:[%s197 + $0x50] sm:$0xf]
      %v3824 = vld [vmem:[%s197 + $0x54] sm:$0xf]
      %v3825 = vld [vmem:[%s197 + $0x58] sm:$0xf]
      %v3826 = vld [vmem:[%s197 + $0x5c] sm:$0xf]
      %v3827 = vld [vmem:[%s197 + $0x60] sm:$0xf]
      %v3828 = vld [vmem:[%s197 + $0x64] sm:$0xf]
      %v3829 = vld [vmem:[%s197 + $0x68] sm:$0xf]
      %v3830 = vld [vmem:[%s197 + $0x6c] sm:$0xf]
      %v3831 = vld [vmem:[%s197 + $0x70] sm:$0xf]
      %v3832 = vld [vmem:[%s197 + $0x74] sm:$0xf]
      %v3833 = vld [vmem:[%s197 + $0x78] sm:$0xf]
      %v3834 = vld [vmem:[%s197 + $0x7c] sm:$0xf]
      %v3835 = vld [vmem:[%s197 + $0x80] sm:$0xf]
      %v3836 = vld [vmem:[%s197 + $0x84] sm:$0xf]
      %v3837 = vld [vmem:[%s197 + $0x88] sm:$0xf]
      %v3838 = vld [vmem:[%s197 + $0x8c] sm:$0xf]
      %v3839 = vld [vmem:[%s197 + $0x90] sm:$0xf]
      %v3840 = vld [vmem:[%s197 + $0x94] sm:$0xf]
      %v3841 = vld [vmem:[%s197 + $0x98] sm:$0xf]
      %v3842 = vld [vmem:[%s197 + $0x9c] sm:$0xf]
      %v3843 = vld [vmem:[%s197 + $0xa0] sm:$0xf]
      %v3844 = vld [vmem:[%s197 + $0xa4] sm:$0xf]
      %v3845 = vld [vmem:[%s197 + $0xa8] sm:$0xf]
      %v3846 = vld [vmem:[%s197 + $0xac] sm:$0x1]
      %s3847 = scalar_lea.vmem %s1, 256
      %v3848 = vld [vmem:[%s3847] sm:$0xf]
      %v3849 = vld [vmem:[%s3847 + $0x4] sm:$0xf]
      %v3850 = vld [vmem:[%s3847 + $0x8] sm:$0xf]
      %v3851 = vld [vmem:[%s3847 + $0xc] sm:$0xf]
      %v3852 = vld [vmem:[%s3847 + $0x10] sm:$0xf]
      %v3853 = vld [vmem:[%s3847 + $0x14] sm:$0xf]
      %v3854 = vld [vmem:[%s3847 + $0x18] sm:$0xf]
      %v3855 = vld [vmem:[%s3847 + $0x1c] sm:$0xf]
      %v3896 = vunpack.c.l.b16 %v3807
      %v3897 = vunpack.c.l.b16 %v3808
      %v3898 = vunpack.c.l.b16 %v3809
      %v3899 = vunpack.c.l.b16 %v3810
      %v3900 = vunpack.c.l.b16 %v3811
      %v3901 = vunpack.c.l.b16 %v3812
      %v3902 = vunpack.c.l.b16 %v3813
      %v3903 = vunpack.c.l.b16 %v3814
      %v3904 = vunpack.c.l.b16 %v3815
      %v3905 = vunpack.c.l.b16 %v3816
      %v3906 = vunpack.c.l.b16 %v3817
      %v3907 = vunpack.c.l.b16 %v3818
      %v3908 = vunpack.c.l.b16 %v3819
      %v3909 = vunpack.c.l.b16 %v3820
      %v3910 = vunpack.c.l.b16 %v3821
      %v3911 = vunpack.c.l.b16 %v3822
      %v3912 = vunpack.c.l.b16 %v3823
      %v3913 = vunpack.c.l.b16 %v3824
      %v3914 = vunpack.c.l.b16 %v3825
      %v3915 = vunpack.c.l.b16 %v3826
      %v3916 = vunpack.c.l.b16 %v3827
      %v3917 = vunpack.c.l.b16 %v3828
      %v3918 = vunpack.c.l.b16 %v3829
      %v3919 = vunpack.c.l.b16 %v3830
      %v3920 = vunpack.c.l.b16 %v3831
      %v3921 = vunpack.c.l.b16 %v3832
      %v3922 = vunpack.c.l.b16 %v3833
      %v3923 = vunpack.c.l.b16 %v3834
      %v3924 = vunpack.c.l.b16 %v3835
      %v3925 = vunpack.c.l.b16 %v3836
      %v3926 = vunpack.c.l.b16 %v3837
      %v3927 = vunpack.c.l.b16 %v3838
      %v3928 = vunpack.c.l.b16 %v3839
      %v3929 = vunpack.c.l.b16 %v3840
      %v3930 = vunpack.c.l.b16 %v3841
      %v3931 = vunpack.c.l.b16 %v3842
      %v3932 = vunpack.c.l.b16 %v3843
      %v3933 = vunpack.c.l.b16 %v3844
      %v3934 = vunpack.c.l.b16 %v3845
      %v3935 = vunpack.c.l.b16 %v3846
      %v3936 = vpack.c.b16 %v3897, %v3896
      %v3937 = vpack.c.b16 %v3899, %v3898
      %v3938 = vpack.c.b16 %v3901, %v3900
      %v3939 = vpack.c.b16 %v3903, %v3902
      %v3940 = vpack.c.b16 %v3905, %v3904
      %v3941 = vpack.c.b16 %v3907, %v3906
      %v3942 = vpack.c.b16 %v3909, %v3908
      %v3943 = vpack.c.b16 %v3911, %v3910
      %v3944 = vpack.c.b16 %v3913, %v3912
      %v3945 = vpack.c.b16 %v3915, %v3914
      %v3946 = vpack.c.b16 %v3917, %v3916
      %v3947 = vpack.c.b16 %v3919, %v3918
      %v3948 = vpack.c.b16 %v3921, %v3920
      %v3949 = vpack.c.b16 %v3923, %v3922
      %v3950 = vpack.c.b16 %v3925, %v3924
      %v3951 = vpack.c.b16 %v3927, %v3926
      %v3952 = vpack.c.b16 %v3929, %v3928
      %v3953 = vpack.c.b16 %v3931, %v3930
      %v3954 = vpack.c.b16 %v3933, %v3932
      %v3955 = vpack.c.b16 %v3935, %v3934
      %vm3956 = vcmask 1044480
      %v3957 = vrot.slane %v3936, 3
      %v3958 = vrot.slane %v3937, 3
      %v3959 = vsel %vm3956, %v3957, %v3958
      %v3960 = vrot.slane %v3938, 3
      %v3961 = vsel %vm3956, %v3958, %v3960
      %v3962 = vrot.slane %v3939, 3
      %v3963 = vsel %vm3956, %v3960, %v3962
      %v3964 = vrot.slane %v3940, 3
      %v3965 = vsel %vm3956, %v3962, %v3964
      %v3966 = vrot.slane %v3941, 3
      %v3967 = vsel %vm3956, %v3964, %v3966
      %v3968 = vrot.slane %v3942, 3
      %v3969 = vsel %vm3956, %v3966, %v3968
      %v3970 = vrot.slane %v3943, 3
      %v3971 = vsel %vm3956, %v3968, %v3970
      %v3972 = vrot.slane %v3944, 3
      %v3973 = vsel %vm3956, %v3970, %v3972
      %v3974 = vrot.slane %v3945, 3
      %v3975 = vsel %vm3956, %v3972, %v3974
      %v3976 = vrot.slane %v3946, 3
      %v3977 = vsel %vm3956, %v3974, %v3976
      %v3978 = vrot.slane %v3947, 3
      %v3979 = vsel %vm3956, %v3976, %v3978
      %v3980 = vrot.slane %v3948, 3
      %v3981 = vsel %vm3956, %v3978, %v3980
      %v3982 = vrot.slane %v3949, 3
      %v3983 = vsel %vm3956, %v3980, %v3982
      %v3984 = vrot.slane %v3950, 3
      %v3985 = vsel %vm3956, %v3982, %v3984
      %v3986 = vrot.slane %v3951, 3
      %v3987 = vsel %vm3956, %v3984, %v3986
      %v3988 = vrot.slane %v3952, 3
      %v3989 = vsel %vm3956, %v3986, %v3988
      %v3990 = vrot.slane %v3953, 3
      %v3991 = vsel %vm3956, %v3988, %v3990
      %v3992 = vrot.slane %v3954, 3
      %v3993 = vsel %vm3956, %v3990, %v3992
      %v3994 = vrot.slane %v3955, 3
      %v3995 = vsel %vm3956, %v3992, %v3994
      %v4004 = vunpack.c.l.b16 %v3848
      %v4005 = vunpack.c.l.b16 %v3849
      %v4006 = vunpack.c.l.b16 %v3850
      %v4007 = vunpack.c.l.b16 %v3851
      %v4008 = vunpack.c.l.b16 %v3852
      %v4009 = vunpack.c.l.b16 %v3853
      %v4010 = vunpack.c.l.b16 %v3854
      %v4011 = vunpack.c.l.b16 %v3855
      %v4012 = vpack.c.b16 %v4005, %v4004
      %v4013 = vpack.c.b16 %v4007, %v4006
      %v4014 = vpack.c.b16 %v4009, %v4008
      %v4015 = vpack.c.b16 %v4011, %v4010
      %v4021 = vsel %vm546, %v3959, 0
      %v4024 = vsel %vm546, %v3961, 0
      %v4027 = vsel %vm546, %v3963, 0
      %v4030 = vsel %vm546, %v3965, 0
      %v4033 = vsel %vm546, %v3967, 0
      %v4036 = vsel %vm546, %v3969, 0
      %v4039 = vsel %vm546, %v3971, 0
      %v4042 = vsel %vm546, %v3973, 0
      %v4045 = vsel %vm546, %v3975, 0
      %v4048 = vsel %vm546, %v3977, 0
      %v4051 = vsel %vm546, %v3979, 0
      %v4054 = vsel %vm546, %v3981, 0
      %v4057 = vsel %vm546, %v3983, 0
      %v4060 = vsel %vm546, %v3985, 0
      %v4063 = vsel %vm546, %v3987, 0
      %v4066 = vsel %vm546, %v3989, 0
      %v4069 = vsel %vm546, %v3991, 0
      %v4072 = vsel %vm546, %v3993, 0
      %v4075 = vsel %vm546, %v3995, 0
      %v4078 = vsel %vm546, %v3994, 0
      %4080 = vmatprep.subr.bf16.mxu0 0
      %4081 = vmatpush1.bf16.msra.mxu0 %v4012
      %4082 = vmatprep.subr.bf16.mxu0 0
      %4083 = vmatpush1.bf16.msra.mxu0 %v4013
      %4084 = vmatprep.subr.bf16.mxu0 0
      %4085 = vmatpush1.bf16.msra.mxu0 %v4014
      %4086 = vmatprep.subr.bf16.mxu0 0
      %4087 = vmatpush1.bf16.msra.mxu0 %v4015
      %4088 = vmatprep.subr.bf16.mxu0 0
      %4089 = vmatpush1.bf16.msra.mxu0 0
      %4090 = vmatprep.subr.bf16.mxu0 0
      %4091 = vmatpush1.bf16.msra.mxu0 0
      %4092 = vmatprep.subr.bf16.mxu0 0
      %4093 = vmatpush1.bf16.msra.mxu0 0
      %4094 = vmatprep.subr.bf16.mxu0 0
      %4095 = vmatpush1.bf16.msra.mxu0 0
      %4096 = vmatprep.subr.bf16.mxu0 0
      %4097 = vmatpush1.bf16.msra.mxu0 0
      %4098 = vmatprep.subr.bf16.mxu0 0
      %4099 = vmatpush1.bf16.msra.mxu0 0
      %4100 = vmatprep.subr.bf16.mxu0 0
      %4101 = vmatpush1.bf16.msra.mxu0 0
      %4102 = vmatprep.subr.bf16.mxu0 0
      %4103 = vmatpush1.bf16.msra.mxu0 0
      %4104 = vmatprep.subr.bf16.mxu0 0
      %4105 = vmatpush1.bf16.msra.mxu0 0
      %4106 = vmatprep.subr.bf16.mxu0 0
      %4107 = vmatpush1.bf16.msra.mxu0 0
      %4108 = vmatprep.subr.bf16.mxu0 0
      %4109 = vmatpush1.bf16.msra.mxu0 0
      %4110 = vmatprep.subr.bf16.mxu0 0
      %4111 = vmatpush1.bf16.msra.mxu0 0
      %4112 = vmatprep.mubr.bf16.mxu0 0
      %4113 = vmatmul.mubr.bf16.gmra.mrb[0].mxu0 %v4021
      %v4114 = vpop.f32.mrb[0].mxu0
      %v4115 = vadd.f32 0.0, %v4114
      %v4116 = vpop.f32.mrb[0].mxu0
      %v4117 = vpop.f32.mrb[0].mxu0
      %v4118 = vadd.f32 0.0, %v4117
      %v4119 = vpop.f32.mrb[0].mxu0
      %4120 = vmatprep.mubr.bf16.mxu0 0
      %4121 = vmatmul.mubr.bf16.gmra.mrb[0].mxu0 %v4024
      %v4122 = vpop.f32.mrb[0].mxu0
      %v4123 = vadd.f32 0.0, %v4122
      %v4124 = vpop.f32.mrb[0].mxu0
      %v4125 = vpop.f32.mrb[0].mxu0
      %v4126 = vadd.f32 0.0, %v4125
      %v4127 = vpop.f32.mrb[0].mxu0
      %4128 = vmatprep.mubr.bf16.mxu0 0
      %4129 = vmatmul.mubr.bf16.gmra.mrb[0].mxu0 %v4027
      %v4130 = vpop.f32.mrb[0].mxu0
      %v4131 = vadd.f32 0.0, %v4130
      %v4132 = vpop.f32.mrb[0].mxu0
      %v4133 = vpop.f32.mrb[0].mxu0
      %v4134 = vadd.f32 0.0, %v4133
      %v4135 = vpop.f32.mrb[0].mxu0
      %4136 = vmatprep.mubr.bf16.mxu0 0
      %4137 = vmatmul.mubr.bf16.gmra.mrb[0].mxu0 %v4030
      %v4138 = vpop.f32.mrb[0].mxu0
      %v4139 = vadd.f32 0.0, %v4138
      %v4140 = vpop.f32.mrb[0].mxu0
      %v4141 = vpop.f32.mrb[0].mxu0
      %v4142 = vadd.f32 0.0, %v4141
      %v4143 = vpop.f32.mrb[0].mxu0
      %4144 = vmatprep.mubr.bf16.mxu0 0
      %4145 = vmatmul.mubr.bf16.gmra.mrb[0].mxu0 %v4033
      %v4146 = vpop.f32.mrb[0].mxu0
      %v4147 = vadd.f32 0.0, %v4146
      %v4148 = vpop.f32.mrb[0].mxu0
      %v4149 = vpop.f32.mrb[0].mxu0
      %v4150 = vadd.f32 0.0, %v4149
      %v4151 = vpop.f32.mrb[0].mxu0
      %4152 = vmatprep.mubr.bf16.mxu0 0
      %4153 = vmatmul.mubr.bf16.gmra.mrb[0].mxu0 %v4036
      %v4154 = vpop.f32.mrb[0].mxu0
      %v4155 = vadd.f32 0.0, %v4154
      %v4156 = vpop.f32.mrb[0].mxu0
      %v4157 = vpop.f32.mrb[0].mxu0
      %v4158 = vadd.f32 0.0, %v4157
      %v4159 = vpop.f32.mrb[0].mxu0
      %4160 = vmatprep.mubr.bf16.mxu0 0
      %4161 = vmatmul.mubr.bf16.gmra.mrb[0].mxu0 %v4039
      %v4162 = vpop.f32.mrb[0].mxu0
      %v4163 = vadd.f32 0.0, %v4162
      %v4164 = vpop.f32.mrb[0].mxu0
      %v4165 = vpop.f32.mrb[0].mxu0
      %v4166 = vadd.f32 0.0, %v4165
      %v4167 = vpop.f32.mrb[0].mxu0
      %4168 = vmatprep.mubr.bf16.mxu0 0
      %4169 = vmatmul.mubr.bf16.gmra.mrb[0].mxu0 %v4042
      %v4170 = vpop.f32.mrb[0].mxu0
      %v4171 = vadd.f32 0.0, %v4170
      %v4172 = vpop.f32.mrb[0].mxu0
      %v4173 = vpop.f32.mrb[0].mxu0
      %v4174 = vadd.f32 0.0, %v4173
      %v4175 = vpop.f32.mrb[0].mxu0
      %4176 = vmatprep.mubr.bf16.mxu0 0
      %4177 = vmatmul.mubr.bf16.gmra.mrb[0].mxu0 %v4045
      %v4178 = vpop.f32.mrb[0].mxu0
      %v4179 = vadd.f32 0.0, %v4178
      %v4180 = vpop.f32.mrb[0].mxu0
      %v4181 = vpop.f32.mrb[0].mxu0
      %v4182 = vadd.f32 0.0, %v4181
      %v4183 = vpop.f32.mrb[0].mxu0
      %4184 = vmatprep.mubr.bf16.mxu0 0
      %4185 = vmatmul.mubr.bf16.gmra.mrb[0].mxu0 %v4048
      %v4186 = vpop.f32.mrb[0].mxu0
      %v4187 = vadd.f32 0.0, %v4186
      %v4188 = vpop.f32.mrb[0].mxu0
      %v4189 = vpop.f32.mrb[0].mxu0
      %v4190 = vadd.f32 0.0, %v4189
      %v4191 = vpop.f32.mrb[0].mxu0
      %4192 = vmatprep.mubr.bf16.mxu0 0
      %4193 = vmatmul.mubr.bf16.gmra.mrb[0].mxu0 %v4051
      %v4194 = vpop.f32.mrb[0].mxu0
      %v4195 = vadd.f32 0.0, %v4194
      %v4196 = vpop.f32.mrb[0].mxu0
      %v4197 = vpop.f32.mrb[0].mxu0
      %v4198 = vadd.f32 0.0, %v4197
      %v4199 = vpop.f32.mrb[0].mxu0
      %4200 = vmatprep.mubr.bf16.mxu0 0
      %4201 = vmatmul.mubr.bf16.gmra.mrb[0].mxu0 %v4054
      %v4202 = vpop.f32.mrb[0].mxu0
      %v4203 = vadd.f32 0.0, %v4202
      %v4204 = vpop.f32.mrb[0].mxu0
      %v4205 = vpop.f32.mrb[0].mxu0
      %v4206 = vadd.f32 0.0, %v4205
      %v4207 = vpop.f32.mrb[0].mxu0
      %4208 = vmatprep.mubr.bf16.mxu0 0
      %4209 = vmatmul.mubr.bf16.gmra.mrb[0].mxu0 %v4057
      %v4210 = vpop.f32.mrb[0].mxu0
      %v4211 = vadd.f32 0.0, %v4210
      %v4212 = vpop.f32.mrb[0].mxu0
      %v4213 = vpop.f32.mrb[0].mxu0
      %v4214 = vadd.f32 0.0, %v4213
      %v4215 = vpop.f32.mrb[0].mxu0
      %4216 = vmatprep.mubr.bf16.mxu0 0
      %4217 = vmatmul.mubr.bf16.gmra.mrb[0].mxu0 %v4060
      %v4218 = vpop.f32.mrb[0].mxu0
      %v4219 = vadd.f32 0.0, %v4218
      %v4220 = vpop.f32.mrb[0].mxu0
      %v4221 = vpop.f32.mrb[0].mxu0
      %v4222 = vadd.f32 0.0, %v4221
      %v4223 = vpop.f32.mrb[0].mxu0
      %4224 = vmatprep.mubr.bf16.mxu0 0
      %4225 = vmatmul.mubr.bf16.gmra.mrb[0].mxu0 %v4063
      %v4226 = vpop.f32.mrb[0].mxu0
      %v4227 = vadd.f32 0.0, %v4226
      %v4228 = vpop.f32.mrb[0].mxu0
      %v4229 = vpop.f32.mrb[0].mxu0
      %v4230 = vadd.f32 0.0, %v4229
      %v4231 = vpop.f32.mrb[0].mxu0
      %4232 = vmatprep.mubr.bf16.mxu0 0
      %4233 = vmatmul.mubr.bf16.gmra.mrb[0].mxu0 %v4066
      %v4234 = vpop.f32.mrb[0].mxu0
      %v4235 = vadd.f32 0.0, %v4234
      %v4236 = vpop.f32.mrb[0].mxu0
      %v4237 = vpop.f32.mrb[0].mxu0
      %v4238 = vadd.f32 0.0, %v4237
      %v4239 = vpop.f32.mrb[0].mxu0
      %4240 = vmatprep.mubr.bf16.mxu0 0
      %4241 = vmatmul.mubr.bf16.gmra.mrb[0].mxu0 %v4069
      %v4242 = vpop.f32.mrb[0].mxu0
      %v4243 = vadd.f32 0.0, %v4242
      %v4244 = vpop.f32.mrb[0].mxu0
      %v4245 = vpop.f32.mrb[0].mxu0
      %v4246 = vadd.f32 0.0, %v4245
      %v4247 = vpop.f32.mrb[0].mxu0
      %4248 = vmatprep.mubr.bf16.mxu0 0
      %4249 = vmatmul.mubr.bf16.gmra.mrb[0].mxu0 %v4072
      %v4250 = vpop.f32.mrb[0].mxu0
      %v4251 = vadd.f32 0.0, %v4250
      %v4252 = vpop.f32.mrb[0].mxu0
      %v4253 = vpop.f32.mrb[0].mxu0
      %v4254 = vadd.f32 0.0, %v4253
      %v4255 = vpop.f32.mrb[0].mxu0
      %4256 = vmatprep.mubr.bf16.mxu0 0
      %4257 = vmatmul.mubr.bf16.gmra.mrb[0].mxu0 %v4075
      %v4258 = vpop.f32.mrb[0].mxu0
      %v4259 = vadd.f32 0.0, %v4258
      %v4260 = vpop.f32.mrb[0].mxu0
      %v4261 = vpop.f32.mrb[0].mxu0
      %v4262 = vadd.f32 0.0, %v4261
      %v4263 = vpop.f32.mrb[0].mxu0
      %4264 = vmatprep.mubr.bf16.mxu0 0
      %4265 = vmatmul.mubr.bf16.gmra.mrb[0].mxu0 %v4078
      %v4266 = vpop.f32.mrb[0].mxu0
      %v4267 = vadd.f32 0.0, %v4266
      %v4268 = vpop.f32.mrb[0].mxu0
      %v4269 = vpop.f32.mrb[0].mxu0
      %v4270 = vpop.f32.mrb[0].mxu0
      %4271 = vdwg.mxu0
      %v4272 = vadd.f32 %v3768, %v4115
      %v4273 = vadd.f32 %v3769, %v4118
      %v4274 = vadd.f32 %v3770, %v4123
      %v4275 = vadd.f32 %v3771, %v4126
      %v4276 = vadd.f32 %v3772, %v4131
      %v4277 = vadd.f32 %v3773, %v4134
      %v4278 = vadd.f32 %v3774, %v4139
      %v4279 = vadd.f32 %v3775, %v4142
      %v4280 = vadd.f32 %v3776, %v4147
      %v4281 = vadd.f32 %v3777, %v4150
      %v4282 = vadd.f32 %v3778, %v4155
      %v4283 = vadd.f32 %v3779, %v4158
      %v4284 = vadd.f32 %v3780, %v4163
      %v4285 = vadd.f32 %v3781, %v4166
      %v4286 = vadd.f32 %v3782, %v4171
      %v4287 = vadd.f32 %v3783, %v4174
      %v4288 = vadd.f32 %v3784, %v4179
      %v4289 = vadd.f32 %v3785, %v4182
      %v4290 = vadd.f32 %v3786, %v4187
      %v4291 = vadd.f32 %v3787, %v4190
      %v4292 = vadd.f32 %v3788, %v4195
      %v4293 = vadd.f32 %v3789, %v4198
      %v4294 = vadd.f32 %v3790, %v4203
      %v4295 = vadd.f32 %v3791, %v4206
      %v4296 = vadd.f32 %v3792, %v4211
      %v4297 = vadd.f32 %v3793, %v4214
      %v4298 = vadd.f32 %v3794, %v4219
      %v4299 = vadd.f32 %v3795, %v4222
      %v4300 = vadd.f32 %v3796, %v4227
      %v4301 = vadd.f32 %v3797, %v4230
      %v4302 = vadd.f32 %v3798, %v4235
      %v4303 = vadd.f32 %v3799, %v4238
      %v4304 = vadd.f32 %v3800, %v4243
      %v4305 = vadd.f32 %v3801, %v4246
      %v4306 = vadd.f32 %v3802, %v4251
      %v4307 = vadd.f32 %v3803, %v4254
      %v4308 = vadd.f32 %v3804, %v4259
      %v4309 = vadd.f32 %v3805, %v4262
      %v4310 = vadd.f32 %v3806, %v4267
      %v4311 = vld [vmem:[%s2] sm:$0x1]
      %v4313 = vlaneseq
      %v4314 = vshrl.u32 %v4313, 7
      %v4315 = vsub.s32 0, %v4314
      %v4316 = vrot.slane %v4311, %v4315
      %v4318 = vadd.f32 %v4272, %v4316
      %v4319 = vadd.f32 %v4273, %v4316
      %v4320 = vadd.f32 %v4274, %v4316
      %v4321 = vadd.f32 %v4275, %v4316
      %v4322 = vadd.f32 %v4276, %v4316
      %v4323 = vadd.f32 %v4277, %v4316
      %v4324 = vadd.f32 %v4278, %v4316
      %v4325 = vadd.f32 %v4279, %v4316
      %v4326 = vadd.f32 %v4280, %v4316
      %v4327 = vadd.f32 %v4281, %v4316
      %v4328 = vadd.f32 %v4282, %v4316
      %v4329 = vadd.f32 %v4283, %v4316
      %v4330 = vadd.f32 %v4284, %v4316
      %v4331 = vadd.f32 %v4285, %v4316
      %v4332 = vadd.f32 %v4286, %v4316
      %v4333 = vadd.f32 %v4287, %v4316
      %v4334 = vadd.f32 %v4288, %v4316
      %v4335 = vadd.f32 %v4289, %v4316
      %v4336 = vadd.f32 %v4290, %v4316
      %v4337 = vadd.f32 %v4291, %v4316
      %v4338 = vadd.f32 %v4292, %v4316
      %v4339 = vadd.f32 %v4293, %v4316
      %v4340 = vadd.f32 %v4294, %v4316
      %v4341 = vadd.f32 %v4295, %v4316
      %v4342 = vadd.f32 %v4296, %v4316
      %v4343 = vadd.f32 %v4297, %v4316
      %v4344 = vadd.f32 %v4298, %v4316
      %v4345 = vadd.f32 %v4299, %v4316
      %v4346 = vadd.f32 %v4300, %v4316
      %v4347 = vadd.f32 %v4301, %v4316
      %v4348 = vadd.f32 %v4302, %v4316
      %v4349 = vadd.f32 %v4303, %v4316
      %v4350 = vadd.f32 %v4304, %v4316
      %v4351 = vadd.f32 %v4305, %v4316
      %v4352 = vadd.f32 %v4306, %v4316
      %v4353 = vadd.f32 %v4307, %v4316
      %v4354 = vadd.f32 %v4308, %v4316
      %v4355 = vadd.f32 %v4309, %v4316
      %v4356 = vadd.f32 %v4310, %v4316
      %v4357 = vmax.f32 %v4318, 0.0
      %v4358 = vmax.f32 %v4319, 0.0
      %v4359 = vmax.f32 %v4320, 0.0
      %v4360 = vmax.f32 %v4321, 0.0
      %v4361 = vmax.f32 %v4322, 0.0
      %v4362 = vmax.f32 %v4323, 0.0
      %v4363 = vmax.f32 %v4324, 0.0
      %v4364 = vmax.f32 %v4325, 0.0
      %v4365 = vmax.f32 %v4326, 0.0
      %v4366 = vmax.f32 %v4327, 0.0
      %v4367 = vmax.f32 %v4328, 0.0
      %v4368 = vmax.f32 %v4329, 0.0
      %v4369 = vmax.f32 %v4330, 0.0
      %v4370 = vmax.f32 %v4331, 0.0
      %v4371 = vmax.f32 %v4332, 0.0
      %v4372 = vmax.f32 %v4333, 0.0
      %v4373 = vmax.f32 %v4334, 0.0
      %v4374 = vmax.f32 %v4335, 0.0
      %v4375 = vmax.f32 %v4336, 0.0
      %v4376 = vmax.f32 %v4337, 0.0
      %v4377 = vmax.f32 %v4338, 0.0
      %v4378 = vmax.f32 %v4339, 0.0
      %v4379 = vmax.f32 %v4340, 0.0
      %v4380 = vmax.f32 %v4341, 0.0
      %v4381 = vmax.f32 %v4342, 0.0
      %v4382 = vmax.f32 %v4343, 0.0
      %v4383 = vmax.f32 %v4344, 0.0
      %v4384 = vmax.f32 %v4345, 0.0
      %v4385 = vmax.f32 %v4346, 0.0
      %v4386 = vmax.f32 %v4347, 0.0
      %v4387 = vmax.f32 %v4348, 0.0
      %v4388 = vmax.f32 %v4349, 0.0
      %v4389 = vmax.f32 %v4350, 0.0
      %v4390 = vmax.f32 %v4351, 0.0
      %v4391 = vmax.f32 %v4352, 0.0
      %v4392 = vmax.f32 %v4353, 0.0
      %v4393 = vmax.f32 %v4354, 0.0
      %v4394 = vmax.f32 %v4355, 0.0
      %v4395 = vmax.f32 %v4356, 0.0
      %vm4433 = vcmask 1046528
      %v4434 = vrot.slane %v4357, 1
      %v4435 = vrot.slane %v4358, 1
      %v4436 = vsel %vm4433, %v4434, %v4435
      %v4437 = vrot.slane %v4359, 1
      %v4438 = vsel %vm4433, %v4435, %v4437
      %v4439 = vrot.slane %v4360, 1
      %v4440 = vsel %vm4433, %v4437, %v4439
      %v4441 = vrot.slane %v4361, 1
      %v4442 = vsel %vm4433, %v4439, %v4441
      %v4443 = vrot.slane %v4362, 1
      %v4444 = vsel %vm4433, %v4441, %v4443
      %v4445 = vrot.slane %v4363, 1
      %v4446 = vsel %vm4433, %v4443, %v4445
      %v4447 = vrot.slane %v4364, 1
      %v4448 = vsel %vm4433, %v4445, %v4447
      %v4449 = vrot.slane %v4365, 1
      %v4450 = vsel %vm4433, %v4447, %v4449
      %v4451 = vrot.slane %v4366, 1
      %v4452 = vsel %vm4433, %v4449, %v4451
      %v4453 = vrot.slane %v4367, 1
      %v4454 = vsel %vm4433, %v4451, %v4453
      %v4455 = vrot.slane %v4368, 1
      %v4456 = vsel %vm4433, %v4453, %v4455
      %v4457 = vrot.slane %v4369, 1
      %v4458 = vsel %vm4433, %v4455, %v4457
      %v4459 = vrot.slane %v4370, 1
      %v4460 = vsel %vm4433, %v4457, %v4459
      %v4461 = vrot.slane %v4371, 1
      %v4462 = vsel %vm4433, %v4459, %v4461
      %v4463 = vrot.slane %v4372, 1
      %v4464 = vsel %vm4433, %v4461, %v4463
      %v4465 = vrot.slane %v4373, 1
      %v4466 = vsel %vm4433, %v4463, %v4465
      %v4467 = vrot.slane %v4374, 1
      %v4468 = vsel %vm4433, %v4465, %v4467
      %v4469 = vrot.slane %v4375, 1
      %v4470 = vsel %vm4433, %v4467, %v4469
      %v4471 = vrot.slane %v4376, 1
      %v4472 = vsel %vm4433, %v4469, %v4471
      %v4473 = vrot.slane %v4377, 1
      %v4474 = vsel %vm4433, %v4471, %v4473
      %v4475 = vrot.slane %v4378, 1
      %v4476 = vsel %vm4433, %v4473, %v4475
      %v4477 = vrot.slane %v4379, 1
      %v4478 = vsel %vm4433, %v4475, %v4477
      %v4479 = vrot.slane %v4380, 1
      %v4480 = vsel %vm4433, %v4477, %v4479
      %v4481 = vrot.slane %v4381, 1
      %v4482 = vsel %vm4433, %v4479, %v4481
      %v4483 = vrot.slane %v4382, 1
      %v4484 = vsel %vm4433, %v4481, %v4483
      %v4485 = vrot.slane %v4383, 1
      %v4486 = vsel %vm4433, %v4483, %v4485
      %v4487 = vrot.slane %v4384, 1
      %v4488 = vsel %vm4433, %v4485, %v4487
      %v4489 = vrot.slane %v4385, 1
      %v4490 = vsel %vm4433, %v4487, %v4489
      %v4491 = vrot.slane %v4386, 1
      %v4492 = vsel %vm4433, %v4489, %v4491
      %v4493 = vrot.slane %v4387, 1
      %v4494 = vsel %vm4433, %v4491, %v4493
      %v4495 = vrot.slane %v4388, 1
      %v4496 = vsel %vm4433, %v4493, %v4495
      %v4497 = vrot.slane %v4389, 1
      %v4498 = vsel %vm4433, %v4495, %v4497
      %v4499 = vrot.slane %v4390, 1
      %v4500 = vsel %vm4433, %v4497, %v4499
      %v4501 = vrot.slane %v4391, 1
      %v4502 = vsel %vm4433, %v4499, %v4501
      %v4503 = vrot.slane %v4392, 1
      %v4504 = vsel %vm4433, %v4501, %v4503
      %v4505 = vrot.slane %v4393, 1
      %v4506 = vsel %vm4433, %v4503, %v4505
      %v4543 = vmax.f32 %v4357, %v4436
      %v4544 = vmax.f32 %v4358, %v4438
      %v4545 = vmax.f32 %v4359, %v4440
      %v4546 = vmax.f32 %v4360, %v4442
      %v4547 = vmax.f32 %v4361, %v4444
      %v4548 = vmax.f32 %v4362, %v4446
      %v4549 = vmax.f32 %v4363, %v4448
      %v4550 = vmax.f32 %v4364, %v4450
      %v4551 = vmax.f32 %v4365, %v4452
      %v4552 = vmax.f32 %v4366, %v4454
      %v4553 = vmax.f32 %v4367, %v4456
      %v4554 = vmax.f32 %v4368, %v4458
      %v4555 = vmax.f32 %v4369, %v4460
      %v4556 = vmax.f32 %v4370, %v4462
      %v4557 = vmax.f32 %v4371, %v4464
      %v4558 = vmax.f32 %v4372, %v4466
      %v4559 = vmax.f32 %v4373, %v4468
      %v4560 = vmax.f32 %v4374, %v4470
      %v4561 = vmax.f32 %v4375, %v4472
      %v4562 = vmax.f32 %v4376, %v4474
      %v4563 = vmax.f32 %v4377, %v4476
      %v4564 = vmax.f32 %v4378, %v4478
      %v4565 = vmax.f32 %v4379, %v4480
      %v4566 = vmax.f32 %v4380, %v4482
      %v4567 = vmax.f32 %v4381, %v4484
      %v4568 = vmax.f32 %v4382, %v4486
      %v4569 = vmax.f32 %v4383, %v4488
      %v4570 = vmax.f32 %v4384, %v4490
      %v4571 = vmax.f32 %v4385, %v4492
      %v4572 = vmax.f32 %v4386, %v4494
      %v4573 = vmax.f32 %v4387, %v4496
      %v4574 = vmax.f32 %v4388, %v4498
      %v4575 = vmax.f32 %v4389, %v4500
      %v4576 = vmax.f32 %v4390, %v4502
      %v4577 = vmax.f32 %v4391, %v4504
      %v4578 = vmax.f32 %v4392, %v4506
      %v4581 = vrot.slane %v4394, 1
      %v4582 = vsel %vm4433, %v4505, %v4581
      %v4583 = vrot.slane %v4395, 1
      %v4584 = vsel %vm4433, %v4581, %v4583
      %v4588 = vmax.f32 %v4393, %v4582
      %v4589 = vmax.f32 %v4394, %v4584
      %v4590 = vmax.f32 %v4395, %v4583
      %vm4628 = vcmask 1045504
      %v4629 = vrot.slane %v4545, 2
      %v4630 = vrot.slane %v4546, 2
      %v4631 = vsel %vm4628, %v4629, %v4630
      %v4632 = vrot.slane %v4547, 2
      %v4633 = vsel %vm4628, %v4630, %v4632
      %v4634 = vrot.slane %v4548, 2
      %v4635 = vsel %vm4628, %v4632, %v4634
      %v4636 = vrot.slane %v4549, 2
      %v4637 = vsel %vm4628, %v4634, %v4636
      %v4638 = vrot.slane %v4550, 2
      %v4639 = vsel %vm4628, %v4636, %v4638
      %v4640 = vrot.slane %v4551, 2
      %v4641 = vsel %vm4628, %v4638, %v4640
      %v4642 = vrot.slane %v4552, 2
      %v4643 = vsel %vm4628, %v4640, %v4642
      %v4644 = vrot.slane %v4553, 2
      %v4645 = vsel %vm4628, %v4642, %v4644
      %v4646 = vrot.slane %v4554, 2
      %v4647 = vsel %vm4628, %v4644, %v4646
      %v4648 = vrot.slane %v4555, 2
      %v4649 = vsel %vm4628, %v4646, %v4648
      %v4650 = vrot.slane %v4556, 2
      %v4651 = vsel %vm4628, %v4648, %v4650
      %v4652 = vrot.slane %v4557, 2
      %v4653 = vsel %vm4628, %v4650, %v4652
      %v4654 = vrot.slane %v4558, 2
      %v4655 = vsel %vm4628, %v4652, %v4654
      %v4656 = vrot.slane %v4559, 2
      %v4657 = vsel %vm4628, %v4654, %v4656
      %v4658 = vrot.slane %v4560, 2
      %v4659 = vsel %vm4628, %v4656, %v4658
      %v4660 = vrot.slane %v4561, 2
      %v4661 = vsel %vm4628, %v4658, %v4660
      %v4662 = vrot.slane %v4562, 2
      %v4663 = vsel %vm4628, %v4660, %v4662
      %v4664 = vrot.slane %v4563, 2
      %v4665 = vsel %vm4628, %v4662, %v4664
      %v4666 = vrot.slane %v4564, 2
      %v4667 = vsel %vm4628, %v4664, %v4666
      %v4668 = vrot.slane %v4565, 2
      %v4669 = vsel %vm4628, %v4666, %v4668
      %v4670 = vrot.slane %v4566, 2
      %v4671 = vsel %vm4628, %v4668, %v4670
      %v4672 = vrot.slane %v4567, 2
      %v4673 = vsel %vm4628, %v4670, %v4672
      %v4674 = vrot.slane %v4568, 2
      %v4675 = vsel %vm4628, %v4672, %v4674
      %v4676 = vrot.slane %v4569, 2
      %v4677 = vsel %vm4628, %v4674, %v4676
      %v4678 = vrot.slane %v4570, 2
      %v4679 = vsel %vm4628, %v4676, %v4678
      %v4680 = vrot.slane %v4571, 2
      %v4681 = vsel %vm4628, %v4678, %v4680
      %v4682 = vrot.slane %v4572, 2
      %v4683 = vsel %vm4628, %v4680, %v4682
      %v4684 = vrot.slane %v4573, 2
      %v4685 = vsel %vm4628, %v4682, %v4684
      %v4686 = vrot.slane %v4574, 2
      %v4687 = vsel %vm4628, %v4684, %v4686
      %v4688 = vrot.slane %v4575, 2
      %v4689 = vsel %vm4628, %v4686, %v4688
      %v4690 = vrot.slane %v4576, 2
      %v4691 = vsel %vm4628, %v4688, %v4690
      %v4692 = vrot.slane %v4577, 2
      %v4693 = vsel %vm4628, %v4690, %v4692
      %v4694 = vrot.slane %v4578, 2
      %v4695 = vsel %vm4628, %v4692, %v4694
      %v4696 = vrot.slane %v4588, 2
      %v4697 = vsel %vm4628, %v4694, %v4696
      %v4698 = vrot.slane %v4589, 2
      %v4699 = vsel %vm4628, %v4696, %v4698
      %v4700 = vrot.slane %v4590, 2
      %v4701 = vsel %vm4628, %v4698, %v4700
      %v4738 = vmax.f32 %v4543, %v4631
      %v4739 = vmax.f32 %v4544, %v4633
      %v4740 = vmax.f32 %v4545, %v4635
      %v4741 = vmax.f32 %v4546, %v4637
      %v4742 = vmax.f32 %v4547, %v4639
      %v4743 = vmax.f32 %v4548, %v4641
      %v4744 = vmax.f32 %v4549, %v4643
      %v4745 = vmax.f32 %v4550, %v4645
      %v4746 = vmax.f32 %v4551, %v4647
      %v4747 = vmax.f32 %v4552, %v4649
      %v4748 = vmax.f32 %v4553, %v4651
      %v4749 = vmax.f32 %v4554, %v4653
      %v4750 = vmax.f32 %v4555, %v4655
      %v4751 = vmax.f32 %v4556, %v4657
      %v4752 = vmax.f32 %v4557, %v4659
      %v4753 = vmax.f32 %v4558, %v4661
      %v4754 = vmax.f32 %v4559, %v4663
      %v4755 = vmax.f32 %v4560, %v4665
      %v4756 = vmax.f32 %v4561, %v4667
      %v4757 = vmax.f32 %v4562, %v4669
      %v4758 = vmax.f32 %v4563, %v4671
      %v4759 = vmax.f32 %v4564, %v4673
      %v4760 = vmax.f32 %v4565, %v4675
      %v4761 = vmax.f32 %v4566, %v4677
      %v4762 = vmax.f32 %v4567, %v4679
      %v4763 = vmax.f32 %v4568, %v4681
      %v4764 = vmax.f32 %v4569, %v4683
      %v4765 = vmax.f32 %v4570, %v4685
      %v4766 = vmax.f32 %v4571, %v4687
      %v4767 = vmax.f32 %v4572, %v4689
      %v4768 = vmax.f32 %v4573, %v4691
      %v4769 = vmax.f32 %v4574, %v4693
      %v4770 = vmax.f32 %v4575, %v4695
      %v4771 = vmax.f32 %v4576, %v4697
      %v4772 = vmax.f32 %v4577, %v4699
      %v4773 = vmax.f32 %v4578, %v4701
      %v4774 = vpack.c.bf16 %v4739, %v4738
      %v4775 = vpack.c.bf16 %v4741, %v4740
      %v4776 = vpack.c.bf16 %v4743, %v4742
      %v4777 = vpack.c.bf16 %v4745, %v4744
      %v4778 = vpack.c.bf16 %v4747, %v4746
      %v4779 = vpack.c.bf16 %v4749, %v4748
      %v4780 = vpack.c.bf16 %v4751, %v4750
      %v4781 = vpack.c.bf16 %v4753, %v4752
      %v4782 = vpack.c.bf16 %v4755, %v4754
      %v4783 = vpack.c.bf16 %v4757, %v4756
      %v4784 = vpack.c.bf16 %v4759, %v4758
      %v4785 = vpack.c.bf16 %v4761, %v4760
      %v4786 = vpack.c.bf16 %v4763, %v4762
      %v4787 = vpack.c.bf16 %v4765, %v4764
      %v4788 = vpack.c.bf16 %v4767, %v4766
      %v4789 = vpack.c.bf16 %v4769, %v4768
      %v4790 = vpack.c.bf16 %v4771, %v4770
      %v4791 = vpack.c.bf16 %v4773, %v4772
      %v4810 = vunpack.c.l.b16 %v4774
      %v4811 = vunpack.c.h.b16 %v4774
      %v4812 = vunpack.c.l.b16 %v4775
      %v4813 = vunpack.c.h.b16 %v4775
      %v4814 = vunpack.c.l.b16 %v4776
      %v4815 = vunpack.c.h.b16 %v4776
      %v4816 = vunpack.c.l.b16 %v4777
      %v4817 = vunpack.c.h.b16 %v4777
      %v4818 = vunpack.c.l.b16 %v4778
      %v4819 = vunpack.c.h.b16 %v4778
      %v4820 = vunpack.c.l.b16 %v4779
      %v4821 = vunpack.c.h.b16 %v4779
      %v4822 = vunpack.c.l.b16 %v4780
      %v4823 = vunpack.c.h.b16 %v4780
      %v4824 = vunpack.c.l.b16 %v4781
      %v4825 = vunpack.c.h.b16 %v4781
      %v4826 = vunpack.c.l.b16 %v4782
      %v4827 = vunpack.c.h.b16 %v4782
      %v4828 = vunpack.c.l.b16 %v4783
      %v4829 = vunpack.c.h.b16 %v4783
      %v4830 = vunpack.c.l.b16 %v4784
      %v4831 = vunpack.c.h.b16 %v4784
      %v4832 = vunpack.c.l.b16 %v4785
      %v4833 = vunpack.c.h.b16 %v4785
      %v4834 = vunpack.c.l.b16 %v4786
      %v4835 = vunpack.c.h.b16 %v4786
      %v4836 = vunpack.c.l.b16 %v4787
      %v4837 = vunpack.c.h.b16 %v4787
      %v4838 = vunpack.c.l.b16 %v4788
      %v4839 = vunpack.c.h.b16 %v4788
      %v4840 = vunpack.c.l.b16 %v4789
      %v4841 = vunpack.c.h.b16 %v4789
      %v4842 = vunpack.c.l.b16 %v4790
      %v4843 = vunpack.c.h.b16 %v4790
      %v4844 = vunpack.c.l.b16 %v4791
      %v4845 = vunpack.c.h.b16 %v4791
      %v4846 = vpack.c.b16 %v4810, %v4810
      %v4847 = vpack.c.b16 %v4811, %v4811
      %v4848 = vpack.c.b16 %v4812, %v4812
      %v4849 = vpack.c.b16 %v4813, %v4813
      %v4850 = vpack.c.b16 %v4814, %v4814
      %v4851 = vpack.c.b16 %v4815, %v4815
      %v4852 = vpack.c.b16 %v4816, %v4816
      %v4853 = vpack.c.b16 %v4817, %v4817
      %v4854 = vpack.c.b16 %v4818, %v4818
      %v4855 = vpack.c.b16 %v4819, %v4819
      %v4856 = vpack.c.b16 %v4820, %v4820
      %v4857 = vpack.c.b16 %v4821, %v4821
      %v4858 = vpack.c.b16 %v4822, %v4822
      %v4859 = vpack.c.b16 %v4823, %v4823
      %v4860 = vpack.c.b16 %v4824, %v4824
      %v4861 = vpack.c.b16 %v4825, %v4825
      %v4862 = vpack.c.b16 %v4826, %v4826
      %v4863 = vpack.c.b16 %v4827, %v4827
      %v4864 = vpack.c.b16 %v4828, %v4828
      %v4865 = vpack.c.b16 %v4829, %v4829
      %v4866 = vpack.c.b16 %v4830, %v4830
      %v4867 = vpack.c.b16 %v4831, %v4831
      %v4868 = vpack.c.b16 %v4832, %v4832
      %v4869 = vpack.c.b16 %v4833, %v4833
      %v4870 = vpack.c.b16 %v4834, %v4834
      %v4871 = vpack.c.b16 %v4835, %v4835
      %v4872 = vpack.c.b16 %v4836, %v4836
      %v4873 = vpack.c.b16 %v4837, %v4837
      %v4874 = vpack.c.b16 %v4838, %v4838
      %v4875 = vpack.c.b16 %v4839, %v4839
      %v4876 = vpack.c.b16 %v4840, %v4840
      %v4877 = vpack.c.b16 %v4841, %v4841
      %v4878 = vpack.c.b16 %v4842, %v4842
      %v4879 = vpack.c.b16 %v4843, %v4843
      %v4880 = vpack.c.b16 %v4844, %v4844
      %v4881 = vpack.c.b16 %v4845, %v4845
      %vm4918 = vcmask 519168
      %4919 = vst.msk [vmem:[%s206] sm:$0xf] %vm4918, %v4846
      %4920 = vst.msk [vmem:[%s206 + $0x4] sm:$0xf] %vm4918, %v4847
      %4921 = vst.msk [vmem:[%s206 + $0x8] sm:$0xf] %vm4918, %v4848
      %4922 = vst.msk [vmem:[%s206 + $0xc] sm:$0xf] %vm4918, %v4849
      %4923 = vst.msk [vmem:[%s206 + $0x10] sm:$0xf] %vm4918, %v4850
      %4924 = vst.msk [vmem:[%s206 + $0x14] sm:$0xf] %vm4918, %v4851
      %4925 = vst.msk [vmem:[%s206 + $0x18] sm:$0xf] %vm4918, %v4852
      %4926 = vst.msk [vmem:[%s206 + $0x1c] sm:$0xf] %vm4918, %v4853
      %4927 = vst.msk [vmem:[%s206 + $0x20] sm:$0xf] %vm4918, %v4854
      %4928 = vst.msk [vmem:[%s206 + $0x24] sm:$0xf] %vm4918, %v4855
      %4929 = vst.msk [vmem:[%s206 + $0x28] sm:$0xf] %vm4918, %v4856
      %4930 = vst.msk [vmem:[%s206 + $0x2c] sm:$0xf] %vm4918, %v4857
      %4931 = vst.msk [vmem:[%s206 + $0x30] sm:$0xf] %vm4918, %v4858
      %4932 = vst.msk [vmem:[%s206 + $0x34] sm:$0xf] %vm4918, %v4859
      %4933 = vst.msk [vmem:[%s206 + $0x38] sm:$0xf] %vm4918, %v4860
      %4934 = vst.msk [vmem:[%s206 + $0x3c] sm:$0xf] %vm4918, %v4861
      %4935 = vst.msk [vmem:[%s206 + $0x40] sm:$0xf] %vm4918, %v4862
      %4936 = vst.msk [vmem:[%s206 + $0x44] sm:$0xf] %vm4918, %v4863
      %4937 = vst.msk [vmem:[%s206 + $0x48] sm:$0xf] %vm4918, %v4864
      %4938 = vst.msk [vmem:[%s206 + $0x4c] sm:$0xf] %vm4918, %v4865
      %4939 = vst.msk [vmem:[%s206 + $0x50] sm:$0xf] %vm4918, %v4866
      %4940 = vst.msk [vmem:[%s206 + $0x54] sm:$0xf] %vm4918, %v4867
      %4941 = vst.msk [vmem:[%s206 + $0x58] sm:$0xf] %vm4918, %v4868
      %4942 = vst.msk [vmem:[%s206 + $0x5c] sm:$0xf] %vm4918, %v4869
      %4943 = vst.msk [vmem:[%s206 + $0x60] sm:$0xf] %vm4918, %v4870
      %4944 = vst.msk [vmem:[%s206 + $0x64] sm:$0xf] %vm4918, %v4871
      %4945 = vst.msk [vmem:[%s206 + $0x68] sm:$0xf] %vm4918, %v4872
      %4946 = vst.msk [vmem:[%s206 + $0x6c] sm:$0xf] %vm4918, %v4873
      %4947 = vst.msk [vmem:[%s206 + $0x70] sm:$0xf] %vm4918, %v4874
      %4948 = vst.msk [vmem:[%s206 + $0x74] sm:$0xf] %vm4918, %v4875
      %4949 = vst.msk [vmem:[%s206 + $0x78] sm:$0xf] %vm4918, %v4876
      %4950 = vst.msk [vmem:[%s206 + $0x7c] sm:$0xf] %vm4918, %v4877
      %4951 = vst.msk [vmem:[%s206 + $0x80] sm:$0xf] %vm4918, %v4878
      %4952 = vst.msk [vmem:[%s206 + $0x84] sm:$0xf] %vm4918, %v4879
      %4953 = vst.msk [vmem:[%s206 + $0x88] sm:$0xf] %vm4918, %v4880
      %4954 = vst.msk [vmem:[%s206 + $0x8c] sm:$0xf] %vm4918, %v4881
      %p4955 = scmp.lt.s32.totalorder %s18, 1
      %s4956 = scalar_select %p4955, %s18, 1
      %p4957 = scmp.lt.s32.totalorder %s19, 0
      %s4958 = scalar_select %p4957, %s19, 0
      %s4959 = smul.addr %s4958, 36
      %s4960 = smul.addr %s4956, 36
      %s4961 = sadd.s32 %s4959, %s4960
      %s4962 = smul.addr %s4961, 4
      %s4963 = scalar_lea.vmem %s3, %s4962
      // Predicated region
      $region33: #{encoder3_forward_pallas.6} parent=31 // pred_check
        %p4964 = pneg %p116
      $region34: #{encoder3_forward_pallas.6} parent=31 // pred_check_branch
        %4966 = sbr.rel (%p4964) target = $region36
      $region35: #{encoder3_forward_pallas.6} parent=31 // pred_region
        _
      $region36: #{encoder3_forward_pallas.6} parent=31 // pred_fallthru
        _
    $region32: #{encoder3_forward_pallas.6} parent=5 // pred_fallthru
      _
    %p4967 = scmp.le.s32.totalorder 2, %s9
    // Predicated region
    $region37: #{encoder3_forward_pallas.6} parent=5 // pred_check
      %p4968 = pneg %p4967
    $region38: #{encoder3_forward_pallas.6} parent=5 // pred_check_branch
      %4970 = sbr.rel (%p4968) target = $region40
    $region39: #{encoder3_forward_pallas.6} parent=5 // pred_region
      %s4971 = ssub.s32 %s9, 2
      // Predicated region
      $region41: #{encoder3_forward_pallas.6} parent=39 // pred_check
        %p4972 = pneg %p122
      $region42: #{encoder3_forward_pallas.6} parent=39 // pred_check_branch
        %4974 = sbr.rel (%p4972) target = $region44
      $region43: #{encoder3_forward_pallas.6} parent=39 // pred_region
        %p4975 = scmp.lt.s32.totalorder %s20, 1
        %s4976 = scalar_select %p4975, %s20, 1
        %p4977 = scmp.lt.s32.totalorder %s21, 0
        %s4978 = scalar_select %p4977, %s21, 0
        %s4979 = smul.addr %s4978, 36
        %s4980 = smul.addr %s4976, 36
        %s4981 = sadd.s32 %s4979, %s4980
        %s4982 = smul.addr %s4981, 4
        %s4983 = scalar_lea.vmem %s3, %s4982
      $region44: #{encoder3_forward_pallas.6} parent=39 // pred_fallthru
        _
    $region40: #{encoder3_forward_pallas.6} parent=5 // pred_fallthru
      _
  $region6: #{encoder3_forward_pallas.6} parent=0 // loop_footer
    %s13 = sadd.s32 1, %s9
  $region7: #{encoder3_forward_pallas.6} parent=0 // loop_footer_branch
    %8 = sbr.rel target = $region3
  $region8: #{encoder3_forward_pallas.6} parent=0 // loop_exit
    _

// kernel: encoder3_forward_pallas.8
$region0: #{encoder3_forward_pallas.8}
  #allocation0 [shape = 'u32[]', space=smem, size = 0x4, offset = 0x4, fixed_abs, tag = 'smem constant byte address 0x4 - core index']
  #allocation1 [shape = 'u32[144,128]{1,0:T(1,128)}', space=vmem, size = 0x12000, scoped, tag = 'internal scratch']
  %s0 = inlined_call_operand.vmem [shape: bf16[2,1,120,128], index: 0, kind: input, shape index: {}]
  %s1 = inlined_call_operand.vmem [shape: bf16[9,128,128], index: 1, kind: input, shape index: {}]
  %s2 = inlined_call_operand.vmem [shape: f32[1,128], index: 2, kind: input, shape index: {}]
  %s3 = inlined_call_operand.vmem [shape: bf16[2,1,80,128], index: 3, kind: output, shape index: {}]
  %s4 = sld [smem:[#allocation0]]
  $region45: #{encoder3_forward_pallas.8} parent=0
    _
  %s6 = ssub.s32 1, %s4
  %s7 = scalar_select 0, %s6, %s4
  loop: start=0, step=1, limit=4
  $region2: #{encoder3_forward_pallas.8} parent=0 // loop_pre_header
    _
  $region3: #{encoder3_forward_pallas.8} parent=0 // loop_header
    %s9 = sphi 0, %s13
    %p10 = scmp.ge.s32.totalorder %s9, 4
    %s16 = sphi 0, %s28
    %s17 = sphi 0, %s24
    %s18 = sphi 0, %s16
    %s19 = sphi 0, %s17
    %s20 = sphi 0, %s18
    %s21 = sphi 0, %s19
    %s33 = sphi 0, %s35
    %s36 = sphi 0, %s33
    %s37 = sphi 0, %s36
    %s53 = sphi 0, %s37
    %s57 = sphi 0, %s57
    %s59 = sphi 0, %s57
    %s60 = sphi 0, %s59
    %s74 = sphi 0, %s60
    %s78 = sphi 0, %s78
    %s80 = sphi 0, %s78
    %s81 = sphi 0, %s80
    %s95 = sphi 0, %s81
    %s103 = sphi 0, %s105
    %s106 = sphi 0, %s103
    %s107 = sphi 0, %s106
    %s123 = sphi 0, %s107
  $region4: #{encoder3_forward_pallas.8} parent=0 // loop_header_branch
    %12 = sbr.rel (%p10) target = $region8
  $region5: #{encoder3_forward_pallas.8} parent=0 // loop_body
    %s14 = ssub.s32 %s9, 1
    %s15 = ssub.s32 %s9, 2
    %s22 = sadd.s32 1, %s17
    %p23 = scmp.ge.s32.totalorder %s22, 1
    %s24 = scalar_select %p23, 0, %s22
    %s25 = sadd.s32 1, %s16
    %s26 = scalar_select %p23, %s25, %s16
    %p27 = scmp.ge.s32.totalorder %s26, 2
    %s28 = scalar_select %p27, 0, %s26
    %s29 = ssub.s32 %s16, %s28
    %s30 = ssub.s32 %s17, %s24
    %s31 = sor.u32 %s29, %s30
    %p32 = scmp.eq.s32.totalorder %s31, 0
    %s34 = sadd.s32 %s33, 1
    %s35 = scalar_select %p32, %s33, %s34
    %p38 = pneg %p32
    %p39 = scmp.eq.s32.totalorder %s9, 1
    %p40 = por %p38, %p39
    %p41 = scmp.ne.s32.totalorder %s33, %s36
    %p42 = scmp.eq.s32.totalorder %s9, 0
    %p43 = por %p41, %p42
    %p44 = scmp.ne.s32.totalorder %s33, %s36
    %p45 = scmp.eq.s32.totalorder %s14, 1
    %p46 = por %p44, %p45
    %p47 = scmp.ne.s32.totalorder %s36, %s37
    %p48 = scmp.eq.s32.totalorder %s14, 0
    %p49 = por %p47, %p48
    %p50 = scmp.ne.s32.totalorder %s36, %s37
    %p51 = scmp.eq.s32.totalorder %s15, 1
    %p52 = por %p50, %p51
    %p54 = scmp.ne.s32.totalorder %s37, %s53
    %p55 = scmp.eq.s32.totalorder %s15, 0
    %p56 = por %p54, %p55
    %s58 = sadd.s32 %s57, 1
    %p61 = scmp.eq.s32.totalorder %s9, 1
    %p62 = scmp.ne.s32.totalorder %s57, %s59
    %p63 = scmp.eq.s32.totalorder %s9, 0
    %p64 = por %p62, %p63
    %p65 = scmp.ne.s32.totalorder %s57, %s59
    %p66 = scmp.eq.s32.totalorder %s14, 1
    %p67 = por %p65, %p66
    %p68 = scmp.ne.s32.totalorder %s59, %s60
    %p69 = scmp.eq.s32.totalorder %s14, 0
    %p70 = por %p68, %p69
    %p71 = scmp.ne.s32.totalorder %s59, %s60
    %p72 = scmp.eq.s32.totalorder %s15, 1
    %p73 = por %p71, %p72
    %p75 = scmp.ne.s32.totalorder %s60, %s74
    %p76 = scmp.eq.s32.totalorder %s15, 0
    %p77 = por %p75, %p76
    %s79 = sadd.s32 %s78, 1
    %p82 = scmp.eq.s32.totalorder %s9, 1
    %p83 = scmp.ne.s32.totalorder %s78, %s80
    %p84 = scmp.eq.s32.totalorder %s9, 0
    %p85 = por %p83, %p84
    %p86 = scmp.ne.s32.totalorder %s78, %s80
    %p87 = scmp.eq.s32.totalorder %s14, 1
    %p88 = por %p86, %p87
    %p89 = scmp.ne.s32.totalorder %s80, %s81
    %p90 = scmp.eq.s32.totalorder %s14, 0
    %p91 = por %p89, %p90
    %p92 = scmp.ne.s32.totalorder %s80, %s81
    %p93 = scmp.eq.s32.totalorder %s15, 1
    %p94 = por %p92, %p93
    %p96 = scmp.ne.s32.totalorder %s81, %s95
    %p97 = scmp.eq.s32.totalorder %s15, 0
    %p98 = por %p96, %p97
    %s99 = ssub.s32 %s16, %s28
    %s100 = ssub.s32 %s17, %s24
    %s101 = sor.u32 %s99, %s100
    %p102 = scmp.eq.s32.totalorder %s101, 0
    %s104 = sadd.s32 %s103, 1
    %s105 = scalar_select %p102, %s103, %s104
    %p108 = pneg %p102
    %p109 = scmp.eq.s32.totalorder %s9, 1
    %p110 = por %p108, %p109
    %p111 = scmp.ne.s32.totalorder %s103, %s106
    %p112 = scmp.eq.s32.totalorder %s9, 0
    %p113 = por %p111, %p112
    %p114 = scmp.ne.s32.totalorder %s103, %s106
    %p115 = scmp.eq.s32.totalorder %s14, 1
    %p116 = por %p114, %p115
    %p117 = scmp.ne.s32.totalorder %s106, %s107
    %p118 = scmp.eq.s32.totalorder %s14, 0
    %p119 = por %p117, %p118
    %p120 = scmp.ne.s32.totalorder %s106, %s107
    %p121 = scmp.eq.s32.totalorder %s15, 1
    %p122 = por %p120, %p121
    %p124 = scmp.ne.s32.totalorder %s107, %s123
    %p125 = scmp.eq.s32.totalorder %s15, 0
    %p126 = por %p124, %p125
    %p127 = scmp.le.s32.totalorder 1, %s9
    %p128 = scmp.lt.s32.totalorder %s9, 3
    %p129 = pnand %p127, %p128
    %p130 = pneg %p129
    // Predicated region
    $region9: #{encoder3_forward_pallas.8} parent=5 // pred_check
      _
    $region10: #{encoder3_forward_pallas.8} parent=5 // pred_check_branch
      %132 = sbr.rel (%p129) target = $region12
    $region11: #{encoder3_forward_pallas.8} parent=5 // pred_region
      %s133 = ssub.s32 %s9, 1
      // Predicated region
      $region13: #{encoder3_forward_pallas.8} parent=11 // pred_check
        %p134 = pneg %p70
      $region14: #{encoder3_forward_pallas.8} parent=11 // pred_check_branch
        %136 = sbr.rel (%p134) target = $region16
      $region15: #{encoder3_forward_pallas.8} parent=11 // pred_region
        _
      $region16: #{encoder3_forward_pallas.8} parent=11 // pred_fallthru
        _
      // Predicated region
      $region17: #{encoder3_forward_pallas.8} parent=11 // pred_check
        %p137 = pneg %p91
      $region18: #{encoder3_forward_pallas.8} parent=11 // pred_check_branch
        %139 = sbr.rel (%p137) target = $region20
      $region19: #{encoder3_forward_pallas.8} parent=11 // pred_region
        _
      $region20: #{encoder3_forward_pallas.8} parent=11 // pred_fallthru
        _
    $region12: #{encoder3_forward_pallas.8} parent=5 // pred_fallthru
      _
    %p140 = scmp.lt.s32.totalorder %s9, 2
    // Predicated region
    $region21: #{encoder3_forward_pallas.8} parent=5 // pred_check
      %p141 = pneg %p140
    $region22: #{encoder3_forward_pallas.8} parent=5 // pred_check_branch
      %143 = sbr.rel (%p141) target = $region24
    $region23: #{encoder3_forward_pallas.8} parent=5 // pred_region
      // Predicated region
      $region25: #{encoder3_forward_pallas.8} parent=23 // pred_check
        %p144 = pneg %p43
      $region26: #{encoder3_forward_pallas.8} parent=23 // pred_check_branch
        %146 = sbr.rel (%p144) target = $region28
      $region27: #{encoder3_forward_pallas.8} parent=23 // pred_region
        %p147 = scmp.lt.s32.totalorder %s16, 1
        %s148 = scalar_select %p147, %s16, 1
        %p149 = scmp.lt.s32.totalorder %s17, 0
        %s150 = scalar_select %p149, %s17, 0
        %s151 = smul.addr %s150, 15
        %s152 = smul.addr %s148, 15
        %s153 = sadd.s32 %s151, %s152
        %s154 = smul.addr %s153, 4
        %s155 = scalar_lea.vmem %s0, %s154
      $region28: #{encoder3_forward_pallas.8} parent=23 // pred_fallthru
        _
    $region24: #{encoder3_forward_pallas.8} parent=5 // pred_fallthru
      _
    %p156 = scmp.le.s32.totalorder 1, %s9
    %p157 = scmp.lt.s32.totalorder %s9, 3
    %p158 = pnand %p156, %p157
    %p159 = pneg %p158
    // Predicated region
    $region29: #{encoder3_forward_pallas.8} parent=5 // pred_check
      _
    $region30: #{encoder3_forward_pallas.8} parent=5 // pred_check_branch
      %161 = sbr.rel (%p158) target = $region32
    $region31: #{encoder3_forward_pallas.8} parent=5 // pred_region
      %s162 = ssub.s32 %s9, 1
      %p163 = scmp.lt.s32.totalorder %s18, 1
      %s164 = scalar_select %p163, %s18, 1
      %p165 = scmp.lt.s32.totalorder %s19, 0
      %s166 = scalar_select %p165, %s19, 0
      %s167 = smul.addr %s166, 15
      %s168 = smul.addr %s164, 15
      %s169 = sadd.s32 %s167, %s168
      %s170 = smul.addr %s169, 4
      %s171 = scalar_lea.vmem %s0, %s170
      %p172 = pneg %p49
      %p173 = pneg %p46
      %p174 = pneg %p70
      %p175 = pneg %p67
      %p176 = pneg %p91
      %p177 = pneg %p88
      %p178 = pneg %p119
      %p179 = pneg %p116
      %p180 = scmp.lt.s32.totalorder %s18, 1
      %s181 = scalar_select %p180, %s18, 1
      %p182 = scmp.lt.s32.totalorder %s19, 0
      %s183 = scalar_select %p182, %s19, 0
      %s184 = smul.addr %s183, 10
      %s185 = smul.addr %s181, 10
      %s186 = sadd.s32 %s184, %s185
      %s187 = smul.addr %s186, 4
      %s188 = scalar_lea.vmem %s3, %s187
      %p189 = scmp.lt.s32.totalorder %s18, 1
      %s190 = scalar_select %p189, %s18, 1
      %p191 = scmp.lt.s32.totalorder %s19, 0
      %s192 = scalar_select %p191, %s19, 0
      %s193 = smul.addr %s192, 15
      %s194 = smul.addr %s190, 15
      %s195 = sadd.s32 %s193, %s194
      %s196 = smul.addr %s195, 4
      %s197 = scalar_lea.vmem %s0, %s196
      %p198 = scmp.lt.s32.totalorder %s18, 1
      %s199 = scalar_select %p198, %s18, 1
      %p200 = scmp.lt.s32.totalorder %s19, 0
      %s201 = scalar_select %p200, %s19, 0
      %s202 = smul.addr %s201, 10
      %s203 = smul.addr %s199, 10
      %s204 = sadd.s32 %s202, %s203
      %s205 = smul.addr %s204, 4
      %s206 = scalar_lea.vmem %s3, %s205
      %v208 = vld [vmem:[%s197] sm:$0xf]
      %v209 = vld [vmem:[%s197 + $0x4] sm:$0xf]
      %v210 = vld [vmem:[%s197 + $0x8] sm:$0xf]
      %v211 = vld [vmem:[%s197 + $0xc] sm:$0xf]
      %v212 = vld [vmem:[%s197 + $0x10] sm:$0xf]
      %v213 = vld [vmem:[%s197 + $0x14] sm:$0xf]
      %v214 = vld [vmem:[%s197 + $0x18] sm:$0xf]
      %v215 = vld [vmem:[%s197 + $0x1c] sm:$0xf]
      %v216 = vld [vmem:[%s197 + $0x20] sm:$0xf]
      %v217 = vld [vmem:[%s197 + $0x24] sm:$0xf]
      %v218 = vld [vmem:[%s197 + $0x28] sm:$0xf]
      %v219 = vld [vmem:[%s197 + $0x2c] sm:$0x3]
      %v220 = vld [vmem:[%s1] sm:$0xf]
      %v221 = vld [vmem:[%s1 + $0x4] sm:$0xf]
      %v222 = vld [vmem:[%s1 + $0x8] sm:$0xf]
      %v223 = vld [vmem:[%s1 + $0xc] sm:$0xf]
      %v224 = vld [vmem:[%s1 + $0x10] sm:$0xf]
      %v225 = vld [vmem:[%s1 + $0x14] sm:$0xf]
      %v226 = vld [vmem:[%s1 + $0x18] sm:$0xf]
      %v227 = vld [vmem:[%s1 + $0x1c] sm:$0xf]
      %v228 = vld [vmem:[%s1 + $0x20] sm:$0xf]
      %v229 = vld [vmem:[%s1 + $0x24] sm:$0xf]
      %v230 = vld [vmem:[%s1 + $0x28] sm:$0xf]
      %v231 = vld [vmem:[%s1 + $0x2c] sm:$0xf]
      %v232 = vld [vmem:[%s1 + $0x30] sm:$0xf]
      %v233 = vld [vmem:[%s1 + $0x34] sm:$0xf]
      %v234 = vld [vmem:[%s1 + $0x38] sm:$0xf]
      %v235 = vld [vmem:[%s1 + $0x3c] sm:$0xf]
      %s236 = scalar_lea.vmem %s1, 64
      %v237 = vld [vmem:[%s236] sm:$0xf]
      %v238 = vld [vmem:[%s236 + $0x4] sm:$0xf]
      %v239 = vld [vmem:[%s236 + $0x8] sm:$0xf]
      %v240 = vld [vmem:[%s236 + $0xc] sm:$0xf]
      %v241 = vld [vmem:[%s236 + $0x10] sm:$0xf]
      %v242 = vld [vmem:[%s236 + $0x14] sm:$0xf]
      %v243 = vld [vmem:[%s236 + $0x18] sm:$0xf]
      %v244 = vld [vmem:[%s236 + $0x1c] sm:$0xf]
      %v245 = vld [vmem:[%s236 + $0x20] sm:$0xf]
      %v246 = vld [vmem:[%s236 + $0x24] sm:$0xf]
      %v247 = vld [vmem:[%s236 + $0x28] sm:$0xf]
      %v248 = vld [vmem:[%s236 + $0x2c] sm:$0xf]
      %v249 = vld [vmem:[%s236 + $0x30] sm:$0xf]
      %v250 = vld [vmem:[%s236 + $0x34] sm:$0xf]
      %v251 = vld [vmem:[%s236 + $0x38] sm:$0xf]
      %v252 = vld [vmem:[%s236 + $0x3c] sm:$0xf]
      %v265 = vunpack.c.l.b16 %v208
      %v266 = vunpack.c.l.b16 %v209
      %v267 = vunpack.c.l.b16 %v210
      %v268 = vunpack.c.l.b16 %v211
      %v269 = vunpack.c.l.b16 %v212
      %v270 = vunpack.c.l.b16 %v213
      %v271 = vunpack.c.l.b16 %v214
      %v272 = vunpack.c.l.b16 %v215
      %v273 = vunpack.c.l.b16 %v216
      %v274 = vunpack.c.l.b16 %v217
      %v275 = vunpack.c.l.b16 %v218
      %v276 = vunpack.c.l.b16 %v219
      %v277 = vpack.c.b16 %v266, %v265
      %v278 = vpack.c.b16 %v268, %v267
      %v279 = vpack.c.b16 %v270, %v269
      %v280 = vpack.c.b16 %v272, %v271
      %v281 = vpack.c.b16 %v274, %v273
      %v282 = vpack.c.b16 %v276, %v275
      %vm283 = vsmask.f32 7424
      %v285 = vshrl.u32 %v277, 16
      %v287 = vshll.u32 %v277, 16
      %v289 = vrot.slane %v287, 1
      %v290 = vor.u32 %v285, %v289
      %v292 = vshll.u32 %v278, 16
      %v294 = vrot.slane %v292, 1
      %v295 = vsel %vm283, %v290, %v294
      %v296 = vshrl.u32 %v278, 16
      %v298 = vor.u32 %v296, %v294
      %v300 = vshll.u32 %v279, 16
      %v302 = vrot.slane %v300, 1
      %v303 = vsel %vm283, %v298, %v302
      %v304 = vshrl.u32 %v279, 16
      %v306 = vor.u32 %v304, %v302
      %v308 = vshll.u32 %v280, 16
      %v310 = vrot.slane %v308, 1
      %v311 = vsel %vm283, %v306, %v310
      %v312 = vshrl.u32 %v280, 16
      %v314 = vor.u32 %v312, %v310
      %v316 = vshll.u32 %v281, 16
      %v318 = vrot.slane %v316, 1
      %v319 = vsel %vm283, %v314, %v318
      %v320 = vshrl.u32 %v281, 16
      %v322 = vor.u32 %v320, %v318
      %v324 = vshll.u32 %v282, 16
      %v326 = vrot.slane %v324, 1
      %v327 = vsel %vm283, %v322, %v326
      %v328 = vshrl.u32 %v282, 16
      %v330 = vor.u32 %v328, %v326
      %v353 = vunpack.c.l.b16 %v237
      %v354 = vunpack.c.l.b16 %v238
      %v355 = vunpack.c.l.b16 %v239
      %v356 = vunpack.c.l.b16 %v240
      %v357 = vunpack.c.l.b16 %v241
      %v358 = vunpack.c.l.b16 %v242
      %v359 = vunpack.c.l.b16 %v243
      %v360 = vunpack.c.l.b16 %v244
      %v361 = vunpack.c.l.b16 %v245
      %v362 = vunpack.c.l.b16 %v246
      %v363 = vunpack.c.l.b16 %v247
      %v364 = vunpack.c.l.b16 %v248
      %v365 = vunpack.c.l.b16 %v249
      %v366 = vunpack.c.l.b16 %v250
      %v367 = vunpack.c.l.b16 %v251
      %v368 = vunpack.c.l.b16 %v252
      %v369 = vpack.c.b16 %v354, %v353
      %v370 = vpack.c.b16 %v356, %v355
      %v371 = vpack.c.b16 %v358, %v357
      %v372 = vpack.c.b16 %v360, %v359
      %v373 = vpack.c.b16 %v362, %v361
      %v374 = vpack.c.b16 %v364, %v363
      %v375 = vpack.c.b16 %v366, %v365
      %v376 = vpack.c.b16 %v368, %v367
      %385 = vmatprep.subr.bf16.mxu0 0
      %386 = vmatpush1.bf16.msra.mxu0 %v369
      %387 = vmatprep.subr.bf16.mxu0 0
      %388 = vmatpush1.bf16.msra.mxu0 %v370
      %389 = vmatprep.subr.bf16.mxu0 0
      %390 = vmatpush1.bf16.msra.mxu0 %v371
      %391 = vmatprep.subr.bf16.mxu0 0
      %392 = vmatpush1.bf16.msra.mxu0 %v372
      %393 = vmatprep.subr.bf16.mxu0 0
      %394 = vmatpush1.bf16.msra.mxu0 %v373
      %395 = vmatprep.subr.bf16.mxu0 0
      %396 = vmatpush1.bf16.msra.mxu0 %v374
      %397 = vmatprep.subr.bf16.mxu0 0
      %398 = vmatpush1.bf16.msra.mxu0 %v375
      %399 = vmatprep.subr.bf16.mxu0 0
      %400 = vmatpush1.bf16.msra.mxu0 %v376
      %401 = vmatprep.subr.bf16.mxu0 0
      %402 = vmatpush1.bf16.msra.mxu0 0
      %403 = vmatprep.subr.bf16.mxu0 0
      %404 = vmatpush1.bf16.msra.mxu0 0
      %405 = vmatprep.subr.bf16.mxu0 0
      %406 = vmatpush1.bf16.msra.mxu0 0
      %407 = vmatprep.subr.bf16.mxu0 0
      %408 = vmatpush1.bf16.msra.mxu0 0
      %409 = vmatprep.subr.bf16.mxu0 0
      %410 = vmatpush1.bf16.msra.mxu0 0
      %411 = vmatprep.subr.bf16.mxu0 0
      %412 = vmatpush1.bf16.msra.mxu0 0
      %413 = vmatprep.subr.bf16.mxu0 0
      %414 = vmatpush1.bf16.msra.mxu0 0
      %415 = vmatprep.subr.bf16.mxu0 0
      %416 = vmatpush1.bf16.msra.mxu0 0
      %417 = vmatprep.mubr.bf16.mxu0 0
      %418 = vmatmul.mubr.bf16.gmra.mrb[0].mxu0 %v295
      %v419 = vpop.f32.mrb[0].mxu0
      %v420 = vadd.f32 0.0, %v419
      %v421 = vpop.f32.mrb[0].mxu0
      %v422 = vpop.f32.mrb[0].mxu0
      %v423 = vadd.f32 0.0, %v422
      %v424 = vpop.f32.mrb[0].mxu0
      %425 = vmatprep.mubr.bf16.mxu0 0
      %426 = vmatmul.mubr.bf16.gmra.mrb[0].mxu0 %v303
      %v427 = vpop.f32.mrb[0].mxu0
      %v428 = vadd.f32 0.0, %v427
      %v429 = vpop.f32.mrb[0].mxu0
      %v430 = vpop.f32.mrb[0].mxu0
      %v431 = vadd.f32 0.0, %v430
      %v432 = vpop.f32.mrb[0].mxu0
      %433 = vmatprep.mubr.bf16.mxu0 0
      %434 = vmatmul.mubr.bf16.gmra.mrb[0].mxu0 %v311
      %v435 = vpop.f32.mrb[0].mxu0
      %v436 = vadd.f32 0.0, %v435
      %v437 = vpop.f32.mrb[0].mxu0
      %v438 = vpop.f32.mrb[0].mxu0
      %v439 = vadd.f32 0.0, %v438
      %v440 = vpop.f32.mrb[0].mxu0
      %441 = vmatprep.mubr.bf16.mxu0 0
      %442 = vmatmul.mubr.bf16.gmra.mrb[0].mxu0 %v319
      %v443 = vpop.f32.mrb[0].mxu0
      %v444 = vadd.f32 0.0, %v443
      %v445 = vpop.f32.mrb[0].mxu0
      %v446 = vpop.f32.mrb[0].mxu0
      %v447 = vadd.f32 0.0, %v446
      %v448 = vpop.f32.mrb[0].mxu0
      %449 = vmatprep.mubr.bf16.mxu0 0
      %450 = vmatmul.mubr.bf16.gmra.mrb[0].mxu0 %v327
      %v451 = vpop.f32.mrb[0].mxu0
      %v452 = vadd.f32 0.0, %v451
      %v453 = vpop.f32.mrb[0].mxu0
      %v454 = vpop.f32.mrb[0].mxu0
      %v455 = vadd.f32 0.0, %v454
      %v456 = vpop.f32.mrb[0].mxu0
      %457 = vmatprep.mubr.bf16.mxu0 0
      %458 = vmatmul.mubr.bf16.gmra.mrb[0].mxu0 %v330
      %v459 = vpop.f32.mrb[0].mxu0
      %v460 = vadd.f32 0.0, %v459
      %v461 = vpop.f32.mrb[0].mxu0
      %v462 = vpop.f32.mrb[0].mxu0
      %v463 = vadd.f32 0.0, %v462
      %v464 = vpop.f32.mrb[0].mxu0
      %465 = vdwg.mxu0
      %v488 = vunpack.c.l.b16 %v220
      %v489 = vunpack.c.l.b16 %v221
      %v490 = vunpack.c.l.b16 %v222
      %v491 = vunpack.c.l.b16 %v223
      %v492 = vunpack.c.l.b16 %v224
      %v493 = vunpack.c.l.b16 %v225
      %v494 = vunpack.c.l.b16 %v226
      %v495 = vunpack.c.l.b16 %v227
      %v496 = vunpack.c.l.b16 %v228
      %v497 = vunpack.c.l.b16 %v229
      %v498 = vunpack.c.l.b16 %v230
      %v499 = vunpack.c.l.b16 %v231
      %v500 = vunpack.c.l.b16 %v232
      %v501 = vunpack.c.l.b16 %v233
      %v502 = vunpack.c.l.b16 %v234
      %v503 = vunpack.c.l.b16 %v235
      %v504 = vpack.c.b16 %v489, %v488
      %v505 = vpack.c.b16 %v491, %v490
      %v506 = vpack.c.b16 %v493, %v492
      %v507 = vpack.c.b16 %v495, %v494
      %v508 = vpack.c.b16 %v497, %v496
      %v509 = vpack.c.b16 %v499, %v498
      %v510 = vpack.c.b16 %v501, %v500
      %v511 = vpack.c.b16 %v503, %v502
      %520 = vmatprep.subr.bf16.mxu0 0
      %521 = vmatpush1.bf16.msra.mxu0 %v504
      %522 = vmatprep.subr.bf16.mxu0 0
      %523 = vmatpush1.bf16.msra.mxu0 %v505
      %524 = vmatprep.subr.bf16.mxu0 0
      %525 = vmatpush1.bf16.msra.mxu0 %v506
      %526 = vmatprep.subr.bf16.mxu0 0
      %527 = vmatpush1.bf16.msra.mxu0 %v507
      %528 = vmatprep.subr.bf16.mxu0 0
      %529 = vmatpush1.bf16.msra.mxu0 %v508
      %530 = vmatprep.subr.bf16.mxu0 0
      %531 = vmatpush1.bf16.msra.mxu0 %v509
      %532 = vmatprep.subr.bf16.mxu0 0
      %533 = vmatpush1.bf16.msra.mxu0 %v510
      %534 = vmatprep.subr.bf16.mxu0 0
      %535 = vmatpush1.bf16.msra.mxu0 %v511
      %536 = vmatprep.subr.bf16.mxu0 0
      %537 = vmatpush1.bf16.msra.mxu0 0
      %538 = vmatprep.subr.bf16.mxu0 0
      %539 = vmatpush1.bf16.msra.mxu0 0
      %540 = vmatprep.subr.bf16.mxu0 0
      %541 = vmatpush1.bf16.msra.mxu0 0
      %542 = vmatprep.subr.bf16.mxu0 0
      %543 = vmatpush1.bf16.msra.mxu0 0
      %544 = vmatprep.subr.bf16.mxu0 0
      %545 = vmatpush1.bf16.msra.mxu0 0
      %546 = vmatprep.subr.bf16.mxu0 0
      %547 = vmatpush1.bf16.msra.mxu0 0
      %548 = vmatprep.subr.bf16.mxu0 0
      %549 = vmatpush1.bf16.msra.mxu0 0
      %550 = vmatprep.subr.bf16.mxu0 0
      %551 = vmatpush1.bf16.msra.mxu0 0
      %552 = vmatprep.mubr.bf16.mxu0 0
      %553 = vmatmul.mubr.bf16.gmra.mrb[0].mxu0 %v277
      %v554 = vpop.f32.mrb[0].mxu0
      %v555 = vadd.f32 %v420, %v554
      %v556 = vpop.f32.mrb[0].mxu0
      %v557 = vpop.f32.mrb[0].mxu0
      %v558 = vadd.f32 %v423, %v557
      %v559 = vpop.f32.mrb[0].mxu0
      %560 = vmatprep.mubr.bf16.mxu0 0
      %561 = vmatmul.mubr.bf16.gmra.mrb[0].mxu0 %v278
      %v562 = vpop.f32.mrb[0].mxu0
      %v563 = vadd.f32 %v428, %v562
      %v564 = vpop.f32.mrb[0].mxu0
      %v565 = vpop.f32.mrb[0].mxu0
      %v566 = vadd.f32 %v431, %v565
      %v567 = vpop.f32.mrb[0].mxu0
      %568 = vmatprep.mubr.bf16.mxu0 0
      %569 = vmatmul.mubr.bf16.gmra.mrb[0].mxu0 %v279
      %v570 = vpop.f32.mrb[0].mxu0
      %v571 = vadd.f32 %v436, %v570
      %v572 = vpop.f32.mrb[0].mxu0
      %v573 = vpop.f32.mrb[0].mxu0
      %v574 = vadd.f32 %v439, %v573
      %v575 = vpop.f32.mrb[0].mxu0
      %576 = vmatprep.mubr.bf16.mxu0 0
      %577 = vmatmul.mubr.bf16.gmra.mrb[0].mxu0 %v280
      %v578 = vpop.f32.mrb[0].mxu0
      %v579 = vadd.f32 %v444, %v578
      %v580 = vpop.f32.mrb[0].mxu0
      %v581 = vpop.f32.mrb[0].mxu0
      %v582 = vadd.f32 %v447, %v581
      %v583 = vpop.f32.mrb[0].mxu0
      %584 = vmatprep.mubr.bf16.mxu0 0
      %585 = vmatmul.mubr.bf16.gmra.mrb[0].mxu0 %v281
      %v586 = vpop.f32.mrb[0].mxu0
      %v587 = vadd.f32 %v452, %v586
      %v588 = vpop.f32.mrb[0].mxu0
      %v589 = vpop.f32.mrb[0].mxu0
      %v590 = vadd.f32 %v455, %v589
      %v591 = vpop.f32.mrb[0].mxu0
      %592 = vmatprep.mubr.bf16.mxu0 0
      %593 = vmatmul.mubr.bf16.gmra.mrb[0].mxu0 %v282
      %v594 = vpop.f32.mrb[0].mxu0
      %v595 = vadd.f32 %v460, %v594
      %v596 = vpop.f32.mrb[0].mxu0
      %v597 = vpop.f32.mrb[0].mxu0
      %v598 = vadd.f32 %v463, %v597
      %v599 = vpop.f32.mrb[0].mxu0
      %600 = vdwg.mxu0
      %v601 = vld [vmem:[%s197] sm:$0xe]
      %v602 = vld [vmem:[%s197 + $0x2c] sm:$0x7]
      %s603 = scalar_lea.vmem %s1, 128
      %v604 = vld [vmem:[%s603] sm:$0xf]
      %v605 = vld [vmem:[%s603 + $0x4] sm:$0xf]
      %v606 = vld [vmem:[%s603 + $0x8] sm:$0xf]
      %v607 = vld [vmem:[%s603 + $0xc] sm:$0xf]
      %v608 = vld [vmem:[%s603 + $0x10] sm:$0xf]
      %v609 = vld [vmem:[%s603 + $0x14] sm:$0xf]
      %v610 = vld [vmem:[%s603 + $0x18] sm:$0xf]
      %v611 = vld [vmem:[%s603 + $0x1c] sm:$0xf]
      %v612 = vld [vmem:[%s603 + $0x20] sm:$0xf]
      %v613 = vld [vmem:[%s603 + $0x24] sm:$0xf]
      %v614 = vld [vmem:[%s603 + $0x28] sm:$0xf]
      %v615 = vld [vmem:[%s603 + $0x2c] sm:$0xf]
      %v616 = vld [vmem:[%s603 + $0x30] sm:$0xf]
      %v617 = vld [vmem:[%s603 + $0x34] sm:$0xf]
      %v618 = vld [vmem:[%s603 + $0x38] sm:$0xf]
      %v619 = vld [vmem:[%s603 + $0x3c] sm:$0xf]
      %v622 = vunpack.c.l.b16 %v601
      %v623 = vunpack.c.l.b16 %v602
      %v624 = vpack.c.b16 %v266, %v622
      %v625 = vpack.c.b16 %v623, %v275
      %vm626 = vcmask 1046528
      %v627 = vrot.slane %v624, 1
      %v628 = vrot.slane %v278, 1
      %v629 = vsel %vm626, %v627, %v628
      %v630 = vrot.slane %v279, 1
      %v631 = vsel %vm626, %v628, %v630
      %v632 = vrot.slane %v280, 1
      %v633 = vsel %vm626, %v630, %v632
      %v634 = vrot.slane %v281, 1
      %v635 = vsel %vm626, %v632, %v634
      %v636 = vrot.slane %v625, 1
      %v637 = vsel %vm626, %v634, %v636
      %v660 = vunpack.c.l.b16 %v604
      %v661 = vunpack.c.l.b16 %v605
      %v662 = vunpack.c.l.b16 %v606
      %v663 = vunpack.c.l.b16 %v607
      %v664 = vunpack.c.l.b16 %v608
      %v665 = vunpack.c.l.b16 %v609
      %v666 = vunpack.c.l.b16 %v610
      %v667 = vunpack.c.l.b16 %v611
      %v668 = vunpack.c.l.b16 %v612
      %v669 = vunpack.c.l.b16 %v613
      %v670 = vunpack.c.l.b16 %v614
      %v671 = vunpack.c.l.b16 %v615
      %v672 = vunpack.c.l.b16 %v616
      %v673 = vunpack.c.l.b16 %v617
      %v674 = vunpack.c.l.b16 %v618
      %v675 = vunpack.c.l.b16 %v619
      %v676 = vpack.c.b16 %v661, %v660
      %v677 = vpack.c.b16 %v663, %v662
      %v678 = vpack.c.b16 %v665, %v664
      %v679 = vpack.c.b16 %v667, %v666
      %v680 = vpack.c.b16 %v669, %v668
      %v681 = vpack.c.b16 %v671, %v670
      %v682 = vpack.c.b16 %v673, %v672
      %v683 = vpack.c.b16 %v675, %v674
      %692 = vmatprep.subr.bf16.mxu0 0
      %693 = vmatpush1.bf16.msra.mxu0 %v676
      %694 = vmatprep.subr.bf16.mxu0 0
      %695 = vmatpush1.bf16.msra.mxu0 %v677
      %696 = vmatprep.subr.bf16.mxu0 0
      %697 = vmatpush1.bf16.msra.mxu0 %v678
      %698 = vmatprep.subr.bf16.mxu0 0
      %699 = vmatpush1.bf16.msra.mxu0 %v679
      %700 = vmatprep.subr.bf16.mxu0 0
      %701 = vmatpush1.bf16.msra.mxu0 %v680
      %702 = vmatprep.subr.bf16.mxu0 0
      %703 = vmatpush1.bf16.msra.mxu0 %v681
      %704 = vmatprep.subr.bf16.mxu0 0
      %705 = vmatpush1.bf16.msra.mxu0 %v682
      %706 = vmatprep.subr.bf16.mxu0 0
      %707 = vmatpush1.bf16.msra.mxu0 %v683
      %708 = vmatprep.subr.bf16.mxu0 0
      %709 = vmatpush1.bf16.msra.mxu0 0
      %710 = vmatprep.subr.bf16.mxu0 0
      %711 = vmatpush1.bf16.msra.mxu0 0
      %712 = vmatprep.subr.bf16.mxu0 0
      %713 = vmatpush1.bf16.msra.mxu0 0
      %714 = vmatprep.subr.bf16.mxu0 0
      %715 = vmatpush1.bf16.msra.mxu0 0
      %716 = vmatprep.subr.bf16.mxu0 0
      %717 = vmatpush1.bf16.msra.mxu0 0
      %718 = vmatprep.subr.bf16.mxu0 0
      %719 = vmatpush1.bf16.msra.mxu0 0
      %720 = vmatprep.subr.bf16.mxu0 0
      %721 = vmatpush1.bf16.msra.mxu0 0
      %722 = vmatprep.subr.bf16.mxu0 0
      %723 = vmatpush1.bf16.msra.mxu0 0
      %724 = vmatprep.mubr.bf16.mxu0 0
      %725 = vmatmul.mubr.bf16.gmra.mrb[0].mxu0 %v629
      %v726 = vpop.f32.mrb[0].mxu0
      %v727 = vadd.f32 0.0, %v726
      %v728 = vpop.f32.mrb[0].mxu0
      %v729 = vpop.f32.mrb[0].mxu0
      %v730 = vadd.f32 0.0, %v729
      %v731 = vpop.f32.mrb[0].mxu0
      %732 = vmatprep.mubr.bf16.mxu0 0
      %733 = vmatmul.mubr.bf16.gmra.mrb[0].mxu0 %v631
      %v734 = vpop.f32.mrb[0].mxu0
      %v735 = vadd.f32 0.0, %v734
      %v736 = vpop.f32.mrb[0].mxu0
      %v737 = vpop.f32.mrb[0].mxu0
      %v738 = vadd.f32 0.0, %v737
      %v739 = vpop.f32.mrb[0].mxu0
      %740 = vmatprep.mubr.bf16.mxu0 0
      %741 = vmatmul.mubr.bf16.gmra.mrb[0].mxu0 %v633
      %v742 = vpop.f32.mrb[0].mxu0
      %v743 = vadd.f32 0.0, %v742
      %v744 = vpop.f32.mrb[0].mxu0
      %v745 = vpop.f32.mrb[0].mxu0
      %v746 = vadd.f32 0.0, %v745
      %v747 = vpop.f32.mrb[0].mxu0
      %748 = vmatprep.mubr.bf16.mxu0 0
      %749 = vmatmul.mubr.bf16.gmra.mrb[0].mxu0 %v635
      %v750 = vpop.f32.mrb[0].mxu0
      %v751 = vadd.f32 0.0, %v750
      %v752 = vpop.f32.mrb[0].mxu0
      %v753 = vpop.f32.mrb[0].mxu0
      %v754 = vadd.f32 0.0, %v753
      %v755 = vpop.f32.mrb[0].mxu0
      %756 = vmatprep.mubr.bf16.mxu0 0
      %757 = vmatmul.mubr.bf16.gmra.mrb[0].mxu0 %v637
      %v758 = vpop.f32.mrb[0].mxu0
      %v759 = vadd.f32 0.0, %v758
      %v760 = vpop.f32.mrb[0].mxu0
      %v761 = vpop.f32.mrb[0].mxu0
      %v762 = vadd.f32 0.0, %v761
      %v763 = vpop.f32.mrb[0].mxu0
      %764 = vmatprep.mubr.bf16.mxu0 0
      %765 = vmatmul.mubr.bf16.gmra.mrb[0].mxu0 %v636
      %v766 = vpop.f32.mrb[0].mxu0
      %v767 = vadd.f32 0.0, %v766
      %v768 = vpop.f32.mrb[0].mxu0
      %v769 = vpop.f32.mrb[0].mxu0
      %v770 = vadd.f32 0.0, %v769
      %v771 = vpop.f32.mrb[0].mxu0
      %772 = vdwg.mxu0
      %v773 = vadd.f32 %v555, %v727
      %v774 = vadd.f32 %v558, %v730
      %v775 = vadd.f32 %v563, %v735
      %v776 = vadd.f32 %v566, %v738
      %v777 = vadd.f32 %v571, %v743
      %v778 = vadd.f32 %v574, %v746
      %v779 = vadd.f32 %v579, %v751
      %v780 = vadd.f32 %v582, %v754
      %v781 = vadd.f32 %v587, %v759
      %v782 = vadd.f32 %v590, %v762
      %v783 = vadd.f32 %v595, %v767
      %v784 = vadd.f32 %v598, %v770
      %v785 = vld [vmem:[%s197 + $0x4] sm:$0xe]
      %v786 = vld [vmem:[%s197 + $0x8] sm:$0xf]
      %v787 = vld [vmem:[%s197 + $0xc] sm:$0xf]
      %v788 = vld [vmem:[%s197 + $0x10] sm:$0xf]
      %v789 = vld [vmem:[%s197 + $0x14] sm:$0xf]
      %v790 = vld [vmem:[%s197 + $0x18] sm:$0xf]
      %v791 = vld [vmem:[%s197 + $0x1c] sm:$0xf]
      %v792 = vld [vmem:[%s197 + $0x20] sm:$0xf]
      %v793 = vld [vmem:[%s197 + $0x24] sm:$0xf]
      %v794 = vld [vmem:[%s197 + $0x28] sm:$0xf]
      %v795 = vld [vmem:[%s197 + $0x2c] sm:$0xf]
      %v796 = vld [vmem:[%s197 + $0x30] sm:$0x7]
      %s797 = scalar_lea.vmem %s1, 192
      %v798 = vld [vmem:[%s797] sm:$0xf]
      %v799 = vld [vmem:[%s797 + $0x4] sm:$0xf]
      %v800 = vld [vmem:[%s797 + $0x8] sm:$0xf]
      %v801 = vld [vmem:[%s797 + $0xc] sm:$0xf]
      %v802 = vld [vmem:[%s797 + $0x10] sm:$0xf]
      %v803 = vld [vmem:[%s797 + $0x14] sm:$0xf]
      %v804 = vld [vmem:[%s797 + $0x18] sm:$0xf]
      %v805 = vld [vmem:[%s797 + $0x1c] sm:$0xf]
      %v806 = vld [vmem:[%s797 + $0x20] sm:$0xf]
      %v807 = vld [vmem:[%s797 + $0x24] sm:$0xf]
      %v808 = vld [vmem:[%s797 + $0x28] sm:$0xf]
      %v809 = vld [vmem:[%s797 + $0x2c] sm:$0xf]
      %v810 = vld [vmem:[%s797 + $0x30] sm:$0xf]
      %v811 = vld [vmem:[%s797 + $0x34] sm:$0xf]
      %v812 = vld [vmem:[%s797 + $0x38] sm:$0xf]
      %v813 = vld [vmem:[%s797 + $0x3c] sm:$0xf]
      %v826 = vunpack.c.l.b16 %v785
      %v827 = vunpack.c.l.b16 %v786
      %v828 = vunpack.c.l.b16 %v787
      %v829 = vunpack.c.l.b16 %v788
      %v830 = vunpack.c.l.b16 %v789
      %v831 = vunpack.c.l.b16 %v790
      %v832 = vunpack.c.l.b16 %v791
      %v833 = vunpack.c.l.b16 %v792
      %v834 = vunpack.c.l.b16 %v793
      %v835 = vunpack.c.l.b16 %v794
      %v836 = vunpack.c.l.b16 %v795
      %v837 = vunpack.c.l.b16 %v796
      %v838 = vpack.c.b16 %v827, %v826
      %v839 = vpack.c.b16 %v829, %v828
      %v840 = vpack.c.b16 %v831, %v830
      %v841 = vpack.c.b16 %v833, %v832
      %v842 = vpack.c.b16 %v835, %v834
      %v843 = vpack.c.b16 %v837, %v836
      %v844 = vrot.slane %v838, 1
      %v845 = vrot.slane %v839, 1
      %v846 = vsel %vm626, %v844, %v845
      %v847 = vrot.slane %v840, 1
      %v848 = vsel %vm626, %v845, %v847
      %v849 = vrot.slane %v841, 1
      %v850 = vsel %vm626, %v847, %v849
      %v851 = vrot.slane %v842, 1
      %v852 = vsel %vm626, %v849, %v851
      %v853 = vrot.slane %v843, 1
      %v854 = vsel %vm626, %v851, %v853
      %v877 = vunpack.c.l.b16 %v798
      %v878 = vunpack.c.l.b16 %v799
      %v879 = vunpack.c.l.b16 %v800
      %v880 = vunpack.c.l.b16 %v801
      %v881 = vunpack.c.l.b16 %v802
      %v882 = vunpack.c.l.b16 %v803
      %v883 = vunpack.c.l.b16 %v804
      %v884 = vunpack.c.l.b16 %v805
      %v885 = vunpack.c.l.b16 %v806
      %v886 = vunpack.c.l.b16 %v807
      %v887 = vunpack.c.l.b16 %v808
      %v888 = vunpack.c.l.b16 %v809
      %v889 = vunpack.c.l.b16 %v810
      %v890 = vunpack.c.l.b16 %v811
      %v891 = vunpack.c.l.b16 %v812
      %v892 = vunpack.c.l.b16 %v813
      %v893 = vpack.c.b16 %v878, %v877
      %v894 = vpack.c.b16 %v880, %v879
      %v895 = vpack.c.b16 %v882, %v881
      %v896 = vpack.c.b16 %v884, %v883
      %v897 = vpack.c.b16 %v886, %v885
      %v898 = vpack.c.b16 %v888, %v887
      %v899 = vpack.c.b16 %v890, %v889
      %v900 = vpack.c.b16 %v892, %v891
      %909 = vmatprep.subr.bf16.mxu0 0
      %910 = vmatpush1.bf16.msra.mxu0 %v893
      %911 = vmatprep.subr.bf16.mxu0 0
      %912 = vmatpush1.bf16.msra.mxu0 %v894
      %913 = vmatprep.subr.bf16.mxu0 0
      %914 = vmatpush1.bf16.msra.mxu0 %v895
      %915 = vmatprep.subr.bf16.mxu0 0
      %916 = vmatpush1.bf16.msra.mxu0 %v896
      %917 = vmatprep.subr.bf16.mxu0 0
      %918 = vmatpush1.bf16.msra.mxu0 %v897
      %919 = vmatprep.subr.bf16.mxu0 0
      %920 = vmatpush1.bf16.msra.mxu0 %v898
      %921 = vmatprep.subr.bf16.mxu0 0
      %922 = vmatpush1.bf16.msra.mxu0 %v899
      %923 = vmatprep.subr.bf16.mxu0 0
      %924 = vmatpush1.bf16.msra.mxu0 %v900
      %925 = vmatprep.subr.bf16.mxu0 0
      %926 = vmatpush1.bf16.msra.mxu0 0
      %927 = vmatprep.subr.bf16.mxu0 0
      %928 = vmatpush1.bf16.msra.mxu0 0
      %929 = vmatprep.subr.bf16.mxu0 0
      %930 = vmatpush1.bf16.msra.mxu0 0
      %931 = vmatprep.subr.bf16.mxu0 0
      %932 = vmatpush1.bf16.msra.mxu0 0
      %933 = vmatprep.subr.bf16.mxu0 0
      %934 = vmatpush1.bf16.msra.mxu0 0
      %935 = vmatprep.subr.bf16.mxu0 0
      %936 = vmatpush1.bf16.msra.mxu0 0
      %937 = vmatprep.subr.bf16.mxu0 0
      %938 = vmatpush1.bf16.msra.mxu0 0
      %939 = vmatprep.subr.bf16.mxu0 0
      %940 = vmatpush1.bf16.msra.mxu0 0
      %941 = vmatprep.mubr.bf16.mxu0 0
      %942 = vmatmul.mubr.bf16.gmra.mrb[0].mxu0 %v846
      %v943 = vpop.f32.mrb[0].mxu0
      %v944 = vadd.f32 0.0, %v943
      %v945 = vpop.f32.mrb[0].mxu0
      %v946 = vpop.f32.mrb[0].mxu0
      %v947 = vadd.f32 0.0, %v946
      %v948 = vpop.f32.mrb[0].mxu0
      %949 = vmatprep.mubr.bf16.mxu0 0
      %950 = vmatmul.mubr.bf16.gmra.mrb[0].mxu0 %v848
      %v951 = vpop.f32.mrb[0].mxu0
      %v952 = vadd.f32 0.0, %v951
      %v953 = vpop.f32.mrb[0].mxu0
      %v954 = vpop.f32.mrb[0].mxu0
      %v955 = vadd.f32 0.0, %v954
      %v956 = vpop.f32.mrb[0].mxu0
      %957 = vmatprep.mubr.bf16.mxu0 0
      %958 = vmatmul.mubr.bf16.gmra.mrb[0].mxu0 %v850
      %v959 = vpop.f32.mrb[0].mxu0
      %v960 = vadd.f32 0.0, %v959
      %v961 = vpop.f32.mrb[0].mxu0
      %v962 = vpop.f32.mrb[0].mxu0
      %v963 = vadd.f32 0.0, %v962
      %v964 = vpop.f32.mrb[0].mxu0
      %965 = vmatprep.mubr.bf16.mxu0 0
      %966 = vmatmul.mubr.bf16.gmra.mrb[0].mxu0 %v852
      %v967 = vpop.f32.mrb[0].mxu0
      %v968 = vadd.f32 0.0, %v967
      %v969 = vpop.f32.mrb[0].mxu0
      %v970 = vpop.f32.mrb[0].mxu0
      %v971 = vadd.f32 0.0, %v970
      %v972 = vpop.f32.mrb[0].mxu0
      %973 = vmatprep.mubr.bf16.mxu0 0
      %974 = vmatmul.mubr.bf16.gmra.mrb[0].mxu0 %v854
      %v975 = vpop.f32.mrb[0].mxu0
      %v976 = vadd.f32 0.0, %v975
      %v977 = vpop.f32.mrb[0].mxu0
      %v978 = vpop.f32.mrb[0].mxu0
      %v979 = vadd.f32 0.0, %v978
      %v980 = vpop.f32.mrb[0].mxu0
      %981 = vmatprep.mubr.bf16.mxu0 0
      %982 = vmatmul.mubr.bf16.gmra.mrb[0].mxu0 %v853
      %v983 = vpop.f32.mrb[0].mxu0
      %v984 = vadd.f32 0.0, %v983
      %v985 = vpop.f32.mrb[0].mxu0
      %v986 = vpop.f32.mrb[0].mxu0
      %v987 = vadd.f32 0.0, %v986
      %v988 = vpop.f32.mrb[0].mxu0
      %989 = vdwg.mxu0
      %v990 = vadd.f32 %v773, %v944
      %v991 = vadd.f32 %v774, %v947
      %v992 = vadd.f32 %v775, %v952
      %v993 = vadd.f32 %v776, %v955
      %v994 = vadd.f32 %v777, %v960
      %v995 = vadd.f32 %v778, %v963
      %v996 = vadd.f32 %v779, %v968
      %v997 = vadd.f32 %v780, %v971
      %v998 = vadd.f32 %v781, %v976
      %v999 = vadd.f32 %v782, %v979
      %v1000 = vadd.f32 %v783, %v984
      %v1001 = vadd.f32 %v784, %v987
      %s1002 = scalar_lea.vmem %s1, 256
      %v1003 = vld [vmem:[%s1002] sm:$0xf]
      %v1004 = vld [vmem:[%s1002 + $0x4] sm:$0xf]
      %v1005 = vld [vmem:[%s1002 + $0x8] sm:$0xf]
      %v1006 = vld [vmem:[%s1002 + $0xc] sm:$0xf]
      %v1007 = vld [vmem:[%s1002 + $0x10] sm:$0xf]
      %v1008 = vld [vmem:[%s1002 + $0x14] sm:$0xf]
      %v1009 = vld [vmem:[%s1002 + $0x18] sm:$0xf]
      %v1010 = vld [vmem:[%s1002 + $0x1c] sm:$0xf]
      %v1011 = vld [vmem:[%s1002 + $0x20] sm:$0xf]
      %v1012 = vld [vmem:[%s1002 + $0x24] sm:$0xf]
      %v1013 = vld [vmem:[%s1002 + $0x28] sm:$0xf]
      %v1014 = vld [vmem:[%s1002 + $0x2c] sm:$0xf]
      %v1015 = vld [vmem:[%s1002 + $0x30] sm:$0xf]
      %v1016 = vld [vmem:[%s1002 + $0x34] sm:$0xf]
      %v1017 = vld [vmem:[%s1002 + $0x38] sm:$0xf]
      %v1018 = vld [vmem:[%s1002 + $0x3c] sm:$0xf]
      %vm1019 = vsmask.f32 6400
      %v1021 = vshrl.u32 %v838, 16
      %v1023 = vrot.slane %v1021, 1
      %v1024 = vshll.u32 %v838, 16
      %v1026 = vrot.slane %v1024, 2
      %v1027 = vor.u32 %v1023, %v1026
      %v1029 = vshrl.u32 %v839, 16
      %v1031 = vrot.slane %v1029, 1
      %v1032 = vshll.u32 %v839, 16
      %v1034 = vrot.slane %v1032, 2
      %v1035 = vor.u32 %v1031, %v1034
      %v1036 = vsel %vm1019, %v1027, %v1035
      %v1038 = vshrl.u32 %v840, 16
      %v1040 = vrot.slane %v1038, 1
      %v1041 = vshll.u32 %v840, 16
      %v1043 = vrot.slane %v1041, 2
      %v1044 = vor.u32 %v1040, %v1043
      %v1045 = vsel %vm1019, %v1035, %v1044
      %v1047 = vshrl.u32 %v841, 16
      %v1049 = vrot.slane %v1047, 1
      %v1050 = vshll.u32 %v841, 16
      %v1052 = vrot.slane %v1050, 2
      %v1053 = vor.u32 %v1049, %v1052
      %v1054 = vsel %vm1019, %v1044, %v1053
      %v1056 = vshrl.u32 %v842, 16
      %v1058 = vrot.slane %v1056, 1
      %v1059 = vshll.u32 %v842, 16
      %v1061 = vrot.slane %v1059, 2
      %v1062 = vor.u32 %v1058, %v1061
      %v1063 = vsel %vm1019, %v1053, %v1062
      %v1065 = vshrl.u32 %v843, 16
      %v1067 = vrot.slane %v1065, 1
      %v1068 = vshll.u32 %v843, 16
      %v1070 = vrot.slane %v1068, 2
      %v1071 = vor.u32 %v1067, %v1070
      %v1072 = vsel %vm1019, %v1062, %v1071
      %v1095 = vunpack.c.l.b16 %v1003
      %v1096 = vunpack.c.l.b16 %v1004
      %v1097 = vunpack.c.l.b16 %v1005
      %v1098 = vunpack.c.l.b16 %v1006
      %v1099 = vunpack.c.l.b16 %v1007
      %v1100 = vunpack.c.l.b16 %v1008
      %v1101 = vunpack.c.l.b16 %v1009
      %v1102 = vunpack.c.l.b16 %v1010
      %v1103 = vunpack.c.l.b16 %v1011
      %v1104 = vunpack.c.l.b16 %v1012
      %v1105 = vunpack.c.l.b16 %v1013
      %v1106 = vunpack.c.l.b16 %v1014
      %v1107 = vunpack.c.l.b16 %v1015
      %v1108 = vunpack.c.l.b16 %v1016
      %v1109 = vunpack.c.l.b16 %v1017
      %v1110 = vunpack.c.l.b16 %v1018
      %v1111 = vpack.c.b16 %v1096, %v1095
      %v1112 = vpack.c.b16 %v1098, %v1097
      %v1113 = vpack.c.b16 %v1100, %v1099
      %v1114 = vpack.c.b16 %v1102, %v1101
      %v1115 = vpack.c.b16 %v1104, %v1103
      %v1116 = vpack.c.b16 %v1106, %v1105
      %v1117 = vpack.c.b16 %v1108, %v1107
      %v1118 = vpack.c.b16 %v1110, %v1109
      %1127 = vmatprep.subr.bf16.mxu0 0
      %1128 = vmatpush1.bf16.msra.mxu0 %v1111
      %1129 = vmatprep.subr.bf16.mxu0 0
      %1130 = vmatpush1.bf16.msra.mxu0 %v1112
      %1131 = vmatprep.subr.bf16.mxu0 0
      %1132 = vmatpush1.bf16.msra.mxu0 %v1113
      %1133 = vmatprep.subr.bf16.mxu0 0
      %1134 = vmatpush1.bf16.msra.mxu0 %v1114
      %1135 = vmatprep.subr.bf16.mxu0 0
      %1136 = vmatpush1.bf16.msra.mxu0 %v1115
      %1137 = vmatprep.subr.bf16.mxu0 0
      %1138 = vmatpush1.bf16.msra.mxu0 %v1116
      %1139 = vmatprep.subr.bf16.mxu0 0
      %1140 = vmatpush1.bf16.msra.mxu0 %v1117
      %1141 = vmatprep.subr.bf16.mxu0 0
      %1142 = vmatpush1.bf16.msra.mxu0 %v1118
      %1143 = vmatprep.subr.bf16.mxu0 0
      %1144 = vmatpush1.bf16.msra.mxu0 0
      %1145 = vmatprep.subr.bf16.mxu0 0
      %1146 = vmatpush1.bf16.msra.mxu0 0
      %1147 = vmatprep.subr.bf16.mxu0 0
      %1148 = vmatpush1.bf16.msra.mxu0 0
      %1149 = vmatprep.subr.bf16.mxu0 0
      %1150 = vmatpush1.bf16.msra.mxu0 0
      %1151 = vmatprep.subr.bf16.mxu0 0
      %1152 = vmatpush1.bf16.msra.mxu0 0
      %1153 = vmatprep.subr.bf16.mxu0 0
      %1154 = vmatpush1.bf16.msra.mxu0 0
      %1155 = vmatprep.subr.bf16.mxu0 0
      %1156 = vmatpush1.bf16.msra.mxu0 0
      %1157 = vmatprep.subr.bf16.mxu0 0
      %1158 = vmatpush1.bf16.msra.mxu0 0
      %1159 = vmatprep.mubr.bf16.mxu0 0
      %1160 = vmatmul.mubr.bf16.gmra.mrb[0].mxu0 %v1036
      %v1161 = vpop.f32.mrb[0].mxu0
      %v1162 = vadd.f32 0.0, %v1161
      %v1163 = vpop.f32.mrb[0].mxu0
      %v1164 = vpop.f32.mrb[0].mxu0
      %v1165 = vadd.f32 0.0, %v1164
      %v1166 = vpop.f32.mrb[0].mxu0
      %1167 = vmatprep.mubr.bf16.mxu0 0
      %1168 = vmatmul.mubr.bf16.gmra.mrb[0].mxu0 %v1045
      %v1169 = vpop.f32.mrb[0].mxu0
      %v1170 = vadd.f32 0.0, %v1169
      %v1171 = vpop.f32.mrb[0].mxu0
      %v1172 = vpop.f32.mrb[0].mxu0
      %v1173 = vadd.f32 0.0, %v1172
      %v1174 = vpop.f32.mrb[0].mxu0
      %1175 = vmatprep.mubr.bf16.mxu0 0
      %1176 = vmatmul.mubr.bf16.gmra.mrb[0].mxu0 %v1054
      %v1177 = vpop.f32.mrb[0].mxu0
      %v1178 = vadd.f32 0.0, %v1177
      %v1179 = vpop.f32.mrb[0].mxu0
      %v1180 = vpop.f32.mrb[0].mxu0
      %v1181 = vadd.f32 0.0, %v1180
      %v1182 = vpop.f32.mrb[0].mxu0
      %1183 = vmatprep.mubr.bf16.mxu0 0
      %1184 = vmatmul.mubr.bf16.gmra.mrb[0].mxu0 %v1063
      %v1185 = vpop.f32.mrb[0].mxu0
      %v1186 = vadd.f32 0.0, %v1185
      %v1187 = vpop.f32.mrb[0].mxu0
      %v1188 = vpop.f32.mrb[0].mxu0
      %v1189 = vadd.f32 0.0, %v1188
      %v1190 = vpop.f32.mrb[0].mxu0
      %1191 = vmatprep.mubr.bf16.mxu0 0
      %1192 = vmatmul.mubr.bf16.gmra.mrb[0].mxu0 %v1072
      %v1193 = vpop.f32.mrb[0].mxu0
      %v1194 = vadd.f32 0.0, %v1193
      %v1195 = vpop.f32.mrb[0].mxu0
      %v1196 = vpop.f32.mrb[0].mxu0
      %v1197 = vadd.f32 0.0, %v1196
      %v1198 = vpop.f32.mrb[0].mxu0
      %1199 = vmatprep.mubr.bf16.mxu0 0
      %1200 = vmatmul.mubr.bf16.gmra.mrb[0].mxu0 %v1071
      %v1201 = vpop.f32.mrb[0].mxu0
      %v1202 = vadd.f32 0.0, %v1201
      %v1203 = vpop.f32.mrb[0].mxu0
      %v1204 = vpop.f32.mrb[0].mxu0
      %v1205 = vadd.f32 0.0, %v1204
      %v1206 = vpop.f32.mrb[0].mxu0
      %1207 = vdwg.mxu0
      %v1208 = vadd.f32 %v990, %v1162
      %v1209 = vadd.f32 %v991, %v1165
      %v1210 = vadd.f32 %v992, %v1170
      %v1211 = vadd.f32 %v993, %v1173
      %v1212 = vadd.f32 %v994, %v1178
      %v1213 = vadd.f32 %v995, %v1181
      %v1214 = vadd.f32 %v996, %v1186
      %v1215 = vadd.f32 %v997, %v1189
      %v1216 = vadd.f32 %v998, %v1194
      %v1217 = vadd.f32 %v999, %v1197
      %v1218 = vadd.f32 %v1000, %v1202
      %v1219 = vadd.f32 %v1001, %v1205
      %v1220 = vld [vmem:[%s197 + $0x4] sm:$0xc]
      %v1221 = vld [vmem:[%s197 + $0x30] sm:$0xf]
      %s1222 = scalar_lea.vmem %s1, 320
      %v1223 = vld [vmem:[%s1222] sm:$0xf]
      %v1224 = vld [vmem:[%s1222 + $0x4] sm:$0xf]
      %v1225 = vld [vmem:[%s1222 + $0x8] sm:$0xf]
      %v1226 = vld [vmem:[%s1222 + $0xc] sm:$0xf]
      %v1227 = vld [vmem:[%s1222 + $0x10] sm:$0xf]
      %v1228 = vld [vmem:[%s1222 + $0x14] sm:$0xf]
      %v1229 = vld [vmem:[%s1222 + $0x18] sm:$0xf]
      %v1230 = vld [vmem:[%s1222 + $0x1c] sm:$0xf]
      %v1231 = vld [vmem:[%s1222 + $0x20] sm:$0xf]
      %v1232 = vld [vmem:[%s1222 + $0x24] sm:$0xf]
      %v1233 = vld [vmem:[%s1222 + $0x28] sm:$0xf]
      %v1234 = vld [vmem:[%s1222 + $0x2c] sm:$0xf]
      %v1235 = vld [vmem:[%s1222 + $0x30] sm:$0xf]
      %v1236 = vld [vmem:[%s1222 + $0x34] sm:$0xf]
      %v1237 = vld [vmem:[%s1222 + $0x38] sm:$0xf]
      %v1238 = vld [vmem:[%s1222 + $0x3c] sm:$0xf]
      %v1241 = vunpack.c.l.b16 %v1220
      %v1242 = vunpack.c.l.b16 %v1221
      %v1243 = vpack.c.b16 %v827, %v1241
      %v1244 = vpack.c.b16 %v1242, %v836
      %vm1245 = vcmask 1045504
      %v1246 = vrot.slane %v1243, 2
      %v1247 = vrot.slane %v839, 2
      %v1248 = vsel %vm1245, %v1246, %v1247
      %v1249 = vrot.slane %v840, 2
      %v1250 = vsel %vm1245, %v1247, %v1249
      %v1251 = vrot.slane %v841, 2
      %v1252 = vsel %vm1245, %v1249, %v1251
      %v1253 = vrot.slane %v842, 2
      %v1254 = vsel %vm1245, %v1251, %v1253
      %v1255 = vrot.slane %v1244, 2
      %v1256 = vsel %vm1245, %v1253, %v1255
      %v1279 = vunpack.c.l.b16 %v1223
      %v1280 = vunpack.c.l.b16 %v1224
      %v1281 = vunpack.c.l.b16 %v1225
      %v1282 = vunpack.c.l.b16 %v1226
      %v1283 = vunpack.c.l.b16 %v1227
      %v1284 = vunpack.c.l.b16 %v1228
      %v1285 = vunpack.c.l.b16 %v1229
      %v1286 = vunpack.c.l.b16 %v1230
      %v1287 = vunpack.c.l.b16 %v1231
      %v1288 = vunpack.c.l.b16 %v1232
      %v1289 = vunpack.c.l.b16 %v1233
      %v1290 = vunpack.c.l.b16 %v1234
      %v1291 = vunpack.c.l.b16 %v1235
      %v1292 = vunpack.c.l.b16 %v1236
      %v1293 = vunpack.c.l.b16 %v1237
      %v1294 = vunpack.c.l.b16 %v1238
      %v1295 = vpack.c.b16 %v1280, %v1279
      %v1296 = vpack.c.b16 %v1282, %v1281
      %v1297 = vpack.c.b16 %v1284, %v1283
      %v1298 = vpack.c.b16 %v1286, %v1285
      %v1299 = vpack.c.b16 %v1288, %v1287
      %v1300 = vpack.c.b16 %v1290, %v1289
      %v1301 = vpack.c.b16 %v1292, %v1291
      %v1302 = vpack.c.b16 %v1294, %v1293
      %1311 = vmatprep.subr.bf16.mxu0 0
      %1312 = vmatpush1.bf16.msra.mxu0 %v1295
      %1313 = vmatprep.subr.bf16.mxu0 0
      %1314 = vmatpush1.bf16.msra.mxu0 %v1296
      %1315 = vmatprep.subr.bf16.mxu0 0
      %1316 = vmatpush1.bf16.msra.mxu0 %v1297
      %1317 = vmatprep.subr.bf16.mxu0 0
      %1318 = vmatpush1.bf16.msra.mxu0 %v1298
      %1319 = vmatprep.subr.bf16.mxu0 0
      %1320 = vmatpush1.bf16.msra.mxu0 %v1299
      %1321 = vmatprep.subr.bf16.mxu0 0
      %1322 = vmatpush1.bf16.msra.mxu0 %v1300
      %1323 = vmatprep.subr.bf16.mxu0 0
      %1324 = vmatpush1.bf16.msra.mxu0 %v1301
      %1325 = vmatprep.subr.bf16.mxu0 0
      %1326 = vmatpush1.bf16.msra.mxu0 %v1302
      %1327 = vmatprep.subr.bf16.mxu0 0
      %1328 = vmatpush1.bf16.msra.mxu0 0
      %1329 = vmatprep.subr.bf16.mxu0 0
      %1330 = vmatpush1.bf16.msra.mxu0 0
      %1331 = vmatprep.subr.bf16.mxu0 0
      %1332 = vmatpush1.bf16.msra.mxu0 0
      %1333 = vmatprep.subr.bf16.mxu0 0
      %1334 = vmatpush1.bf16.msra.mxu0 0
      %1335 = vmatprep.subr.bf16.mxu0 0
      %1336 = vmatpush1.bf16.msra.mxu0 0
      %1337 = vmatprep.subr.bf16.mxu0 0
      %1338 = vmatpush1.bf16.msra.mxu0 0
      %1339 = vmatprep.subr.bf16.mxu0 0
      %1340 = vmatpush1.bf16.msra.mxu0 0
      %1341 = vmatprep.subr.bf16.mxu0 0
      %1342 = vmatpush1.bf16.msra.mxu0 0
      %1343 = vmatprep.mubr.bf16.mxu0 0
      %1344 = vmatmul.mubr.bf16.gmra.mrb[0].mxu0 %v1248
      %v1345 = vpop.f32.mrb[0].mxu0
      %v1346 = vadd.f32 0.0, %v1345
      %v1347 = vpop.f32.mrb[0].mxu0
      %v1348 = vpop.f32.mrb[0].mxu0
      %v1349 = vadd.f32 0.0, %v1348
      %v1350 = vpop.f32.mrb[0].mxu0
      %1351 = vmatprep.mubr.bf16.mxu0 0
      %1352 = vmatmul.mubr.bf16.gmra.mrb[0].mxu0 %v1250
      %v1353 = vpop.f32.mrb[0].mxu0
      %v1354 = vadd.f32 0.0, %v1353
      %v1355 = vpop.f32.mrb[0].mxu0
      %v1356 = vpop.f32.mrb[0].mxu0
      %v1357 = vadd.f32 0.0, %v1356
      %v1358 = vpop.f32.mrb[0].mxu0
      %1359 = vmatprep.mubr.bf16.mxu0 0
      %1360 = vmatmul.mubr.bf16.gmra.mrb[0].mxu0 %v1252
      %v1361 = vpop.f32.mrb[0].mxu0
      %v1362 = vadd.f32 0.0, %v1361
      %v1363 = vpop.f32.mrb[0].mxu0
      %v1364 = vpop.f32.mrb[0].mxu0
      %v1365 = vadd.f32 0.0, %v1364
      %v1366 = vpop.f32.mrb[0].mxu0
      %1367 = vmatprep.mubr.bf16.mxu0 0
      %1368 = vmatmul.mubr.bf16.gmra.mrb[0].mxu0 %v1254
      %v1369 = vpop.f32.mrb[0].mxu0
      %v1370 = vadd.f32 0.0, %v1369
      %v1371 = vpop.f32.mrb[0].mxu0
      %v1372 = vpop.f32.mrb[0].mxu0
      %v1373 = vadd.f32 0.0, %v1372
      %v1374 = vpop.f32.mrb[0].mxu0
      %1375 = vmatprep.mubr.bf16.mxu0 0
      %1376 = vmatmul.mubr.bf16.gmra.mrb[0].mxu0 %v1256
      %v1377 = vpop.f32.mrb[0].mxu0
      %v1378 = vadd.f32 0.0, %v1377
      %v1379 = vpop.f32.mrb[0].mxu0
      %v1380 = vpop.f32.mrb[0].mxu0
      %v1381 = vadd.f32 0.0, %v1380
      %v1382 = vpop.f32.mrb[0].mxu0
      %1383 = vmatprep.mubr.bf16.mxu0 0
      %1384 = vmatmul.mubr.bf16.gmra.mrb[0].mxu0 %v1255
      %v1385 = vpop.f32.mrb[0].mxu0
      %v1386 = vadd.f32 0.0, %v1385
      %v1387 = vpop.f32.mrb[0].mxu0
      %v1388 = vpop.f32.mrb[0].mxu0
      %v1389 = vadd.f32 0.0, %v1388
      %v1390 = vpop.f32.mrb[0].mxu0
      %1391 = vdwg.mxu0
      %v1392 = vadd.f32 %v1208, %v1346
      %v1393 = vadd.f32 %v1209, %v1349
      %v1394 = vadd.f32 %v1210, %v1354
      %v1395 = vadd.f32 %v1211, %v1357
      %v1396 = vadd.f32 %v1212, %v1362
      %v1397 = vadd.f32 %v1213, %v1365
      %v1398 = vadd.f32 %v1214, %v1370
      %v1399 = vadd.f32 %v1215, %v1373
      %v1400 = vadd.f32 %v1216, %v1378
      %v1401 = vadd.f32 %v1217, %v1381
      %v1402 = vadd.f32 %v1218, %v1386
      %v1403 = vadd.f32 %v1219, %v1389
      %v1404 = vld [vmem:[%s197 + $0x8] sm:$0xc]
      %v1405 = vld [vmem:[%s197 + $0xc] sm:$0xf]
      %v1406 = vld [vmem:[%s197 + $0x10] sm:$0xf]
      %v1407 = vld [vmem:[%s197 + $0x14] sm:$0xf]
      %v1408 = vld [vmem:[%s197 + $0x18] sm:$0xf]
      %v1409 = vld [vmem:[%s197 + $0x1c] sm:$0xf]
      %v1410 = vld [vmem:[%s197 + $0x20] sm:$0xf]
      %v1411 = vld [vmem:[%s197 + $0x24] sm:$0xf]
      %v1412 = vld [vmem:[%s197 + $0x28] sm:$0xf]
      %v1413 = vld [vmem:[%s197 + $0x2c] sm:$0xf]
      %v1414 = vld [vmem:[%s197 + $0x30] sm:$0xf]
      %v1415 = vld [vmem:[%s197 + $0x34] sm:$0xf]
      %s1416 = scalar_lea.vmem %s1, 384
      %v1417 = vld [vmem:[%s1416] sm:$0xf]
      %v1418 = vld [vmem:[%s1416 + $0x4] sm:$0xf]
      %v1419 = vld [vmem:[%s1416 + $0x8] sm:$0xf]
      %v1420 = vld [vmem:[%s1416 + $0xc] sm:$0xf]
      %v1421 = vld [vmem:[%s1416 + $0x10] sm:$0xf]
      %v1422 = vld [vmem:[%s1416 + $0x14] sm:$0xf]
      %v1423 = vld [vmem:[%s1416 + $0x18] sm:$0xf]
      %v1424 = vld [vmem:[%s1416 + $0x1c] sm:$0xf]
      %v1425 = vld [vmem:[%s1416 + $0x20] sm:$0xf]
      %v1426 = vld [vmem:[%s1416 + $0x24] sm:$0xf]
      %v1427 = vld [vmem:[%s1416 + $0x28] sm:$0xf]
      %v1428 = vld [vmem:[%s1416 + $0x2c] sm:$0xf]
      %v1429 = vld [vmem:[%s1416 + $0x30] sm:$0xf]
      %v1430 = vld [vmem:[%s1416 + $0x34] sm:$0xf]
      %v1431 = vld [vmem:[%s1416 + $0x38] sm:$0xf]
      %v1432 = vld [vmem:[%s1416 + $0x3c] sm:$0xf]
      %v1445 = vunpack.c.l.b16 %v1404
      %v1446 = vunpack.c.l.b16 %v1405
      %v1447 = vunpack.c.l.b16 %v1406
      %v1448 = vunpack.c.l.b16 %v1407
      %v1449 = vunpack.c.l.b16 %v1408
      %v1450 = vunpack.c.l.b16 %v1409
      %v1451 = vunpack.c.l.b16 %v1410
      %v1452 = vunpack.c.l.b16 %v1411
      %v1453 = vunpack.c.l.b16 %v1412
      %v1454 = vunpack.c.l.b16 %v1413
      %v1455 = vunpack.c.l.b16 %v1414
      %v1456 = vunpack.c.l.b16 %v1415
      %v1457 = vpack.c.b16 %v1446, %v1445
      %v1458 = vpack.c.b16 %v1448, %v1447
      %v1459 = vpack.c.b16 %v1450, %v1449
      %v1460 = vpack.c.b16 %v1452, %v1451
      %v1461 = vpack.c.b16 %v1454, %v1453
      %v1462 = vpack.c.b16 %v1456, %v1455
      %v1463 = vrot.slane %v1457, 2
      %v1464 = vrot.slane %v1458, 2
      %v1465 = vsel %vm1245, %v1463, %v1464
      %v1466 = vrot.slane %v1459, 2
      %v1467 = vsel %vm1245, %v1464, %v1466
      %v1468 = vrot.slane %v1460, 2
      %v1469 = vsel %vm1245, %v1466, %v1468
      %v1470 = vrot.slane %v1461, 2
      %v1471 = vsel %vm1245, %v1468, %v1470
      %v1472 = vrot.slane %v1462, 2
      %v1473 = vsel %vm1245, %v1470, %v1472
      %v1496 = vunpack.c.l.b16 %v1417
      %v1497 = vunpack.c.l.b16 %v1418
      %v1498 = vunpack.c.l.b16 %v1419
      %v1499 = vunpack.c.l.b16 %v1420
      %v1500 = vunpack.c.l.b16 %v1421
      %v1501 = vunpack.c.l.b16 %v1422
      %v1502 = vunpack.c.l.b16 %v1423
      %v1503 = vunpack.c.l.b16 %v1424
      %v1504 = vunpack.c.l.b16 %v1425
      %v1505 = vunpack.c.l.b16 %v1426
      %v1506 = vunpack.c.l.b16 %v1427
      %v1507 = vunpack.c.l.b16 %v1428
      %v1508 = vunpack.c.l.b16 %v1429
      %v1509 = vunpack.c.l.b16 %v1430
      %v1510 = vunpack.c.l.b16 %v1431
      %v1511 = vunpack.c.l.b16 %v1432
      %v1512 = vpack.c.b16 %v1497, %v1496
      %v1513 = vpack.c.b16 %v1499, %v1498
      %v1514 = vpack.c.b16 %v1501, %v1500
      %v1515 = vpack.c.b16 %v1503, %v1502
      %v1516 = vpack.c.b16 %v1505, %v1504
      %v1517 = vpack.c.b16 %v1507, %v1506
      %v1518 = vpack.c.b16 %v1509, %v1508
      %v1519 = vpack.c.b16 %v1511, %v1510
      %1528 = vmatprep.subr.bf16.mxu0 0
      %1529 = vmatpush1.bf16.msra.mxu0 %v1512
      %1530 = vmatprep.subr.bf16.mxu0 0
      %1531 = vmatpush1.bf16.msra.mxu0 %v1513
      %1532 = vmatprep.subr.bf16.mxu0 0
      %1533 = vmatpush1.bf16.msra.mxu0 %v1514
      %1534 = vmatprep.subr.bf16.mxu0 0
      %1535 = vmatpush1.bf16.msra.mxu0 %v1515
      %1536 = vmatprep.subr.bf16.mxu0 0
      %1537 = vmatpush1.bf16.msra.mxu0 %v1516
      %1538 = vmatprep.subr.bf16.mxu0 0
      %1539 = vmatpush1.bf16.msra.mxu0 %v1517
      %1540 = vmatprep.subr.bf16.mxu0 0
      %1541 = vmatpush1.bf16.msra.mxu0 %v1518
      %1542 = vmatprep.subr.bf16.mxu0 0
      %1543 = vmatpush1.bf16.msra.mxu0 %v1519
      %1544 = vmatprep.subr.bf16.mxu0 0
      %1545 = vmatpush1.bf16.msra.mxu0 0
      %1546 = vmatprep.subr.bf16.mxu0 0
      %1547 = vmatpush1.bf16.msra.mxu0 0
      %1548 = vmatprep.subr.bf16.mxu0 0
      %1549 = vmatpush1.bf16.msra.mxu0 0
      %1550 = vmatprep.subr.bf16.mxu0 0
      %1551 = vmatpush1.bf16.msra.mxu0 0
      %1552 = vmatprep.subr.bf16.mxu0 0
      %1553 = vmatpush1.bf16.msra.mxu0 0
      %1554 = vmatprep.subr.bf16.mxu0 0
      %1555 = vmatpush1.bf16.msra.mxu0 0
      %1556 = vmatprep.subr.bf16.mxu0 0
      %1557 = vmatpush1.bf16.msra.mxu0 0
      %1558 = vmatprep.subr.bf16.mxu0 0
      %1559 = vmatpush1.bf16.msra.mxu0 0
      %1560 = vmatprep.mubr.bf16.mxu0 0
      %1561 = vmatmul.mubr.bf16.gmra.mrb[0].mxu0 %v1465
      %v1562 = vpop.f32.mrb[0].mxu0
      %v1563 = vadd.f32 0.0, %v1562
      %v1564 = vpop.f32.mrb[0].mxu0
      %v1565 = vpop.f32.mrb[0].mxu0
      %v1566 = vadd.f32 0.0, %v1565
      %v1567 = vpop.f32.mrb[0].mxu0
      %1568 = vmatprep.mubr.bf16.mxu0 0
      %1569 = vmatmul.mubr.bf16.gmra.mrb[0].mxu0 %v1467
      %v1570 = vpop.f32.mrb[0].mxu0
      %v1571 = vadd.f32 0.0, %v1570
      %v1572 = vpop.f32.mrb[0].mxu0
      %v1573 = vpop.f32.mrb[0].mxu0
      %v1574 = vadd.f32 0.0, %v1573
      %v1575 = vpop.f32.mrb[0].mxu0
      %1576 = vmatprep.mubr.bf16.mxu0 0
      %1577 = vmatmul.mubr.bf16.gmra.mrb[0].mxu0 %v1469
      %v1578 = vpop.f32.mrb[0].mxu0
      %v1579 = vadd.f32 0.0, %v1578
      %v1580 = vpop.f32.mrb[0].mxu0
      %v1581 = vpop.f32.mrb[0].mxu0
      %v1582 = vadd.f32 0.0, %v1581
      %v1583 = vpop.f32.mrb[0].mxu0
      %1584 = vmatprep.mubr.bf16.mxu0 0
      %1585 = vmatmul.mubr.bf16.gmra.mrb[0].mxu0 %v1471
      %v1586 = vpop.f32.mrb[0].mxu0
      %v1587 = vadd.f32 0.0, %v1586
      %v1588 = vpop.f32.mrb[0].mxu0
      %v1589 = vpop.f32.mrb[0].mxu0
      %v1590 = vadd.f32 0.0, %v1589
      %v1591 = vpop.f32.mrb[0].mxu0
      %1592 = vmatprep.mubr.bf16.mxu0 0
      %1593 = vmatmul.mubr.bf16.gmra.mrb[0].mxu0 %v1473
      %v1594 = vpop.f32.mrb[0].mxu0
      %v1595 = vadd.f32 0.0, %v1594
      %v1596 = vpop.f32.mrb[0].mxu0
      %v1597 = vpop.f32.mrb[0].mxu0
      %v1598 = vadd.f32 0.0, %v1597
      %v1599 = vpop.f32.mrb[0].mxu0
      %1600 = vmatprep.mubr.bf16.mxu0 0
      %1601 = vmatmul.mubr.bf16.gmra.mrb[0].mxu0 %v1472
      %v1602 = vpop.f32.mrb[0].mxu0
      %v1603 = vadd.f32 0.0, %v1602
      %v1604 = vpop.f32.mrb[0].mxu0
      %v1605 = vpop.f32.mrb[0].mxu0
      %v1606 = vadd.f32 0.0, %v1605
      %v1607 = vpop.f32.mrb[0].mxu0
      %1608 = vdwg.mxu0
      %v1609 = vadd.f32 %v1392, %v1563
      %v1610 = vadd.f32 %v1393, %v1566
      %v1611 = vadd.f32 %v1394, %v1571
      %v1612 = vadd.f32 %v1395, %v1574
      %v1613 = vadd.f32 %v1396, %v1579
      %v1614 = vadd.f32 %v1397, %v1582
      %v1615 = vadd.f32 %v1398, %v1587
      %v1616 = vadd.f32 %v1399, %v1590
      %v1617 = vadd.f32 %v1400, %v1595
      %v1618 = vadd.f32 %v1401, %v1598
      %v1619 = vadd.f32 %v1402, %v1603
      %v1620 = vadd.f32 %v1403, %v1606
      %s1621 = scalar_lea.vmem %s1, 448
      %v1622 = vld [vmem:[%s1621] sm:$0xf]
      %v1623 = vld [vmem:[%s1621 + $0x4] sm:$0xf]
      %v1624 = vld [vmem:[%s1621 + $0x8] sm:$0xf]
      %v1625 = vld [vmem:[%s1621 + $0xc] sm:$0xf]
      %v1626 = vld [vmem:[%s1621 + $0x10] sm:$0xf]
      %v1627 = vld [vmem:[%s1621 + $0x14] sm:$0xf]
      %v1628 = vld [vmem:[%s1621 + $0x18] sm:$0xf]
      %v1629 = vld [vmem:[%s1621 + $0x1c] sm:$0xf]
      %v1630 = vld [vmem:[%s1621 + $0x20] sm:$0xf]
      %v1631 = vld [vmem:[%s1621 + $0x24] sm:$0xf]
      %v1632 = vld [vmem:[%s1621 + $0x28] sm:$0xf]
      %v1633 = vld [vmem:[%s1621 + $0x2c] sm:$0xf]
      %v1634 = vld [vmem:[%s1621 + $0x30] sm:$0xf]
      %v1635 = vld [vmem:[%s1621 + $0x34] sm:$0xf]
      %v1636 = vld [vmem:[%s1621 + $0x38] sm:$0xf]
      %v1637 = vld [vmem:[%s1621 + $0x3c] sm:$0xf]
      %vm1638 = vsmask.f32 5376
      %v1640 = vshrl.u32 %v1457, 16
      %v1642 = vrot.slane %v1640, 2
      %v1643 = vshll.u32 %v1457, 16
      %v1645 = vrot.slane %v1643, 3
      %v1646 = vor.u32 %v1642, %v1645
      %v1648 = vshrl.u32 %v1458, 16
      %v1650 = vrot.slane %v1648, 2
      %v1651 = vshll.u32 %v1458, 16
      %v1653 = vrot.slane %v1651, 3
      %v1654 = vor.u32 %v1650, %v1653
      %v1655 = vsel %vm1638, %v1646, %v1654
      %v1657 = vshrl.u32 %v1459, 16
      %v1659 = vrot.slane %v1657, 2
      %v1660 = vshll.u32 %v1459, 16
      %v1662 = vrot.slane %v1660, 3
      %v1663 = vor.u32 %v1659, %v1662
      %v1664 = vsel %vm1638, %v1654, %v1663
      %v1666 = vshrl.u32 %v1460, 16
      %v1668 = vrot.slane %v1666, 2
      %v1669 = vshll.u32 %v1460, 16
      %v1671 = vrot.slane %v1669, 3
      %v1672 = vor.u32 %v1668, %v1671
      %v1673 = vsel %vm1638, %v1663, %v1672
      %v1675 = vshrl.u32 %v1461, 16
      %v1677 = vrot.slane %v1675, 2
      %v1678 = vshll.u32 %v1461, 16
      %v1680 = vrot.slane %v1678, 3
      %v1681 = vor.u32 %v1677, %v1680
      %v1682 = vsel %vm1638, %v1672, %v1681
      %v1684 = vshrl.u32 %v1462, 16
      %v1686 = vrot.slane %v1684, 2
      %v1687 = vshll.u32 %v1462, 16
      %v1689 = vrot.slane %v1687, 3
      %v1690 = vor.u32 %v1686, %v1689
      %v1691 = vsel %vm1638, %v1681, %v1690
      %v1714 = vunpack.c.l.b16 %v1622
      %v1715 = vunpack.c.l.b16 %v1623
      %v1716 = vunpack.c.l.b16 %v1624
      %v1717 = vunpack.c.l.b16 %v1625
      %v1718 = vunpack.c.l.b16 %v1626
      %v1719 = vunpack.c.l.b16 %v1627
      %v1720 = vunpack.c.l.b16 %v1628
      %v1721 = vunpack.c.l.b16 %v1629
      %v1722 = vunpack.c.l.b16 %v1630
      %v1723 = vunpack.c.l.b16 %v1631
      %v1724 = vunpack.c.l.b16 %v1632
      %v1725 = vunpack.c.l.b16 %v1633
      %v1726 = vunpack.c.l.b16 %v1634
      %v1727 = vunpack.c.l.b16 %v1635
      %v1728 = vunpack.c.l.b16 %v1636
      %v1729 = vunpack.c.l.b16 %v1637
      %v1730 = vpack.c.b16 %v1715, %v1714
      %v1731 = vpack.c.b16 %v1717, %v1716
      %v1732 = vpack.c.b16 %v1719, %v1718
      %v1733 = vpack.c.b16 %v1721, %v1720
      %v1734 = vpack.c.b16 %v1723, %v1722
      %v1735 = vpack.c.b16 %v1725, %v1724
      %v1736 = vpack.c.b16 %v1727, %v1726
      %v1737 = vpack.c.b16 %v1729, %v1728
      %1746 = vmatprep.subr.bf16.mxu0 0
      %1747 = vmatpush1.bf16.msra.mxu0 %v1730
      %1748 = vmatprep.subr.bf16.mxu0 0
      %1749 = vmatpush1.bf16.msra.mxu0 %v1731
      %1750 = vmatprep.subr.bf16.mxu0 0
      %1751 = vmatpush1.bf16.msra.mxu0 %v1732
      %1752 = vmatprep.subr.bf16.mxu0 0
      %1753 = vmatpush1.bf16.msra.mxu0 %v1733
      %1754 = vmatprep.subr.bf16.mxu0 0
      %1755 = vmatpush1.bf16.msra.mxu0 %v1734
      %1756 = vmatprep.subr.bf16.mxu0 0
      %1757 = vmatpush1.bf16.msra.mxu0 %v1735
      %1758 = vmatprep.subr.bf16.mxu0 0
      %1759 = vmatpush1.bf16.msra.mxu0 %v1736
      %1760 = vmatprep.subr.bf16.mxu0 0
      %1761 = vmatpush1.bf16.msra.mxu0 %v1737
      %1762 = vmatprep.subr.bf16.mxu0 0
      %1763 = vmatpush1.bf16.msra.mxu0 0
      %1764 = vmatprep.subr.bf16.mxu0 0
      %1765 = vmatpush1.bf16.msra.mxu0 0
      %1766 = vmatprep.subr.bf16.mxu0 0
      %1767 = vmatpush1.bf16.msra.mxu0 0
      %1768 = vmatprep.subr.bf16.mxu0 0
      %1769 = vmatpush1.bf16.msra.mxu0 0
      %1770 = vmatprep.subr.bf16.mxu0 0
      %1771 = vmatpush1.bf16.msra.mxu0 0
      %1772 = vmatprep.subr.bf16.mxu0 0
      %1773 = vmatpush1.bf16.msra.mxu0 0
      %1774 = vmatprep.subr.bf16.mxu0 0
      %1775 = vmatpush1.bf16.msra.mxu0 0
      %1776 = vmatprep.subr.bf16.mxu0 0
      %1777 = vmatpush1.bf16.msra.mxu0 0
      %1778 = vmatprep.mubr.bf16.mxu0 0
      %1779 = vmatmul.mubr.bf16.gmra.mrb[0].mxu0 %v1655
      %v1780 = vpop.f32.mrb[0].mxu0
      %v1781 = vadd.f32 0.0, %v1780
      %v1782 = vpop.f32.mrb[0].mxu0
      %v1783 = vpop.f32.mrb[0].mxu0
      %v1784 = vadd.f32 0.0, %v1783
      %v1785 = vpop.f32.mrb[0].mxu0
      %1786 = vmatprep.mubr.bf16.mxu0 0
      %1787 = vmatmul.mubr.bf16.gmra.mrb[0].mxu0 %v1664
      %v1788 = vpop.f32.mrb[0].mxu0
      %v1789 = vadd.f32 0.0, %v1788
      %v1790 = vpop.f32.mrb[0].mxu0
      %v1791 = vpop.f32.mrb[0].mxu0
      %v1792 = vadd.f32 0.0, %v1791
      %v1793 = vpop.f32.mrb[0].mxu0
      %1794 = vmatprep.mubr.bf16.mxu0 0
      %1795 = vmatmul.mubr.bf16.gmra.mrb[0].mxu0 %v1673
      %v1796 = vpop.f32.mrb[0].mxu0
      %v1797 = vadd.f32 0.0, %v1796
      %v1798 = vpop.f32.mrb[0].mxu0
      %v1799 = vpop.f32.mrb[0].mxu0
      %v1800 = vadd.f32 0.0, %v1799
      %v1801 = vpop.f32.mrb[0].mxu0
      %1802 = vmatprep.mubr.bf16.mxu0 0
      %1803 = vmatmul.mubr.bf16.gmra.mrb[0].mxu0 %v1682
      %v1804 = vpop.f32.mrb[0].mxu0
      %v1805 = vadd.f32 0.0, %v1804
      %v1806 = vpop.f32.mrb[0].mxu0
      %v1807 = vpop.f32.mrb[0].mxu0
      %v1808 = vadd.f32 0.0, %v1807
      %v1809 = vpop.f32.mrb[0].mxu0
      %1810 = vmatprep.mubr.bf16.mxu0 0
      %1811 = vmatmul.mubr.bf16.gmra.mrb[0].mxu0 %v1691
      %v1812 = vpop.f32.mrb[0].mxu0
      %v1813 = vadd.f32 0.0, %v1812
      %v1814 = vpop.f32.mrb[0].mxu0
      %v1815 = vpop.f32.mrb[0].mxu0
      %v1816 = vadd.f32 0.0, %v1815
      %v1817 = vpop.f32.mrb[0].mxu0
      %1818 = vmatprep.mubr.bf16.mxu0 0
      %1819 = vmatmul.mubr.bf16.gmra.mrb[0].mxu0 %v1690
      %v1820 = vpop.f32.mrb[0].mxu0
      %v1821 = vadd.f32 0.0, %v1820
      %v1822 = vpop.f32.mrb[0].mxu0
      %v1823 = vpop.f32.mrb[0].mxu0
      %v1824 = vadd.f32 0.0, %v1823
      %v1825 = vpop.f32.mrb[0].mxu0
      %1826 = vdwg.mxu0
      %v1827 = vadd.f32 %v1609, %v1781
      %v1828 = vadd.f32 %v1610, %v1784
      %v1829 = vadd.f32 %v1611, %v1789
      %v1830 = vadd.f32 %v1612, %v1792
      %v1831 = vadd.f32 %v1613, %v1797
      %v1832 = vadd.f32 %v1614, %v1800
      %v1833 = vadd.f32 %v1615, %v1805
      %v1834 = vadd.f32 %v1616, %v1808
      %v1835 = vadd.f32 %v1617, %v1813
      %v1836 = vadd.f32 %v1618, %v1816
      %v1837 = vadd.f32 %v1619, %v1821
      %v1838 = vadd.f32 %v1620, %v1824
      %v1839 = vld [vmem:[%s197 + $0x8] sm:$0x8]
      %v1840 = vld [vmem:[%s197 + $0xc] sm:$0xf]
      %v1841 = vld [vmem:[%s197 + $0x10] sm:$0xf]
      %v1842 = vld [vmem:[%s197 + $0x14] sm:$0xf]
      %v1843 = vld [vmem:[%s197 + $0x18] sm:$0xf]
      %v1844 = vld [vmem:[%s197 + $0x1c] sm:$0xf]
      %v1845 = vld [vmem:[%s197 + $0x20] sm:$0xf]
      %v1846 = vld [vmem:[%s197 + $0x24] sm:$0xf]
      %v1847 = vld [vmem:[%s197 + $0x28] sm:$0xf]
      %v1848 = vld [vmem:[%s197 + $0x2c] sm:$0xf]
      %v1849 = vld [vmem:[%s197 + $0x30] sm:$0xf]
      %v1850 = vld [vmem:[%s197 + $0x34] sm:$0xf]
      %v1851 = vld [vmem:[%s197 + $0x38] sm:$0x1]
      %s1852 = scalar_lea.vmem %s1, 512
      %v1853 = vld [vmem:[%s1852] sm:$0xf]
      %v1854 = vld [vmem:[%s1852 + $0x4] sm:$0xf]
      %v1855 = vld [vmem:[%s1852 + $0x8] sm:$0xf]
      %v1856 = vld [vmem:[%s1852 + $0xc] sm:$0xf]
      %v1857 = vld [vmem:[%s1852 + $0x10] sm:$0xf]
      %v1858 = vld [vmem:[%s1852 + $0x14] sm:$0xf]
      %v1859 = vld [vmem:[%s1852 + $0x18] sm:$0xf]
      %v1860 = vld [vmem:[%s1852 + $0x1c] sm:$0xf]
      %v1861 = vld [vmem:[%s1852 + $0x20] sm:$0xf]
      %v1862 = vld [vmem:[%s1852 + $0x24] sm:$0xf]
      %v1863 = vld [vmem:[%s1852 + $0x28] sm:$0xf]
      %v1864 = vld [vmem:[%s1852 + $0x2c] sm:$0xf]
      %v1865 = vld [vmem:[%s1852 + $0x30] sm:$0xf]
      %v1866 = vld [vmem:[%s1852 + $0x34] sm:$0xf]
      %v1867 = vld [vmem:[%s1852 + $0x38] sm:$0xf]
      %v1868 = vld [vmem:[%s1852 + $0x3c] sm:$0xf]
      %v1882 = vunpack.c.l.b16 %v1839
      %v1883 = vunpack.c.l.b16 %v1840
      %v1884 = vunpack.c.l.b16 %v1841
      %v1885 = vunpack.c.l.b16 %v1842
      %v1886 = vunpack.c.l.b16 %v1843
      %v1887 = vunpack.c.l.b16 %v1844
      %v1888 = vunpack.c.l.b16 %v1845
      %v1889 = vunpack.c.l.b16 %v1846
      %v1890 = vunpack.c.l.b16 %v1847
      %v1891 = vunpack.c.l.b16 %v1848
      %v1892 = vunpack.c.l.b16 %v1849
      %v1893 = vunpack.c.l.b16 %v1850
      %v1894 = vunpack.c.l.b16 %v1851
      %v1895 = vpack.c.b16 %v1883, %v1882
      %v1896 = vpack.c.b16 %v1885, %v1884
      %v1897 = vpack.c.b16 %v1887, %v1886
      %v1898 = vpack.c.b16 %v1889, %v1888
      %v1899 = vpack.c.b16 %v1891, %v1890
      %v1900 = vpack.c.b16 %v1893, %v1892
      %v1901 = vpack.c.b16 %v1894, %v1894
      %vm1902 = vcmask 1044480
      %v1903 = vrot.slane %v1895, 3
      %v1904 = vrot.slane %v1896, 3
      %v1905 = vsel %vm1902, %v1903, %v1904
      %v1906 = vrot.slane %v1897, 3
      %v1907 = vsel %vm1902, %v1904, %v1906
      %v1908 = vrot.slane %v1898, 3
      %v1909 = vsel %vm1902, %v1906, %v1908
      %v1910 = vrot.slane %v1899, 3
      %v1911 = vsel %vm1902, %v1908, %v1910
      %v1912 = vrot.slane %v1900, 3
      %v1913 = vsel %vm1902, %v1910, %v1912
      %v1914 = vrot.slane %v1901, 3
      %v1915 = vsel %vm1902, %v1912, %v1914
      %v1938 = vunpack.c.l.b16 %v1853
      %v1939 = vunpack.c.l.b16 %v1854
      %v1940 = vunpack.c.l.b16 %v1855
      %v1941 = vunpack.c.l.b16 %v1856
      %v1942 = vunpack.c.l.b16 %v1857
      %v1943 = vunpack.c.l.b16 %v1858
      %v1944 = vunpack.c.l.b16 %v1859
      %v1945 = vunpack.c.l.b16 %v1860
      %v1946 = vunpack.c.l.b16 %v1861
      %v1947 = vunpack.c.l.b16 %v1862
      %v1948 = vunpack.c.l.b16 %v1863
      %v1949 = vunpack.c.l.b16 %v1864
      %v1950 = vunpack.c.l.b16 %v1865
      %v1951 = vunpack.c.l.b16 %v1866
      %v1952 = vunpack.c.l.b16 %v1867
      %v1953 = vunpack.c.l.b16 %v1868
      %v1954 = vpack.c.b16 %v1939, %v1938
      %v1955 = vpack.c.b16 %v1941, %v1940
      %v1956 = vpack.c.b16 %v1943, %v1942
      %v1957 = vpack.c.b16 %v1945, %v1944
      %v1958 = vpack.c.b16 %v1947, %v1946
      %v1959 = vpack.c.b16 %v1949, %v1948
      %v1960 = vpack.c.b16 %v1951, %v1950
      %v1961 = vpack.c.b16 %v1953, %v1952
      %1970 = vmatprep.subr.bf16.mxu0 0
      %1971 = vmatpush1.bf16.msra.mxu0 %v1954
      %1972 = vmatprep.subr.bf16.mxu0 0
      %1973 = vmatpush1.bf16.msra.mxu0 %v1955
      %1974 = vmatprep.subr.bf16.mxu0 0
      %1975 = vmatpush1.bf16.msra.mxu0 %v1956
      %1976 = vmatprep.subr.bf16.mxu0 0
      %1977 = vmatpush1.bf16.msra.mxu0 %v1957
      %1978 = vmatprep.subr.bf16.mxu0 0
      %1979 = vmatpush1.bf16.msra.mxu0 %v1958
      %1980 = vmatprep.subr.bf16.mxu0 0
      %1981 = vmatpush1.bf16.msra.mxu0 %v1959
      %1982 = vmatprep.subr.bf16.mxu0 0
      %1983 = vmatpush1.bf16.msra.mxu0 %v1960
      %1984 = vmatprep.subr.bf16.mxu0 0
      %1985 = vmatpush1.bf16.msra.mxu0 %v1961
      %1986 = vmatprep.subr.bf16.mxu0 0
      %1987 = vmatpush1.bf16.msra.mxu0 0
      %1988 = vmatprep.subr.bf16.mxu0 0
      %1989 = vmatpush1.bf16.msra.mxu0 0
      %1990 = vmatprep.subr.bf16.mxu0 0
      %1991 = vmatpush1.bf16.msra.mxu0 0
      %1992 = vmatprep.subr.bf16.mxu0 0
      %1993 = vmatpush1.bf16.msra.mxu0 0
      %1994 = vmatprep.subr.bf16.mxu0 0
      %1995 = vmatpush1.bf16.msra.mxu0 0
      %1996 = vmatprep.subr.bf16.mxu0 0
      %1997 = vmatpush1.bf16.msra.mxu0 0
      %1998 = vmatprep.subr.bf16.mxu0 0
      %1999 = vmatpush1.bf16.msra.mxu0 0
      %2000 = vmatprep.subr.bf16.mxu0 0
      %2001 = vmatpush1.bf16.msra.mxu0 0
      %2002 = vmatprep.mubr.bf16.mxu0 0
      %2003 = vmatmul.mubr.bf16.gmra.mrb[0].mxu0 %v1905
      %v2004 = vpop.f32.mrb[0].mxu0
      %v2005 = vadd.f32 0.0, %v2004
      %v2006 = vpop.f32.mrb[0].mxu0
      %v2007 = vpop.f32.mrb[0].mxu0
      %v2008 = vadd.f32 0.0, %v2007
      %v2009 = vpop.f32.mrb[0].mxu0
      %2010 = vmatprep.mubr.bf16.mxu0 0
      %2011 = vmatmul.mubr.bf16.gmra.mrb[0].mxu0 %v1907
      %v2012 = vpop.f32.mrb[0].mxu0
      %v2013 = vadd.f32 0.0, %v2012
      %v2014 = vpop.f32.mrb[0].mxu0
      %v2015 = vpop.f32.mrb[0].mxu0
      %v2016 = vadd.f32 0.0, %v2015
      %v2017 = vpop.f32.mrb[0].mxu0
      %2018 = vmatprep.mubr.bf16.mxu0 0
      %2019 = vmatmul.mubr.bf16.gmra.mrb[0].mxu0 %v1909
      %v2020 = vpop.f32.mrb[0].mxu0
      %v2021 = vadd.f32 0.0, %v2020
      %v2022 = vpop.f32.mrb[0].mxu0
      %v2023 = vpop.f32.mrb[0].mxu0
      %v2024 = vadd.f32 0.0, %v2023
      %v2025 = vpop.f32.mrb[0].mxu0
      %2026 = vmatprep.mubr.bf16.mxu0 0
      %2027 = vmatmul.mubr.bf16.gmra.mrb[0].mxu0 %v1911
      %v2028 = vpop.f32.mrb[0].mxu0
      %v2029 = vadd.f32 0.0, %v2028
      %v2030 = vpop.f32.mrb[0].mxu0
      %v2031 = vpop.f32.mrb[0].mxu0
      %v2032 = vadd.f32 0.0, %v2031
      %v2033 = vpop.f32.mrb[0].mxu0
      %2034 = vmatprep.mubr.bf16.mxu0 0
      %2035 = vmatmul.mubr.bf16.gmra.mrb[0].mxu0 %v1913
      %v2036 = vpop.f32.mrb[0].mxu0
      %v2037 = vadd.f32 0.0, %v2036
      %v2038 = vpop.f32.mrb[0].mxu0
      %v2039 = vpop.f32.mrb[0].mxu0
      %v2040 = vadd.f32 0.0, %v2039
      %v2041 = vpop.f32.mrb[0].mxu0
      %2042 = vmatprep.mubr.bf16.mxu0 0
      %2043 = vmatmul.mubr.bf16.gmra.mrb[0].mxu0 %v1915
      %v2044 = vpop.f32.mrb[0].mxu0
      %v2045 = vadd.f32 0.0, %v2044
      %v2046 = vpop.f32.mrb[0].mxu0
      %v2047 = vpop.f32.mrb[0].mxu0
      %v2048 = vadd.f32 0.0, %v2047
      %v2049 = vpop.f32.mrb[0].mxu0
      %2050 = vdwg.mxu0
      %v2051 = vadd.f32 %v1827, %v2005
      %v2052 = vadd.f32 %v1828, %v2008
      %v2053 = vadd.f32 %v1829, %v2013
      %v2054 = vadd.f32 %v1830, %v2016
      %v2055 = vadd.f32 %v1831, %v2021
      %v2056 = vadd.f32 %v1832, %v2024
      %v2057 = vadd.f32 %v1833, %v2029
      %v2058 = vadd.f32 %v1834, %v2032
      %v2059 = vadd.f32 %v1835, %v2037
      %v2060 = vadd.f32 %v1836, %v2040
      %v2061 = vadd.f32 %v1837, %v2045
      %v2062 = vadd.f32 %v1838, %v2048
      %v2063 = vld [vmem:[%s2] sm:$0x1]
      %v2065 = vlaneseq
      %v2066 = vshrl.u32 %v2065, 7
      %v2067 = vsub.s32 0, %v2066
      %v2068 = vrot.slane %v2063, %v2067
      %v2070 = vadd.f32 %v2051, %v2068
      %v2071 = vadd.f32 %v2052, %v2068
      %v2072 = vadd.f32 %v2053, %v2068
      %v2073 = vadd.f32 %v2054, %v2068
      %v2074 = vadd.f32 %v2055, %v2068
      %v2075 = vadd.f32 %v2056, %v2068
      %v2076 = vadd.f32 %v2057, %v2068
      %v2077 = vadd.f32 %v2058, %v2068
      %v2078 = vadd.f32 %v2059, %v2068
      %v2079 = vadd.f32 %v2060, %v2068
      %v2080 = vadd.f32 %v2061, %v2068
      %v2081 = vadd.f32 %v2062, %v2068
      %v2082 = vmax.f32 %v2070, 0.0
      %v2083 = vmax.f32 %v2071, 0.0
      %v2084 = vmax.f32 %v2072, 0.0
      %v2085 = vmax.f32 %v2073, 0.0
      %v2086 = vmax.f32 %v2074, 0.0
      %v2087 = vmax.f32 %v2075, 0.0
      %v2088 = vmax.f32 %v2076, 0.0
      %v2089 = vmax.f32 %v2077, 0.0
      %v2090 = vmax.f32 %v2078, 0.0
      %v2091 = vmax.f32 %v2079, 0.0
      %v2092 = vmax.f32 %v2080, 0.0
      %v2093 = vmax.f32 %v2081, 0.0
      %vm2105 = vcmask 1046528
      %v2106 = vrot.slane %v2082, 1
      %v2107 = vrot.slane %v2083, 1
      %v2108 = vsel %vm2105, %v2106, %v2107
      %v2109 = vrot.slane %v2084, 1
      %v2110 = vsel %vm2105, %v2107, %v2109
      %v2111 = vrot.slane %v2085, 1
      %v2112 = vsel %vm2105, %v2109, %v2111
      %v2113 = vrot.slane %v2086, 1
      %v2114 = vsel %vm2105, %v2111, %v2113
      %v2115 = vrot.slane %v2087, 1
      %v2116 = vsel %vm2105, %v2113, %v2115
      %v2117 = vrot.slane %v2088, 1
      %v2118 = vsel %vm2105, %v2115, %v2117
      %v2119 = vrot.slane %v2089, 1
      %v2120 = vsel %vm2105, %v2117, %v2119
      %v2121 = vrot.slane %v2090, 1
      %v2122 = vsel %vm2105, %v2119, %v2121
      %v2123 = vrot.slane %v2091, 1
      %v2124 = vsel %vm2105, %v2121, %v2123
      %v2125 = vrot.slane %v2092, 1
      %v2126 = vsel %vm2105, %v2123, %v2125
      %v2137 = vmax.f32 %v2082, %v2108
      %v2138 = vmax.f32 %v2083, %v2110
      %v2139 = vmax.f32 %v2084, %v2112
      %v2140 = vmax.f32 %v2085, %v2114
      %v2141 = vmax.f32 %v2086, %v2116
      %v2142 = vmax.f32 %v2087, %v2118
      %v2143 = vmax.f32 %v2088, %v2120
      %v2144 = vmax.f32 %v2089, %v2122
      %v2145 = vmax.f32 %v2090, %v2124
      %v2146 = vmax.f32 %v2091, %v2126
      %v2148 = vrot.slane %v2093, 1
      %v2149 = vsel %vm2105, %v2125, %v2148
      %v2152 = vmax.f32 %v2092, %v2149
      %v2153 = vmax.f32 %v2093, %v2148
      %vm2165 = vcmask 1045504
      %v2166 = vrot.slane %v2138, 2
      %v2167 = vrot.slane %v2139, 2
      %v2168 = vsel %vm2165, %v2166, %v2167
      %v2169 = vrot.slane %v2140, 2
      %v2170 = vsel %vm2165, %v2167, %v2169
      %v2171 = vrot.slane %v2141, 2
      %v2172 = vsel %vm2165, %v2169, %v2171
      %v2173 = vrot.slane %v2142, 2
      %v2174 = vsel %vm2165, %v2171, %v2173
      %v2175 = vrot.slane %v2143, 2
      %v2176 = vsel %vm2165, %v2173, %v2175
      %v2177 = vrot.slane %v2144, 2
      %v2178 = vsel %vm2165, %v2175, %v2177
      %v2179 = vrot.slane %v2145, 2
      %v2180 = vsel %vm2165, %v2177, %v2179
      %v2181 = vrot.slane %v2146, 2
      %v2182 = vsel %vm2165, %v2179, %v2181
      %v2183 = vrot.slane %v2152, 2
      %v2184 = vsel %vm2165, %v2181, %v2183
      %v2185 = vrot.slane %v2153, 2
      %v2186 = vsel %vm2165, %v2183, %v2185
      %v2197 = vmax.f32 %v2137, %v2168
      %v2198 = vmax.f32 %v2138, %v2170
      %v2199 = vmax.f32 %v2139, %v2172
      %v2200 = vmax.f32 %v2140, %v2174
      %v2201 = vmax.f32 %v2141, %v2176
      %v2202 = vmax.f32 %v2142, %v2178
      %v2203 = vmax.f32 %v2143, %v2180
      %v2204 = vmax.f32 %v2144, %v2182
      %v2205 = vmax.f32 %v2145, %v2184
      %v2206 = vmax.f32 %v2146, %v2186
      %v2207 = vpack.c.bf16 %v2198, %v2197
      %v2208 = vpack.c.bf16 %v2200, %v2199
      %v2209 = vpack.c.bf16 %v2202, %v2201
      %v2210 = vpack.c.bf16 %v2204, %v2203
      %v2211 = vpack.c.bf16 %v2206, %v2205
      %v2217 = vunpack.c.l.b16 %v2207
      %v2218 = vunpack.c.h.b16 %v2207
      %v2219 = vunpack.c.l.b16 %v2208
      %v2220 = vunpack.c.h.b16 %v2208
      %v2221 = vunpack.c.l.b16 %v2209
      %v2222 = vunpack.c.h.b16 %v2209
      %v2223 = vunpack.c.l.b16 %v2210
      %v2224 = vunpack.c.h.b16 %v2210
      %v2225 = vunpack.c.l.b16 %v2211
      %v2226 = vunpack.c.h.b16 %v2211
      %v2227 = vpack.c.b16 %v2217, %v2217
      %v2228 = vpack.c.b16 %v2218, %v2218
      %v2229 = vpack.c.b16 %v2219, %v2219
      %v2230 = vpack.c.b16 %v2220, %v2220
      %v2231 = vpack.c.b16 %v2221, %v2221
      %v2232 = vpack.c.b16 %v2222, %v2222
      %v2233 = vpack.c.b16 %v2223, %v2223
      %v2234 = vpack.c.b16 %v2224, %v2224
      %v2235 = vpack.c.b16 %v2225, %v2225
      %v2236 = vpack.c.b16 %v2226, %v2226
      %2247 = vst [vmem:[%s206] sm:$0xf] %v2227
      %2248 = vst [vmem:[%s206 + $0x4] sm:$0xf] %v2228
      %2249 = vst [vmem:[%s206 + $0x8] sm:$0xf] %v2229
      %2250 = vst [vmem:[%s206 + $0xc] sm:$0xf] %v2230
      %2251 = vst [vmem:[%s206 + $0x10] sm:$0xf] %v2231
      %2252 = vst [vmem:[%s206 + $0x14] sm:$0xf] %v2232
      %2253 = vst [vmem:[%s206 + $0x18] sm:$0xf] %v2233
      %2254 = vst [vmem:[%s206 + $0x1c] sm:$0xf] %v2234
      %2255 = vst [vmem:[%s206 + $0x20] sm:$0xf] %v2235
      %2256 = vst [vmem:[%s206 + $0x24] sm:$0xf] %v2236
      %p2257 = scmp.lt.s32.totalorder %s18, 1
      %s2258 = scalar_select %p2257, %s18, 1
      %p2259 = scmp.lt.s32.totalorder %s19, 0
      %s2260 = scalar_select %p2259, %s19, 0
      %s2261 = smul.addr %s2260, 10
      %s2262 = smul.addr %s2258, 10
      %s2263 = sadd.s32 %s2261, %s2262
      %s2264 = smul.addr %s2263, 4
      %s2265 = scalar_lea.vmem %s3, %s2264
      // Predicated region
      $region33: #{encoder3_forward_pallas.8} parent=31 // pred_check
        %p2266 = pneg %p116
      $region34: #{encoder3_forward_pallas.8} parent=31 // pred_check_branch
        %2268 = sbr.rel (%p2266) target = $region36
      $region35: #{encoder3_forward_pallas.8} parent=31 // pred_region
        _
      $region36: #{encoder3_forward_pallas.8} parent=31 // pred_fallthru
        _
    $region32: #{encoder3_forward_pallas.8} parent=5 // pred_fallthru
      _
    %p2269 = scmp.le.s32.totalorder 2, %s9
    // Predicated region
    $region37: #{encoder3_forward_pallas.8} parent=5 // pred_check
      %p2270 = pneg %p2269
    $region38: #{encoder3_forward_pallas.8} parent=5 // pred_check_branch
      %2272 = sbr.rel (%p2270) target = $region40
    $region39: #{encoder3_forward_pallas.8} parent=5 // pred_region
      %s2273 = ssub.s32 %s9, 2
      // Predicated region
      $region41: #{encoder3_forward_pallas.8} parent=39 // pred_check
        %p2274 = pneg %p122
      $region42: #{encoder3_forward_pallas.8} parent=39 // pred_check_branch
        %2276 = sbr.rel (%p2274) target = $region44
      $region43: #{encoder3_forward_pallas.8} parent=39 // pred_region
        %p2277 = scmp.lt.s32.totalorder %s20, 1
        %s2278 = scalar_select %p2277, %s20, 1
        %p2279 = scmp.lt.s32.totalorder %s21, 0
        %s2280 = scalar_select %p2279, %s21, 0
        %s2281 = smul.addr %s2280, 10
        %s2282 = smul.addr %s2278, 10
        %s2283 = sadd.s32 %s2281, %s2282
        %s2284 = smul.addr %s2283, 4
        %s2285 = scalar_lea.vmem %s3, %s2284
      $region44: #{encoder3_forward_pallas.8} parent=39 // pred_fallthru
        _
    $region40: #{encoder3_forward_pallas.8} parent=5 // pred_fallthru
      _
  $region6: #{encoder3_forward_pallas.8} parent=0 // loop_footer
    %s13 = sadd.s32 1, %s9
  $region7: #{encoder3_forward_pallas.8} parent=0 // loop_footer_branch
    %8 = sbr.rel target = $region3
  $region8: #{encoder3_forward_pallas.8} parent=0 // loop_exit
    _

// kernel: encoder3_forward_pallas.9
$region0: #{encoder3_forward_pallas.9}
  #allocation0 [shape = 'u32[]', space=smem, size = 0x4, offset = 0x4, fixed_abs, tag = 'smem constant byte address 0x4 - core index']
  #allocation1 [shape = 'u32[144,128]{1,0:T(1,128)}', space=vmem, size = 0x12000, scoped, tag = 'internal scratch']
  %s0 = inlined_call_operand.vmem [shape: bf16[2,1,42,128], index: 0, kind: input, shape index: {}]
  %s1 = inlined_call_operand.vmem [shape: bf16[9,128,256], index: 1, kind: input, shape index: {}]
  %s2 = inlined_call_operand.vmem [shape: f32[1,256], index: 2, kind: input, shape index: {}]
  %s3 = inlined_call_operand.vmem [shape: f32[2,1,24,256], index: 3, kind: output, shape index: {}]
  %s4 = sld [smem:[#allocation0]]
  $region45: #{encoder3_forward_pallas.9} parent=0
    _
  %s6 = ssub.s32 1, %s4
  %s7 = scalar_select 0, %s6, %s4
  loop: start=0, step=1, limit=4
  $region2: #{encoder3_forward_pallas.9} parent=0 // loop_pre_header
    _
  $region3: #{encoder3_forward_pallas.9} parent=0 // loop_header
    %s9 = sphi 0, %s13
    %p10 = scmp.ge.s32.totalorder %s9, 4
    %s16 = sphi 0, %s28
    %s17 = sphi 0, %s24
    %s18 = sphi 0, %s16
    %s19 = sphi 0, %s17
    %s20 = sphi 0, %s18
    %s21 = sphi 0, %s19
    %s33 = sphi 0, %s35
    %s36 = sphi 0, %s33
    %s37 = sphi 0, %s36
    %s53 = sphi 0, %s37
    %s57 = sphi 0, %s57
    %s59 = sphi 0, %s57
    %s60 = sphi 0, %s59
    %s74 = sphi 0, %s60
    %s78 = sphi 0, %s78
    %s80 = sphi 0, %s78
    %s81 = sphi 0, %s80
    %s95 = sphi 0, %s81
    %s103 = sphi 0, %s105
    %s106 = sphi 0, %s103
    %s107 = sphi 0, %s106
    %s123 = sphi 0, %s107
  $region4: #{encoder3_forward_pallas.9} parent=0 // loop_header_branch
    %12 = sbr.rel (%p10) target = $region8
  $region5: #{encoder3_forward_pallas.9} parent=0 // loop_body
    %s14 = ssub.s32 %s9, 1
    %s15 = ssub.s32 %s9, 2
    %s22 = sadd.s32 1, %s17
    %p23 = scmp.ge.s32.totalorder %s22, 1
    %s24 = scalar_select %p23, 0, %s22
    %s25 = sadd.s32 1, %s16
    %s26 = scalar_select %p23, %s25, %s16
    %p27 = scmp.ge.s32.totalorder %s26, 2
    %s28 = scalar_select %p27, 0, %s26
    %s29 = ssub.s32 %s16, %s28
    %s30 = ssub.s32 %s17, %s24
    %s31 = sor.u32 %s29, %s30
    %p32 = scmp.eq.s32.totalorder %s31, 0
    %s34 = sadd.s32 %s33, 1
    %s35 = scalar_select %p32, %s33, %s34
    %p38 = pneg %p32
    %p39 = scmp.eq.s32.totalorder %s9, 1
    %p40 = por %p38, %p39
    %p41 = scmp.ne.s32.totalorder %s33, %s36
    %p42 = scmp.eq.s32.totalorder %s9, 0
    %p43 = por %p41, %p42
    %p44 = scmp.ne.s32.totalorder %s33, %s36
    %p45 = scmp.eq.s32.totalorder %s14, 1
    %p46 = por %p44, %p45
    %p47 = scmp.ne.s32.totalorder %s36, %s37
    %p48 = scmp.eq.s32.totalorder %s14, 0
    %p49 = por %p47, %p48
    %p50 = scmp.ne.s32.totalorder %s36, %s37
    %p51 = scmp.eq.s32.totalorder %s15, 1
    %p52 = por %p50, %p51
    %p54 = scmp.ne.s32.totalorder %s37, %s53
    %p55 = scmp.eq.s32.totalorder %s15, 0
    %p56 = por %p54, %p55
    %s58 = sadd.s32 %s57, 1
    %p61 = scmp.eq.s32.totalorder %s9, 1
    %p62 = scmp.ne.s32.totalorder %s57, %s59
    %p63 = scmp.eq.s32.totalorder %s9, 0
    %p64 = por %p62, %p63
    %p65 = scmp.ne.s32.totalorder %s57, %s59
    %p66 = scmp.eq.s32.totalorder %s14, 1
    %p67 = por %p65, %p66
    %p68 = scmp.ne.s32.totalorder %s59, %s60
    %p69 = scmp.eq.s32.totalorder %s14, 0
    %p70 = por %p68, %p69
    %p71 = scmp.ne.s32.totalorder %s59, %s60
    %p72 = scmp.eq.s32.totalorder %s15, 1
    %p73 = por %p71, %p72
    %p75 = scmp.ne.s32.totalorder %s60, %s74
    %p76 = scmp.eq.s32.totalorder %s15, 0
    %p77 = por %p75, %p76
    %s79 = sadd.s32 %s78, 1
    %p82 = scmp.eq.s32.totalorder %s9, 1
    %p83 = scmp.ne.s32.totalorder %s78, %s80
    %p84 = scmp.eq.s32.totalorder %s9, 0
    %p85 = por %p83, %p84
    %p86 = scmp.ne.s32.totalorder %s78, %s80
    %p87 = scmp.eq.s32.totalorder %s14, 1
    %p88 = por %p86, %p87
    %p89 = scmp.ne.s32.totalorder %s80, %s81
    %p90 = scmp.eq.s32.totalorder %s14, 0
    %p91 = por %p89, %p90
    %p92 = scmp.ne.s32.totalorder %s80, %s81
    %p93 = scmp.eq.s32.totalorder %s15, 1
    %p94 = por %p92, %p93
    %p96 = scmp.ne.s32.totalorder %s81, %s95
    %p97 = scmp.eq.s32.totalorder %s15, 0
    %p98 = por %p96, %p97
    %s99 = ssub.s32 %s16, %s28
    %s100 = ssub.s32 %s17, %s24
    %s101 = sor.u32 %s99, %s100
    %p102 = scmp.eq.s32.totalorder %s101, 0
    %s104 = sadd.s32 %s103, 1
    %s105 = scalar_select %p102, %s103, %s104
    %p108 = pneg %p102
    %p109 = scmp.eq.s32.totalorder %s9, 1
    %p110 = por %p108, %p109
    %p111 = scmp.ne.s32.totalorder %s103, %s106
    %p112 = scmp.eq.s32.totalorder %s9, 0
    %p113 = por %p111, %p112
    %p114 = scmp.ne.s32.totalorder %s103, %s106
    %p115 = scmp.eq.s32.totalorder %s14, 1
    %p116 = por %p114, %p115
    %p117 = scmp.ne.s32.totalorder %s106, %s107
    %p118 = scmp.eq.s32.totalorder %s14, 0
    %p119 = por %p117, %p118
    %p120 = scmp.ne.s32.totalorder %s106, %s107
    %p121 = scmp.eq.s32.totalorder %s15, 1
    %p122 = por %p120, %p121
    %p124 = scmp.ne.s32.totalorder %s107, %s123
    %p125 = scmp.eq.s32.totalorder %s15, 0
    %p126 = por %p124, %p125
    %p127 = scmp.le.s32.totalorder 1, %s9
    %p128 = scmp.lt.s32.totalorder %s9, 3
    %p129 = pnand %p127, %p128
    %p130 = pneg %p129
    // Predicated region
    $region9: #{encoder3_forward_pallas.9} parent=5 // pred_check
      _
    $region10: #{encoder3_forward_pallas.9} parent=5 // pred_check_branch
      %132 = sbr.rel (%p129) target = $region12
    $region11: #{encoder3_forward_pallas.9} parent=5 // pred_region
      %s133 = ssub.s32 %s9, 1
      // Predicated region
      $region13: #{encoder3_forward_pallas.9} parent=11 // pred_check
        %p134 = pneg %p70
      $region14: #{encoder3_forward_pallas.9} parent=11 // pred_check_branch
        %136 = sbr.rel (%p134) target = $region16
      $region15: #{encoder3_forward_pallas.9} parent=11 // pred_region
        _
      $region16: #{encoder3_forward_pallas.9} parent=11 // pred_fallthru
        _
      // Predicated region
      $region17: #{encoder3_forward_pallas.9} parent=11 // pred_check
        %p137 = pneg %p91
      $region18: #{encoder3_forward_pallas.9} parent=11 // pred_check_branch
        %139 = sbr.rel (%p137) target = $region20
      $region19: #{encoder3_forward_pallas.9} parent=11 // pred_region
        _
      $region20: #{encoder3_forward_pallas.9} parent=11 // pred_fallthru
        _
    $region12: #{encoder3_forward_pallas.9} parent=5 // pred_fallthru
      _
    %p140 = scmp.lt.s32.totalorder %s9, 2
    // Predicated region
    $region21: #{encoder3_forward_pallas.9} parent=5 // pred_check
      %p141 = pneg %p140
    $region22: #{encoder3_forward_pallas.9} parent=5 // pred_check_branch
      %143 = sbr.rel (%p141) target = $region24
    $region23: #{encoder3_forward_pallas.9} parent=5 // pred_region
      // Predicated region
      $region25: #{encoder3_forward_pallas.9} parent=23 // pred_check
        %p144 = pneg %p43
      $region26: #{encoder3_forward_pallas.9} parent=23 // pred_check_branch
        %146 = sbr.rel (%p144) target = $region28
      $region27: #{encoder3_forward_pallas.9} parent=23 // pred_region
        %p147 = scmp.lt.s32.totalorder %s16, 1
        %s148 = scalar_select %p147, %s16, 1
        %p149 = scmp.lt.s32.totalorder %s17, 0
        %s150 = scalar_select %p149, %s17, 0
        %s151 = smul.addr %s150, 6
        %s152 = smul.addr %s148, 6
        %s153 = sadd.s32 %s151, %s152
        %s154 = smul.addr %s153, 4
        %s155 = scalar_lea.vmem %s0, %s154
      $region28: #{encoder3_forward_pallas.9} parent=23 // pred_fallthru
        _
    $region24: #{encoder3_forward_pallas.9} parent=5 // pred_fallthru
      _
    %p156 = scmp.le.s32.totalorder 1, %s9
    %p157 = scmp.lt.s32.totalorder %s9, 3
    %p158 = pnand %p156, %p157
    %p159 = pneg %p158
    // Predicated region
    $region29: #{encoder3_forward_pallas.9} parent=5 // pred_check
      _
    $region30: #{encoder3_forward_pallas.9} parent=5 // pred_check_branch
      %161 = sbr.rel (%p158) target = $region32
    $region31: #{encoder3_forward_pallas.9} parent=5 // pred_region
      %s162 = ssub.s32 %s9, 1
      %p163 = scmp.lt.s32.totalorder %s18, 1
      %s164 = scalar_select %p163, %s18, 1
      %p165 = scmp.lt.s32.totalorder %s19, 0
      %s166 = scalar_select %p165, %s19, 0
      %s167 = smul.addr %s166, 6
      %s168 = smul.addr %s164, 6
      %s169 = sadd.s32 %s167, %s168
      %s170 = smul.addr %s169, 4
      %s171 = scalar_lea.vmem %s0, %s170
      %p172 = pneg %p49
      %p173 = pneg %p46
      %p174 = pneg %p70
      %p175 = pneg %p67
      %p176 = pneg %p91
      %p177 = pneg %p88
      %p178 = pneg %p119
      %p179 = pneg %p116
      %p180 = scmp.lt.s32.totalorder %s18, 1
      %s181 = scalar_select %p180, %s18, 1
      %p182 = scmp.lt.s32.totalorder %s19, 0
      %s183 = scalar_select %p182, %s19, 0
      %s184 = smul.addr %s183, 6
      %s185 = smul.addr %s181, 6
      %s186 = sadd.s32 %s184, %s185
      %s187 = smul.addr %s186, 8
      %s188 = scalar_lea.vmem %s3, %s187
      %p189 = scmp.lt.s32.totalorder %s18, 1
      %s190 = scalar_select %p189, %s18, 1
      %p191 = scmp.lt.s32.totalorder %s19, 0
      %s192 = scalar_select %p191, %s19, 0
      %s193 = smul.addr %s192, 6
      %s194 = smul.addr %s190, 6
      %s195 = sadd.s32 %s193, %s194
      %s196 = smul.addr %s195, 4
      %s197 = scalar_lea.vmem %s0, %s196
      %p198 = scmp.lt.s32.totalorder %s18, 1
      %s199 = scalar_select %p198, %s18, 1
      %p200 = scmp.lt.s32.totalorder %s19, 0
      %s201 = scalar_select %p200, %s19, 0
      %s202 = smul.addr %s201, 6
      %s203 = smul.addr %s199, 6
      %s204 = sadd.s32 %s202, %s203
      %s205 = smul.addr %s204, 8
      %s206 = scalar_lea.vmem %s3, %s205
      %v208 = vld [vmem:[%s197] sm:$0xf]
      %v209 = vld [vmem:[%s197 + $0x4] sm:$0xf]
      %v210 = vld [vmem:[%s197 + $0x8] sm:$0xf]
      %v211 = vld [vmem:[%s1] sm:$0xff]
      %v212 = vld [vmem:[%s1 + $0x8] sm:$0xff]
      %v213 = vld [vmem:[%s1 + $0x10] sm:$0xff]
      %v214 = vld [vmem:[%s1 + $0x18] sm:$0xff]
      %v215 = vld [vmem:[%s1 + $0x20] sm:$0xff]
      %v216 = vld [vmem:[%s1 + $0x28] sm:$0xff]
      %v217 = vld [vmem:[%s1 + $0x30] sm:$0xff]
      %v218 = vld [vmem:[%s1 + $0x38] sm:$0xff]
      %v219 = vld [vmem:[%s1 + $0x40] sm:$0xff]
      %v220 = vld [vmem:[%s1 + $0x48] sm:$0xff]
      %v221 = vld [vmem:[%s1 + $0x50] sm:$0xff]
      %v222 = vld [vmem:[%s1 + $0x58] sm:$0xff]
      %v223 = vld [vmem:[%s1 + $0x60] sm:$0xff]
      %v224 = vld [vmem:[%s1 + $0x68] sm:$0xff]
      %v225 = vld [vmem:[%s1 + $0x70] sm:$0xff]
      %v226 = vld [vmem:[%s1 + $0x78] sm:$0xff]
      %v227 = vld [vmem:[%s197 + $0xc] sm:$0x1]
      %s228 = scalar_lea.vmem %s1, 128
      %v229 = vld [vmem:[%s228] sm:$0xff]
      %v230 = vld [vmem:[%s228 + $0x8] sm:$0xff]
      %v231 = vld [vmem:[%s228 + $0x10] sm:$0xff]
      %v232 = vld [vmem:[%s228 + $0x18] sm:$0xff]
      %v233 = vld [vmem:[%s228 + $0x20] sm:$0xff]
      %v234 = vld [vmem:[%s228 + $0x28] sm:$0xff]
      %v235 = vld [vmem:[%s228 + $0x30] sm:$0xff]
      %v236 = vld [vmem:[%s228 + $0x38] sm:$0xff]
      %v237 = vld [vmem:[%s228 + $0x40] sm:$0xff]
      %v238 = vld [vmem:[%s228 + $0x48] sm:$0xff]
      %v239 = vld [vmem:[%s228 + $0x50] sm:$0xff]
      %v240 = vld [vmem:[%s228 + $0x58] sm:$0xff]
      %v241 = vld [vmem:[%s228 + $0x60] sm:$0xff]
      %v242 = vld [vmem:[%s228 + $0x68] sm:$0xff]
      %v243 = vld [vmem:[%s228 + $0x70] sm:$0xff]
      %v244 = vld [vmem:[%s228 + $0x78] sm:$0xff]
      %v249 = vunpack.c.l.b16 %v208
      %v250 = vunpack.c.l.b16 %v209
      %v251 = vunpack.c.l.b16 %v210
      %v252 = vunpack.c.l.b16 %v227
      %v253 = vpack.c.b16 %v250, %v249
      %v254 = vpack.c.b16 %v252, %v251
      %vm255 = vsmask.f32 7424
      %v257 = vshrl.u32 %v253, 16
      %v259 = vshll.u32 %v253, 16
      %v261 = vrot.slane %v259, 1
      %v262 = vor.u32 %v257, %v261
      %v264 = vshll.u32 %v254, 16
      %v266 = vrot.slane %v264, 1
      %v267 = vsel %vm255, %v262, %v266
      %v268 = vshrl.u32 %v254, 16
      %v270 = vor.u32 %v268, %v266
      %v289 = vunpack.c.l.b16 %v229
      %v290 = vunpack.c.h.b16 %v229
      %v291 = vunpack.c.l.b16 %v230
      %v292 = vunpack.c.h.b16 %v230
      %v293 = vunpack.c.l.b16 %v231
      %v294 = vunpack.c.h.b16 %v231
      %v295 = vunpack.c.l.b16 %v232
      %v296 = vunpack.c.h.b16 %v232
      %v297 = vunpack.c.l.b16 %v233
      %v298 = vunpack.c.h.b16 %v233
      %v299 = vunpack.c.l.b16 %v234
      %v300 = vunpack.c.h.b16 %v234
      %v301 = vunpack.c.l.b16 %v235
      %v302 = vunpack.c.h.b16 %v235
      %v303 = vunpack.c.l.b16 %v236
      %v304 = vunpack.c.h.b16 %v236
      %v305 = vunpack.c.l.b16 %v237
      %v306 = vunpack.c.h.b16 %v237
      %v307 = vunpack.c.l.b16 %v238
      %v308 = vunpack.c.h.b16 %v238
      %v309 = vunpack.c.l.b16 %v239
      %v310 = vunpack.c.h.b16 %v239
      %v311 = vunpack.c.l.b16 %v240
      %v312 = vunpack.c.h.b16 %v240
      %v313 = vunpack.c.l.b16 %v241
      %v314 = vunpack.c.h.b16 %v241
      %v315 = vunpack.c.l.b16 %v242
      %v316 = vunpack.c.h.b16 %v242
      %v317 = vunpack.c.l.b16 %v243
      %v318 = vunpack.c.h.b16 %v243
      %v319 = vunpack.c.l.b16 %v244
      %v320 = vunpack.c.h.b16 %v244
      %v321 = vpack.c.b16 %v291, %v289
      %v322 = vpack.c.b16 %v292, %v290
      %v323 = vpack.c.b16 %v295, %v293
      %v324 = vpack.c.b16 %v296, %v294
      %v325 = vpack.c.b16 %v299, %v297
      %v326 = vpack.c.b16 %v300, %v298
      %v327 = vpack.c.b16 %v303, %v301
      %v328 = vpack.c.b16 %v304, %v302
      %v329 = vpack.c.b16 %v307, %v305
      %v330 = vpack.c.b16 %v308, %v306
      %v331 = vpack.c.b16 %v311, %v309
      %v332 = vpack.c.b16 %v312, %v310
      %v333 = vpack.c.b16 %v315, %v313
      %v334 = vpack.c.b16 %v316, %v314
      %v335 = vpack.c.b16 %v319, %v317
      %v336 = vpack.c.b16 %v320, %v318
      %353 = vmatprep.subr.bf16.mxu0 %v322
      %354 = vmatpush1.bf16.msra.mxu0 %v321
      %355 = vmatprep.subr.bf16.mxu0 %v324
      %356 = vmatpush1.bf16.msra.mxu0 %v323
      %357 = vmatprep.subr.bf16.mxu0 %v326
      %358 = vmatpush1.bf16.msra.mxu0 %v325
      %359 = vmatprep.subr.bf16.mxu0 %v328
      %360 = vmatpush1.bf16.msra.mxu0 %v327
      %361 = vmatprep.subr.bf16.mxu0 %v330
      %362 = vmatpush1.bf16.msra.mxu0 %v329
      %363 = vmatprep.subr.bf16.mxu0 %v332
      %364 = vmatpush1.bf16.msra.mxu0 %v331
      %365 = vmatprep.subr.bf16.mxu0 %v334
      %366 = vmatpush1.bf16.msra.mxu0 %v333
      %367 = vmatprep.subr.bf16.mxu0 %v336
      %368 = vmatpush1.bf16.msra.mxu0 %v335
      %369 = vmatprep.subr.bf16.mxu0 0
      %370 = vmatpush1.bf16.msra.mxu0 0
      %371 = vmatprep.subr.bf16.mxu0 0
      %372 = vmatpush1.bf16.msra.mxu0 0
      %373 = vmatprep.subr.bf16.mxu0 0
      %374 = vmatpush1.bf16.msra.mxu0 0
      %375 = vmatprep.subr.bf16.mxu0 0
      %376 = vmatpush1.bf16.msra.mxu0 0
      %377 = vmatprep.subr.bf16.mxu0 0
      %378 = vmatpush1.bf16.msra.mxu0 0
      %379 = vmatprep.subr.bf16.mxu0 0
      %380 = vmatpush1.bf16.msra.mxu0 0
      %381 = vmatprep.subr.bf16.mxu0 0
      %382 = vmatpush1.bf16.msra.mxu0 0
      %383 = vmatprep.subr.bf16.mxu0 0
      %384 = vmatpush1.bf16.msra.mxu0 0
      %385 = vmatprep.mubr.bf16.mxu0 0
      %386 = vmatmul.mubr.bf16.gmra.mrb[0].mxu0 %v267
      %v387 = vpop.f32.mrb[0].mxu0
      %v388 = vadd.f32 0.0, %v387
      %v389 = vpop.f32.mrb[0].mxu0
      %v390 = vadd.f32 0.0, %v389
      %v391 = vpop.f32.mrb[0].mxu0
      %v392 = vadd.f32 0.0, %v391
      %v393 = vpop.f32.mrb[0].mxu0
      %v394 = vadd.f32 0.0, %v393
      %395 = vmatprep.mubr.bf16.mxu0 0
      %396 = vmatmul.mubr.bf16.gmra.mrb[0].mxu0 %v270
      %v397 = vpop.f32.mrb[0].mxu0
      %v398 = vadd.f32 0.0, %v397
      %v399 = vpop.f32.mrb[0].mxu0
      %v400 = vadd.f32 0.0, %v399
      %v401 = vpop.f32.mrb[0].mxu0
      %v402 = vpop.f32.mrb[0].mxu0
      %403 = vdwg.mxu0
      %v404 = vpack.c.b16 %v251, %v251
      %v423 = vunpack.c.l.b16 %v211
      %v424 = vunpack.c.h.b16 %v211
      %v425 = vunpack.c.l.b16 %v212
      %v426 = vunpack.c.h.b16 %v212
      %v427 = vunpack.c.l.b16 %v213
      %v428 = vunpack.c.h.b16 %v213
      %v429 = vunpack.c.l.b16 %v214
      %v430 = vunpack.c.h.b16 %v214
      %v431 = vunpack.c.l.b16 %v215
      %v432 = vunpack.c.h.b16 %v215
      %v433 = vunpack.c.l.b16 %v216
      %v434 = vunpack.c.h.b16 %v216
      %v435 = vunpack.c.l.b16 %v217
      %v436 = vunpack.c.h.b16 %v217
      %v437 = vunpack.c.l.b16 %v218
      %v438 = vunpack.c.h.b16 %v218
      %v439 = vunpack.c.l.b16 %v219
      %v440 = vunpack.c.h.b16 %v219
      %v441 = vunpack.c.l.b16 %v220
      %v442 = vunpack.c.h.b16 %v220
      %v443 = vunpack.c.l.b16 %v221
      %v444 = vunpack.c.h.b16 %v221
      %v445 = vunpack.c.l.b16 %v222
      %v446 = vunpack.c.h.b16 %v222
      %v447 = vunpack.c.l.b16 %v223
      %v448 = vunpack.c.h.b16 %v223
      %v449 = vunpack.c.l.b16 %v224
      %v450 = vunpack.c.h.b16 %v224
      %v451 = vunpack.c.l.b16 %v225
      %v452 = vunpack.c.h.b16 %v225
      %v453 = vunpack.c.l.b16 %v226
      %v454 = vunpack.c.h.b16 %v226
      %v455 = vpack.c.b16 %v425, %v423
      %v456 = vpack.c.b16 %v426, %v424
      %v457 = vpack.c.b16 %v429, %v427
      %v458 = vpack.c.b16 %v430, %v428
      %v459 = vpack.c.b16 %v433, %v431
      %v460 = vpack.c.b16 %v434, %v432
      %v461 = vpack.c.b16 %v437, %v435
      %v462 = vpack.c.b16 %v438, %v436
      %v463 = vpack.c.b16 %v441, %v439
      %v464 = vpack.c.b16 %v442, %v440
      %v465 = vpack.c.b16 %v445, %v443
      %v466 = vpack.c.b16 %v446, %v444
      %v467 = vpack.c.b16 %v449, %v447
      %v468 = vpack.c.b16 %v450, %v448
      %v469 = vpack.c.b16 %v453, %v451
      %v470 = vpack.c.b16 %v454, %v452
      %487 = vmatprep.subr.bf16.mxu0 %v456
      %488 = vmatpush1.bf16.msra.mxu0 %v455
      %489 = vmatprep.subr.bf16.mxu0 %v458
      %490 = vmatpush1.bf16.msra.mxu0 %v457
      %491 = vmatprep.subr.bf16.mxu0 %v460
      %492 = vmatpush1.bf16.msra.mxu0 %v459
      %493 = vmatprep.subr.bf16.mxu0 %v462
      %494 = vmatpush1.bf16.msra.mxu0 %v461
      %495 = vmatprep.subr.bf16.mxu0 %v464
      %496 = vmatpush1.bf16.msra.mxu0 %v463
      %497 = vmatprep.subr.bf16.mxu0 %v466
      %498 = vmatpush1.bf16.msra.mxu0 %v465
      %499 = vmatprep.subr.bf16.mxu0 %v468
      %500 = vmatpush1.bf16.msra.mxu0 %v467
      %501 = vmatprep.subr.bf16.mxu0 %v470
      %502 = vmatpush1.bf16.msra.mxu0 %v469
      %503 = vmatprep.subr.bf16.mxu0 0
      %504 = vmatpush1.bf16.msra.mxu0 0
      %505 = vmatprep.subr.bf16.mxu0 0
      %506 = vmatpush1.bf16.msra.mxu0 0
      %507 = vmatprep.subr.bf16.mxu0 0
      %508 = vmatpush1.bf16.msra.mxu0 0
      %509 = vmatprep.subr.bf16.mxu0 0
      %510 = vmatpush1.bf16.msra.mxu0 0
      %511 = vmatprep.subr.bf16.mxu0 0
      %512 = vmatpush1.bf16.msra.mxu0 0
      %513 = vmatprep.subr.bf16.mxu0 0
      %514 = vmatpush1.bf16.msra.mxu0 0
      %515 = vmatprep.subr.bf16.mxu0 0
      %516 = vmatpush1.bf16.msra.mxu0 0
      %517 = vmatprep.subr.bf16.mxu0 0
      %518 = vmatpush1.bf16.msra.mxu0 0
      %519 = vmatprep.mubr.bf16.mxu0 0
      %520 = vmatmul.mubr.bf16.gmra.mrb[0].mxu0 %v253
      %v521 = vpop.f32.mrb[0].mxu0
      %v522 = vadd.f32 %v388, %v521
      %v523 = vpop.f32.mrb[0].mxu0
      %v524 = vadd.f32 %v390, %v523
      %v525 = vpop.f32.mrb[0].mxu0
      %v526 = vadd.f32 %v392, %v525
      %v527 = vpop.f32.mrb[0].mxu0
      %v528 = vadd.f32 %v394, %v527
      %529 = vmatprep.mubr.bf16.mxu0 0
      %530 = vmatmul.mubr.bf16.gmra.mrb[0].mxu0 %v404
      %v531 = vpop.f32.mrb[0].mxu0
      %v532 = vadd.f32 %v398, %v531
      %v533 = vpop.f32.mrb[0].mxu0
      %v534 = vadd.f32 %v400, %v533
      %v535 = vpop.f32.mrb[0].mxu0
      %v536 = vpop.f32.mrb[0].mxu0
      %537 = vdwg.mxu0
      %v538 = vld [vmem:[%s197] sm:$0xe]
      %s539 = scalar_lea.vmem %s1, 256
      %v540 = vld [vmem:[%s539] sm:$0xff]
      %v541 = vld [vmem:[%s539 + $0x8] sm:$0xff]
      %v542 = vld [vmem:[%s539 + $0x10] sm:$0xff]
      %v543 = vld [vmem:[%s539 + $0x18] sm:$0xff]
      %v544 = vld [vmem:[%s539 + $0x20] sm:$0xff]
      %v545 = vld [vmem:[%s539 + $0x28] sm:$0xff]
      %v546 = vld [vmem:[%s539 + $0x30] sm:$0xff]
      %v547 = vld [vmem:[%s539 + $0x38] sm:$0xff]
      %v548 = vld [vmem:[%s539 + $0x40] sm:$0xff]
      %v549 = vld [vmem:[%s539 + $0x48] sm:$0xff]
      %v550 = vld [vmem:[%s539 + $0x50] sm:$0xff]
      %v551 = vld [vmem:[%s539 + $0x58] sm:$0xff]
      %v552 = vld [vmem:[%s539 + $0x60] sm:$0xff]
      %v553 = vld [vmem:[%s539 + $0x68] sm:$0xff]
      %v554 = vld [vmem:[%s539 + $0x70] sm:$0xff]
      %v555 = vld [vmem:[%s539 + $0x78] sm:$0xff]
      %v557 = vunpack.c.l.b16 %v538
      %v558 = vpack.c.b16 %v250, %v557
      %vm559 = vcmask 1046528
      %v560 = vrot.slane %v558, 1
      %v561 = vrot.slane %v254, 1
      %v562 = vsel %vm559, %v560, %v561
      %v581 = vunpack.c.l.b16 %v540
      %v582 = vunpack.c.h.b16 %v540
      %v583 = vunpack.c.l.b16 %v541
      %v584 = vunpack.c.h.b16 %v541
      %v585 = vunpack.c.l.b16 %v542
      %v586 = vunpack.c.h.b16 %v542
      %v587 = vunpack.c.l.b16 %v543
      %v588 = vunpack.c.h.b16 %v543
      %v589 = vunpack.c.l.b16 %v544
      %v590 = vunpack.c.h.b16 %v544
      %v591 = vunpack.c.l.b16 %v545
      %v592 = vunpack.c.h.b16 %v545
      %v593 = vunpack.c.l.b16 %v546
      %v594 = vunpack.c.h.b16 %v546
      %v595 = vunpack.c.l.b16 %v547
      %v596 = vunpack.c.h.b16 %v547
      %v597 = vunpack.c.l.b16 %v548
      %v598 = vunpack.c.h.b16 %v548
      %v599 = vunpack.c.l.b16 %v549
      %v600 = vunpack.c.h.b16 %v549
      %v601 = vunpack.c.l.b16 %v550
      %v602 = vunpack.c.h.b16 %v550
      %v603 = vunpack.c.l.b16 %v551
      %v604 = vunpack.c.h.b16 %v551
      %v605 = vunpack.c.l.b16 %v552
      %v606 = vunpack.c.h.b16 %v552
      %v607 = vunpack.c.l.b16 %v553
      %v608 = vunpack.c.h.b16 %v553
      %v609 = vunpack.c.l.b16 %v554
      %v610 = vunpack.c.h.b16 %v554
      %v611 = vunpack.c.l.b16 %v555
      %v612 = vunpack.c.h.b16 %v555
      %v613 = vpack.c.b16 %v583, %v581
      %v614 = vpack.c.b16 %v584, %v582
      %v615 = vpack.c.b16 %v587, %v585
      %v616 = vpack.c.b16 %v588, %v586
      %v617 = vpack.c.b16 %v591, %v589
      %v618 = vpack.c.b16 %v592, %v590
      %v619 = vpack.c.b16 %v595, %v593
      %v620 = vpack.c.b16 %v596, %v594
      %v621 = vpack.c.b16 %v599, %v597
      %v622 = vpack.c.b16 %v600, %v598
      %v623 = vpack.c.b16 %v603, %v601
      %v624 = vpack.c.b16 %v604, %v602
      %v625 = vpack.c.b16 %v607, %v605
      %v626 = vpack.c.b16 %v608, %v606
      %v627 = vpack.c.b16 %v611, %v609
      %v628 = vpack.c.b16 %v612, %v610
      %645 = vmatprep.subr.bf16.mxu0 %v614
      %646 = vmatpush1.bf16.msra.mxu0 %v613
      %647 = vmatprep.subr.bf16.mxu0 %v616
      %648 = vmatpush1.bf16.msra.mxu0 %v615
      %649 = vmatprep.subr.bf16.mxu0 %v618
      %650 = vmatpush1.bf16.msra.mxu0 %v617
      %651 = vmatprep.subr.bf16.mxu0 %v620
      %652 = vmatpush1.bf16.msra.mxu0 %v619
      %653 = vmatprep.subr.bf16.mxu0 %v622
      %654 = vmatpush1.bf16.msra.mxu0 %v621
      %655 = vmatprep.subr.bf16.mxu0 %v624
      %656 = vmatpush1.bf16.msra.mxu0 %v623
      %657 = vmatprep.subr.bf16.mxu0 %v626
      %658 = vmatpush1.bf16.msra.mxu0 %v625
      %659 = vmatprep.subr.bf16.mxu0 %v628
      %660 = vmatpush1.bf16.msra.mxu0 %v627
      %661 = vmatprep.subr.bf16.mxu0 0
      %662 = vmatpush1.bf16.msra.mxu0 0
      %663 = vmatprep.subr.bf16.mxu0 0
      %664 = vmatpush1.bf16.msra.mxu0 0
      %665 = vmatprep.subr.bf16.mxu0 0
      %666 = vmatpush1.bf16.msra.mxu0 0
      %667 = vmatprep.subr.bf16.mxu0 0
      %668 = vmatpush1.bf16.msra.mxu0 0
      %669 = vmatprep.subr.bf16.mxu0 0
      %670 = vmatpush1.bf16.msra.mxu0 0
      %671 = vmatprep.subr.bf16.mxu0 0
      %672 = vmatpush1.bf16.msra.mxu0 0
      %673 = vmatprep.subr.bf16.mxu0 0
      %674 = vmatpush1.bf16.msra.mxu0 0
      %675 = vmatprep.subr.bf16.mxu0 0
      %676 = vmatpush1.bf16.msra.mxu0 0
      %677 = vmatprep.mubr.bf16.mxu0 0
      %678 = vmatmul.mubr.bf16.gmra.mrb[0].mxu0 %v562
      %v679 = vpop.f32.mrb[0].mxu0
      %v680 = vadd.f32 0.0, %v679
      %v681 = vpop.f32.mrb[0].mxu0
      %v682 = vadd.f32 0.0, %v681
      %v683 = vpop.f32.mrb[0].mxu0
      %v684 = vadd.f32 0.0, %v683
      %v685 = vpop.f32.mrb[0].mxu0
      %v686 = vadd.f32 0.0, %v685
      %687 = vmatprep.mubr.bf16.mxu0 0
      %688 = vmatmul.mubr.bf16.gmra.mrb[0].mxu0 %v561
      %v689 = vpop.f32.mrb[0].mxu0
      %v690 = vadd.f32 0.0, %v689
      %v691 = vpop.f32.mrb[0].mxu0
      %v692 = vadd.f32 0.0, %v691
      %v693 = vpop.f32.mrb[0].mxu0
      %v694 = vpop.f32.mrb[0].mxu0
      %695 = vdwg.mxu0
      %v696 = vadd.f32 %v522, %v680
      %v697 = vadd.f32 %v524, %v682
      %v698 = vadd.f32 %v526, %v684
      %v699 = vadd.f32 %v528, %v686
      %v700 = vadd.f32 %v532, %v690
      %v701 = vadd.f32 %v534, %v692
      %v702 = vld [vmem:[%s197] sm:$0x8]
      %v703 = vld [vmem:[%s197 + $0xc] sm:$0x7]
      %s704 = scalar_lea.vmem %s1, 384
      %v705 = vld [vmem:[%s704] sm:$0xff]
      %v706 = vld [vmem:[%s704 + $0x8] sm:$0xff]
      %v707 = vld [vmem:[%s704 + $0x10] sm:$0xff]
      %v708 = vld [vmem:[%s704 + $0x18] sm:$0xff]
      %v709 = vld [vmem:[%s704 + $0x20] sm:$0xff]
      %v710 = vld [vmem:[%s704 + $0x28] sm:$0xff]
      %v711 = vld [vmem:[%s704 + $0x30] sm:$0xff]
      %v712 = vld [vmem:[%s704 + $0x38] sm:$0xff]
      %v713 = vld [vmem:[%s704 + $0x40] sm:$0xff]
      %v714 = vld [vmem:[%s704 + $0x48] sm:$0xff]
      %v715 = vld [vmem:[%s704 + $0x50] sm:$0xff]
      %v716 = vld [vmem:[%s704 + $0x58] sm:$0xff]
      %v717 = vld [vmem:[%s704 + $0x60] sm:$0xff]
      %v718 = vld [vmem:[%s704 + $0x68] sm:$0xff]
      %v719 = vld [vmem:[%s704 + $0x70] sm:$0xff]
      %v720 = vld [vmem:[%s704 + $0x78] sm:$0xff]
      %v723 = vunpack.c.l.b16 %v702
      %v724 = vunpack.c.l.b16 %v703
      %v725 = vpack.c.b16 %v250, %v723
      %v726 = vpack.c.b16 %v724, %v251
      %vm727 = vcmask 1044480
      %v728 = vrot.slane %v725, 3
      %v729 = vrot.slane %v726, 3
      %v730 = vsel %vm727, %v728, %v729
      %v749 = vunpack.c.l.b16 %v705
      %v750 = vunpack.c.h.b16 %v705
      %v751 = vunpack.c.l.b16 %v706
      %v752 = vunpack.c.h.b16 %v706
      %v753 = vunpack.c.l.b16 %v707
      %v754 = vunpack.c.h.b16 %v707
      %v755 = vunpack.c.l.b16 %v708
      %v756 = vunpack.c.h.b16 %v708
      %v757 = vunpack.c.l.b16 %v709
      %v758 = vunpack.c.h.b16 %v709
      %v759 = vunpack.c.l.b16 %v710
      %v760 = vunpack.c.h.b16 %v710
      %v761 = vunpack.c.l.b16 %v711
      %v762 = vunpack.c.h.b16 %v711
      %v763 = vunpack.c.l.b16 %v712
      %v764 = vunpack.c.h.b16 %v712
      %v765 = vunpack.c.l.b16 %v713
      %v766 = vunpack.c.h.b16 %v713
      %v767 = vunpack.c.l.b16 %v714
      %v768 = vunpack.c.h.b16 %v714
      %v769 = vunpack.c.l.b16 %v715
      %v770 = vunpack.c.h.b16 %v715
      %v771 = vunpack.c.l.b16 %v716
      %v772 = vunpack.c.h.b16 %v716
      %v773 = vunpack.c.l.b16 %v717
      %v774 = vunpack.c.h.b16 %v717
      %v775 = vunpack.c.l.b16 %v718
      %v776 = vunpack.c.h.b16 %v718
      %v777 = vunpack.c.l.b16 %v719
      %v778 = vunpack.c.h.b16 %v719
      %v779 = vunpack.c.l.b16 %v720
      %v780 = vunpack.c.h.b16 %v720
      %v781 = vpack.c.b16 %v751, %v749
      %v782 = vpack.c.b16 %v752, %v750
      %v783 = vpack.c.b16 %v755, %v753
      %v784 = vpack.c.b16 %v756, %v754
      %v785 = vpack.c.b16 %v759, %v757
      %v786 = vpack.c.b16 %v760, %v758
      %v787 = vpack.c.b16 %v763, %v761
      %v788 = vpack.c.b16 %v764, %v762
      %v789 = vpack.c.b16 %v767, %v765
      %v790 = vpack.c.b16 %v768, %v766
      %v791 = vpack.c.b16 %v771, %v769
      %v792 = vpack.c.b16 %v772, %v770
      %v793 = vpack.c.b16 %v775, %v773
      %v794 = vpack.c.b16 %v776, %v774
      %v795 = vpack.c.b16 %v779, %v777
      %v796 = vpack.c.b16 %v780, %v778
      %813 = vmatprep.subr.bf16.mxu0 %v782
      %814 = vmatpush1.bf16.msra.mxu0 %v781
      %815 = vmatprep.subr.bf16.mxu0 %v784
      %816 = vmatpush1.bf16.msra.mxu0 %v783
      %817 = vmatprep.subr.bf16.mxu0 %v786
      %818 = vmatpush1.bf16.msra.mxu0 %v785
      %819 = vmatprep.subr.bf16.mxu0 %v788
      %820 = vmatpush1.bf16.msra.mxu0 %v787
      %821 = vmatprep.subr.bf16.mxu0 %v790
      %822 = vmatpush1.bf16.msra.mxu0 %v789
      %823 = vmatprep.subr.bf16.mxu0 %v792
      %824 = vmatpush1.bf16.msra.mxu0 %v791
      %825 = vmatprep.subr.bf16.mxu0 %v794
      %826 = vmatpush1.bf16.msra.mxu0 %v793
      %827 = vmatprep.subr.bf16.mxu0 %v796
      %828 = vmatpush1.bf16.msra.mxu0 %v795
      %829 = vmatprep.subr.bf16.mxu0 0
      %830 = vmatpush1.bf16.msra.mxu0 0
      %831 = vmatprep.subr.bf16.mxu0 0
      %832 = vmatpush1.bf16.msra.mxu0 0
      %833 = vmatprep.subr.bf16.mxu0 0
      %834 = vmatpush1.bf16.msra.mxu0 0
      %835 = vmatprep.subr.bf16.mxu0 0
      %836 = vmatpush1.bf16.msra.mxu0 0
      %837 = vmatprep.subr.bf16.mxu0 0
      %838 = vmatpush1.bf16.msra.mxu0 0
      %839 = vmatprep.subr.bf16.mxu0 0
      %840 = vmatpush1.bf16.msra.mxu0 0
      %841 = vmatprep.subr.bf16.mxu0 0
      %842 = vmatpush1.bf16.msra.mxu0 0
      %843 = vmatprep.subr.bf16.mxu0 0
      %844 = vmatpush1.bf16.msra.mxu0 0
      %845 = vmatprep.mubr.bf16.mxu0 0
      %846 = vmatmul.mubr.bf16.gmra.mrb[0].mxu0 %v730
      %v847 = vpop.f32.mrb[0].mxu0
      %v848 = vadd.f32 0.0, %v847
      %v849 = vpop.f32.mrb[0].mxu0
      %v850 = vadd.f32 0.0, %v849
      %v851 = vpop.f32.mrb[0].mxu0
      %v852 = vadd.f32 0.0, %v851
      %v853 = vpop.f32.mrb[0].mxu0
      %v854 = vadd.f32 0.0, %v853
      %855 = vmatprep.mubr.bf16.mxu0 0
      %856 = vmatmul.mubr.bf16.gmra.mrb[0].mxu0 %v729
      %v857 = vpop.f32.mrb[0].mxu0
      %v858 = vadd.f32 0.0, %v857
      %v859 = vpop.f32.mrb[0].mxu0
      %v860 = vadd.f32 0.0, %v859
      %v861 = vpop.f32.mrb[0].mxu0
      %v862 = vpop.f32.mrb[0].mxu0
      %863 = vdwg.mxu0
      %v864 = vadd.f32 %v696, %v848
      %v865 = vadd.f32 %v697, %v850
      %v866 = vadd.f32 %v698, %v852
      %v867 = vadd.f32 %v699, %v854
      %v868 = vadd.f32 %v700, %v858
      %v869 = vadd.f32 %v701, %v860
      %v870 = vld [vmem:[%s197 + $0xc] sm:$0xf]
      %s871 = scalar_lea.vmem %s1, 512
      %v872 = vld [vmem:[%s871] sm:$0xff]
      %v873 = vld [vmem:[%s871 + $0x8] sm:$0xff]
      %v874 = vld [vmem:[%s871 + $0x10] sm:$0xff]
      %v875 = vld [vmem:[%s871 + $0x18] sm:$0xff]
      %v876 = vld [vmem:[%s871 + $0x20] sm:$0xff]
      %v877 = vld [vmem:[%s871 + $0x28] sm:$0xff]
      %v878 = vld [vmem:[%s871 + $0x30] sm:$0xff]
      %v879 = vld [vmem:[%s871 + $0x38] sm:$0xff]
      %v880 = vld [vmem:[%s871 + $0x40] sm:$0xff]
      %v881 = vld [vmem:[%s871 + $0x48] sm:$0xff]
      %v882 = vld [vmem:[%s871 + $0x50] sm:$0xff]
      %v883 = vld [vmem:[%s871 + $0x58] sm:$0xff]
      %v884 = vld [vmem:[%s871 + $0x60] sm:$0xff]
      %v885 = vld [vmem:[%s871 + $0x68] sm:$0xff]
      %v886 = vld [vmem:[%s871 + $0x70] sm:$0xff]
      %v887 = vld [vmem:[%s871 + $0x78] sm:$0xff]
      %v889 = vunpack.c.l.b16 %v870
      %v890 = vpack.c.b16 %v889, %v251
      %vm891 = vsmask.f32 4352
      %v893 = vshrl.u32 %v725, 16
      %v895 = vrot.slane %v893, 3
      %v896 = vshll.u32 %v725, 16
      %v898 = vrot.slane %v896, 4
      %v899 = vor.u32 %v895, %v898
      %v901 = vshrl.u32 %v890, 16
      %v903 = vrot.slane %v901, 3
      %v904 = vshll.u32 %v890, 16
      %v906 = vrot.slane %v904, 4
      %v907 = vor.u32 %v903, %v906
      %v908 = vsel %vm891, %v899, %v907
      %v927 = vunpack.c.l.b16 %v872
      %v928 = vunpack.c.h.b16 %v872
      %v929 = vunpack.c.l.b16 %v873
      %v930 = vunpack.c.h.b16 %v873
      %v931 = vunpack.c.l.b16 %v874
      %v932 = vunpack.c.h.b16 %v874
      %v933 = vunpack.c.l.b16 %v875
      %v934 = vunpack.c.h.b16 %v875
      %v935 = vunpack.c.l.b16 %v876
      %v936 = vunpack.c.h.b16 %v876
      %v937 = vunpack.c.l.b16 %v877
      %v938 = vunpack.c.h.b16 %v877
      %v939 = vunpack.c.l.b16 %v878
      %v940 = vunpack.c.h.b16 %v878
      %v941 = vunpack.c.l.b16 %v879
      %v942 = vunpack.c.h.b16 %v879
      %v943 = vunpack.c.l.b16 %v880
      %v944 = vunpack.c.h.b16 %v880
      %v945 = vunpack.c.l.b16 %v881
      %v946 = vunpack.c.h.b16 %v881
      %v947 = vunpack.c.l.b16 %v882
      %v948 = vunpack.c.h.b16 %v882
      %v949 = vunpack.c.l.b16 %v883
      %v950 = vunpack.c.h.b16 %v883
      %v951 = vunpack.c.l.b16 %v884
      %v952 = vunpack.c.h.b16 %v884
      %v953 = vunpack.c.l.b16 %v885
      %v954 = vunpack.c.h.b16 %v885
      %v955 = vunpack.c.l.b16 %v886
      %v956 = vunpack.c.h.b16 %v886
      %v957 = vunpack.c.l.b16 %v887
      %v958 = vunpack.c.h.b16 %v887
      %v959 = vpack.c.b16 %v929, %v927
      %v960 = vpack.c.b16 %v930, %v928
      %v961 = vpack.c.b16 %v933, %v931
      %v962 = vpack.c.b16 %v934, %v932
      %v963 = vpack.c.b16 %v937, %v935
      %v964 = vpack.c.b16 %v938, %v936
      %v965 = vpack.c.b16 %v941, %v939
      %v966 = vpack.c.b16 %v942, %v940
      %v967 = vpack.c.b16 %v945, %v943
      %v968 = vpack.c.b16 %v946, %v944
      %v969 = vpack.c.b16 %v949, %v947
      %v970 = vpack.c.b16 %v950, %v948
      %v971 = vpack.c.b16 %v953, %v951
      %v972 = vpack.c.b16 %v954, %v952
      %v973 = vpack.c.b16 %v957, %v955
      %v974 = vpack.c.b16 %v958, %v956
      %991 = vmatprep.subr.bf16.mxu0 %v960
      %992 = vmatpush1.bf16.msra.mxu0 %v959
      %993 = vmatprep.subr.bf16.mxu0 %v962
      %994 = vmatpush1.bf16.msra.mxu0 %v961
      %995 = vmatprep.subr.bf16.mxu0 %v964
      %996 = vmatpush1.bf16.msra.mxu0 %v963
      %997 = vmatprep.subr.bf16.mxu0 %v966
      %998 = vmatpush1.bf16.msra.mxu0 %v965
      %999 = vmatprep.subr.bf16.mxu0 %v968
      %1000 = vmatpush1.bf16.msra.mxu0 %v967
      %1001 = vmatprep.subr.bf16.mxu0 %v970
      %1002 = vmatpush1.bf16.msra.mxu0 %v969
      %1003 = vmatprep.subr.bf16.mxu0 %v972
      %1004 = vmatpush1.bf16.msra.mxu0 %v971
      %1005 = vmatprep.subr.bf16.mxu0 %v974
      %1006 = vmatpush1.bf16.msra.mxu0 %v973
      %1007 = vmatprep.subr.bf16.mxu0 0
      %1008 = vmatpush1.bf16.msra.mxu0 0
      %1009 = vmatprep.subr.bf16.mxu0 0
      %1010 = vmatpush1.bf16.msra.mxu0 0
      %1011 = vmatprep.subr.bf16.mxu0 0
      %1012 = vmatpush1.bf16.msra.mxu0 0
      %1013 = vmatprep.subr.bf16.mxu0 0
      %1014 = vmatpush1.bf16.msra.mxu0 0
      %1015 = vmatprep.subr.bf16.mxu0 0
      %1016 = vmatpush1.bf16.msra.mxu0 0
      %1017 = vmatprep.subr.bf16.mxu0 0
      %1018 = vmatpush1.bf16.msra.mxu0 0
      %1019 = vmatprep.subr.bf16.mxu0 0
      %1020 = vmatpush1.bf16.msra.mxu0 0
      %1021 = vmatprep.subr.bf16.mxu0 0
      %1022 = vmatpush1.bf16.msra.mxu0 0
      %1023 = vmatprep.mubr.bf16.mxu0 0
      %1024 = vmatmul.mubr.bf16.gmra.mrb[0].mxu0 %v908
      %v1025 = vpop.f32.mrb[0].mxu0
      %v1026 = vadd.f32 0.0, %v1025
      %v1027 = vpop.f32.mrb[0].mxu0
      %v1028 = vadd.f32 0.0, %v1027
      %v1029 = vpop.f32.mrb[0].mxu0
      %v1030 = vadd.f32 0.0, %v1029
      %v1031 = vpop.f32.mrb[0].mxu0
      %v1032 = vadd.f32 0.0, %v1031
      %1033 = vmatprep.mubr.bf16.mxu0 0
      %1034 = vmatmul.mubr.bf16.gmra.mrb[0].mxu0 %v907
      %v1035 = vpop.f32.mrb[0].mxu0
      %v1036 = vadd.f32 0.0, %v1035
      %v1037 = vpop.f32.mrb[0].mxu0
      %v1038 = vadd.f32 0.0, %v1037
      %v1039 = vpop.f32.mrb[0].mxu0
      %v1040 = vpop.f32.mrb[0].mxu0
      %1041 = vdwg.mxu0
      %v1042 = vadd.f32 %v864, %v1026
      %v1043 = vadd.f32 %v865, %v1028
      %v1044 = vadd.f32 %v866, %v1030
      %v1045 = vadd.f32 %v867, %v1032
      %v1046 = vadd.f32 %v868, %v1036
      %v1047 = vadd.f32 %v869, %v1038
      %s1048 = scalar_lea.vmem %s1, 640
      %v1049 = vld [vmem:[%s1048] sm:$0xff]
      %v1050 = vld [vmem:[%s1048 + $0x8] sm:$0xff]
      %v1051 = vld [vmem:[%s1048 + $0x10] sm:$0xff]
      %v1052 = vld [vmem:[%s1048 + $0x18] sm:$0xff]
      %v1053 = vld [vmem:[%s1048 + $0x20] sm:$0xff]
      %v1054 = vld [vmem:[%s1048 + $0x28] sm:$0xff]
      %v1055 = vld [vmem:[%s1048 + $0x30] sm:$0xff]
      %v1056 = vld [vmem:[%s1048 + $0x38] sm:$0xff]
      %v1057 = vld [vmem:[%s1048 + $0x40] sm:$0xff]
      %v1058 = vld [vmem:[%s1048 + $0x48] sm:$0xff]
      %v1059 = vld [vmem:[%s1048 + $0x50] sm:$0xff]
      %v1060 = vld [vmem:[%s1048 + $0x58] sm:$0xff]
      %v1061 = vld [vmem:[%s1048 + $0x60] sm:$0xff]
      %v1062 = vld [vmem:[%s1048 + $0x68] sm:$0xff]
      %v1063 = vld [vmem:[%s1048 + $0x70] sm:$0xff]
      %v1064 = vld [vmem:[%s1048 + $0x78] sm:$0xff]
      %v1065 = vpack.c.b16 %v251, %v250
      %v1066 = vpack.c.b16 %v889, %v889
      %v1085 = vunpack.c.l.b16 %v1049
      %v1086 = vunpack.c.h.b16 %v1049
      %v1087 = vunpack.c.l.b16 %v1050
      %v1088 = vunpack.c.h.b16 %v1050
      %v1089 = vunpack.c.l.b16 %v1051
      %v1090 = vunpack.c.h.b16 %v1051
      %v1091 = vunpack.c.l.b16 %v1052
      %v1092 = vunpack.c.h.b16 %v1052
      %v1093 = vunpack.c.l.b16 %v1053
      %v1094 = vunpack.c.h.b16 %v1053
      %v1095 = vunpack.c.l.b16 %v1054
      %v1096 = vunpack.c.h.b16 %v1054
      %v1097 = vunpack.c.l.b16 %v1055
      %v1098 = vunpack.c.h.b16 %v1055
      %v1099 = vunpack.c.l.b16 %v1056
      %v1100 = vunpack.c.h.b16 %v1056
      %v1101 = vunpack.c.l.b16 %v1057
      %v1102 = vunpack.c.h.b16 %v1057
      %v1103 = vunpack.c.l.b16 %v1058
      %v1104 = vunpack.c.h.b16 %v1058
      %v1105 = vunpack.c.l.b16 %v1059
      %v1106 = vunpack.c.h.b16 %v1059
      %v1107 = vunpack.c.l.b16 %v1060
      %v1108 = vunpack.c.h.b16 %v1060
      %v1109 = vunpack.c.l.b16 %v1061
      %v1110 = vunpack.c.h.b16 %v1061
      %v1111 = vunpack.c.l.b16 %v1062
      %v1112 = vunpack.c.h.b16 %v1062
      %v1113 = vunpack.c.l.b16 %v1063
      %v1114 = vunpack.c.h.b16 %v1063
      %v1115 = vunpack.c.l.b16 %v1064
      %v1116 = vunpack.c.h.b16 %v1064
      %v1117 = vpack.c.b16 %v1087, %v1085
      %v1118 = vpack.c.b16 %v1088, %v1086
      %v1119 = vpack.c.b16 %v1091, %v1089
      %v1120 = vpack.c.b16 %v1092, %v1090
      %v1121 = vpack.c.b16 %v1095, %v1093
      %v1122 = vpack.c.b16 %v1096, %v1094
      %v1123 = vpack.c.b16 %v1099, %v1097
      %v1124 = vpack.c.b16 %v1100, %v1098
      %v1125 = vpack.c.b16 %v1103, %v1101
      %v1126 = vpack.c.b16 %v1104, %v1102
      %v1127 = vpack.c.b16 %v1107, %v1105
      %v1128 = vpack.c.b16 %v1108, %v1106
      %v1129 = vpack.c.b16 %v1111, %v1109
      %v1130 = vpack.c.b16 %v1112, %v1110
      %v1131 = vpack.c.b16 %v1115, %v1113
      %v1132 = vpack.c.b16 %v1116, %v1114
      %1149 = vmatprep.subr.bf16.mxu0 %v1118
      %1150 = vmatpush1.bf16.msra.mxu0 %v1117
      %1151 = vmatprep.subr.bf16.mxu0 %v1120
      %1152 = vmatpush1.bf16.msra.mxu0 %v1119
      %1153 = vmatprep.subr.bf16.mxu0 %v1122
      %1154 = vmatpush1.bf16.msra.mxu0 %v1121
      %1155 = vmatprep.subr.bf16.mxu0 %v1124
      %1156 = vmatpush1.bf16.msra.mxu0 %v1123
      %1157 = vmatprep.subr.bf16.mxu0 %v1126
      %1158 = vmatpush1.bf16.msra.mxu0 %v1125
      %1159 = vmatprep.subr.bf16.mxu0 %v1128
      %1160 = vmatpush1.bf16.msra.mxu0 %v1127
      %1161 = vmatprep.subr.bf16.mxu0 %v1130
      %1162 = vmatpush1.bf16.msra.mxu0 %v1129
      %1163 = vmatprep.subr.bf16.mxu0 %v1132
      %1164 = vmatpush1.bf16.msra.mxu0 %v1131
      %1165 = vmatprep.subr.bf16.mxu0 0
      %1166 = vmatpush1.bf16.msra.mxu0 0
      %1167 = vmatprep.subr.bf16.mxu0 0
      %1168 = vmatpush1.bf16.msra.mxu0 0
      %1169 = vmatprep.subr.bf16.mxu0 0
      %1170 = vmatpush1.bf16.msra.mxu0 0
      %1171 = vmatprep.subr.bf16.mxu0 0
      %1172 = vmatpush1.bf16.msra.mxu0 0
      %1173 = vmatprep.subr.bf16.mxu0 0
      %1174 = vmatpush1.bf16.msra.mxu0 0
      %1175 = vmatprep.subr.bf16.mxu0 0
      %1176 = vmatpush1.bf16.msra.mxu0 0
      %1177 = vmatprep.subr.bf16.mxu0 0
      %1178 = vmatpush1.bf16.msra.mxu0 0
      %1179 = vmatprep.subr.bf16.mxu0 0
      %1180 = vmatpush1.bf16.msra.mxu0 0
      %1181 = vmatprep.mubr.bf16.mxu0 0
      %1182 = vmatmul.mubr.bf16.gmra.mrb[0].mxu0 %v1065
      %v1183 = vpop.f32.mrb[0].mxu0
      %v1184 = vadd.f32 0.0, %v1183
      %v1185 = vpop.f32.mrb[0].mxu0
      %v1186 = vadd.f32 0.0, %v1185
      %v1187 = vpop.f32.mrb[0].mxu0
      %v1188 = vadd.f32 0.0, %v1187
      %v1189 = vpop.f32.mrb[0].mxu0
      %v1190 = vadd.f32 0.0, %v1189
      %1191 = vmatprep.mubr.bf16.mxu0 0
      %1192 = vmatmul.mubr.bf16.gmra.mrb[0].mxu0 %v1066
      %v1193 = vpop.f32.mrb[0].mxu0
      %v1194 = vadd.f32 0.0, %v1193
      %v1195 = vpop.f32.mrb[0].mxu0
      %v1196 = vadd.f32 0.0, %v1195
      %v1197 = vpop.f32.mrb[0].mxu0
      %v1198 = vpop.f32.mrb[0].mxu0
      %1199 = vdwg.mxu0
      %v1200 = vadd.f32 %v1042, %v1184
      %v1201 = vadd.f32 %v1043, %v1186
      %v1202 = vadd.f32 %v1044, %v1188
      %v1203 = vadd.f32 %v1045, %v1190
      %v1204 = vadd.f32 %v1046, %v1194
      %v1205 = vadd.f32 %v1047, %v1196
      %v1206 = vld [vmem:[%s197 + $0x4] sm:$0xc]
      %v1207 = vld [vmem:[%s197 + $0x8] sm:$0xf]
      %v1208 = vld [vmem:[%s197 + $0xc] sm:$0xf]
      %v1209 = vld [vmem:[%s197 + $0x10] sm:$0x3]
      %s1210 = scalar_lea.vmem %s1, 768
      %v1211 = vld [vmem:[%s1210] sm:$0xff]
      %v1212 = vld [vmem:[%s1210 + $0x8] sm:$0xff]
      %v1213 = vld [vmem:[%s1210 + $0x10] sm:$0xff]
      %v1214 = vld [vmem:[%s1210 + $0x18] sm:$0xff]
      %v1215 = vld [vmem:[%s1210 + $0x20] sm:$0xff]
      %v1216 = vld [vmem:[%s1210 + $0x28] sm:$0xff]
      %v1217 = vld [vmem:[%s1210 + $0x30] sm:$0xff]
      %v1218 = vld [vmem:[%s1210 + $0x38] sm:$0xff]
      %v1219 = vld [vmem:[%s1210 + $0x40] sm:$0xff]
      %v1220 = vld [vmem:[%s1210 + $0x48] sm:$0xff]
      %v1221 = vld [vmem:[%s1210 + $0x50] sm:$0xff]
      %v1222 = vld [vmem:[%s1210 + $0x58] sm:$0xff]
      %v1223 = vld [vmem:[%s1210 + $0x60] sm:$0xff]
      %v1224 = vld [vmem:[%s1210 + $0x68] sm:$0xff]
      %v1225 = vld [vmem:[%s1210 + $0x70] sm:$0xff]
      %v1226 = vld [vmem:[%s1210 + $0x78] sm:$0xff]
      %v1231 = vunpack.c.l.b16 %v1206
      %v1232 = vunpack.c.l.b16 %v1207
      %v1233 = vunpack.c.l.b16 %v1208
      %v1234 = vunpack.c.l.b16 %v1209
      %v1235 = vpack.c.b16 %v1232, %v1231
      %v1236 = vpack.c.b16 %v1234, %v1233
      %vm1237 = vcmask 1045504
      %v1238 = vrot.slane %v1235, 2
      %v1239 = vrot.slane %v1236, 2
      %v1240 = vsel %vm1237, %v1238, %v1239
      %v1259 = vunpack.c.l.b16 %v1211
      %v1260 = vunpack.c.h.b16 %v1211
      %v1261 = vunpack.c.l.b16 %v1212
      %v1262 = vunpack.c.h.b16 %v1212
      %v1263 = vunpack.c.l.b16 %v1213
      %v1264 = vunpack.c.h.b16 %v1213
      %v1265 = vunpack.c.l.b16 %v1214
      %v1266 = vunpack.c.h.b16 %v1214
      %v1267 = vunpack.c.l.b16 %v1215
      %v1268 = vunpack.c.h.b16 %v1215
      %v1269 = vunpack.c.l.b16 %v1216
      %v1270 = vunpack.c.h.b16 %v1216
      %v1271 = vunpack.c.l.b16 %v1217
      %v1272 = vunpack.c.h.b16 %v1217
      %v1273 = vunpack.c.l.b16 %v1218
      %v1274 = vunpack.c.h.b16 %v1218
      %v1275 = vunpack.c.l.b16 %v1219
      %v1276 = vunpack.c.h.b16 %v1219
      %v1277 = vunpack.c.l.b16 %v1220
      %v1278 = vunpack.c.h.b16 %v1220
      %v1279 = vunpack.c.l.b16 %v1221
      %v1280 = vunpack.c.h.b16 %v1221
      %v1281 = vunpack.c.l.b16 %v1222
      %v1282 = vunpack.c.h.b16 %v1222
      %v1283 = vunpack.c.l.b16 %v1223
      %v1284 = vunpack.c.h.b16 %v1223
      %v1285 = vunpack.c.l.b16 %v1224
      %v1286 = vunpack.c.h.b16 %v1224
      %v1287 = vunpack.c.l.b16 %v1225
      %v1288 = vunpack.c.h.b16 %v1225
      %v1289 = vunpack.c.l.b16 %v1226
      %v1290 = vunpack.c.h.b16 %v1226
      %v1291 = vpack.c.b16 %v1261, %v1259
      %v1292 = vpack.c.b16 %v1262, %v1260
      %v1293 = vpack.c.b16 %v1265, %v1263
      %v1294 = vpack.c.b16 %v1266, %v1264
      %v1295 = vpack.c.b16 %v1269, %v1267
      %v1296 = vpack.c.b16 %v1270, %v1268
      %v1297 = vpack.c.b16 %v1273, %v1271
      %v1298 = vpack.c.b16 %v1274, %v1272
      %v1299 = vpack.c.b16 %v1277, %v1275
      %v1300 = vpack.c.b16 %v1278, %v1276
      %v1301 = vpack.c.b16 %v1281, %v1279
      %v1302 = vpack.c.b16 %v1282, %v1280
      %v1303 = vpack.c.b16 %v1285, %v1283
      %v1304 = vpack.c.b16 %v1286, %v1284
      %v1305 = vpack.c.b16 %v1289, %v1287
      %v1306 = vpack.c.b16 %v1290, %v1288
      %1323 = vmatprep.subr.bf16.mxu0 %v1292
      %1324 = vmatpush1.bf16.msra.mxu0 %v1291
      %1325 = vmatprep.subr.bf16.mxu0 %v1294
      %1326 = vmatpush1.bf16.msra.mxu0 %v1293
      %1327 = vmatprep.subr.bf16.mxu0 %v1296
      %1328 = vmatpush1.bf16.msra.mxu0 %v1295
      %1329 = vmatprep.subr.bf16.mxu0 %v1298
      %1330 = vmatpush1.bf16.msra.mxu0 %v1297
      %1331 = vmatprep.subr.bf16.mxu0 %v1300
      %1332 = vmatpush1.bf16.msra.mxu0 %v1299
      %1333 = vmatprep.subr.bf16.mxu0 %v1302
      %1334 = vmatpush1.bf16.msra.mxu0 %v1301
      %1335 = vmatprep.subr.bf16.mxu0 %v1304
      %1336 = vmatpush1.bf16.msra.mxu0 %v1303
      %1337 = vmatprep.subr.bf16.mxu0 %v1306
      %1338 = vmatpush1.bf16.msra.mxu0 %v1305
      %1339 = vmatprep.subr.bf16.mxu0 0
      %1340 = vmatpush1.bf16.msra.mxu0 0
      %1341 = vmatprep.subr.bf16.mxu0 0
      %1342 = vmatpush1.bf16.msra.mxu0 0
      %1343 = vmatprep.subr.bf16.mxu0 0
      %1344 = vmatpush1.bf16.msra.mxu0 0
      %1345 = vmatprep.subr.bf16.mxu0 0
      %1346 = vmatpush1.bf16.msra.mxu0 0
      %1347 = vmatprep.subr.bf16.mxu0 0
      %1348 = vmatpush1.bf16.msra.mxu0 0
      %1349 = vmatprep.subr.bf16.mxu0 0
      %1350 = vmatpush1.bf16.msra.mxu0 0
      %1351 = vmatprep.subr.bf16.mxu0 0
      %1352 = vmatpush1.bf16.msra.mxu0 0
      %1353 = vmatprep.subr.bf16.mxu0 0
      %1354 = vmatpush1.bf16.msra.mxu0 0
      %1355 = vmatprep.mubr.bf16.mxu0 0
      %1356 = vmatmul.mubr.bf16.gmra.mrb[0].mxu0 %v1240
      %v1357 = vpop.f32.mrb[0].mxu0
      %v1358 = vadd.f32 0.0, %v1357
      %v1359 = vpop.f32.mrb[0].mxu0
      %v1360 = vadd.f32 0.0, %v1359
      %v1361 = vpop.f32.mrb[0].mxu0
      %v1362 = vadd.f32 0.0, %v1361
      %v1363 = vpop.f32.mrb[0].mxu0
      %v1364 = vadd.f32 0.0, %v1363
      %1365 = vmatprep.mubr.bf16.mxu0 0
      %1366 = vmatmul.mubr.bf16.gmra.mrb[0].mxu0 %v1239
      %v1367 = vpop.f32.mrb[0].mxu0
      %v1368 = vadd.f32 0.0, %v1367
      %v1369 = vpop.f32.mrb[0].mxu0
      %v1370 = vadd.f32 0.0, %v1369
      %v1371 = vpop.f32.mrb[0].mxu0
      %v1372 = vpop.f32.mrb[0].mxu0
      %1373 = vdwg.mxu0
      %v1374 = vadd.f32 %v1200, %v1358
      %v1375 = vadd.f32 %v1201, %v1360
      %v1376 = vadd.f32 %v1202, %v1362
      %v1377 = vadd.f32 %v1203, %v1364
      %v1378 = vadd.f32 %v1204, %v1368
      %v1379 = vadd.f32 %v1205, %v1370
      %v1380 = vld [vmem:[%s197 + $0x10] sm:$0x7]
      %s1381 = scalar_lea.vmem %s1, 896
      %v1382 = vld [vmem:[%s1381] sm:$0xff]
      %v1383 = vld [vmem:[%s1381 + $0x8] sm:$0xff]
      %v1384 = vld [vmem:[%s1381 + $0x10] sm:$0xff]
      %v1385 = vld [vmem:[%s1381 + $0x18] sm:$0xff]
      %v1386 = vld [vmem:[%s1381 + $0x20] sm:$0xff]
      %v1387 = vld [vmem:[%s1381 + $0x28] sm:$0xff]
      %v1388 = vld [vmem:[%s1381 + $0x30] sm:$0xff]
      %v1389 = vld [vmem:[%s1381 + $0x38] sm:$0xff]
      %v1390 = vld [vmem:[%s1381 + $0x40] sm:$0xff]
      %v1391 = vld [vmem:[%s1381 + $0x48] sm:$0xff]
      %v1392 = vld [vmem:[%s1381 + $0x50] sm:$0xff]
      %v1393 = vld [vmem:[%s1381 + $0x58] sm:$0xff]
      %v1394 = vld [vmem:[%s1381 + $0x60] sm:$0xff]
      %v1395 = vld [vmem:[%s1381 + $0x68] sm:$0xff]
      %v1396 = vld [vmem:[%s1381 + $0x70] sm:$0xff]
      %v1397 = vld [vmem:[%s1381 + $0x78] sm:$0xff]
      %v1399 = vunpack.c.l.b16 %v1380
      %v1400 = vpack.c.b16 %v1399, %v1233
      %vm1401 = vsmask.f32 5376
      %v1403 = vshrl.u32 %v1235, 16
      %v1405 = vrot.slane %v1403, 2
      %v1406 = vshll.u32 %v1235, 16
      %v1408 = vrot.slane %v1406, 3
      %v1409 = vor.u32 %v1405, %v1408
      %v1411 = vshrl.u32 %v1400, 16
      %v1413 = vrot.slane %v1411, 2
      %v1414 = vshll.u32 %v1400, 16
      %v1416 = vrot.slane %v1414, 3
      %v1417 = vor.u32 %v1413, %v1416
      %v1418 = vsel %vm1401, %v1409, %v1417
      %v1437 = vunpack.c.l.b16 %v1382
      %v1438 = vunpack.c.h.b16 %v1382
      %v1439 = vunpack.c.l.b16 %v1383
      %v1440 = vunpack.c.h.b16 %v1383
      %v1441 = vunpack.c.l.b16 %v1384
      %v1442 = vunpack.c.h.b16 %v1384
      %v1443 = vunpack.c.l.b16 %v1385
      %v1444 = vunpack.c.h.b16 %v1385
      %v1445 = vunpack.c.l.b16 %v1386
      %v1446 = vunpack.c.h.b16 %v1386
      %v1447 = vunpack.c.l.b16 %v1387
      %v1448 = vunpack.c.h.b16 %v1387
      %v1449 = vunpack.c.l.b16 %v1388
      %v1450 = vunpack.c.h.b16 %v1388
      %v1451 = vunpack.c.l.b16 %v1389
      %v1452 = vunpack.c.h.b16 %v1389
      %v1453 = vunpack.c.l.b16 %v1390
      %v1454 = vunpack.c.h.b16 %v1390
      %v1455 = vunpack.c.l.b16 %v1391
      %v1456 = vunpack.c.h.b16 %v1391
      %v1457 = vunpack.c.l.b16 %v1392
      %v1458 = vunpack.c.h.b16 %v1392
      %v1459 = vunpack.c.l.b16 %v1393
      %v1460 = vunpack.c.h.b16 %v1393
      %v1461 = vunpack.c.l.b16 %v1394
      %v1462 = vunpack.c.h.b16 %v1394
      %v1463 = vunpack.c.l.b16 %v1395
      %v1464 = vunpack.c.h.b16 %v1395
      %v1465 = vunpack.c.l.b16 %v1396
      %v1466 = vunpack.c.h.b16 %v1396
      %v1467 = vunpack.c.l.b16 %v1397
      %v1468 = vunpack.c.h.b16 %v1397
      %v1469 = vpack.c.b16 %v1439, %v1437
      %v1470 = vpack.c.b16 %v1440, %v1438
      %v1471 = vpack.c.b16 %v1443, %v1441
      %v1472 = vpack.c.b16 %v1444, %v1442
      %v1473 = vpack.c.b16 %v1447, %v1445
      %v1474 = vpack.c.b16 %v1448, %v1446
      %v1475 = vpack.c.b16 %v1451, %v1449
      %v1476 = vpack.c.b16 %v1452, %v1450
      %v1477 = vpack.c.b16 %v1455, %v1453
      %v1478 = vpack.c.b16 %v1456, %v1454
      %v1479 = vpack.c.b16 %v1459, %v1457
      %v1480 = vpack.c.b16 %v1460, %v1458
      %v1481 = vpack.c.b16 %v1463, %v1461
      %v1482 = vpack.c.b16 %v1464, %v1462
      %v1483 = vpack.c.b16 %v1467, %v1465
      %v1484 = vpack.c.b16 %v1468, %v1466
      %1501 = vmatprep.subr.bf16.mxu0 %v1470
      %1502 = vmatpush1.bf16.msra.mxu0 %v1469
      %1503 = vmatprep.subr.bf16.mxu0 %v1472
      %1504 = vmatpush1.bf16.msra.mxu0 %v1471
      %1505 = vmatprep.subr.bf16.mxu0 %v1474
      %1506 = vmatpush1.bf16.msra.mxu0 %v1473
      %1507 = vmatprep.subr.bf16.mxu0 %v1476
      %1508 = vmatpush1.bf16.msra.mxu0 %v1475
      %1509 = vmatprep.subr.bf16.mxu0 %v1478
      %1510 = vmatpush1.bf16.msra.mxu0 %v1477
      %1511 = vmatprep.subr.bf16.mxu0 %v1480
      %1512 = vmatpush1.bf16.msra.mxu0 %v1479
      %1513 = vmatprep.subr.bf16.mxu0 %v1482
      %1514 = vmatpush1.bf16.msra.mxu0 %v1481
      %1515 = vmatprep.subr.bf16.mxu0 %v1484
      %1516 = vmatpush1.bf16.msra.mxu0 %v1483
      %1517 = vmatprep.subr.bf16.mxu0 0
      %1518 = vmatpush1.bf16.msra.mxu0 0
      %1519 = vmatprep.subr.bf16.mxu0 0
      %1520 = vmatpush1.bf16.msra.mxu0 0
      %1521 = vmatprep.subr.bf16.mxu0 0
      %1522 = vmatpush1.bf16.msra.mxu0 0
      %1523 = vmatprep.subr.bf16.mxu0 0
      %1524 = vmatpush1.bf16.msra.mxu0 0
      %1525 = vmatprep.subr.bf16.mxu0 0
      %1526 = vmatpush1.bf16.msra.mxu0 0
      %1527 = vmatprep.subr.bf16.mxu0 0
      %1528 = vmatpush1.bf16.msra.mxu0 0
      %1529 = vmatprep.subr.bf16.mxu0 0
      %1530 = vmatpush1.bf16.msra.mxu0 0
      %1531 = vmatprep.subr.bf16.mxu0 0
      %1532 = vmatpush1.bf16.msra.mxu0 0
      %1533 = vmatprep.mubr.bf16.mxu0 0
      %1534 = vmatmul.mubr.bf16.gmra.mrb[0].mxu0 %v1418
      %v1535 = vpop.f32.mrb[0].mxu0
      %v1536 = vadd.f32 0.0, %v1535
      %v1537 = vpop.f32.mrb[0].mxu0
      %v1538 = vadd.f32 0.0, %v1537
      %v1539 = vpop.f32.mrb[0].mxu0
      %v1540 = vadd.f32 0.0, %v1539
      %v1541 = vpop.f32.mrb[0].mxu0
      %v1542 = vadd.f32 0.0, %v1541
      %1543 = vmatprep.mubr.bf16.mxu0 0
      %1544 = vmatmul.mubr.bf16.gmra.mrb[0].mxu0 %v1417
      %v1545 = vpop.f32.mrb[0].mxu0
      %v1546 = vadd.f32 0.0, %v1545
      %v1547 = vpop.f32.mrb[0].mxu0
      %v1548 = vadd.f32 0.0, %v1547
      %v1549 = vpop.f32.mrb[0].mxu0
      %v1550 = vpop.f32.mrb[0].mxu0
      %1551 = vdwg.mxu0
      %v1552 = vadd.f32 %v1374, %v1536
      %v1553 = vadd.f32 %v1375, %v1538
      %v1554 = vadd.f32 %v1376, %v1540
      %v1555 = vadd.f32 %v1377, %v1542
      %v1556 = vadd.f32 %v1378, %v1546
      %v1557 = vadd.f32 %v1379, %v1548
      %v1558 = vld [vmem:[%s197 + $0x4] sm:$0x8]
      %s1559 = scalar_lea.vmem %s1, 1024
      %v1560 = vld [vmem:[%s1559] sm:$0xff]
      %v1561 = vld [vmem:[%s1559 + $0x8] sm:$0xff]
      %v1562 = vld [vmem:[%s1559 + $0x10] sm:$0xff]
      %v1563 = vld [vmem:[%s1559 + $0x18] sm:$0xff]
      %v1564 = vld [vmem:[%s1559 + $0x20] sm:$0xff]
      %v1565 = vld [vmem:[%s1559 + $0x28] sm:$0xff]
      %v1566 = vld [vmem:[%s1559 + $0x30] sm:$0xff]
      %v1567 = vld [vmem:[%s1559 + $0x38] sm:$0xff]
      %v1568 = vld [vmem:[%s1559 + $0x40] sm:$0xff]
      %v1569 = vld [vmem:[%s1559 + $0x48] sm:$0xff]
      %v1570 = vld [vmem:[%s1559 + $0x50] sm:$0xff]
      %v1571 = vld [vmem:[%s1559 + $0x58] sm:$0xff]
      %v1572 = vld [vmem:[%s1559 + $0x60] sm:$0xff]
      %v1573 = vld [vmem:[%s1559 + $0x68] sm:$0xff]
      %v1574 = vld [vmem:[%s1559 + $0x70] sm:$0xff]
      %v1575 = vld [vmem:[%s1559 + $0x78] sm:$0xff]
      %v1577 = vunpack.c.l.b16 %v1558
      %v1578 = vpack.c.b16 %v1232, %v1577
      %v1579 = vrot.slane %v1578, 3
      %v1580 = vrot.slane %v1400, 3
      %v1581 = vsel %vm727, %v1579, %v1580
      %v1600 = vunpack.c.l.b16 %v1560
      %v1601 = vunpack.c.h.b16 %v1560
      %v1602 = vunpack.c.l.b16 %v1561
      %v1603 = vunpack.c.h.b16 %v1561
      %v1604 = vunpack.c.l.b16 %v1562
      %v1605 = vunpack.c.h.b16 %v1562
      %v1606 = vunpack.c.l.b16 %v1563
      %v1607 = vunpack.c.h.b16 %v1563
      %v1608 = vunpack.c.l.b16 %v1564
      %v1609 = vunpack.c.h.b16 %v1564
      %v1610 = vunpack.c.l.b16 %v1565
      %v1611 = vunpack.c.h.b16 %v1565
      %v1612 = vunpack.c.l.b16 %v1566
      %v1613 = vunpack.c.h.b16 %v1566
      %v1614 = vunpack.c.l.b16 %v1567
      %v1615 = vunpack.c.h.b16 %v1567
      %v1616 = vunpack.c.l.b16 %v1568
      %v1617 = vunpack.c.h.b16 %v1568
      %v1618 = vunpack.c.l.b16 %v1569
      %v1619 = vunpack.c.h.b16 %v1569
      %v1620 = vunpack.c.l.b16 %v1570
      %v1621 = vunpack.c.h.b16 %v1570
      %v1622 = vunpack.c.l.b16 %v1571
      %v1623 = vunpack.c.h.b16 %v1571
      %v1624 = vunpack.c.l.b16 %v1572
      %v1625 = vunpack.c.h.b16 %v1572
      %v1626 = vunpack.c.l.b16 %v1573
      %v1627 = vunpack.c.h.b16 %v1573
      %v1628 = vunpack.c.l.b16 %v1574
      %v1629 = vunpack.c.h.b16 %v1574
      %v1630 = vunpack.c.l.b16 %v1575
      %v1631 = vunpack.c.h.b16 %v1575
      %v1632 = vpack.c.b16 %v1602, %v1600
      %v1633 = vpack.c.b16 %v1603, %v1601
      %v1634 = vpack.c.b16 %v1606, %v1604
      %v1635 = vpack.c.b16 %v1607, %v1605
      %v1636 = vpack.c.b16 %v1610, %v1608
      %v1637 = vpack.c.b16 %v1611, %v1609
      %v1638 = vpack.c.b16 %v1614, %v1612
      %v1639 = vpack.c.b16 %v1615, %v1613
      %v1640 = vpack.c.b16 %v1618, %v1616
      %v1641 = vpack.c.b16 %v1619, %v1617
      %v1642 = vpack.c.b16 %v1622, %v1620
      %v1643 = vpack.c.b16 %v1623, %v1621
      %v1644 = vpack.c.b16 %v1626, %v1624
      %v1645 = vpack.c.b16 %v1627, %v1625
      %v1646 = vpack.c.b16 %v1630, %v1628
      %v1647 = vpack.c.b16 %v1631, %v1629
      %1664 = vmatprep.subr.bf16.mxu0 %v1633
      %1665 = vmatpush1.bf16.msra.mxu0 %v1632
      %1666 = vmatprep.subr.bf16.mxu0 %v1635
      %1667 = vmatpush1.bf16.msra.mxu0 %v1634
      %1668 = vmatprep.subr.bf16.mxu0 %v1637
      %1669 = vmatpush1.bf16.msra.mxu0 %v1636
      %1670 = vmatprep.subr.bf16.mxu0 %v1639
      %1671 = vmatpush1.bf16.msra.mxu0 %v1638
      %1672 = vmatprep.subr.bf16.mxu0 %v1641
      %1673 = vmatpush1.bf16.msra.mxu0 %v1640
      %1674 = vmatprep.subr.bf16.mxu0 %v1643
      %1675 = vmatpush1.bf16.msra.mxu0 %v1642
      %1676 = vmatprep.subr.bf16.mxu0 %v1645
      %1677 = vmatpush1.bf16.msra.mxu0 %v1644
      %1678 = vmatprep.subr.bf16.mxu0 %v1647
      %1679 = vmatpush1.bf16.msra.mxu0 %v1646
      %1680 = vmatprep.subr.bf16.mxu0 0
      %1681 = vmatpush1.bf16.msra.mxu0 0
      %1682 = vmatprep.subr.bf16.mxu0 0
      %1683 = vmatpush1.bf16.msra.mxu0 0
      %1684 = vmatprep.subr.bf16.mxu0 0
      %1685 = vmatpush1.bf16.msra.mxu0 0
      %1686 = vmatprep.subr.bf16.mxu0 0
      %1687 = vmatpush1.bf16.msra.mxu0 0
      %1688 = vmatprep.subr.bf16.mxu0 0
      %1689 = vmatpush1.bf16.msra.mxu0 0
      %1690 = vmatprep.subr.bf16.mxu0 0
      %1691 = vmatpush1.bf16.msra.mxu0 0
      %1692 = vmatprep.subr.bf16.mxu0 0
      %1693 = vmatpush1.bf16.msra.mxu0 0
      %1694 = vmatprep.subr.bf16.mxu0 0
      %1695 = vmatpush1.bf16.msra.mxu0 0
      %1696 = vmatprep.mubr.bf16.mxu0 0
      %1697 = vmatmul.mubr.bf16.gmra.mrb[0].mxu0 %v1581
      %v1698 = vpop.f32.mrb[0].mxu0
      %v1699 = vadd.f32 0.0, %v1698
      %v1700 = vpop.f32.mrb[0].mxu0
      %v1701 = vadd.f32 0.0, %v1700
      %v1702 = vpop.f32.mrb[0].mxu0
      %v1703 = vadd.f32 0.0, %v1702
      %v1704 = vpop.f32.mrb[0].mxu0
      %v1705 = vadd.f32 0.0, %v1704
      %1706 = vmatprep.mubr.bf16.mxu0 0
      %1707 = vmatmul.mubr.bf16.gmra.mrb[0].mxu0 %v1580
      %v1708 = vpop.f32.mrb[0].mxu0
      %v1709 = vadd.f32 0.0, %v1708
      %v1710 = vpop.f32.mrb[0].mxu0
      %v1711 = vadd.f32 0.0, %v1710
      %v1712 = vpop.f32.mrb[0].mxu0
      %v1713 = vpop.f32.mrb[0].mxu0
      %1714 = vdwg.mxu0
      %v1715 = vadd.f32 %v1552, %v1699
      %v1716 = vadd.f32 %v1553, %v1701
      %v1717 = vadd.f32 %v1554, %v1703
      %v1718 = vadd.f32 %v1555, %v1705
      %v1719 = vadd.f32 %v1556, %v1709
      %v1720 = vadd.f32 %v1557, %v1711
      %v1721 = vld [vmem:[%s2] sm:$0x3]
      %v1723 = vlaneseq
      %v1724 = vshrl.u32 %v1723, 7
      %v1725 = vsub.s32 0, %v1724
      %v1726 = vrot.slane %v1721, %v1725
      %v1727 = vlaneseq
      %v1728 = vshrl.u32 %v1727, 7
      %v1729 = vsub.s32 1, %v1728
      %v1730 = vrot.slane %v1721, %v1729
      %v1733 = vadd.f32 %v1715, %v1726
      %v1734 = vadd.f32 %v1716, %v1730
      %v1735 = vadd.f32 %v1717, %v1726
      %v1736 = vadd.f32 %v1718, %v1730
      %v1737 = vadd.f32 %v1719, %v1726
      %v1738 = vadd.f32 %v1720, %v1730
      %v1739 = vmax.f32 %v1733, 0.0
      %v1740 = vmax.f32 %v1734, 0.0
      %v1741 = vmax.f32 %v1735, 0.0
      %v1742 = vmax.f32 %v1736, 0.0
      %v1743 = vmax.f32 %v1737, 0.0
      %v1744 = vmax.f32 %v1738, 0.0
      %1745 = vst [vmem:[%s206] sm:$0xff] %v1739
      %1746 = vst [vmem:[%s206 + $0x8] sm:$0xff] %v1740
      %1747 = vst [vmem:[%s206 + $0x10] sm:$0xff] %v1741
      %1748 = vst [vmem:[%s206 + $0x18] sm:$0xff] %v1742
      %1749 = vst [vmem:[%s206 + $0x20] sm:$0xff] %v1743
      %1750 = vst [vmem:[%s206 + $0x28] sm:$0xff] %v1744
      %p1751 = scmp.lt.s32.totalorder %s18, 1
      %s1752 = scalar_select %p1751, %s18, 1
      %p1753 = scmp.lt.s32.totalorder %s19, 0
      %s1754 = scalar_select %p1753, %s19, 0
      %s1755 = smul.addr %s1754, 6
      %s1756 = smul.addr %s1752, 6
      %s1757 = sadd.s32 %s1755, %s1756
      %s1758 = smul.addr %s1757, 8
      %s1759 = scalar_lea.vmem %s3, %s1758
      // Predicated region
      $region33: #{encoder3_forward_pallas.9} parent=31 // pred_check
        %p1760 = pneg %p116
      $region34: #{encoder3_forward_pallas.9} parent=31 // pred_check_branch
        %1762 = sbr.rel (%p1760) target = $region36
      $region35: #{encoder3_forward_pallas.9} parent=31 // pred_region
        _
      $region36: #{encoder3_forward_pallas.9} parent=31 // pred_fallthru
        _
    $region32: #{encoder3_forward_pallas.9} parent=5 // pred_fallthru
      _
    %p1763 = scmp.le.s32.totalorder 2, %s9
    // Predicated region
    $region37: #{encoder3_forward_pallas.9} parent=5 // pred_check
      %p1764 = pneg %p1763
    $region38: #{encoder3_forward_pallas.9} parent=5 // pred_check_branch
      %1766 = sbr.rel (%p1764) target = $region40
    $region39: #{encoder3_forward_pallas.9} parent=5 // pred_region
      %s1767 = ssub.s32 %s9, 2
      // Predicated region
      $region41: #{encoder3_forward_pallas.9} parent=39 // pred_check
        %p1768 = pneg %p122
      $region42: #{encoder3_forward_pallas.9} parent=39 // pred_check_branch
        %1770 = sbr.rel (%p1768) target = $region44
      $region43: #{encoder3_forward_pallas.9} parent=39 // pred_region
        %p1771 = scmp.lt.s32.totalorder %s20, 1
        %s1772 = scalar_select %p1771, %s20, 1
        %p1773 = scmp.lt.s32.totalorder %s21, 0
        %s1774 = scalar_select %p1773, %s21, 0
        %s1775 = smul.addr %s1774, 6
        %s1776 = smul.addr %s1772, 6
        %s1777 = sadd.s32 %s1775, %s1776
        %s1778 = smul.addr %s1777, 8
        %s1779 = scalar_lea.vmem %s3, %s1778
      $region44: #{encoder3_forward_pallas.9} parent=39 // pred_fallthru
        _
    $region40: #{encoder3_forward_pallas.9} parent=5 // pred_fallthru
      _
  $region6: #{encoder3_forward_pallas.9} parent=0 // loop_footer
    %s13 = sadd.s32 1, %s9
  $region7: #{encoder3_forward_pallas.9} parent=0 // loop_footer_branch
    %8 = sbr.rel target = $region3
  $region8: #{encoder3_forward_pallas.9} parent=0 // loop_exit
    _

</llo_original>
